<compile_context>
chip_gen: v7x
topology: tpu7x:2x2x1
jax: 0.10.0
libtpu: 0.0.40
codegen_flags: <defaults>
</compile_context>

<pallas_src>
import functools

import numpy as np
import jax
import jax.numpy as jnp
from jax.experimental import pallas as pl
from jax.experimental.pallas import tpu as pltpu

KPOOL, SPOOL = 5, 3   # avg_pool2d kernel / stride
KCONV = 5             # conv1 kernel size
C_MID = 128           # conv0 output channels
C_OUT = 768           # conv1 output channels
BN_EPS = 1e-3
_LANE = 128


def _customnet_kernel(x_ref, poolx_ref, w0x_ref, b0x_ref, w1_ref, b1_ref,
                      fcw_ref, fcb_ref, out_ref):
    # x_ref:     (TB, C_in*H*W)     f32   NCHW-flattened input rows (one batch tile)
    # poolx_ref: (C_in*H*W, K0)     bf16  expanded avg-pool matrix (K0 = pad(P*C_in, 128))
    # w0x_ref:   (K0, P*C_MID)      bf16  block-diagonal 1x1-conv weight, BN scale folded
    # b0x_ref:   (1, P*C_MID)       f32   conv0 folded-BN bias, tiled over the P positions
    # w1_ref:    (P*C_MID, C_OUT)   bf16  conv1 weight (kh,kw,c_mid flattened), BN scale folded
    # b1_ref:    (1, C_OUT)         f32   conv1 folded-BN bias
    # fcw_ref:   (C_OUT, NCP)       bf16  fc weight, output padded to 128 lanes
    # fcb_ref:   (1, NCP)           f32
    # out_ref:   (TB, NCP)          f32

    # avg_pool2d(kernel=5, stride=3): keep the input at f32 precision (pool matrix upcast in VMEM).
    pooled = jnp.dot(x_ref[...], poolx_ref[...].astype(jnp.float32),
                     preferred_element_type=jnp.float32)

    # conv0 (1x1) + folded BN bias + ReLU, emitted directly in (TB, P*128) flattened layout.
    h0 = jnp.dot(pooled.astype(jnp.bfloat16), w0x_ref[...],
                 preferred_element_type=jnp.float32)
    h0 = jnp.maximum(h0 + b0x_ref[...], 0.0)

    # conv1 (5x5 covering the whole 5x5 map) == single K = P*128 contraction, bf16 in / f32 acc.
    h1 = jnp.dot(h0.astype(jnp.bfloat16), w1_ref[...],
                 preferred_element_type=jnp.float32)
    h1 = jnp.maximum(h1 + b1_ref[...], 0.0)

    # fc (lane-dense 128-padded output).
    out_ref[...] = jnp.dot(h1.astype(jnp.bfloat16), fcw_ref[...],
                           preferred_element_type=jnp.float32) + fcb_ref[...]


@functools.lru_cache(maxsize=None)
def _pool_expanded_nchw(H, W, C_in):
    """avg_pool2d(5,3) as a (C_in*H*W, K0) matrix acting on NCHW-flattened samples.

    Row index = c*H*W + h*W + w (so x.reshape(B, -1) can be fed directly: no NCHW->NHWC
    relayout in HBM).  Column layout is position-major: col = p*C_in + c, padded to
    K0 = pad(P*C_in, 128).
    """
    PH = (H - KPOOL) // SPOOL + 1
    PW = (W - KPOOL) // SPOOL + 1
    P = PH * PW
    S = H * W
    K0 = ((P * C_in + _LANE - 1) // _LANE) * _LANE
    poolx = np.zeros((C_in * S, K0), np.float32)
    inv = 1.0 / (KPOOL * KPOOL)
    for c in range(C_in):
        for ph in range(PH):
            for pw in range(PW):
                col = (ph * PW + pw) * C_in + c
                for i in range(KPOOL):
                    for j in range(KPOOL):
                        row = c * S + (ph * SPOOL + i) * W + (pw * SPOOL + j)
                        poolx[row, col] = inv
    return poolx, P, PH, PW, K0


def prepare_constants(params, H, W):
    """Fold BN (eval mode), reshape / pad / cast every weight ONCE, off the per-call path."""
    C_in = params["w0"].shape[1]
    poolx_np, P, PH, PW, K0 = _pool_expanded_nchw(H, W, C_in)
    # fc has in_features=768 -> conv1's 5x5 kernel must cover the whole pooled map (e.g. 17x17 input).
    assert PH == KCONV and PW == KCONV, "input spatial size must give a 5x5 pooled map (e.g. 17x17)"
    NC = params["fcw"].shape[0]
    NCP = ((NC + _LANE - 1) // _LANE) * _LANE

    s0 = params["g0"] / jnp.sqrt(params["rv0"] + BN_EPS)
    b0 = params["be0"] - params["rm0"] * s0
    s1 = params["g1"] / jnp.sqrt(params["rv1"] + BN_EPS)
    b1 = params["be1"] - params["rm1"] * s1

    # conv0 (1x1), BN scale folded, expanded block-diagonally over the P pooled positions so its
    # output is already the (B, P*C_MID) layout conv1 contracts over -> no in-kernel reshape.
    # TODO(synk): drop the 25x block-diagonal zero blow-up (position-major contraction /
    # per-position matmuls); kept as a dense bf16 matrix (~0.8 MB) for lowering robustness.
    w0s = params["w0"][:, :, 0, 0].T * s0[None, :]                       # (C_in, 128)
    w0x = jnp.einsum("pq,ic->piqc", jnp.eye(P, dtype=jnp.float32), w0s)
    w0x = w0x.reshape(P * C_in, P * C_MID)
    w0x = jnp.zeros((K0, P * C_MID), jnp.float32).at[:P * C_in, :].set(w0x)
    b0x = jnp.tile(b0, (P,)).reshape(1, P * C_MID)

    # conv1: flatten (kh, kw, c_mid) onto the contraction axis; bf16 halves the dominant HBM
    # transfer, accumulation stays f32 inside the kernel.
    w1x = jnp.transpose(params["w1"], (2, 3, 1, 0)).reshape(P * C_MID, C_OUT)
    w1x = w1x * s1[None, :]

    # fc, padded to 128 output lanes (lane-dense store); sliced back after the call.
    fcw = jnp.zeros((C_OUT, NCP), jnp.float32).at[:, :NC].set(params["fcw"].T)
    fcb = jnp.zeros((1, NCP), jnp.float32).at[0, :NC].set(params["fcb"])

    return {
        "poolx": jnp.asarray(poolx_np, jnp.bfloat16),
        "w0x": w0x.astype(jnp.bfloat16),
        "b0x": b0x.astype(jnp.float32),
        "w1": w1x.astype(jnp.bfloat16),
        "b1": b1.reshape(1, C_OUT).astype(jnp.float32),
        "fcw": fcw.astype(jnp.bfloat16),
        "fcb": fcb.astype(jnp.float32),
    }


@jax.jit
def customnet_forward_prepared(x_nchw, consts):
    """Run the fused kernel. Returns (B, NCP) logits; class axis is padded to 128 lanes."""
    B = x_nchw.shape[0]
    poolx, w0x, b0x = consts["poolx"], consts["w0x"], consts["b0x"]
    w1, b1, fcw, fcb = consts["w1"], consts["b1"], consts["fcw"], consts["fcb"]
    SC, K0 = poolx.shape
    PN = w0x.shape[1]
    NCP = fcw.shape[1]

    # NCHW-flattened rows; poolx was built for exactly this layout (no transpose/relayout).
    x2 = x_nchw.reshape(B, -1)
    assert x2.shape[1] == SC, (x2.shape, SC)

    # Batch grid: activation blocks are pipelined behind the MXU, weights use constant
    # index_maps so they are fetched once and stay VMEM-resident, intermediates are bounded
    # per block, and the batch axis is "parallel" (dual-TC sharding on v7x).
    TB = min(256, ((B + 7) // 8) * 8)           # TB=256 fits the 32 MiB VMEM budget on all parts
    B_pad = ((B + TB - 1) // TB) * TB
    if B_pad != B:
        x2 = jnp.pad(x2, ((0, B_pad - B), (0, 0)))
    grid = (B_pad // TB,)

    def const_spec(shape):                       # whole array, same block every grid step
        return pl.BlockSpec(shape, lambda i: (0, 0))

    out = pl.pallas_call(
        _customnet_kernel,
        out_shape=jax.ShapeDtypeStruct((B_pad, NCP), jnp.float32),
        grid=grid,
        in_specs=[
            pl.BlockSpec((TB, SC), lambda i: (i, 0)),   # x: one batch tile per step
            const_spec((SC, K0)),                       # poolx   (bf16, resident)
            const_spec((K0, PN)),                       # w0x     (bf16, resident)
            const_spec((1, PN)),                        # b0x     (f32)
            const_spec((PN, C_OUT)),                    # w1      (bf16, resident)
            const_spec((1, C_OUT)),                     # b1      (f32)
            const_spec((C_OUT, NCP)),                   # fcw     (bf16, resident)
            const_spec((1, NCP)),                       # fcb     (f32)
        ],
        out_specs=pl.BlockSpec((TB, NCP), lambda i: (i, 0)),
        compiler_params=pltpu.CompilerParams(
            dimension_semantics=("parallel",),
            vmem_limit_bytes=32 * 1024 * 1024),
    )(x2, poolx, w0x, b0x, w1, b1, fcw, fcb)
    return out[:B]


def customnet_forward(x_nchw, params):
    """Convenience wrapper (folds params per call). For hot loops, call prepare_constants once."""
    consts = prepare_constants(params, x_nchw.shape[2], x_nchw.shape[3])
    nc = params["fcw"].shape[0]
    return customnet_forward_prepared(x_nchw, consts)[:, :nc]


def customnet_reference(x_nchw, params):
    """Plain-JAX reference (same math, no Pallas, full f32)."""
    pooled = jax.lax.reduce_window(
        x_nchw, 0.0, jax.lax.add,
        (1, 1, KPOOL, KPOOL), (1, 1, SPOOL, SPOOL), "VALID") / float(KPOOL * KPOOL)
    s0 = params["g0"] / jnp.sqrt(params["rv0"] + BN_EPS)
    b0 = params["be0"] - params["rm0"] * s0
    s1 = params["g1"] / jnp.sqrt(params["rv1"] + BN_EPS)
    b1 = params["be1"] - params["rm1"] * s1
    h0 = jnp.einsum("bchw,oc->bohw", pooled, params["w0"][:, :, 0, 0],
                    precision="highest")
    h0 = jnp.maximum(h0 * s0[None, :, None, None] + b0[None, :, None, None], 0.0)
    # conv1 kernel covers the entire 5x5 map -> single output position
    h1 = jnp.einsum("bchw,ochw->bo", h0, params["w1"], precision="highest")
    h1 = jnp.maximum(h1 * s1[None, :] + b1[None, :], 0.0)
    return jnp.einsum("bi,oi->bo", h1, params["fcw"], precision="highest") + params["fcb"][None, :]


def init_params(key, in_channels, num_classes):
    ks = jax.random.split(key, 12)
    return {
        "w0": jax.random.normal(ks[0], (C_MID, in_channels, 1, 1), jnp.float32) * 0.1,
        "g0": 1.0 + 0.1 * jax.random.normal(ks[1], (C_MID,), jnp.float32),
        "be0": 0.1 * jax.random.normal(ks[2], (C_MID,), jnp.float32),
        "rm0": 0.1 * jax.random.normal(ks[3], (C_MID,), jnp.float32),
        "rv0": jax.random.uniform(ks[4], (C_MID,), jnp.float32, 0.5, 1.5),
        "w1": jax.random.normal(ks[5], (C_OUT, C_MID, KCONV, KCONV), jnp.float32) * 0.01,
        "g1": 1.0 + 0.1 * jax.random.normal(ks[6], (C_OUT,), jnp.float32),
        "be1": 0.1 * jax.random.normal(ks[7], (C_OUT,), jnp.float32),
        "rm1": 0.1 * jax.random.normal(ks[8], (C_OUT,), jnp.float32),
        "rv1": jax.random.uniform(ks[9], (C_OUT,), jnp.float32, 0.5, 1.5),
        "fcw": jax.random.normal(ks[10], (num_classes, C_OUT), jnp.float32) * 0.001,
        "fcb": jax.random.normal(ks[11], (num_classes,), jnp.float32) * 0.001,
    }


if __name__ == "__main__":
    key = jax.random.PRNGKey(0)
    k_x, k_p = jax.random.split(key)

    B, C_IN, H, W = 2, 4, 17, 17   # 17x17 -> avgpool(5,3) -> 5x5 map -> conv1(5x5) -> 1x1
    NUM_CLASSES = 10

    x = jax.random.normal(k_x, (B, C_IN, H, W), jnp.float32)
    params = init_params(k_p, C_IN, NUM_CLASSES)

    # Fold/cast/upload all constants once (off the per-call path), then run the jitted kernel.
    consts = prepare_constants(params, H, W)
    out = jax.block_until_ready(customnet_forward_prepared(x, consts)[:, :NUM_CLASSES])
    ref = jax.block_until_ready(customnet_reference(x, params))

    assert out.shape == (B, NUM_CLASSES), out.shape
    # bf16 weights + f32 accumulation: comfortably within these tolerances.
    np.testing.assert_allclose(np.asarray(out), np.asarray(ref), rtol=2e-2, atol=2e-3)

    print("KERNEL_OK")
</pallas_src>

<mosaic_0001>
module attributes {stable_mosaic.version = 11 : i64} {
  func.func @_customnet_kernel(%arg0: i32, %arg1: memref<8x1156xf32, #tpu.memory_space<vmem>>, %arg2: memref<1156x128xbf16, #tpu.memory_space<vmem>>, %arg3: memref<128x3200xbf16, #tpu.memory_space<vmem>>, %arg4: memref<1x3200xf32, #tpu.memory_space<vmem>>, %arg5: memref<3200x768xbf16, #tpu.memory_space<vmem>>, %arg6: memref<1x768xf32, #tpu.memory_space<vmem>>, %arg7: memref<768x128xbf16, #tpu.memory_space<vmem>>, %arg8: memref<1x128xf32, #tpu.memory_space<vmem>>, %arg9: memref<8x128xf32, #tpu.memory_space<vmem>>) attributes {dimension_semantics = [#tpu.dimension_semantics<parallel>], iteration_bounds = array<i64: 1>, scalar_prefetch = 0 : i64, scratch_operands = 0 : i64, tpu.core_type = #tpu.core_type<tc>, window_params = [{transform_indices = @transform_0, window_bounds = array<i64: 8, 1156>}, {pipeline_mode = #tpu.pipeline_mode<synchronous>, transform_indices = @transform_1, window_bounds = array<i64: 1156, 128>}, {pipeline_mode = #tpu.pipeline_mode<synchronous>, transform_indices = @transform_2, window_bounds = array<i64: 128, 3200>}, {pipeline_mode = #tpu.pipeline_mode<synchronous>, transform_indices = @transform_3, window_bounds = array<i64: 1, 3200>}, {pipeline_mode = #tpu.pipeline_mode<synchronous>, transform_indices = @transform_4, window_bounds = array<i64: 3200, 768>}, {pipeline_mode = #tpu.pipeline_mode<synchronous>, transform_indices = @transform_5, window_bounds = array<i64: 1, 768>}, {pipeline_mode = #tpu.pipeline_mode<synchronous>, transform_indices = @transform_6, window_bounds = array<i64: 768, 128>}, {pipeline_mode = #tpu.pipeline_mode<synchronous>, transform_indices = @transform_7, window_bounds = array<i64: 1, 128>}, {transform_indices = @transform_8, window_bounds = array<i64: 8, 128>}]} {
    %c0 = arith.constant 0 : index
    %c0_0 = arith.constant 0 : index
    %0 = vector.load %arg1[%c0, %c0_0] : memref<8x1156xf32, #tpu.memory_space<vmem>>, vector<8x1156xf32>
    %c0_1 = arith.constant 0 : index
    %c0_2 = arith.constant 0 : index
    %1 = vector.load %arg2[%c0_1, %c0_2] : memref<1156x128xbf16, #tpu.memory_space<vmem>>, vector<1156x128xbf16>
    %2 = arith.extf %1 : vector<1156x128xbf16> to vector<1156x128xf32>
    %cst = arith.constant dense<0.000000e+00> : vector<8x128xf32>
    %3 = tpu.matmul %0, %2, %cst {dimension_numbers = #tpu.dot_dimension_numbers<[1], [0], [0], [1], [0, 0, 1, 1], [], []>} : vector<8x1156xf32>, vector<1156x128xf32>, vector<8x128xf32> -> vector<8x128xf32>
    %4 = arith.truncf %3 : vector<8x128xf32> to vector<8x128xbf16>
    %c0_3 = arith.constant 0 : index
    %c0_4 = arith.constant 0 : index
    %5 = vector.load %arg3[%c0_3, %c0_4] : memref<128x3200xbf16, #tpu.memory_space<vmem>>, vector<128x3200xbf16>
    %cst_5 = arith.constant dense<0.000000e+00> : vector<8x3200xf32>
    %6 = tpu.matmul %4, %5, %cst_5 {dimension_numbers = #tpu.dot_dimension_numbers<[1], [0], [0], [1], [0, 0, 1, 1], [], []>} : vector<8x128xbf16>, vector<128x3200xbf16>, vector<8x3200xf32> -> vector<8x3200xf32>
    %c0_6 = arith.constant 0 : index
    %c0_7 = arith.constant 0 : index
    %7 = vector.load %arg4[%c0_6, %c0_7] : memref<1x3200xf32, #tpu.memory_space<vmem>>, vector<1x3200xf32>
    %8 = vector.broadcast %7 : vector<1x3200xf32> to vector<8x3200xf32>
    %9 = arith.addf %6, %8 : vector<8x3200xf32>
    %cst_8 = arith.constant 0.000000e+00 : f32
    %10 = vector.broadcast %cst_8 : f32 to vector<8x3200xf32>
    %11 = arith.maximumf %9, %10 : vector<8x3200xf32>
    %12 = arith.truncf %11 : vector<8x3200xf32> to vector<8x3200xbf16>
    %c0_9 = arith.constant 0 : index
    %c0_10 = arith.constant 0 : index
    %13 = vector.load %arg5[%c0_9, %c0_10] : memref<3200x768xbf16, #tpu.memory_space<vmem>>, vector<3200x768xbf16>
    %cst_11 = arith.constant dense<0.000000e+00> : vector<8x768xf32>
    %14 = tpu.matmul %12, %13, %cst_11 {dimension_numbers = #tpu.dot_dimension_numbers<[1], [0], [0], [1], [0, 0, 1, 1], [], []>} : vector<8x3200xbf16>, vector<3200x768xbf16>, vector<8x768xf32> -> vector<8x768xf32>
    %c0_12 = arith.constant 0 : index
    %c0_13 = arith.constant 0 : index
    %15 = vector.load %arg6[%c0_12, %c0_13] : memref<1x768xf32, #tpu.memory_space<vmem>>, vector<1x768xf32>
    %16 = vector.broadcast %15 : vector<1x768xf32> to vector<8x768xf32>
    %17 = arith.addf %14, %16 : vector<8x768xf32>
    %cst_14 = arith.constant 0.000000e+00 : f32
    %18 = vector.broadcast %cst_14 : f32 to vector<8x768xf32>
    %19 = arith.maximumf %17, %18 : vector<8x768xf32>
    %20 = arith.truncf %19 : vector<8x768xf32> to vector<8x768xbf16>
    %c0_15 = arith.constant 0 : index
    %c0_16 = arith.constant 0 : index
    %21 = vector.load %arg7[%c0_15, %c0_16] : memref<768x128xbf16, #tpu.memory_space<vmem>>, vector<768x128xbf16>
    %cst_17 = arith.constant dense<0.000000e+00> : vector<8x128xf32>
    %22 = tpu.matmul %20, %21, %cst_17 {dimension_numbers = #tpu.dot_dimension_numbers<[1], [0], [0], [1], [0, 0, 1, 1], [], []>} : vector<8x768xbf16>, vector<768x128xbf16>, vector<8x128xf32> -> vector<8x128xf32>
    %c0_18 = arith.constant 0 : index
    %c0_19 = arith.constant 0 : index
    %23 = vector.load %arg8[%c0_18, %c0_19] : memref<1x128xf32, #tpu.memory_space<vmem>>, vector<1x128xf32>
    %24 = vector.broadcast %23 : vector<1x128xf32> to vector<8x128xf32>
    %25 = arith.addf %22, %24 : vector<8x128xf32>
    %c0_20 = arith.constant 0 : index
    %c0_21 = arith.constant 0 : index
    %26 = vector.load %arg9[%c0_20, %c0_21] : memref<8x128xf32, #tpu.memory_space<vmem>>, vector<8x128xf32>
    tpu.vector_store %arg9[%c0_20, %c0_21], %25 {strides = array<i32>} : memref<8x128xf32, #tpu.memory_space<vmem>>, vector<8x128xf32>,
    return
  }
  func.func @transform_0(%arg0: i32) -> (i32, i32) {
    %c0_i32 = arith.constant 0 : i32
    %c0_i32_0 = arith.constant 0 : i32
    return %arg0, %c0_i32 : i32, i32
  }
  func.func @transform_1(%arg0: i32) -> (i32, i32) {
    %c0_i32 = arith.constant 0 : i32
    %c0_i32_0 = arith.constant 0 : i32
    %c0_i32_1 = arith.constant 0 : i32
    return %c0_i32, %c0_i32_0 : i32, i32
  }
  func.func @transform_2(%arg0: i32) -> (i32, i32) {
    %c0_i32 = arith.constant 0 : i32
    %c0_i32_0 = arith.constant 0 : i32
    %c0_i32_1 = arith.constant 0 : i32
    return %c0_i32, %c0_i32_0 : i32, i32
  }
  func.func @transform_3(%arg0: i32) -> (i32, i32) {
    %c0_i32 = arith.constant 0 : i32
    %c0_i32_0 = arith.constant 0 : i32
    %c0_i32_1 = arith.constant 0 : i32
    return %c0_i32, %c0_i32_0 : i32, i32
  }
  func.func @transform_4(%arg0: i32) -> (i32, i32) {
    %c0_i32 = arith.constant 0 : i32
    %c0_i32_0 = arith.constant 0 : i32
    %c0_i32_1 = arith.constant 0 : i32
    return %c0_i32, %c0_i32_0 : i32, i32
  }
  func.func @transform_5(%arg0: i32) -> (i32, i32) {
    %c0_i32 = arith.constant 0 : i32
    %c0_i32_0 = arith.constant 0 : i32
    %c0_i32_1 = arith.constant 0 : i32
    return %c0_i32, %c0_i32_0 : i32, i32
  }
  func.func @transform_6(%arg0: i32) -> (i32, i32) {
    %c0_i32 = arith.constant 0 : i32
    %c0_i32_0 = arith.constant 0 : i32
    %c0_i32_1 = arith.constant 0 : i32
    return %c0_i32, %c0_i32_0 : i32, i32
  }
  func.func @transform_7(%arg0: i32) -> (i32, i32) {
    %c0_i32 = arith.constant 0 : i32
    %c0_i32_0 = arith.constant 0 : i32
    %c0_i32_1 = arith.constant 0 : i32
    return %c0_i32, %c0_i32_0 : i32, i32
  }
  func.func @transform_8(%arg0: i32) -> (i32, i32) {
    %c0_i32 = arith.constant 0 : i32
    %c0_i32_0 = arith.constant 0 : i32
    return %arg0, %c0_i32 : i32, i32
  }
}

</mosaic_0001>

<llo_original>
// kernel: customnet_forward_prepared.1
$region0: #{customnet_forward_prepared.1}
  #allocation0 [shape = 'u32[]', space=smem, size = 0x4, offset = 0x4, fixed_abs, tag = 'smem constant byte address 0x4 - core index']
  #allocation1 [shape = 'u32[144,128]{1,0:T(1,128)}', space=vmem, size = 0x12000, scoped, tag = 'internal scratch']
  %s0 = inlined_call_operand.vmem [shape: f32[8,1156], index: 0, kind: input, shape index: {}]
  %s1 = inlined_call_operand.hbm [shape: bf16[1156,128], index: 1, kind: input, shape index: {}]
  %s2 = inlined_call_operand.hbm [shape: bf16[128,3200], index: 2, kind: input, shape index: {}]
  %s3 = inlined_call_operand.hbm [shape: f32[1,3200], index: 3, kind: input, shape index: {}]
  %s4 = inlined_call_operand.hbm [shape: bf16[3200,768], index: 4, kind: input, shape index: {}]
  %s5 = inlined_call_operand.hbm [shape: f32[1,768], index: 5, kind: input, shape index: {}]
  %s6 = inlined_call_operand.hbm [shape: bf16[768,128], index: 6, kind: input, shape index: {}]
  %s7 = inlined_call_operand.hbm [shape: f32[1,128], index: 7, kind: input, shape index: {}]
  %s8 = inlined_call_operand.vmem [shape: f32[8,128], index: 8, kind: output, shape index: {}]
  %s9 = sld [smem:[#allocation0]]
  $region70: #{customnet_forward_prepared.1} parent=0
    _
  %s11 = ssub.s32 1, %s9
  %s12 = scalar_select 0, %s11, %s9
  $region1: #{customnet_forward_prepared.1} parent=0
    #allocation2 [shape = 'u8[296960]{0}', space=vmem, size = 0x48800, scoped, tag = 'input window, operand 1, single buffered']
    #allocation3 [shape = 's32[1]{0}', space=sflag, size = 0x4, scoped, tag = 'scoped memory for customnet_forward_prepared.1']
    #allocation4 [shape = 'u8[819200]{0}', space=vmem, size = 0xc8000, scoped, tag = 'input window, operand 2, single buffered']
    #allocation5 [shape = 's32[1]{0}', space=sflag, size = 0x4, scoped, tag = 'scoped memory for customnet_forward_prepared.1']
    #allocation6 [shape = 'u8[12800]{0}', space=vmem, size = 0x3400, scoped, tag = 'input window, operand 3, single buffered']
    #allocation7 [shape = 'u8[4915200]{0}', space=vmem, size = 0x4b0000, scoped, tag = 'input window, operand 4, single buffered']
    #allocation8 [shape = 's32[1]{0}', space=sflag, size = 0x4, scoped, tag = 'scoped memory for customnet_forward_prepared.1']
    #allocation9 [shape = 'u8[3072]{0}', space=vmem, size = 0xc00, scoped, tag = 'input window, operand 5, single buffered']
    #allocation10 [shape = 'u8[196608]{0}', space=vmem, size = 0x30000, scoped, tag = 'input window, operand 6, single buffered']
    #allocation11 [shape = 's32[1]{0}', space=sflag, size = 0x4, scoped, tag = 'scoped memory for customnet_forward_prepared.1']
    #allocation12 [shape = 'u8[512]{0}', space=vmem, size = 0x400, scoped, tag = 'input window, operand 7, single buffered']
    %13 = vsyncpa [#allocation3], 0
    %14 = vsyncpa [#allocation5], 0
    %15 = vsyncpa [#allocation8], 0
    %16 = vsyncpa [#allocation11], 0
    // Predicated region
    $region2: #{customnet_forward_prepared.1} parent=1 // pred_check
      _
    $region3: #{customnet_forward_prepared.1} parent=1 // pred_check_branch
      %18 = sbr.rel (0) target = $region5
    $region4: #{customnet_forward_prepared.1} parent=1 // pred_region
      _
    $region5: #{customnet_forward_prepared.1} parent=1 // pred_fallthru
      _
    // Predicated region
    $region6: #{customnet_forward_prepared.1} parent=1 // pred_check
      _
    $region7: #{customnet_forward_prepared.1} parent=1 // pred_check_branch
      %20 = sbr.rel (0) target = $region9
    $region8: #{customnet_forward_prepared.1} parent=1 // pred_region
      %s22 = ssub.s32 9280, 9280
      %23 = vsyncadd [#allocation3], %s22
      %s24 = sshll.u32 [#allocation2], 4
      %s25 = int_to_ptr.vmem [resolvable:$true] %s24
      %30 = dma.hbm_to_vmem [thread:$0]  %s1, 9280, %s25, [#allocation3], 64, 64, 4
    $region9: #{customnet_forward_prepared.1} parent=1 // pred_fallthru
      _
    // Predicated region
    $region10: #{customnet_forward_prepared.1} parent=1 // pred_check
      _
    $region11: #{customnet_forward_prepared.1} parent=1 // pred_check_branch
      %32 = sbr.rel (0) target = $region13
    $region12: #{customnet_forward_prepared.1} parent=1 // pred_region
      %s34 = ssub.s32 25600, 25600
      %35 = vsyncadd [#allocation5], %s34
      %s36 = sshll.u32 [#allocation4], 4
      %s37 = int_to_ptr.vmem [resolvable:$true] %s36
      %42 = dma.hbm_to_vmem [thread:$0]  %s2, 25600, %s37, [#allocation5], 1600, 1600, 100
    $region13: #{customnet_forward_prepared.1} parent=1 // pred_fallthru
      _
    // Predicated region
    $region14: #{customnet_forward_prepared.1} parent=1 // pred_check
      _
    $region15: #{customnet_forward_prepared.1} parent=1 // pred_check_branch
      %44 = sbr.rel (0) target = $region17
    $region16: #{customnet_forward_prepared.1} parent=1 // pred_region
      %s46 = ssub.s32 400, 400
      %47 = vsyncadd [#allocation5], %s46
      %s49 = sshll.u32 [#allocation6], 4
      %s50 = int_to_ptr.vmem [resolvable:$true] %s49
      %52 = dma.hbm_to_vmem [thread:$0]  %s3, 400, %s50, [#allocation5]
    $region17: #{customnet_forward_prepared.1} parent=1 // pred_fallthru
      _
    // Predicated region
    $region18: #{customnet_forward_prepared.1} parent=1 // pred_check
      _
    $region19: #{customnet_forward_prepared.1} parent=1 // pred_check_branch
      %54 = sbr.rel (0) target = $region21
    $region20: #{customnet_forward_prepared.1} parent=1 // pred_region
      %s56 = ssub.s32 153600, 153600
      %57 = vsyncadd [#allocation8], %s56
      %s58 = sshll.u32 [#allocation7], 4
      %s59 = int_to_ptr.vmem [resolvable:$true] %s58
      %64 = dma.hbm_to_vmem [thread:$0]  %s4, 153600, %s59, [#allocation8], 384, 384, 24
    $region21: #{customnet_forward_prepared.1} parent=1 // pred_fallthru
      _
    // Predicated region
    $region22: #{customnet_forward_prepared.1} parent=1 // pred_check
      _
    $region23: #{customnet_forward_prepared.1} parent=1 // pred_check_branch
      %66 = sbr.rel (0) target = $region25
    $region24: #{customnet_forward_prepared.1} parent=1 // pred_region
      %s68 = ssub.s32 96, 96
      %69 = vsyncadd [#allocation8], %s68
      %s71 = sshll.u32 [#allocation9], 4
      %s72 = int_to_ptr.vmem [resolvable:$true] %s71
      %74 = dma.hbm_to_vmem [thread:$0]  %s5, 96, %s72, [#allocation8]
    $region25: #{customnet_forward_prepared.1} parent=1 // pred_fallthru
      _
    // Predicated region
    $region26: #{customnet_forward_prepared.1} parent=1 // pred_check
      _
    $region27: #{customnet_forward_prepared.1} parent=1 // pred_check_branch
      %76 = sbr.rel (0) target = $region29
    $region28: #{customnet_forward_prepared.1} parent=1 // pred_region
      %s78 = ssub.s32 6144, 6144
      %79 = vsyncadd [#allocation11], %s78
      %s80 = sshll.u32 [#allocation10], 4
      %s81 = int_to_ptr.vmem [resolvable:$true] %s80
      %86 = dma.hbm_to_vmem [thread:$0]  %s6, 6144, %s81, [#allocation11], 64, 64, 4
    $region29: #{customnet_forward_prepared.1} parent=1 // pred_fallthru
      _
    // Predicated region
    $region30: #{customnet_forward_prepared.1} parent=1 // pred_check
      _
    $region31: #{customnet_forward_prepared.1} parent=1 // pred_check_branch
      %88 = sbr.rel (0) target = $region33
    $region32: #{customnet_forward_prepared.1} parent=1 // pred_region
      %s90 = ssub.s32 16, 16
      %91 = vsyncadd [#allocation11], %s90
      %s93 = sshll.u32 [#allocation12], 4
      %s94 = int_to_ptr.vmem [resolvable:$true] %s93
      %96 = dma.hbm_to_vmem [thread:$0]  %s7, 16, %s94, [#allocation11]
    $region33: #{customnet_forward_prepared.1} parent=1 // pred_fallthru
      _
    // Predicated region
    $region34: #{customnet_forward_prepared.1} parent=1 // pred_check
      _
    $region35: #{customnet_forward_prepared.1} parent=1 // pred_check_branch
      %98 = sbr.rel (0) target = $region37
    $region36: #{customnet_forward_prepared.1} parent=1 // pred_region
      %99 = dma.done [#allocation3], 9280
    $region37: #{customnet_forward_prepared.1} parent=1 // pred_fallthru
      _
    // Predicated region
    $region38: #{customnet_forward_prepared.1} parent=1 // pred_check
      _
    $region39: #{customnet_forward_prepared.1} parent=1 // pred_check_branch
      %101 = sbr.rel (0) target = $region41
    $region40: #{customnet_forward_prepared.1} parent=1 // pred_region
      %102 = dma.done [#allocation5], 25600
    $region41: #{customnet_forward_prepared.1} parent=1 // pred_fallthru
      _
    // Predicated region
    $region42: #{customnet_forward_prepared.1} parent=1 // pred_check
      _
    $region43: #{customnet_forward_prepared.1} parent=1 // pred_check_branch
      %104 = sbr.rel (0) target = $region45
    $region44: #{customnet_forward_prepared.1} parent=1 // pred_region
      %105 = dma.done [#allocation5], 400
    $region45: #{customnet_forward_prepared.1} parent=1 // pred_fallthru
      _
    // Predicated region
    $region46: #{customnet_forward_prepared.1} parent=1 // pred_check
      _
    $region47: #{customnet_forward_prepared.1} parent=1 // pred_check_branch
      %107 = sbr.rel (0) target = $region49
    $region48: #{customnet_forward_prepared.1} parent=1 // pred_region
      %108 = dma.done [#allocation8], 153600
    $region49: #{customnet_forward_prepared.1} parent=1 // pred_fallthru
      _
    // Predicated region
    $region50: #{customnet_forward_prepared.1} parent=1 // pred_check
      _
    $region51: #{customnet_forward_prepared.1} parent=1 // pred_check_branch
      %110 = sbr.rel (0) target = $region53
    $region52: #{customnet_forward_prepared.1} parent=1 // pred_region
      %111 = dma.done [#allocation8], 96
    $region53: #{customnet_forward_prepared.1} parent=1 // pred_fallthru
      _
    // Predicated region
    $region54: #{customnet_forward_prepared.1} parent=1 // pred_check
      _
    $region55: #{customnet_forward_prepared.1} parent=1 // pred_check_branch
      %113 = sbr.rel (0) target = $region57
    $region56: #{customnet_forward_prepared.1} parent=1 // pred_region
      %114 = dma.done [#allocation11], 6144
    $region57: #{customnet_forward_prepared.1} parent=1 // pred_fallthru
      _
    // Predicated region
    $region58: #{customnet_forward_prepared.1} parent=1 // pred_check
      _
    $region59: #{customnet_forward_prepared.1} parent=1 // pred_check_branch
      %116 = sbr.rel (0) target = $region61
    $region60: #{customnet_forward_prepared.1} parent=1 // pred_region
      %117 = dma.done [#allocation11], 16
    $region61: #{customnet_forward_prepared.1} parent=1 // pred_fallthru
      _
    %v119 = vld [vmem:[%s0] sm:$0xff]
    %v120 = vld [vmem:[%s0 + $0x8] sm:$0xff]
    %v121 = vld [vmem:[%s0 + $0x10] sm:$0xff]
    %v122 = vld [vmem:[%s0 + $0x18] sm:$0xff]
    %v123 = vld [vmem:[%s0 + $0x20] sm:$0xff]
    %v124 = vld [vmem:[%s0 + $0x28] sm:$0xff]
    %v125 = vld [vmem:[%s0 + $0x30] sm:$0xff]
    %v126 = vld [vmem:[%s0 + $0x38] sm:$0xff]
    %v127 = vld [vmem:[%s0 + $0x40] sm:$0xff]
    %v128 = vld [vmem:[%s0 + $0x48] sm:$0xff]
    %v129 = vld [vmem:[#allocation2] sm:$0xf]
    %v130 = vld [vmem:[#allocation2 + $0x4] sm:$0xf]
    %v131 = vld [vmem:[#allocation2 + $0x8] sm:$0xf]
    %v132 = vld [vmem:[#allocation2 + $0xc] sm:$0xf]
    %v133 = vld [vmem:[#allocation2 + $0x10] sm:$0xf]
    %v134 = vld [vmem:[#allocation2 + $0x14] sm:$0xf]
    %v135 = vld [vmem:[#allocation2 + $0x18] sm:$0xf]
    %v136 = vld [vmem:[#allocation2 + $0x1c] sm:$0xf]
    %v137 = vld [vmem:[#allocation2 + $0x20] sm:$0xf]
    %v138 = vld [vmem:[#allocation2 + $0x24] sm:$0xf]
    %v139 = vld [vmem:[#allocation2 + $0x28] sm:$0xf]
    %v140 = vld [vmem:[#allocation2 + $0x2c] sm:$0xf]
    %v141 = vld [vmem:[#allocation2 + $0x30] sm:$0xf]
    %v142 = vld [vmem:[#allocation2 + $0x34] sm:$0xf]
    %v143 = vld [vmem:[#allocation2 + $0x38] sm:$0xf]
    %v144 = vld [vmem:[#allocation2 + $0x3c] sm:$0xf]
    %v145 = vld [vmem:[#allocation2 + $0x40] sm:$0xf]
    %v146 = vld [vmem:[#allocation2 + $0x44] sm:$0xf]
    %v147 = vld [vmem:[#allocation2 + $0x48] sm:$0xf]
    %v148 = vld [vmem:[#allocation2 + $0x4c] sm:$0xf]
    %v149 = vld [vmem:[#allocation2 + $0x50] sm:$0xf]
    %v150 = vld [vmem:[#allocation2 + $0x54] sm:$0xf]
    %v151 = vld [vmem:[#allocation2 + $0x58] sm:$0xf]
    %v152 = vld [vmem:[#allocation2 + $0x5c] sm:$0xf]
    %v153 = vld [vmem:[#allocation2 + $0x60] sm:$0xf]
    %v154 = vld [vmem:[#allocation2 + $0x64] sm:$0xf]
    %v155 = vld [vmem:[#allocation2 + $0x68] sm:$0xf]
    %v156 = vld [vmem:[#allocation2 + $0x6c] sm:$0xf]
    %v157 = vld [vmem:[#allocation2 + $0x70] sm:$0xf]
    %v158 = vld [vmem:[#allocation2 + $0x74] sm:$0xf]
    %v159 = vld [vmem:[#allocation2 + $0x78] sm:$0xf]
    %v160 = vld [vmem:[#allocation2 + $0x7c] sm:$0xf]
    %v161 = vld [vmem:[#allocation2 + $0x80] sm:$0xf]
    %v162 = vld [vmem:[#allocation2 + $0x84] sm:$0xf]
    %v163 = vld [vmem:[#allocation2 + $0x88] sm:$0xf]
    %v164 = vld [vmem:[#allocation2 + $0x8c] sm:$0xf]
    %v165 = vld [vmem:[#allocation2 + $0x90] sm:$0xf]
    %v166 = vld [vmem:[#allocation2 + $0x94] sm:$0xf]
    %v167 = vld [vmem:[#allocation2 + $0x98] sm:$0xf]
    %v168 = vld [vmem:[#allocation2 + $0x9c] sm:$0xf]
    %v169 = vld [vmem:[#allocation2 + $0xa0] sm:$0xf]
    %v170 = vld [vmem:[#allocation2 + $0xa4] sm:$0xf]
    %v171 = vld [vmem:[#allocation2 + $0xa8] sm:$0xf]
    %v172 = vld [vmem:[#allocation2 + $0xac] sm:$0xf]
    %v173 = vld [vmem:[#allocation2 + $0xb0] sm:$0xf]
    %v174 = vld [vmem:[#allocation2 + $0xb4] sm:$0xf]
    %v175 = vld [vmem:[#allocation2 + $0xb8] sm:$0xf]
    %v176 = vld [vmem:[#allocation2 + $0xbc] sm:$0xf]
    %v177 = vld [vmem:[#allocation2 + $0xc0] sm:$0xf]
    %v178 = vld [vmem:[#allocation2 + $0xc4] sm:$0xf]
    %v179 = vld [vmem:[#allocation2 + $0xc8] sm:$0xf]
    %v180 = vld [vmem:[#allocation2 + $0xcc] sm:$0xf]
    %v181 = vld [vmem:[#allocation2 + $0xd0] sm:$0xf]
    %v182 = vld [vmem:[#allocation2 + $0xd4] sm:$0xf]
    %v183 = vld [vmem:[#allocation2 + $0xd8] sm:$0xf]
    %v184 = vld [vmem:[#allocation2 + $0xdc] sm:$0xf]
    %v185 = vld [vmem:[#allocation2 + $0xe0] sm:$0xf]
    %v186 = vld [vmem:[#allocation2 + $0xe4] sm:$0xf]
    %v187 = vld [vmem:[#allocation2 + $0xe8] sm:$0xf]
    %v188 = vld [vmem:[#allocation2 + $0xec] sm:$0xf]
    %v189 = vld [vmem:[#allocation2 + $0xf0] sm:$0xf]
    %v190 = vld [vmem:[#allocation2 + $0xf4] sm:$0xf]
    %v191 = vld [vmem:[#allocation2 + $0xf8] sm:$0xf]
    %v192 = vld [vmem:[#allocation2 + $0xfc] sm:$0xf]
    %v193 = vld [vmem:[#allocation2 + $0x100] sm:$0xf]
    %v194 = vld [vmem:[#allocation2 + $0x104] sm:$0xf]
    %v195 = vld [vmem:[#allocation2 + $0x108] sm:$0xf]
    %v196 = vld [vmem:[#allocation2 + $0x10c] sm:$0xf]
    %v197 = vld [vmem:[#allocation2 + $0x110] sm:$0xf]
    %v198 = vld [vmem:[#allocation2 + $0x114] sm:$0xf]
    %v199 = vld [vmem:[#allocation2 + $0x118] sm:$0xf]
    %v200 = vld [vmem:[#allocation2 + $0x11c] sm:$0xf]
    %v201 = vld [vmem:[#allocation2 + $0x120] sm:$0xf]
    %v202 = vld [vmem:[#allocation2 + $0x124] sm:$0xf]
    %v203 = vld [vmem:[#allocation2 + $0x128] sm:$0xf]
    %v204 = vld [vmem:[#allocation2 + $0x12c] sm:$0xf]
    %v205 = vld [vmem:[#allocation2 + $0x130] sm:$0xf]
    %v206 = vld [vmem:[#allocation2 + $0x134] sm:$0xf]
    %v207 = vld [vmem:[#allocation2 + $0x138] sm:$0xf]
    %v208 = vld [vmem:[#allocation2 + $0x13c] sm:$0xf]
    %v209 = vld [vmem:[#allocation2 + $0x140] sm:$0xf]
    %v210 = vld [vmem:[#allocation2 + $0x144] sm:$0xf]
    %v211 = vld [vmem:[#allocation2 + $0x148] sm:$0xf]
    %v212 = vld [vmem:[#allocation2 + $0x14c] sm:$0xf]
    %v213 = vld [vmem:[#allocation2 + $0x150] sm:$0xf]
    %v214 = vld [vmem:[#allocation2 + $0x154] sm:$0xf]
    %v215 = vld [vmem:[#allocation2 + $0x158] sm:$0xf]
    %v216 = vld [vmem:[#allocation2 + $0x15c] sm:$0xf]
    %v217 = vld [vmem:[#allocation2 + $0x160] sm:$0xf]
    %v218 = vld [vmem:[#allocation2 + $0x164] sm:$0xf]
    %v219 = vld [vmem:[#allocation2 + $0x168] sm:$0xf]
    %v220 = vld [vmem:[#allocation2 + $0x16c] sm:$0xf]
    %v221 = vld [vmem:[#allocation2 + $0x170] sm:$0xf]
    %v222 = vld [vmem:[#allocation2 + $0x174] sm:$0xf]
    %v223 = vld [vmem:[#allocation2 + $0x178] sm:$0xf]
    %v224 = vld [vmem:[#allocation2 + $0x17c] sm:$0xf]
    %v225 = vld [vmem:[#allocation2 + $0x180] sm:$0xf]
    %v226 = vld [vmem:[#allocation2 + $0x184] sm:$0xf]
    %v227 = vld [vmem:[#allocation2 + $0x188] sm:$0xf]
    %v228 = vld [vmem:[#allocation2 + $0x18c] sm:$0xf]
    %v229 = vld [vmem:[#allocation2 + $0x190] sm:$0xf]
    %v230 = vld [vmem:[#allocation2 + $0x194] sm:$0xf]
    %v231 = vld [vmem:[#allocation2 + $0x198] sm:$0xf]
    %v232 = vld [vmem:[#allocation2 + $0x19c] sm:$0xf]
    %v233 = vld [vmem:[#allocation2 + $0x1a0] sm:$0xf]
    %v234 = vld [vmem:[#allocation2 + $0x1a4] sm:$0xf]
    %v235 = vld [vmem:[#allocation2 + $0x1a8] sm:$0xf]
    %v236 = vld [vmem:[#allocation2 + $0x1ac] sm:$0xf]
    %v237 = vld [vmem:[#allocation2 + $0x1b0] sm:$0xf]
    %v238 = vld [vmem:[#allocation2 + $0x1b4] sm:$0xf]
    %v239 = vld [vmem:[#allocation2 + $0x1b8] sm:$0xf]
    %v240 = vld [vmem:[#allocation2 + $0x1bc] sm:$0xf]
    %v241 = vld [vmem:[#allocation2 + $0x1c0] sm:$0xf]
    %v242 = vld [vmem:[#allocation2 + $0x1c4] sm:$0xf]
    %v243 = vld [vmem:[#allocation2 + $0x1c8] sm:$0xf]
    %v244 = vld [vmem:[#allocation2 + $0x1cc] sm:$0xf]
    %v245 = vld [vmem:[#allocation2 + $0x1d0] sm:$0xf]
    %v246 = vld [vmem:[#allocation2 + $0x1d4] sm:$0xf]
    %v247 = vld [vmem:[#allocation2 + $0x1d8] sm:$0xf]
    %v248 = vld [vmem:[#allocation2 + $0x1dc] sm:$0xf]
    %v249 = vld [vmem:[#allocation2 + $0x1e0] sm:$0xf]
    %v250 = vld [vmem:[#allocation2 + $0x1e4] sm:$0xf]
    %v251 = vld [vmem:[#allocation2 + $0x1e8] sm:$0xf]
    %v252 = vld [vmem:[#allocation2 + $0x1ec] sm:$0xf]
    %v253 = vld [vmem:[#allocation2 + $0x1f0] sm:$0xf]
    %v254 = vld [vmem:[#allocation2 + $0x1f4] sm:$0xf]
    %v255 = vld [vmem:[#allocation2 + $0x1f8] sm:$0xf]
    %v256 = vld [vmem:[#allocation2 + $0x1fc] sm:$0xf]
    %v257 = vld [vmem:[#allocation2 + $0x200] sm:$0xf]
    %v258 = vld [vmem:[#allocation2 + $0x204] sm:$0xf]
    %v259 = vld [vmem:[#allocation2 + $0x208] sm:$0xf]
    %v260 = vld [vmem:[#allocation2 + $0x20c] sm:$0xf]
    %v261 = vld [vmem:[#allocation2 + $0x210] sm:$0xf]
    %v262 = vld [vmem:[#allocation2 + $0x214] sm:$0xf]
    %v263 = vld [vmem:[#allocation2 + $0x218] sm:$0xf]
    %v264 = vld [vmem:[#allocation2 + $0x21c] sm:$0xf]
    %v265 = vld [vmem:[#allocation2 + $0x220] sm:$0xf]
    %v266 = vld [vmem:[#allocation2 + $0x224] sm:$0xf]
    %v267 = vld [vmem:[#allocation2 + $0x228] sm:$0xf]
    %v268 = vld [vmem:[#allocation2 + $0x22c] sm:$0xf]
    %v269 = vld [vmem:[#allocation2 + $0x230] sm:$0xf]
    %v270 = vld [vmem:[#allocation2 + $0x234] sm:$0xf]
    %v271 = vld [vmem:[#allocation2 + $0x238] sm:$0xf]
    %v272 = vld [vmem:[#allocation2 + $0x23c] sm:$0xf]
    %v273 = vld [vmem:[#allocation2 + $0x240] sm:$0x3]
    %v274 = vunpack.c.l.bf16 %v129
    %v275 = vunpack.c.l.bf16 %v130
    %v276 = vunpack.c.l.bf16 %v131
    %v277 = vunpack.c.l.bf16 %v132
    %v278 = vunpack.c.l.bf16 %v133
    %v279 = vunpack.c.l.bf16 %v134
    %v280 = vunpack.c.l.bf16 %v135
    %v281 = vunpack.c.l.bf16 %v136
    %v282 = vunpack.c.l.bf16 %v137
    %v283 = vunpack.c.l.bf16 %v138
    %v284 = vunpack.c.l.bf16 %v139
    %v285 = vunpack.c.l.bf16 %v140
    %v286 = vunpack.c.l.bf16 %v141
    %v287 = vunpack.c.l.bf16 %v142
    %v288 = vunpack.c.l.bf16 %v143
    %v289 = vunpack.c.l.bf16 %v144
    %v290 = vunpack.c.l.bf16 %v145
    %v291 = vunpack.c.l.bf16 %v146
    %v292 = vunpack.c.l.bf16 %v147
    %v293 = vunpack.c.l.bf16 %v148
    %v294 = vunpack.c.l.bf16 %v149
    %v295 = vunpack.c.l.bf16 %v150
    %v296 = vunpack.c.l.bf16 %v151
    %v297 = vunpack.c.l.bf16 %v152
    %v298 = vunpack.c.l.bf16 %v153
    %v299 = vunpack.c.l.bf16 %v154
    %v300 = vunpack.c.l.bf16 %v155
    %v301 = vunpack.c.l.bf16 %v156
    %v302 = vunpack.c.l.bf16 %v157
    %v303 = vunpack.c.l.bf16 %v158
    %v304 = vunpack.c.l.bf16 %v159
    %v305 = vunpack.c.l.bf16 %v160
    %v306 = vunpack.c.l.bf16 %v161
    %v307 = vunpack.c.l.bf16 %v162
    %v308 = vunpack.c.l.bf16 %v163
    %v309 = vunpack.c.l.bf16 %v164
    %v310 = vunpack.c.l.bf16 %v165
    %v311 = vunpack.c.l.bf16 %v166
    %v312 = vunpack.c.l.bf16 %v167
    %v313 = vunpack.c.l.bf16 %v168
    %v314 = vunpack.c.l.bf16 %v169
    %v315 = vunpack.c.l.bf16 %v170
    %v316 = vunpack.c.l.bf16 %v171
    %v317 = vunpack.c.l.bf16 %v172
    %v318 = vunpack.c.l.bf16 %v173
    %v319 = vunpack.c.l.bf16 %v174
    %v320 = vunpack.c.l.bf16 %v175
    %v321 = vunpack.c.l.bf16 %v176
    %v322 = vunpack.c.l.bf16 %v177
    %v323 = vunpack.c.l.bf16 %v178
    %v324 = vunpack.c.l.bf16 %v179
    %v325 = vunpack.c.l.bf16 %v180
    %v326 = vunpack.c.l.bf16 %v181
    %v327 = vunpack.c.l.bf16 %v182
    %v328 = vunpack.c.l.bf16 %v183
    %v329 = vunpack.c.l.bf16 %v184
    %v330 = vunpack.c.l.bf16 %v185
    %v331 = vunpack.c.l.bf16 %v186
    %v332 = vunpack.c.l.bf16 %v187
    %v333 = vunpack.c.l.bf16 %v188
    %v334 = vunpack.c.l.bf16 %v189
    %v335 = vunpack.c.l.bf16 %v190
    %v336 = vunpack.c.l.bf16 %v191
    %v337 = vunpack.c.l.bf16 %v192
    %v338 = vunpack.c.l.bf16 %v193
    %v339 = vunpack.c.l.bf16 %v194
    %v340 = vunpack.c.l.bf16 %v195
    %v341 = vunpack.c.l.bf16 %v196
    %v342 = vunpack.c.l.bf16 %v197
    %v343 = vunpack.c.l.bf16 %v198
    %v344 = vunpack.c.l.bf16 %v199
    %v345 = vunpack.c.l.bf16 %v200
    %v346 = vunpack.c.l.bf16 %v201
    %v347 = vunpack.c.l.bf16 %v202
    %v348 = vunpack.c.l.bf16 %v203
    %v349 = vunpack.c.l.bf16 %v204
    %v350 = vunpack.c.l.bf16 %v205
    %v351 = vunpack.c.l.bf16 %v206
    %v352 = vunpack.c.l.bf16 %v207
    %v353 = vunpack.c.l.bf16 %v208
    %v354 = vunpack.c.l.bf16 %v209
    %v355 = vunpack.c.l.bf16 %v210
    %v356 = vunpack.c.l.bf16 %v211
    %v357 = vunpack.c.l.bf16 %v212
    %v358 = vunpack.c.l.bf16 %v213
    %v359 = vunpack.c.l.bf16 %v214
    %v360 = vunpack.c.l.bf16 %v215
    %v361 = vunpack.c.l.bf16 %v216
    %v362 = vunpack.c.l.bf16 %v217
    %v363 = vunpack.c.l.bf16 %v218
    %v364 = vunpack.c.l.bf16 %v219
    %v365 = vunpack.c.l.bf16 %v220
    %v366 = vunpack.c.l.bf16 %v221
    %v367 = vunpack.c.l.bf16 %v222
    %v368 = vunpack.c.l.bf16 %v223
    %v369 = vunpack.c.l.bf16 %v224
    %v370 = vunpack.c.l.bf16 %v225
    %v371 = vunpack.c.l.bf16 %v226
    %v372 = vunpack.c.l.bf16 %v227
    %v373 = vunpack.c.l.bf16 %v228
    %v374 = vunpack.c.l.bf16 %v229
    %v375 = vunpack.c.l.bf16 %v230
    %v376 = vunpack.c.l.bf16 %v231
    %v377 = vunpack.c.l.bf16 %v232
    %v378 = vunpack.c.l.bf16 %v233
    %v379 = vunpack.c.l.bf16 %v234
    %v380 = vunpack.c.l.bf16 %v235
    %v381 = vunpack.c.l.bf16 %v236
    %v382 = vunpack.c.l.bf16 %v237
    %v383 = vunpack.c.l.bf16 %v238
    %v384 = vunpack.c.l.bf16 %v239
    %v385 = vunpack.c.l.bf16 %v240
    %v386 = vunpack.c.l.bf16 %v241
    %v387 = vunpack.c.l.bf16 %v242
    %v388 = vunpack.c.l.bf16 %v243
    %v389 = vunpack.c.l.bf16 %v244
    %v390 = vunpack.c.l.bf16 %v245
    %v391 = vunpack.c.l.bf16 %v246
    %v392 = vunpack.c.l.bf16 %v247
    %v393 = vunpack.c.l.bf16 %v248
    %v394 = vunpack.c.l.bf16 %v249
    %v395 = vunpack.c.l.bf16 %v250
    %v396 = vunpack.c.l.bf16 %v251
    %v397 = vunpack.c.l.bf16 %v252
    %v398 = vunpack.c.l.bf16 %v253
    %v399 = vunpack.c.l.bf16 %v254
    %v400 = vunpack.c.l.bf16 %v255
    %v401 = vunpack.c.l.bf16 %v256
    %v402 = vunpack.c.l.bf16 %v257
    %v403 = vunpack.c.l.bf16 %v258
    %v404 = vunpack.c.l.bf16 %v259
    %v405 = vunpack.c.l.bf16 %v260
    %v406 = vunpack.c.l.bf16 %v261
    %v407 = vunpack.c.l.bf16 %v262
    %v408 = vunpack.c.l.bf16 %v263
    %v409 = vunpack.c.l.bf16 %v264
    %v410 = vunpack.c.l.bf16 %v265
    %v411 = vunpack.c.l.bf16 %v266
    %v412 = vunpack.c.l.bf16 %v267
    %v413 = vunpack.c.l.bf16 %v268
    %v414 = vunpack.c.l.bf16 %v269
    %v415 = vunpack.c.l.bf16 %v270
    %v416 = vunpack.c.l.bf16 %v271
    %v417 = vunpack.c.l.bf16 %v272
    %v418 = vunpack.c.l.bf16 %v273
    %vm419 = vcmask 31744
    %v421 = vsel %vm419, %v128, 0
    %vm423 = vcmask 1043456
    %v425 = vsel %vm423, %v418, 0
    %427 = vmatprep.subr.mxu0 0.0
    %428 = vmatpush1.msra.mxu0 %v274
    %429 = vmatprep.subr.mxu0 0.0
    %430 = vmatpush1.msra.mxu0 %v275
    %431 = vmatprep.subr.mxu0 0.0
    %432 = vmatpush1.msra.mxu0 %v276
    %433 = vmatprep.subr.mxu0 0.0
    %434 = vmatpush1.msra.mxu0 %v277
    %435 = vmatprep.subr.mxu0 0.0
    %436 = vmatpush1.msra.mxu0 %v278
    %437 = vmatprep.subr.mxu0 0.0
    %438 = vmatpush1.msra.mxu0 %v279
    %439 = vmatprep.subr.mxu0 0.0
    %440 = vmatpush1.msra.mxu0 %v280
    %441 = vmatprep.subr.mxu0 0.0
    %442 = vmatpush1.msra.mxu0 %v281
    %443 = vmatprep.subr.mxu0 0.0
    %444 = vmatpush1.msra.mxu0 %v282
    %445 = vmatprep.subr.mxu0 0.0
    %446 = vmatpush1.msra.mxu0 %v283
    %447 = vmatprep.subr.mxu0 0.0
    %448 = vmatpush1.msra.mxu0 %v284
    %449 = vmatprep.subr.mxu0 0.0
    %450 = vmatpush1.msra.mxu0 %v285
    %451 = vmatprep.subr.mxu0 0.0
    %452 = vmatpush1.msra.mxu0 %v286
    %453 = vmatprep.subr.mxu0 0.0
    %454 = vmatpush1.msra.mxu0 %v287
    %455 = vmatprep.subr.mxu0 0.0
    %456 = vmatpush1.msra.mxu0 %v288
    %457 = vmatprep.subr.mxu0 0.0
    %458 = vmatpush1.msra.mxu0 %v289
    %459 = vmatprep.subr.mxu0 0.0
    %460 = vmatpush1.msra.mxu0 %v290
    %461 = vmatprep.subr.mxu0 0.0
    %462 = vmatpush1.msra.mxu0 %v291
    %463 = vmatprep.subr.mxu0 0.0
    %464 = vmatpush1.msra.mxu0 %v292
    %465 = vmatprep.subr.mxu0 0.0
    %466 = vmatpush1.msra.mxu0 %v293
    %467 = vmatprep.subr.mxu0 0.0
    %468 = vmatpush1.msra.mxu0 %v294
    %469 = vmatprep.subr.mxu0 0.0
    %470 = vmatpush1.msra.mxu0 %v295
    %471 = vmatprep.subr.mxu0 0.0
    %472 = vmatpush1.msra.mxu0 %v296
    %473 = vmatprep.subr.mxu0 0.0
    %474 = vmatpush1.msra.mxu0 %v297
    %475 = vmatprep.subr.mxu0 0.0
    %476 = vmatpush1.msra.mxu0 %v298
    %477 = vmatprep.subr.mxu0 0.0
    %478 = vmatpush1.msra.mxu0 %v299
    %479 = vmatprep.subr.mxu0 0.0
    %480 = vmatpush1.msra.mxu0 %v300
    %481 = vmatprep.subr.mxu0 0.0
    %482 = vmatpush1.msra.mxu0 %v301
    %483 = vmatprep.subr.mxu0 0.0
    %484 = vmatpush1.msra.mxu0 %v302
    %485 = vmatprep.subr.mxu0 0.0
    %486 = vmatpush1.msra.mxu0 %v303
    %487 = vmatprep.subr.mxu0 0.0
    %488 = vmatpush1.msra.mxu0 %v304
    %489 = vmatprep.subr.mxu0 0.0
    %490 = vmatpush1.msra.mxu0 %v305
    %491 = vmatprep.mubr.f32.mxu0 %v120
    %492 = vmatmul.mubr.f32.gmra.mrb[0].mxu0 %v119
    %v493 = vpop.f32.mrb[0].mxu0
    %v494 = vadd.f32 0.0, %v493
    %v495 = vpop.f32.mrb[0].mxu0
    %496 = vdwg.mxu0
    %497 = vmatprep.subr.mxu0 0.0
    %498 = vmatpush1.msra.mxu0 %v306
    %499 = vmatprep.subr.mxu0 0.0
    %500 = vmatpush1.msra.mxu0 %v307
    %501 = vmatprep.subr.mxu0 0.0
    %502 = vmatpush1.msra.mxu0 %v308
    %503 = vmatprep.subr.mxu0 0.0
    %504 = vmatpush1.msra.mxu0 %v309
    %505 = vmatprep.subr.mxu0 0.0
    %506 = vmatpush1.msra.mxu0 %v310
    %507 = vmatprep.subr.mxu0 0.0
    %508 = vmatpush1.msra.mxu0 %v311
    %509 = vmatprep.subr.mxu0 0.0
    %510 = vmatpush1.msra.mxu0 %v312
    %511 = vmatprep.subr.mxu0 0.0
    %512 = vmatpush1.msra.mxu0 %v313
    %513 = vmatprep.subr.mxu0 0.0
    %514 = vmatpush1.msra.mxu0 %v314
    %515 = vmatprep.subr.mxu0 0.0
    %516 = vmatpush1.msra.mxu0 %v315
    %517 = vmatprep.subr.mxu0 0.0
    %518 = vmatpush1.msra.mxu0 %v316
    %519 = vmatprep.subr.mxu0 0.0
    %520 = vmatpush1.msra.mxu0 %v317
    %521 = vmatprep.subr.mxu0 0.0
    %522 = vmatpush1.msra.mxu0 %v318
    %523 = vmatprep.subr.mxu0 0.0
    %524 = vmatpush1.msra.mxu0 %v319
    %525 = vmatprep.subr.mxu0 0.0
    %526 = vmatpush1.msra.mxu0 %v320
    %527 = vmatprep.subr.mxu0 0.0
    %528 = vmatpush1.msra.mxu0 %v321
    %529 = vmatprep.subr.mxu0 0.0
    %530 = vmatpush1.msra.mxu0 %v322
    %531 = vmatprep.subr.mxu0 0.0
    %532 = vmatpush1.msra.mxu0 %v323
    %533 = vmatprep.subr.mxu0 0.0
    %534 = vmatpush1.msra.mxu0 %v324
    %535 = vmatprep.subr.mxu0 0.0
    %536 = vmatpush1.msra.mxu0 %v325
    %537 = vmatprep.subr.mxu0 0.0
    %538 = vmatpush1.msra.mxu0 %v326
    %539 = vmatprep.subr.mxu0 0.0
    %540 = vmatpush1.msra.mxu0 %v327
    %541 = vmatprep.subr.mxu0 0.0
    %542 = vmatpush1.msra.mxu0 %v328
    %543 = vmatprep.subr.mxu0 0.0
    %544 = vmatpush1.msra.mxu0 %v329
    %545 = vmatprep.subr.mxu0 0.0
    %546 = vmatpush1.msra.mxu0 %v330
    %547 = vmatprep.subr.mxu0 0.0
    %548 = vmatpush1.msra.mxu0 %v331
    %549 = vmatprep.subr.mxu0 0.0
    %550 = vmatpush1.msra.mxu0 %v332
    %551 = vmatprep.subr.mxu0 0.0
    %552 = vmatpush1.msra.mxu0 %v333
    %553 = vmatprep.subr.mxu0 0.0
    %554 = vmatpush1.msra.mxu0 %v334
    %555 = vmatprep.subr.mxu0 0.0
    %556 = vmatpush1.msra.mxu0 %v335
    %557 = vmatprep.subr.mxu0 0.0
    %558 = vmatpush1.msra.mxu0 %v336
    %559 = vmatprep.subr.mxu0 0.0
    %560 = vmatpush1.msra.mxu0 %v337
    %561 = vmatprep.mubr.f32.mxu0 %v122
    %562 = vmatmul.mubr.f32.gmra.mrb[0].mxu0 %v121
    %v563 = vpop.f32.mrb[0].mxu0
    %v564 = vadd.f32 %v494, %v563
    %v565 = vpop.f32.mrb[0].mxu0
    %566 = vdwg.mxu0
    %567 = vmatprep.subr.mxu0 0.0
    %568 = vmatpush1.msra.mxu0 %v338
    %569 = vmatprep.subr.mxu0 0.0
    %570 = vmatpush1.msra.mxu0 %v339
    %571 = vmatprep.subr.mxu0 0.0
    %572 = vmatpush1.msra.mxu0 %v340
    %573 = vmatprep.subr.mxu0 0.0
    %574 = vmatpush1.msra.mxu0 %v341
    %575 = vmatprep.subr.mxu0 0.0
    %576 = vmatpush1.msra.mxu0 %v342
    %577 = vmatprep.subr.mxu0 0.0
    %578 = vmatpush1.msra.mxu0 %v343
    %579 = vmatprep.subr.mxu0 0.0
    %580 = vmatpush1.msra.mxu0 %v344
    %581 = vmatprep.subr.mxu0 0.0
    %582 = vmatpush1.msra.mxu0 %v345
    %583 = vmatprep.subr.mxu0 0.0
    %584 = vmatpush1.msra.mxu0 %v346
    %585 = vmatprep.subr.mxu0 0.0
    %586 = vmatpush1.msra.mxu0 %v347
    %587 = vmatprep.subr.mxu0 0.0
    %588 = vmatpush1.msra.mxu0 %v348
    %589 = vmatprep.subr.mxu0 0.0
    %590 = vmatpush1.msra.mxu0 %v349
    %591 = vmatprep.subr.mxu0 0.0
    %592 = vmatpush1.msra.mxu0 %v350
    %593 = vmatprep.subr.mxu0 0.0
    %594 = vmatpush1.msra.mxu0 %v351
    %595 = vmatprep.subr.mxu0 0.0
    %596 = vmatpush1.msra.mxu0 %v352
    %597 = vmatprep.subr.mxu0 0.0
    %598 = vmatpush1.msra.mxu0 %v353
    %599 = vmatprep.subr.mxu0 0.0
    %600 = vmatpush1.msra.mxu0 %v354
    %601 = vmatprep.subr.mxu0 0.0
    %602 = vmatpush1.msra.mxu0 %v355
    %603 = vmatprep.subr.mxu0 0.0
    %604 = vmatpush1.msra.mxu0 %v356
    %605 = vmatprep.subr.mxu0 0.0
    %606 = vmatpush1.msra.mxu0 %v357
    %607 = vmatprep.subr.mxu0 0.0
    %608 = vmatpush1.msra.mxu0 %v358
    %609 = vmatprep.subr.mxu0 0.0
    %610 = vmatpush1.msra.mxu0 %v359
    %611 = vmatprep.subr.mxu0 0.0
    %612 = vmatpush1.msra.mxu0 %v360
    %613 = vmatprep.subr.mxu0 0.0
    %614 = vmatpush1.msra.mxu0 %v361
    %615 = vmatprep.subr.mxu0 0.0
    %616 = vmatpush1.msra.mxu0 %v362
    %617 = vmatprep.subr.mxu0 0.0
    %618 = vmatpush1.msra.mxu0 %v363
    %619 = vmatprep.subr.mxu0 0.0
    %620 = vmatpush1.msra.mxu0 %v364
    %621 = vmatprep.subr.mxu0 0.0
    %622 = vmatpush1.msra.mxu0 %v365
    %623 = vmatprep.subr.mxu0 0.0
    %624 = vmatpush1.msra.mxu0 %v366
    %625 = vmatprep.subr.mxu0 0.0
    %626 = vmatpush1.msra.mxu0 %v367
    %627 = vmatprep.subr.mxu0 0.0
    %628 = vmatpush1.msra.mxu0 %v368
    %629 = vmatprep.subr.mxu0 0.0
    %630 = vmatpush1.msra.mxu0 %v369
    %631 = vmatprep.mubr.f32.mxu0 %v124
    %632 = vmatmul.mubr.f32.gmra.mrb[0].mxu0 %v123
    %v633 = vpop.f32.mrb[0].mxu0
    %v634 = vadd.f32 %v564, %v633
    %v635 = vpop.f32.mrb[0].mxu0
    %636 = vdwg.mxu0
    %637 = vmatprep.subr.mxu0 0.0
    %638 = vmatpush1.msra.mxu0 %v370
    %639 = vmatprep.subr.mxu0 0.0
    %640 = vmatpush1.msra.mxu0 %v371
    %641 = vmatprep.subr.mxu0 0.0
    %642 = vmatpush1.msra.mxu0 %v372
    %643 = vmatprep.subr.mxu0 0.0
    %644 = vmatpush1.msra.mxu0 %v373
    %645 = vmatprep.subr.mxu0 0.0
    %646 = vmatpush1.msra.mxu0 %v374
    %647 = vmatprep.subr.mxu0 0.0
    %648 = vmatpush1.msra.mxu0 %v375
    %649 = vmatprep.subr.mxu0 0.0
    %650 = vmatpush1.msra.mxu0 %v376
    %651 = vmatprep.subr.mxu0 0.0
    %652 = vmatpush1.msra.mxu0 %v377
    %653 = vmatprep.subr.mxu0 0.0
    %654 = vmatpush1.msra.mxu0 %v378
    %655 = vmatprep.subr.mxu0 0.0
    %656 = vmatpush1.msra.mxu0 %v379
    %657 = vmatprep.subr.mxu0 0.0
    %658 = vmatpush1.msra.mxu0 %v380
    %659 = vmatprep.subr.mxu0 0.0
    %660 = vmatpush1.msra.mxu0 %v381
    %661 = vmatprep.subr.mxu0 0.0
    %662 = vmatpush1.msra.mxu0 %v382
    %663 = vmatprep.subr.mxu0 0.0
    %664 = vmatpush1.msra.mxu0 %v383
    %665 = vmatprep.subr.mxu0 0.0
    %666 = vmatpush1.msra.mxu0 %v384
    %667 = vmatprep.subr.mxu0 0.0
    %668 = vmatpush1.msra.mxu0 %v385
    %669 = vmatprep.subr.mxu0 0.0
    %670 = vmatpush1.msra.mxu0 %v386
    %671 = vmatprep.subr.mxu0 0.0
    %672 = vmatpush1.msra.mxu0 %v387
    %673 = vmatprep.subr.mxu0 0.0
    %674 = vmatpush1.msra.mxu0 %v388
    %675 = vmatprep.subr.mxu0 0.0
    %676 = vmatpush1.msra.mxu0 %v389
    %677 = vmatprep.subr.mxu0 0.0
    %678 = vmatpush1.msra.mxu0 %v390
    %679 = vmatprep.subr.mxu0 0.0
    %680 = vmatpush1.msra.mxu0 %v391
    %681 = vmatprep.subr.mxu0 0.0
    %682 = vmatpush1.msra.mxu0 %v392
    %683 = vmatprep.subr.mxu0 0.0
    %684 = vmatpush1.msra.mxu0 %v393
    %685 = vmatprep.subr.mxu0 0.0
    %686 = vmatpush1.msra.mxu0 %v394
    %687 = vmatprep.subr.mxu0 0.0
    %688 = vmatpush1.msra.mxu0 %v395
    %689 = vmatprep.subr.mxu0 0.0
    %690 = vmatpush1.msra.mxu0 %v396
    %691 = vmatprep.subr.mxu0 0.0
    %692 = vmatpush1.msra.mxu0 %v397
    %693 = vmatprep.subr.mxu0 0.0
    %694 = vmatpush1.msra.mxu0 %v398
    %695 = vmatprep.subr.mxu0 0.0
    %696 = vmatpush1.msra.mxu0 %v399
    %697 = vmatprep.subr.mxu0 0.0
    %698 = vmatpush1.msra.mxu0 %v400
    %699 = vmatprep.subr.mxu0 0.0
    %700 = vmatpush1.msra.mxu0 %v401
    %701 = vmatprep.mubr.f32.mxu0 %v126
    %702 = vmatmul.mubr.f32.gmra.mrb[0].mxu0 %v125
    %v703 = vpop.f32.mrb[0].mxu0
    %v704 = vadd.f32 %v634, %v703
    %v705 = vpop.f32.mrb[0].mxu0
    %706 = vdwg.mxu0
    %707 = vmatprep.subr.mxu0 0.0
    %708 = vmatpush1.msra.mxu0 %v402
    %709 = vmatprep.subr.mxu0 0.0
    %710 = vmatpush1.msra.mxu0 %v403
    %711 = vmatprep.subr.mxu0 0.0
    %712 = vmatpush1.msra.mxu0 %v404
    %713 = vmatprep.subr.mxu0 0.0
    %714 = vmatpush1.msra.mxu0 %v405
    %715 = vmatprep.subr.mxu0 0.0
    %716 = vmatpush1.msra.mxu0 %v406
    %717 = vmatprep.subr.mxu0 0.0
    %718 = vmatpush1.msra.mxu0 %v407
    %719 = vmatprep.subr.mxu0 0.0
    %720 = vmatpush1.msra.mxu0 %v408
    %721 = vmatprep.subr.mxu0 0.0
    %722 = vmatpush1.msra.mxu0 %v409
    %723 = vmatprep.subr.mxu0 0.0
    %724 = vmatpush1.msra.mxu0 %v410
    %725 = vmatprep.subr.mxu0 0.0
    %726 = vmatpush1.msra.mxu0 %v411
    %727 = vmatprep.subr.mxu0 0.0
    %728 = vmatpush1.msra.mxu0 %v412
    %729 = vmatprep.subr.mxu0 0.0
    %730 = vmatpush1.msra.mxu0 %v413
    %731 = vmatprep.subr.mxu0 0.0
    %732 = vmatpush1.msra.mxu0 %v414
    %733 = vmatprep.subr.mxu0 0.0
    %734 = vmatpush1.msra.mxu0 %v415
    %735 = vmatprep.subr.mxu0 0.0
    %736 = vmatpush1.msra.mxu0 %v416
    %737 = vmatprep.subr.mxu0 0.0
    %738 = vmatpush1.msra.mxu0 %v417
    %739 = vmatprep.subr.mxu0 0.0
    %740 = vmatpush1.msra.mxu0 %v425
    %741 = vmatprep.subr.mxu0 0.0
    %742 = vmatpush1.msra.mxu0 0.0
    %743 = vmatprep.subr.mxu0 0.0
    %744 = vmatpush1.msra.mxu0 0.0
    %745 = vmatprep.subr.mxu0 0.0
    %746 = vmatpush1.msra.mxu0 0.0
    %747 = vmatprep.subr.mxu0 0.0
    %748 = vmatpush1.msra.mxu0 0.0
    %749 = vmatprep.subr.mxu0 0.0
    %750 = vmatpush1.msra.mxu0 0.0
    %751 = vmatprep.subr.mxu0 0.0
    %752 = vmatpush1.msra.mxu0 0.0
    %753 = vmatprep.subr.mxu0 0.0
    %754 = vmatpush1.msra.mxu0 0.0
    %755 = vmatprep.subr.mxu0 0.0
    %756 = vmatpush1.msra.mxu0 0.0
    %757 = vmatprep.subr.mxu0 0.0
    %758 = vmatpush1.msra.mxu0 0.0
    %759 = vmatprep.subr.mxu0 0.0
    %760 = vmatpush1.msra.mxu0 0.0
    %761 = vmatprep.subr.mxu0 0.0
    %762 = vmatpush1.msra.mxu0 0.0
    %763 = vmatprep.subr.mxu0 0.0
    %764 = vmatpush1.msra.mxu0 0.0
    %765 = vmatprep.subr.mxu0 0.0
    %766 = vmatpush1.msra.mxu0 0.0
    %767 = vmatprep.subr.mxu0 0.0
    %768 = vmatpush1.msra.mxu0 0.0
    %769 = vmatprep.subr.mxu0 0.0
    %770 = vmatpush1.msra.mxu0 0.0
    %771 = vmatprep.mubr.f32.mxu0 %v421
    %772 = vmatmul.mubr.f32.gmra.mrb[0].mxu0 %v127
    %v773 = vpop.f32.mrb[0].mxu0
    %v774 = vadd.f32 %v704, %v773
    %v775 = vpop.f32.mrb[0].mxu0
    %776 = vdwg.mxu0
    %v777 = vpack.c.bf16 %v774, %v774
    %v778 = vld [vmem:[#allocation4] sm:$0xff]
    %v779 = vld [vmem:[#allocation4 + $0x8] sm:$0xff]
    %v780 = vld [vmem:[#allocation4 + $0x10] sm:$0xff]
    %v781 = vld [vmem:[#allocation4 + $0x18] sm:$0xff]
    %v782 = vld [vmem:[#allocation4 + $0x20] sm:$0xff]
    %v783 = vld [vmem:[#allocation4 + $0x28] sm:$0xff]
    %v784 = vld [vmem:[#allocation4 + $0x30] sm:$0xff]
    %v785 = vld [vmem:[#allocation4 + $0x38] sm:$0xff]
    %v786 = vld [vmem:[#allocation4 + $0x40] sm:$0xff]
    %v787 = vld [vmem:[#allocation4 + $0x48] sm:$0xff]
    %v788 = vld [vmem:[#allocation4 + $0x50] sm:$0xff]
    %v789 = vld [vmem:[#allocation4 + $0x58] sm:$0xff]
    %v790 = vld [vmem:[#allocation4 + $0x60] sm:$0xf]
    %v791 = vld [vmem:[#allocation4 + $0x64] sm:$0xff]
    %v792 = vld [vmem:[#allocation4 + $0x6c] sm:$0xff]
    %v793 = vld [vmem:[#allocation4 + $0x74] sm:$0xff]
    %v794 = vld [vmem:[#allocation4 + $0x7c] sm:$0xff]
    %v795 = vld [vmem:[#allocation4 + $0x84] sm:$0xff]
    %v796 = vld [vmem:[#allocation4 + $0x8c] sm:$0xff]
    %v797 = vld [vmem:[#allocation4 + $0x94] sm:$0xff]
    %v798 = vld [vmem:[#allocation4 + $0x9c] sm:$0xff]
    %v799 = vld [vmem:[#allocation4 + $0xa4] sm:$0xff]
    %v800 = vld [vmem:[#allocation4 + $0xac] sm:$0xff]
    %v801 = vld [vmem:[#allocation4 + $0xb4] sm:$0xff]
    %v802 = vld [vmem:[#allocation4 + $0xbc] sm:$0xff]
    %v803 = vld [vmem:[#allocation4 + $0xc4] sm:$0xf]
    %v804 = vld [vmem:[#allocation4 + $0xc8] sm:$0xff]
    %v805 = vld [vmem:[#allocation4 + $0xd0] sm:$0xff]
    %v806 = vld [vmem:[#allocation4 + $0xd8] sm:$0xff]
    %v807 = vld [vmem:[#allocation4 + $0xe0] sm:$0xff]
    %v808 = vld [vmem:[#allocation4 + $0xe8] sm:$0xff]
    %v809 = vld [vmem:[#allocation4 + $0xf0] sm:$0xff]
    %v810 = vld [vmem:[#allocation4 + $0xf8] sm:$0xff]
    %v811 = vld [vmem:[#allocation4 + $0x100] sm:$0xff]
    %v812 = vld [vmem:[#allocation4 + $0x108] sm:$0xff]
    %v813 = vld [vmem:[#allocation4 + $0x110] sm:$0xff]
    %v814 = vld [vmem:[#allocation4 + $0x118] sm:$0xff]
    %v815 = vld [vmem:[#allocation4 + $0x120] sm:$0xff]
    %v816 = vld [vmem:[#allocation4 + $0x128] sm:$0xf]
    %v817 = vld [vmem:[#allocation4 + $0x12c] sm:$0xff]
    %v818 = vld [vmem:[#allocation4 + $0x134] sm:$0xff]
    %v819 = vld [vmem:[#allocation4 + $0x13c] sm:$0xff]
    %v820 = vld [vmem:[#allocation4 + $0x144] sm:$0xff]
    %v821 = vld [vmem:[#allocation4 + $0x14c] sm:$0xff]
    %v822 = vld [vmem:[#allocation4 + $0x154] sm:$0xff]
    %v823 = vld [vmem:[#allocation4 + $0x15c] sm:$0xff]
    %v824 = vld [vmem:[#allocation4 + $0x164] sm:$0xff]
    %v825 = vld [vmem:[#allocation4 + $0x16c] sm:$0xff]
    %v826 = vld [vmem:[#allocation4 + $0x174] sm:$0xff]
    %v827 = vld [vmem:[#allocation4 + $0x17c] sm:$0xff]
    %v828 = vld [vmem:[#allocation4 + $0x184] sm:$0xff]
    %v829 = vld [vmem:[#allocation4 + $0x18c] sm:$0xf]
    %v830 = vld [vmem:[#allocation4 + $0x190] sm:$0xff]
    %v831 = vld [vmem:[#allocation4 + $0x198] sm:$0xff]
    %v832 = vld [vmem:[#allocation4 + $0x1a0] sm:$0xff]
    %v833 = vld [vmem:[#allocation4 + $0x1a8] sm:$0xff]
    %v834 = vld [vmem:[#allocation4 + $0x1b0] sm:$0xff]
    %v835 = vld [vmem:[#allocation4 + $0x1b8] sm:$0xff]
    %v836 = vld [vmem:[#allocation4 + $0x1c0] sm:$0xff]
    %v837 = vld [vmem:[#allocation4 + $0x1c8] sm:$0xff]
    %v838 = vld [vmem:[#allocation4 + $0x1d0] sm:$0xff]
    %v839 = vld [vmem:[#allocation4 + $0x1d8] sm:$0xff]
    %v840 = vld [vmem:[#allocation4 + $0x1e0] sm:$0xff]
    %v841 = vld [vmem:[#allocation4 + $0x1e8] sm:$0xff]
    %v842 = vld [vmem:[#allocation4 + $0x1f0] sm:$0xf]
    %v843 = vld [vmem:[#allocation4 + $0x1f4] sm:$0xff]
    %v844 = vld [vmem:[#allocation4 + $0x1fc] sm:$0xff]
    %v845 = vld [vmem:[#allocation4 + $0x204] sm:$0xff]
    %v846 = vld [vmem:[#allocation4 + $0x20c] sm:$0xff]
    %v847 = vld [vmem:[#allocation4 + $0x214] sm:$0xff]
    %v848 = vld [vmem:[#allocation4 + $0x21c] sm:$0xff]
    %v849 = vld [vmem:[#allocation4 + $0x224] sm:$0xff]
    %v850 = vld [vmem:[#allocation4 + $0x22c] sm:$0xff]
    %v851 = vld [vmem:[#allocation4 + $0x234] sm:$0xff]
    %v852 = vld [vmem:[#allocation4 + $0x23c] sm:$0xff]
    %v853 = vld [vmem:[#allocation4 + $0x244] sm:$0xff]
    %v854 = vld [vmem:[#allocation4 + $0x24c] sm:$0xff]
    %v855 = vld [vmem:[#allocation4 + $0x254] sm:$0xf]
    %v856 = vld [vmem:[#allocation4 + $0x258] sm:$0xff]
    %v857 = vld [vmem:[#allocation4 + $0x260] sm:$0xff]
    %v858 = vld [vmem:[#allocation4 + $0x268] sm:$0xff]
    %v859 = vld [vmem:[#allocation4 + $0x270] sm:$0xff]
    %v860 = vld [vmem:[#allocation4 + $0x278] sm:$0xff]
    %v861 = vld [vmem:[#allocation4 + $0x280] sm:$0xff]
    %v862 = vld [vmem:[#allocation4 + $0x288] sm:$0xff]
    %v863 = vld [vmem:[#allocation4 + $0x290] sm:$0xff]
    %v864 = vld [vmem:[#allocation4 + $0x298] sm:$0xff]
    %v865 = vld [vmem:[#allocation4 + $0x2a0] sm:$0xff]
    %v866 = vld [vmem:[#allocation4 + $0x2a8] sm:$0xff]
    %v867 = vld [vmem:[#allocation4 + $0x2b0] sm:$0xff]
    %v868 = vld [vmem:[#allocation4 + $0x2b8] sm:$0xf]
    %v869 = vld [vmem:[#allocation4 + $0x2bc] sm:$0xff]
    %v870 = vld [vmem:[#allocation4 + $0x2c4] sm:$0xff]
    %v871 = vld [vmem:[#allocation4 + $0x2cc] sm:$0xff]
    %v872 = vld [vmem:[#allocation4 + $0x2d4] sm:$0xff]
    %v873 = vld [vmem:[#allocation4 + $0x2dc] sm:$0xff]
    %v874 = vld [vmem:[#allocation4 + $0x2e4] sm:$0xff]
    %v875 = vld [vmem:[#allocation4 + $0x2ec] sm:$0xff]
    %v876 = vld [vmem:[#allocation4 + $0x2f4] sm:$0xff]
    %v877 = vld [vmem:[#allocation4 + $0x2fc] sm:$0xff]
    %v878 = vld [vmem:[#allocation4 + $0x304] sm:$0xff]
    %v879 = vld [vmem:[#allocation4 + $0x30c] sm:$0xff]
    %v880 = vld [vmem:[#allocation4 + $0x314] sm:$0xff]
    %v881 = vld [vmem:[#allocation4 + $0x31c] sm:$0xf]
    %v882 = vld [vmem:[#allocation4 + $0x320] sm:$0xff]
    %v883 = vld [vmem:[#allocation4 + $0x328] sm:$0xff]
    %v884 = vld [vmem:[#allocation4 + $0x330] sm:$0xff]
    %v885 = vld [vmem:[#allocation4 + $0x338] sm:$0xff]
    %v886 = vld [vmem:[#allocation4 + $0x340] sm:$0xff]
    %v887 = vld [vmem:[#allocation4 + $0x348] sm:$0xff]
    %v888 = vld [vmem:[#allocation4 + $0x350] sm:$0xff]
    %v889 = vld [vmem:[#allocation4 + $0x358] sm:$0xff]
    %v890 = vld [vmem:[#allocation4 + $0x360] sm:$0xff]
    %v891 = vld [vmem:[#allocation4 + $0x368] sm:$0xff]
    %v892 = vld [vmem:[#allocation4 + $0x370] sm:$0xff]
    %v893 = vld [vmem:[#allocation4 + $0x378] sm:$0xff]
    %v894 = vld [vmem:[#allocation4 + $0x380] sm:$0xf]
    %v895 = vld [vmem:[#allocation4 + $0x384] sm:$0xff]
    %v896 = vld [vmem:[#allocation4 + $0x38c] sm:$0xff]
    %v897 = vld [vmem:[#allocation4 + $0x394] sm:$0xff]
    %v898 = vld [vmem:[#allocation4 + $0x39c] sm:$0xff]
    %v899 = vld [vmem:[#allocation4 + $0x3a4] sm:$0xff]
    %v900 = vld [vmem:[#allocation4 + $0x3ac] sm:$0xff]
    %v901 = vld [vmem:[#allocation4 + $0x3b4] sm:$0xff]
    %v902 = vld [vmem:[#allocation4 + $0x3bc] sm:$0xff]
    %v903 = vld [vmem:[#allocation4 + $0x3c4] sm:$0xff]
    %v904 = vld [vmem:[#allocation4 + $0x3cc] sm:$0xff]
    %v905 = vld [vmem:[#allocation4 + $0x3d4] sm:$0xff]
    %v906 = vld [vmem:[#allocation4 + $0x3dc] sm:$0xff]
    %v907 = vld [vmem:[#allocation4 + $0x3e4] sm:$0xf]
    %v908 = vld [vmem:[#allocation4 + $0x3e8] sm:$0xff]
    %v909 = vld [vmem:[#allocation4 + $0x3f0] sm:$0xff]
    %v910 = vld [vmem:[#allocation4 + $0x3f8] sm:$0xff]
    %v911 = vld [vmem:[#allocation4 + $0x400] sm:$0xff]
    %v912 = vld [vmem:[#allocation4 + $0x408] sm:$0xff]
    %v913 = vld [vmem:[#allocation4 + $0x410] sm:$0xff]
    %v914 = vld [vmem:[#allocation4 + $0x418] sm:$0xff]
    %v915 = vld [vmem:[#allocation4 + $0x420] sm:$0xff]
    %v916 = vld [vmem:[#allocation4 + $0x428] sm:$0xff]
    %v917 = vld [vmem:[#allocation4 + $0x430] sm:$0xff]
    %v918 = vld [vmem:[#allocation4 + $0x438] sm:$0xff]
    %v919 = vld [vmem:[#allocation4 + $0x440] sm:$0xff]
    %v920 = vld [vmem:[#allocation4 + $0x448] sm:$0xf]
    %v921 = vld [vmem:[#allocation4 + $0x44c] sm:$0xff]
    %v922 = vld [vmem:[#allocation4 + $0x454] sm:$0xff]
    %v923 = vld [vmem:[#allocation4 + $0x45c] sm:$0xff]
    %v924 = vld [vmem:[#allocation4 + $0x464] sm:$0xff]
    %v925 = vld [vmem:[#allocation4 + $0x46c] sm:$0xff]
    %v926 = vld [vmem:[#allocation4 + $0x474] sm:$0xff]
    %v927 = vld [vmem:[#allocation4 + $0x47c] sm:$0xff]
    %v928 = vld [vmem:[#allocation4 + $0x484] sm:$0xff]
    %v929 = vld [vmem:[#allocation4 + $0x48c] sm:$0xff]
    %v930 = vld [vmem:[#allocation4 + $0x494] sm:$0xff]
    %v931 = vld [vmem:[#allocation4 + $0x49c] sm:$0xff]
    %v932 = vld [vmem:[#allocation4 + $0x4a4] sm:$0xff]
    %v933 = vld [vmem:[#allocation4 + $0x4ac] sm:$0xf]
    %v934 = vld [vmem:[#allocation4 + $0x4b0] sm:$0xff]
    %v935 = vld [vmem:[#allocation4 + $0x4b8] sm:$0xff]
    %v936 = vld [vmem:[#allocation4 + $0x4c0] sm:$0xff]
    %v937 = vld [vmem:[#allocation4 + $0x4c8] sm:$0xff]
    %v938 = vld [vmem:[#allocation4 + $0x4d0] sm:$0xff]
    %v939 = vld [vmem:[#allocation4 + $0x4d8] sm:$0xff]
    %v940 = vld [vmem:[#allocation4 + $0x4e0] sm:$0xff]
    %v941 = vld [vmem:[#allocation4 + $0x4e8] sm:$0xff]
    %v942 = vld [vmem:[#allocation4 + $0x4f0] sm:$0xff]
    %v943 = vld [vmem:[#allocation4 + $0x4f8] sm:$0xff]
    %v944 = vld [vmem:[#allocation4 + $0x500] sm:$0xff]
    %v945 = vld [vmem:[#allocation4 + $0x508] sm:$0xff]
    %v946 = vld [vmem:[#allocation4 + $0x510] sm:$0xf]
    %v947 = vld [vmem:[#allocation4 + $0x514] sm:$0xff]
    %v948 = vld [vmem:[#allocation4 + $0x51c] sm:$0xff]
    %v949 = vld [vmem:[#allocation4 + $0x524] sm:$0xff]
    %v950 = vld [vmem:[#allocation4 + $0x52c] sm:$0xff]
    %v951 = vld [vmem:[#allocation4 + $0x534] sm:$0xff]
    %v952 = vld [vmem:[#allocation4 + $0x53c] sm:$0xff]
    %v953 = vld [vmem:[#allocation4 + $0x544] sm:$0xff]
    %v954 = vld [vmem:[#allocation4 + $0x54c] sm:$0xff]
    %v955 = vld [vmem:[#allocation4 + $0x554] sm:$0xff]
    %v956 = vld [vmem:[#allocation4 + $0x55c] sm:$0xff]
    %v957 = vld [vmem:[#allocation4 + $0x564] sm:$0xff]
    %v958 = vld [vmem:[#allocation4 + $0x56c] sm:$0xff]
    %v959 = vld [vmem:[#allocation4 + $0x574] sm:$0xf]
    %v960 = vld [vmem:[#allocation4 + $0x578] sm:$0xff]
    %v961 = vld [vmem:[#allocation4 + $0x580] sm:$0xff]
    %v962 = vld [vmem:[#allocation4 + $0x588] sm:$0xff]
    %v963 = vld [vmem:[#allocation4 + $0x590] sm:$0xff]
    %v964 = vld [vmem:[#allocation4 + $0x598] sm:$0xff]
    %v965 = vld [vmem:[#allocation4 + $0x5a0] sm:$0xff]
    %v966 = vld [vmem:[#allocation4 + $0x5a8] sm:$0xff]
    %v967 = vld [vmem:[#allocation4 + $0x5b0] sm:$0xff]
    %v968 = vld [vmem:[#allocation4 + $0x5b8] sm:$0xff]
    %v969 = vld [vmem:[#allocation4 + $0x5c0] sm:$0xff]
    %v970 = vld [vmem:[#allocation4 + $0x5c8] sm:$0xff]
    %v971 = vld [vmem:[#allocation4 + $0x5d0] sm:$0xff]
    %v972 = vld [vmem:[#allocation4 + $0x5d8] sm:$0xf]
    %v973 = vld [vmem:[#allocation4 + $0x5dc] sm:$0xff]
    %v974 = vld [vmem:[#allocation4 + $0x5e4] sm:$0xff]
    %v975 = vld [vmem:[#allocation4 + $0x5ec] sm:$0xff]
    %v976 = vld [vmem:[#allocation4 + $0x5f4] sm:$0xff]
    %v977 = vld [vmem:[#allocation4 + $0x5fc] sm:$0xff]
    %v978 = vld [vmem:[#allocation4 + $0x604] sm:$0xff]
    %v979 = vld [vmem:[#allocation4 + $0x60c] sm:$0xff]
    %v980 = vld [vmem:[#allocation4 + $0x614] sm:$0xff]
    %v981 = vld [vmem:[#allocation4 + $0x61c] sm:$0xff]
    %v982 = vld [vmem:[#allocation4 + $0x624] sm:$0xff]
    %v983 = vld [vmem:[#allocation4 + $0x62c] sm:$0xff]
    %v984 = vld [vmem:[#allocation4 + $0x634] sm:$0xff]
    %v985 = vld [vmem:[#allocation4 + $0x63c] sm:$0xf]
    %v986 = vld [vmem:[#allocation6] sm:$0xff]
    %v987 = vld [vmem:[#allocation6 + $0x8] sm:$0xff]
    %v988 = vld [vmem:[#allocation6 + $0x10] sm:$0xff]
    %v989 = vld [vmem:[#allocation6 + $0x18] sm:$0x1]
    %v994 = vlaneseq
    %v995 = vshrl.u32 %v994, 7
    %v996 = vsub.s32 0, %v995
    %v997 = vrot.slane %v986, %v996
    %v998 = vlaneseq
    %v999 = vshrl.u32 %v998, 7
    %v1000 = vsub.s32 1, %v999
    %v1001 = vrot.slane %v986, %v1000
    %v1002 = vlaneseq
    %v1003 = vshrl.u32 %v1002, 7
    %v1004 = vsub.s32 2, %v1003
    %v1005 = vrot.slane %v986, %v1004
    %v1006 = vlaneseq
    %v1007 = vshrl.u32 %v1006, 7
    %v1008 = vsub.s32 3, %v1007
    %v1009 = vrot.slane %v986, %v1008
    %v1010 = vlaneseq
    %v1011 = vshrl.u32 %v1010, 7
    %v1012 = vsub.s32 4, %v1011
    %v1013 = vrot.slane %v986, %v1012
    %v1014 = vlaneseq
    %v1015 = vshrl.u32 %v1014, 7
    %v1016 = vsub.s32 5, %v1015
    %v1017 = vrot.slane %v986, %v1016
    %v1018 = vlaneseq
    %v1019 = vshrl.u32 %v1018, 7
    %v1020 = vsub.s32 6, %v1019
    %v1021 = vrot.slane %v986, %v1020
    %v1022 = vlaneseq
    %v1023 = vshrl.u32 %v1022, 7
    %v1024 = vsub.s32 7, %v1023
    %v1025 = vrot.slane %v986, %v1024
    %v1026 = vlaneseq
    %v1027 = vshrl.u32 %v1026, 7
    %v1028 = vsub.s32 0, %v1027
    %v1029 = vrot.slane %v987, %v1028
    %v1030 = vlaneseq
    %v1031 = vshrl.u32 %v1030, 7
    %v1032 = vsub.s32 1, %v1031
    %v1033 = vrot.slane %v987, %v1032
    %v1034 = vlaneseq
    %v1035 = vshrl.u32 %v1034, 7
    %v1036 = vsub.s32 2, %v1035
    %v1037 = vrot.slane %v987, %v1036
    %v1038 = vlaneseq
    %v1039 = vshrl.u32 %v1038, 7
    %v1040 = vsub.s32 3, %v1039
    %v1041 = vrot.slane %v987, %v1040
    %v1042 = vlaneseq
    %v1043 = vshrl.u32 %v1042, 7
    %v1044 = vsub.s32 4, %v1043
    %v1045 = vrot.slane %v987, %v1044
    %v1046 = vlaneseq
    %v1047 = vshrl.u32 %v1046, 7
    %v1048 = vsub.s32 5, %v1047
    %v1049 = vrot.slane %v987, %v1048
    %v1050 = vlaneseq
    %v1051 = vshrl.u32 %v1050, 7
    %v1052 = vsub.s32 6, %v1051
    %v1053 = vrot.slane %v987, %v1052
    %v1054 = vlaneseq
    %v1055 = vshrl.u32 %v1054, 7
    %v1056 = vsub.s32 7, %v1055
    %v1057 = vrot.slane %v987, %v1056
    %v1058 = vlaneseq
    %v1059 = vshrl.u32 %v1058, 7
    %v1060 = vsub.s32 0, %v1059
    %v1061 = vrot.slane %v988, %v1060
    %v1062 = vlaneseq
    %v1063 = vshrl.u32 %v1062, 7
    %v1064 = vsub.s32 1, %v1063
    %v1065 = vrot.slane %v988, %v1064
    %v1066 = vlaneseq
    %v1067 = vshrl.u32 %v1066, 7
    %v1068 = vsub.s32 2, %v1067
    %v1069 = vrot.slane %v988, %v1068
    %v1070 = vlaneseq
    %v1071 = vshrl.u32 %v1070, 7
    %v1072 = vsub.s32 3, %v1071
    %v1073 = vrot.slane %v988, %v1072
    %v1074 = vlaneseq
    %v1075 = vshrl.u32 %v1074, 7
    %v1076 = vsub.s32 4, %v1075
    %v1077 = vrot.slane %v988, %v1076
    %v1078 = vlaneseq
    %v1079 = vshrl.u32 %v1078, 7
    %v1080 = vsub.s32 5, %v1079
    %v1081 = vrot.slane %v988, %v1080
    %v1082 = vlaneseq
    %v1083 = vshrl.u32 %v1082, 7
    %v1084 = vsub.s32 6, %v1083
    %v1085 = vrot.slane %v988, %v1084
    %v1086 = vlaneseq
    %v1087 = vshrl.u32 %v1086, 7
    %v1088 = vsub.s32 7, %v1087
    %v1089 = vrot.slane %v988, %v1088
    %v1090 = vlaneseq
    %v1091 = vshrl.u32 %v1090, 7
    %v1092 = vsub.s32 0, %v1091
    %v1093 = vrot.slane %v989, %v1092
    %v1327 = vunpack.c.l.b16 %v778
    %v1328 = vunpack.c.h.b16 %v778
    %v1329 = vunpack.c.l.b16 %v779
    %v1330 = vunpack.c.h.b16 %v779
    %v1331 = vunpack.c.l.b16 %v780
    %v1332 = vunpack.c.h.b16 %v780
    %v1333 = vunpack.c.l.b16 %v781
    %v1334 = vunpack.c.h.b16 %v781
    %v1335 = vunpack.c.l.b16 %v782
    %v1336 = vunpack.c.h.b16 %v782
    %v1337 = vunpack.c.l.b16 %v783
    %v1338 = vunpack.c.h.b16 %v783
    %v1339 = vunpack.c.l.b16 %v784
    %v1340 = vunpack.c.h.b16 %v784
    %v1341 = vunpack.c.l.b16 %v785
    %v1342 = vunpack.c.h.b16 %v785
    %v1343 = vunpack.c.l.b16 %v786
    %v1344 = vunpack.c.h.b16 %v786
    %v1345 = vunpack.c.l.b16 %v787
    %v1346 = vunpack.c.h.b16 %v787
    %v1347 = vunpack.c.l.b16 %v788
    %v1348 = vunpack.c.h.b16 %v788
    %v1349 = vunpack.c.l.b16 %v789
    %v1350 = vunpack.c.h.b16 %v789
    %v1351 = vunpack.c.l.b16 %v790
    %v1352 = vunpack.c.l.b16 %v791
    %v1353 = vunpack.c.h.b16 %v791
    %v1354 = vunpack.c.l.b16 %v792
    %v1355 = vunpack.c.h.b16 %v792
    %v1356 = vunpack.c.l.b16 %v793
    %v1357 = vunpack.c.h.b16 %v793
    %v1358 = vunpack.c.l.b16 %v794
    %v1359 = vunpack.c.h.b16 %v794
    %v1360 = vunpack.c.l.b16 %v795
    %v1361 = vunpack.c.h.b16 %v795
    %v1362 = vunpack.c.l.b16 %v796
    %v1363 = vunpack.c.h.b16 %v796
    %v1364 = vunpack.c.l.b16 %v797
    %v1365 = vunpack.c.h.b16 %v797
    %v1366 = vunpack.c.l.b16 %v798
    %v1367 = vunpack.c.h.b16 %v798
    %v1368 = vunpack.c.l.b16 %v799
    %v1369 = vunpack.c.h.b16 %v799
    %v1370 = vunpack.c.l.b16 %v800
    %v1371 = vunpack.c.h.b16 %v800
    %v1372 = vunpack.c.l.b16 %v801
    %v1373 = vunpack.c.h.b16 %v801
    %v1374 = vunpack.c.l.b16 %v802
    %v1375 = vunpack.c.h.b16 %v802
    %v1376 = vunpack.c.l.b16 %v803
    %v1377 = vunpack.c.l.b16 %v804
    %v1378 = vunpack.c.h.b16 %v804
    %v1379 = vunpack.c.l.b16 %v805
    %v1380 = vunpack.c.h.b16 %v805
    %v1381 = vunpack.c.l.b16 %v806
    %v1382 = vunpack.c.h.b16 %v806
    %v1383 = vunpack.c.l.b16 %v807
    %v1384 = vunpack.c.h.b16 %v807
    %v1385 = vunpack.c.l.b16 %v808
    %v1386 = vunpack.c.h.b16 %v808
    %v1387 = vunpack.c.l.b16 %v809
    %v1388 = vunpack.c.h.b16 %v809
    %v1389 = vunpack.c.l.b16 %v810
    %v1390 = vunpack.c.h.b16 %v810
    %v1391 = vunpack.c.l.b16 %v811
    %v1392 = vunpack.c.h.b16 %v811
    %v1393 = vunpack.c.l.b16 %v812
    %v1394 = vunpack.c.h.b16 %v812
    %v1395 = vunpack.c.l.b16 %v813
    %v1396 = vunpack.c.h.b16 %v813
    %v1397 = vunpack.c.l.b16 %v814
    %v1398 = vunpack.c.h.b16 %v814
    %v1399 = vunpack.c.l.b16 %v815
    %v1400 = vunpack.c.h.b16 %v815
    %v1401 = vunpack.c.l.b16 %v816
    %v1402 = vunpack.c.l.b16 %v817
    %v1403 = vunpack.c.h.b16 %v817
    %v1404 = vunpack.c.l.b16 %v818
    %v1405 = vunpack.c.h.b16 %v818
    %v1406 = vunpack.c.l.b16 %v819
    %v1407 = vunpack.c.h.b16 %v819
    %v1408 = vunpack.c.l.b16 %v820
    %v1409 = vunpack.c.h.b16 %v820
    %v1410 = vunpack.c.l.b16 %v821
    %v1411 = vunpack.c.h.b16 %v821
    %v1412 = vunpack.c.l.b16 %v822
    %v1413 = vunpack.c.h.b16 %v822
    %v1414 = vunpack.c.l.b16 %v823
    %v1415 = vunpack.c.h.b16 %v823
    %v1416 = vunpack.c.l.b16 %v824
    %v1417 = vunpack.c.h.b16 %v824
    %v1418 = vunpack.c.l.b16 %v825
    %v1419 = vunpack.c.h.b16 %v825
    %v1420 = vunpack.c.l.b16 %v826
    %v1421 = vunpack.c.h.b16 %v826
    %v1422 = vunpack.c.l.b16 %v827
    %v1423 = vunpack.c.h.b16 %v827
    %v1424 = vunpack.c.l.b16 %v828
    %v1425 = vunpack.c.h.b16 %v828
    %v1426 = vunpack.c.l.b16 %v829
    %v1427 = vunpack.c.l.b16 %v830
    %v1428 = vunpack.c.h.b16 %v830
    %v1429 = vunpack.c.l.b16 %v831
    %v1430 = vunpack.c.h.b16 %v831
    %v1431 = vunpack.c.l.b16 %v832
    %v1432 = vunpack.c.h.b16 %v832
    %v1433 = vunpack.c.l.b16 %v833
    %v1434 = vunpack.c.h.b16 %v833
    %v1435 = vunpack.c.l.b16 %v834
    %v1436 = vunpack.c.h.b16 %v834
    %v1437 = vunpack.c.l.b16 %v835
    %v1438 = vunpack.c.h.b16 %v835
    %v1439 = vunpack.c.l.b16 %v836
    %v1440 = vunpack.c.h.b16 %v836
    %v1441 = vunpack.c.l.b16 %v837
    %v1442 = vunpack.c.h.b16 %v837
    %v1443 = vunpack.c.l.b16 %v838
    %v1444 = vunpack.c.h.b16 %v838
    %v1445 = vunpack.c.l.b16 %v839
    %v1446 = vunpack.c.h.b16 %v839
    %v1447 = vunpack.c.l.b16 %v840
    %v1448 = vunpack.c.h.b16 %v840
    %v1449 = vunpack.c.l.b16 %v841
    %v1450 = vunpack.c.h.b16 %v841
    %v1451 = vunpack.c.l.b16 %v842
    %v1452 = vunpack.c.l.b16 %v843
    %v1453 = vunpack.c.h.b16 %v843
    %v1454 = vunpack.c.l.b16 %v844
    %v1455 = vunpack.c.h.b16 %v844
    %v1456 = vunpack.c.l.b16 %v845
    %v1457 = vunpack.c.h.b16 %v845
    %v1458 = vunpack.c.l.b16 %v846
    %v1459 = vunpack.c.h.b16 %v846
    %v1460 = vunpack.c.l.b16 %v847
    %v1461 = vunpack.c.h.b16 %v847
    %v1462 = vunpack.c.l.b16 %v848
    %v1463 = vunpack.c.h.b16 %v848
    %v1464 = vunpack.c.l.b16 %v849
    %v1465 = vunpack.c.h.b16 %v849
    %v1466 = vunpack.c.l.b16 %v850
    %v1467 = vunpack.c.h.b16 %v850
    %v1468 = vunpack.c.l.b16 %v851
    %v1469 = vunpack.c.h.b16 %v851
    %v1470 = vunpack.c.l.b16 %v852
    %v1471 = vunpack.c.h.b16 %v852
    %v1472 = vunpack.c.l.b16 %v853
    %v1473 = vunpack.c.h.b16 %v853
    %v1474 = vunpack.c.l.b16 %v854
    %v1475 = vunpack.c.h.b16 %v854
    %v1476 = vunpack.c.l.b16 %v855
    %v1477 = vunpack.c.l.b16 %v856
    %v1478 = vunpack.c.h.b16 %v856
    %v1479 = vunpack.c.l.b16 %v857
    %v1480 = vunpack.c.h.b16 %v857
    %v1481 = vunpack.c.l.b16 %v858
    %v1482 = vunpack.c.h.b16 %v858
    %v1483 = vunpack.c.l.b16 %v859
    %v1484 = vunpack.c.h.b16 %v859
    %v1485 = vunpack.c.l.b16 %v860
    %v1486 = vunpack.c.h.b16 %v860
    %v1487 = vunpack.c.l.b16 %v861
    %v1488 = vunpack.c.h.b16 %v861
    %v1489 = vunpack.c.l.b16 %v862
    %v1490 = vunpack.c.h.b16 %v862
    %v1491 = vunpack.c.l.b16 %v863
    %v1492 = vunpack.c.h.b16 %v863
    %v1493 = vunpack.c.l.b16 %v864
    %v1494 = vunpack.c.h.b16 %v864
    %v1495 = vunpack.c.l.b16 %v865
    %v1496 = vunpack.c.h.b16 %v865
    %v1497 = vunpack.c.l.b16 %v866
    %v1498 = vunpack.c.h.b16 %v866
    %v1499 = vunpack.c.l.b16 %v867
    %v1500 = vunpack.c.h.b16 %v867
    %v1501 = vunpack.c.l.b16 %v868
    %v1502 = vunpack.c.l.b16 %v869
    %v1503 = vunpack.c.h.b16 %v869
    %v1504 = vunpack.c.l.b16 %v870
    %v1505 = vunpack.c.h.b16 %v870
    %v1506 = vunpack.c.l.b16 %v871
    %v1507 = vunpack.c.h.b16 %v871
    %v1508 = vunpack.c.l.b16 %v872
    %v1509 = vunpack.c.h.b16 %v872
    %v1510 = vunpack.c.l.b16 %v873
    %v1511 = vunpack.c.h.b16 %v873
    %v1512 = vunpack.c.l.b16 %v874
    %v1513 = vunpack.c.h.b16 %v874
    %v1514 = vunpack.c.l.b16 %v875
    %v1515 = vunpack.c.h.b16 %v875
    %v1516 = vunpack.c.l.b16 %v876
    %v1517 = vunpack.c.h.b16 %v876
    %v1518 = vunpack.c.l.b16 %v877
    %v1519 = vunpack.c.h.b16 %v877
    %v1520 = vunpack.c.l.b16 %v878
    %v1521 = vunpack.c.h.b16 %v878
    %v1522 = vunpack.c.l.b16 %v879
    %v1523 = vunpack.c.h.b16 %v879
    %v1524 = vunpack.c.l.b16 %v880
    %v1525 = vunpack.c.h.b16 %v880
    %v1526 = vunpack.c.l.b16 %v881
    %v1527 = vunpack.c.l.b16 %v882
    %v1528 = vunpack.c.h.b16 %v882
    %v1529 = vunpack.c.l.b16 %v883
    %v1530 = vunpack.c.h.b16 %v883
    %v1531 = vunpack.c.l.b16 %v884
    %v1532 = vunpack.c.h.b16 %v884
    %v1533 = vunpack.c.l.b16 %v885
    %v1534 = vunpack.c.h.b16 %v885
    %v1535 = vunpack.c.l.b16 %v886
    %v1536 = vunpack.c.h.b16 %v886
    %v1537 = vunpack.c.l.b16 %v887
    %v1538 = vunpack.c.h.b16 %v887
    %v1539 = vunpack.c.l.b16 %v888
    %v1540 = vunpack.c.h.b16 %v888
    %v1541 = vunpack.c.l.b16 %v889
    %v1542 = vunpack.c.h.b16 %v889
    %v1543 = vunpack.c.l.b16 %v890
    %v1544 = vunpack.c.h.b16 %v890
    %v1545 = vunpack.c.l.b16 %v891
    %v1546 = vunpack.c.h.b16 %v891
    %v1547 = vunpack.c.l.b16 %v892
    %v1548 = vunpack.c.h.b16 %v892
    %v1549 = vunpack.c.l.b16 %v893
    %v1550 = vunpack.c.h.b16 %v893
    %v1551 = vunpack.c.l.b16 %v894
    %v1552 = vunpack.c.l.b16 %v895
    %v1553 = vunpack.c.h.b16 %v895
    %v1554 = vunpack.c.l.b16 %v896
    %v1555 = vunpack.c.h.b16 %v896
    %v1556 = vunpack.c.l.b16 %v897
    %v1557 = vunpack.c.h.b16 %v897
    %v1558 = vunpack.c.l.b16 %v898
    %v1559 = vunpack.c.h.b16 %v898
    %v1560 = vunpack.c.l.b16 %v899
    %v1561 = vunpack.c.h.b16 %v899
    %v1562 = vunpack.c.l.b16 %v900
    %v1563 = vunpack.c.h.b16 %v900
    %v1564 = vunpack.c.l.b16 %v901
    %v1565 = vunpack.c.h.b16 %v901
    %v1566 = vunpack.c.l.b16 %v902
    %v1567 = vunpack.c.h.b16 %v902
    %v1568 = vunpack.c.l.b16 %v903
    %v1569 = vunpack.c.h.b16 %v903
    %v1570 = vunpack.c.l.b16 %v904
    %v1571 = vunpack.c.h.b16 %v904
    %v1572 = vunpack.c.l.b16 %v905
    %v1573 = vunpack.c.h.b16 %v905
    %v1574 = vunpack.c.l.b16 %v906
    %v1575 = vunpack.c.h.b16 %v906
    %v1576 = vunpack.c.l.b16 %v907
    %v1577 = vunpack.c.l.b16 %v908
    %v1578 = vunpack.c.h.b16 %v908
    %v1579 = vunpack.c.l.b16 %v909
    %v1580 = vunpack.c.h.b16 %v909
    %v1581 = vunpack.c.l.b16 %v910
    %v1582 = vunpack.c.h.b16 %v910
    %v1583 = vunpack.c.l.b16 %v911
    %v1584 = vunpack.c.h.b16 %v911
    %v1585 = vunpack.c.l.b16 %v912
    %v1586 = vunpack.c.h.b16 %v912
    %v1587 = vunpack.c.l.b16 %v913
    %v1588 = vunpack.c.h.b16 %v913
    %v1589 = vunpack.c.l.b16 %v914
    %v1590 = vunpack.c.h.b16 %v914
    %v1591 = vunpack.c.l.b16 %v915
    %v1592 = vunpack.c.h.b16 %v915
    %v1593 = vunpack.c.l.b16 %v916
    %v1594 = vunpack.c.h.b16 %v916
    %v1595 = vunpack.c.l.b16 %v917
    %v1596 = vunpack.c.h.b16 %v917
    %v1597 = vunpack.c.l.b16 %v918
    %v1598 = vunpack.c.h.b16 %v918
    %v1599 = vunpack.c.l.b16 %v919
    %v1600 = vunpack.c.h.b16 %v919
    %v1601 = vunpack.c.l.b16 %v920
    %v1602 = vunpack.c.l.b16 %v921
    %v1603 = vunpack.c.h.b16 %v921
    %v1604 = vunpack.c.l.b16 %v922
    %v1605 = vunpack.c.h.b16 %v922
    %v1606 = vunpack.c.l.b16 %v923
    %v1607 = vunpack.c.h.b16 %v923
    %v1608 = vunpack.c.l.b16 %v924
    %v1609 = vunpack.c.h.b16 %v924
    %v1610 = vunpack.c.l.b16 %v925
    %v1611 = vunpack.c.h.b16 %v925
    %v1612 = vunpack.c.l.b16 %v926
    %v1613 = vunpack.c.h.b16 %v926
    %v1614 = vunpack.c.l.b16 %v927
    %v1615 = vunpack.c.h.b16 %v927
    %v1616 = vunpack.c.l.b16 %v928
    %v1617 = vunpack.c.h.b16 %v928
    %v1618 = vunpack.c.l.b16 %v929
    %v1619 = vunpack.c.h.b16 %v929
    %v1620 = vunpack.c.l.b16 %v930
    %v1621 = vunpack.c.h.b16 %v930
    %v1622 = vunpack.c.l.b16 %v931
    %v1623 = vunpack.c.h.b16 %v931
    %v1624 = vunpack.c.l.b16 %v932
    %v1625 = vunpack.c.h.b16 %v932
    %v1626 = vunpack.c.l.b16 %v933
    %v1627 = vunpack.c.l.b16 %v934
    %v1628 = vunpack.c.h.b16 %v934
    %v1629 = vunpack.c.l.b16 %v935
    %v1630 = vunpack.c.h.b16 %v935
    %v1631 = vunpack.c.l.b16 %v936
    %v1632 = vunpack.c.h.b16 %v936
    %v1633 = vunpack.c.l.b16 %v937
    %v1634 = vunpack.c.h.b16 %v937
    %v1635 = vunpack.c.l.b16 %v938
    %v1636 = vunpack.c.h.b16 %v938
    %v1637 = vunpack.c.l.b16 %v939
    %v1638 = vunpack.c.h.b16 %v939
    %v1639 = vunpack.c.l.b16 %v940
    %v1640 = vunpack.c.h.b16 %v940
    %v1641 = vunpack.c.l.b16 %v941
    %v1642 = vunpack.c.h.b16 %v941
    %v1643 = vunpack.c.l.b16 %v942
    %v1644 = vunpack.c.h.b16 %v942
    %v1645 = vunpack.c.l.b16 %v943
    %v1646 = vunpack.c.h.b16 %v943
    %v1647 = vunpack.c.l.b16 %v944
    %v1648 = vunpack.c.h.b16 %v944
    %v1649 = vunpack.c.l.b16 %v945
    %v1650 = vunpack.c.h.b16 %v945
    %v1651 = vunpack.c.l.b16 %v946
    %v1652 = vunpack.c.l.b16 %v947
    %v1653 = vunpack.c.h.b16 %v947
    %v1654 = vunpack.c.l.b16 %v948
    %v1655 = vunpack.c.h.b16 %v948
    %v1656 = vunpack.c.l.b16 %v949
    %v1657 = vunpack.c.h.b16 %v949
    %v1658 = vunpack.c.l.b16 %v950
    %v1659 = vunpack.c.h.b16 %v950
    %v1660 = vunpack.c.l.b16 %v951
    %v1661 = vunpack.c.h.b16 %v951
    %v1662 = vunpack.c.l.b16 %v952
    %v1663 = vunpack.c.h.b16 %v952
    %v1664 = vunpack.c.l.b16 %v953
    %v1665 = vunpack.c.h.b16 %v953
    %v1666 = vunpack.c.l.b16 %v954
    %v1667 = vunpack.c.h.b16 %v954
    %v1668 = vunpack.c.l.b16 %v955
    %v1669 = vunpack.c.h.b16 %v955
    %v1670 = vunpack.c.l.b16 %v956
    %v1671 = vunpack.c.h.b16 %v956
    %v1672 = vunpack.c.l.b16 %v957
    %v1673 = vunpack.c.h.b16 %v957
    %v1674 = vunpack.c.l.b16 %v958
    %v1675 = vunpack.c.h.b16 %v958
    %v1676 = vunpack.c.l.b16 %v959
    %v1677 = vunpack.c.l.b16 %v960
    %v1678 = vunpack.c.h.b16 %v960
    %v1679 = vunpack.c.l.b16 %v961
    %v1680 = vunpack.c.h.b16 %v961
    %v1681 = vunpack.c.l.b16 %v962
    %v1682 = vunpack.c.h.b16 %v962
    %v1683 = vunpack.c.l.b16 %v963
    %v1684 = vunpack.c.h.b16 %v963
    %v1685 = vunpack.c.l.b16 %v964
    %v1686 = vunpack.c.h.b16 %v964
    %v1687 = vunpack.c.l.b16 %v965
    %v1688 = vunpack.c.h.b16 %v965
    %v1689 = vunpack.c.l.b16 %v966
    %v1690 = vunpack.c.h.b16 %v966
    %v1691 = vunpack.c.l.b16 %v967
    %v1692 = vunpack.c.h.b16 %v967
    %v1693 = vunpack.c.l.b16 %v968
    %v1694 = vunpack.c.h.b16 %v968
    %v1695 = vunpack.c.l.b16 %v969
    %v1696 = vunpack.c.h.b16 %v969
    %v1697 = vunpack.c.l.b16 %v970
    %v1698 = vunpack.c.h.b16 %v970
    %v1699 = vunpack.c.l.b16 %v971
    %v1700 = vunpack.c.h.b16 %v971
    %v1701 = vunpack.c.l.b16 %v972
    %v1702 = vunpack.c.l.b16 %v973
    %v1703 = vunpack.c.h.b16 %v973
    %v1704 = vunpack.c.l.b16 %v974
    %v1705 = vunpack.c.h.b16 %v974
    %v1706 = vunpack.c.l.b16 %v975
    %v1707 = vunpack.c.h.b16 %v975
    %v1708 = vunpack.c.l.b16 %v976
    %v1709 = vunpack.c.h.b16 %v976
    %v1710 = vunpack.c.l.b16 %v977
    %v1711 = vunpack.c.h.b16 %v977
    %v1712 = vunpack.c.l.b16 %v978
    %v1713 = vunpack.c.h.b16 %v978
    %v1714 = vunpack.c.l.b16 %v979
    %v1715 = vunpack.c.h.b16 %v979
    %v1716 = vunpack.c.l.b16 %v980
    %v1717 = vunpack.c.h.b16 %v980
    %v1718 = vunpack.c.l.b16 %v981
    %v1719 = vunpack.c.h.b16 %v981
    %v1720 = vunpack.c.l.b16 %v982
    %v1721 = vunpack.c.h.b16 %v982
    %v1722 = vunpack.c.l.b16 %v983
    %v1723 = vunpack.c.h.b16 %v983
    %v1724 = vunpack.c.l.b16 %v984
    %v1725 = vunpack.c.h.b16 %v984
    %v1726 = vunpack.c.l.b16 %v985
    %v1727 = vpack.c.b16 %v1352, %v1327
    %v1728 = vpack.c.b16 %v1353, %v1328
    %v1729 = vpack.c.b16 %v1354, %v1329
    %v1730 = vpack.c.b16 %v1355, %v1330
    %v1731 = vpack.c.b16 %v1356, %v1331
    %v1732 = vpack.c.b16 %v1357, %v1332
    %v1733 = vpack.c.b16 %v1358, %v1333
    %v1734 = vpack.c.b16 %v1359, %v1334
    %v1735 = vpack.c.b16 %v1360, %v1335
    %v1736 = vpack.c.b16 %v1361, %v1336
    %v1737 = vpack.c.b16 %v1362, %v1337
    %v1738 = vpack.c.b16 %v1363, %v1338
    %v1739 = vpack.c.b16 %v1364, %v1339
    %v1740 = vpack.c.b16 %v1365, %v1340
    %v1741 = vpack.c.b16 %v1366, %v1341
    %v1742 = vpack.c.b16 %v1367, %v1342
    %v1743 = vpack.c.b16 %v1368, %v1343
    %v1744 = vpack.c.b16 %v1369, %v1344
    %v1745 = vpack.c.b16 %v1370, %v1345
    %v1746 = vpack.c.b16 %v1371, %v1346
    %v1747 = vpack.c.b16 %v1372, %v1347
    %v1748 = vpack.c.b16 %v1373, %v1348
    %v1749 = vpack.c.b16 %v1374, %v1349
    %v1750 = vpack.c.b16 %v1375, %v1350
    %v1751 = vpack.c.b16 %v1376, %v1351
    %v1752 = vpack.c.b16 %v1402, %v1377
    %v1753 = vpack.c.b16 %v1403, %v1378
    %v1754 = vpack.c.b16 %v1404, %v1379
    %v1755 = vpack.c.b16 %v1405, %v1380
    %v1756 = vpack.c.b16 %v1406, %v1381
    %v1757 = vpack.c.b16 %v1407, %v1382
    %v1758 = vpack.c.b16 %v1408, %v1383
    %v1759 = vpack.c.b16 %v1409, %v1384
    %v1760 = vpack.c.b16 %v1410, %v1385
    %v1761 = vpack.c.b16 %v1411, %v1386
    %v1762 = vpack.c.b16 %v1412, %v1387
    %v1763 = vpack.c.b16 %v1413, %v1388
    %v1764 = vpack.c.b16 %v1414, %v1389
    %v1765 = vpack.c.b16 %v1415, %v1390
    %v1766 = vpack.c.b16 %v1416, %v1391
    %v1767 = vpack.c.b16 %v1417, %v1392
    %v1768 = vpack.c.b16 %v1418, %v1393
    %v1769 = vpack.c.b16 %v1419, %v1394
    %v1770 = vpack.c.b16 %v1420, %v1395
    %v1771 = vpack.c.b16 %v1421, %v1396
    %v1772 = vpack.c.b16 %v1422, %v1397
    %v1773 = vpack.c.b16 %v1423, %v1398
    %v1774 = vpack.c.b16 %v1424, %v1399
    %v1775 = vpack.c.b16 %v1425, %v1400
    %v1776 = vpack.c.b16 %v1426, %v1401
    %v1777 = vpack.c.b16 %v1452, %v1427
    %v1778 = vpack.c.b16 %v1453, %v1428
    %v1779 = vpack.c.b16 %v1454, %v1429
    %v1780 = vpack.c.b16 %v1455, %v1430
    %v1781 = vpack.c.b16 %v1456, %v1431
    %v1782 = vpack.c.b16 %v1457, %v1432
    %v1783 = vpack.c.b16 %v1458, %v1433
    %v1784 = vpack.c.b16 %v1459, %v1434
    %v1785 = vpack.c.b16 %v1460, %v1435
    %v1786 = vpack.c.b16 %v1461, %v1436
    %v1787 = vpack.c.b16 %v1462, %v1437
    %v1788 = vpack.c.b16 %v1463, %v1438
    %v1789 = vpack.c.b16 %v1464, %v1439
    %v1790 = vpack.c.b16 %v1465, %v1440
    %v1791 = vpack.c.b16 %v1466, %v1441
    %v1792 = vpack.c.b16 %v1467, %v1442
    %v1793 = vpack.c.b16 %v1468, %v1443
    %v1794 = vpack.c.b16 %v1469, %v1444
    %v1795 = vpack.c.b16 %v1470, %v1445
    %v1796 = vpack.c.b16 %v1471, %v1446
    %v1797 = vpack.c.b16 %v1472, %v1447
    %v1798 = vpack.c.b16 %v1473, %v1448
    %v1799 = vpack.c.b16 %v1474, %v1449
    %v1800 = vpack.c.b16 %v1475, %v1450
    %v1801 = vpack.c.b16 %v1476, %v1451
    %v1802 = vpack.c.b16 %v1502, %v1477
    %v1803 = vpack.c.b16 %v1503, %v1478
    %v1804 = vpack.c.b16 %v1504, %v1479
    %v1805 = vpack.c.b16 %v1505, %v1480
    %v1806 = vpack.c.b16 %v1506, %v1481
    %v1807 = vpack.c.b16 %v1507, %v1482
    %v1808 = vpack.c.b16 %v1508, %v1483
    %v1809 = vpack.c.b16 %v1509, %v1484
    %v1810 = vpack.c.b16 %v1510, %v1485
    %v1811 = vpack.c.b16 %v1511, %v1486
    %v1812 = vpack.c.b16 %v1512, %v1487
    %v1813 = vpack.c.b16 %v1513, %v1488
    %v1814 = vpack.c.b16 %v1514, %v1489
    %v1815 = vpack.c.b16 %v1515, %v1490
    %v1816 = vpack.c.b16 %v1516, %v1491
    %v1817 = vpack.c.b16 %v1517, %v1492
    %v1818 = vpack.c.b16 %v1518, %v1493
    %v1819 = vpack.c.b16 %v1519, %v1494
    %v1820 = vpack.c.b16 %v1520, %v1495
    %v1821 = vpack.c.b16 %v1521, %v1496
    %v1822 = vpack.c.b16 %v1522, %v1497
    %v1823 = vpack.c.b16 %v1523, %v1498
    %v1824 = vpack.c.b16 %v1524, %v1499
    %v1825 = vpack.c.b16 %v1525, %v1500
    %v1826 = vpack.c.b16 %v1526, %v1501
    %v1827 = vpack.c.b16 %v1552, %v1527
    %v1828 = vpack.c.b16 %v1553, %v1528
    %v1829 = vpack.c.b16 %v1554, %v1529
    %v1830 = vpack.c.b16 %v1555, %v1530
    %v1831 = vpack.c.b16 %v1556, %v1531
    %v1832 = vpack.c.b16 %v1557, %v1532
    %v1833 = vpack.c.b16 %v1558, %v1533
    %v1834 = vpack.c.b16 %v1559, %v1534
    %v1835 = vpack.c.b16 %v1560, %v1535
    %v1836 = vpack.c.b16 %v1561, %v1536
    %v1837 = vpack.c.b16 %v1562, %v1537
    %v1838 = vpack.c.b16 %v1563, %v1538
    %v1839 = vpack.c.b16 %v1564, %v1539
    %v1840 = vpack.c.b16 %v1565, %v1540
    %v1841 = vpack.c.b16 %v1566, %v1541
    %v1842 = vpack.c.b16 %v1567, %v1542
    %v1843 = vpack.c.b16 %v1568, %v1543
    %v1844 = vpack.c.b16 %v1569, %v1544
    %v1845 = vpack.c.b16 %v1570, %v1545
    %v1846 = vpack.c.b16 %v1571, %v1546
    %v1847 = vpack.c.b16 %v1572, %v1547
    %v1848 = vpack.c.b16 %v1573, %v1548
    %v1849 = vpack.c.b16 %v1574, %v1549
    %v1850 = vpack.c.b16 %v1575, %v1550
    %v1851 = vpack.c.b16 %v1576, %v1551
    %v1852 = vpack.c.b16 %v1602, %v1577
    %v1853 = vpack.c.b16 %v1603, %v1578
    %v1854 = vpack.c.b16 %v1604, %v1579
    %v1855 = vpack.c.b16 %v1605, %v1580
    %v1856 = vpack.c.b16 %v1606, %v1581
    %v1857 = vpack.c.b16 %v1607, %v1582
    %v1858 = vpack.c.b16 %v1608, %v1583
    %v1859 = vpack.c.b16 %v1609, %v1584
    %v1860 = vpack.c.b16 %v1610, %v1585
    %v1861 = vpack.c.b16 %v1611, %v1586
    %v1862 = vpack.c.b16 %v1612, %v1587
    %v1863 = vpack.c.b16 %v1613, %v1588
    %v1864 = vpack.c.b16 %v1614, %v1589
    %v1865 = vpack.c.b16 %v1615, %v1590
    %v1866 = vpack.c.b16 %v1616, %v1591
    %v1867 = vpack.c.b16 %v1617, %v1592
    %v1868 = vpack.c.b16 %v1618, %v1593
    %v1869 = vpack.c.b16 %v1619, %v1594
    %v1870 = vpack.c.b16 %v1620, %v1595
    %v1871 = vpack.c.b16 %v1621, %v1596
    %v1872 = vpack.c.b16 %v1622, %v1597
    %v1873 = vpack.c.b16 %v1623, %v1598
    %v1874 = vpack.c.b16 %v1624, %v1599
    %v1875 = vpack.c.b16 %v1625, %v1600
    %v1876 = vpack.c.b16 %v1626, %v1601
    %v1877 = vpack.c.b16 %v1652, %v1627
    %v1878 = vpack.c.b16 %v1653, %v1628
    %v1879 = vpack.c.b16 %v1654, %v1629
    %v1880 = vpack.c.b16 %v1655, %v1630
    %v1881 = vpack.c.b16 %v1656, %v1631
    %v1882 = vpack.c.b16 %v1657, %v1632
    %v1883 = vpack.c.b16 %v1658, %v1633
    %v1884 = vpack.c.b16 %v1659, %v1634
    %v1885 = vpack.c.b16 %v1660, %v1635
    %v1886 = vpack.c.b16 %v1661, %v1636
    %v1887 = vpack.c.b16 %v1662, %v1637
    %v1888 = vpack.c.b16 %v1663, %v1638
    %v1889 = vpack.c.b16 %v1664, %v1639
    %v1890 = vpack.c.b16 %v1665, %v1640
    %v1891 = vpack.c.b16 %v1666, %v1641
    %v1892 = vpack.c.b16 %v1667, %v1642
    %v1893 = vpack.c.b16 %v1668, %v1643
    %v1894 = vpack.c.b16 %v1669, %v1644
    %v1895 = vpack.c.b16 %v1670, %v1645
    %v1896 = vpack.c.b16 %v1671, %v1646
    %v1897 = vpack.c.b16 %v1672, %v1647
    %v1898 = vpack.c.b16 %v1673, %v1648
    %v1899 = vpack.c.b16 %v1674, %v1649
    %v1900 = vpack.c.b16 %v1675, %v1650
    %v1901 = vpack.c.b16 %v1676, %v1651
    %v1902 = vpack.c.b16 %v1702, %v1677
    %v1903 = vpack.c.b16 %v1703, %v1678
    %v1904 = vpack.c.b16 %v1704, %v1679
    %v1905 = vpack.c.b16 %v1705, %v1680
    %v1906 = vpack.c.b16 %v1706, %v1681
    %v1907 = vpack.c.b16 %v1707, %v1682
    %v1908 = vpack.c.b16 %v1708, %v1683
    %v1909 = vpack.c.b16 %v1709, %v1684
    %v1910 = vpack.c.b16 %v1710, %v1685
    %v1911 = vpack.c.b16 %v1711, %v1686
    %v1912 = vpack.c.b16 %v1712, %v1687
    %v1913 = vpack.c.b16 %v1713, %v1688
    %v1914 = vpack.c.b16 %v1714, %v1689
    %v1915 = vpack.c.b16 %v1715, %v1690
    %v1916 = vpack.c.b16 %v1716, %v1691
    %v1917 = vpack.c.b16 %v1717, %v1692
    %v1918 = vpack.c.b16 %v1718, %v1693
    %v1919 = vpack.c.b16 %v1719, %v1694
    %v1920 = vpack.c.b16 %v1720, %v1695
    %v1921 = vpack.c.b16 %v1721, %v1696
    %v1922 = vpack.c.b16 %v1722, %v1697
    %v1923 = vpack.c.b16 %v1723, %v1698
    %v1924 = vpack.c.b16 %v1724, %v1699
    %v1925 = vpack.c.b16 %v1725, %v1700
    %v1926 = vpack.c.b16 %v1726, %v1701
    %2127 = vmatprep.subr.bf16.mxu0 %v1728
    %2128 = vmatpush1.bf16.msra.mxu0 %v1727
    %2129 = vmatprep.subr.bf16.mxu0 %v1753
    %2130 = vmatpush1.bf16.msra.mxu0 %v1752
    %2131 = vmatprep.subr.bf16.mxu0 %v1778
    %2132 = vmatpush1.bf16.msra.mxu0 %v1777
    %2133 = vmatprep.subr.bf16.mxu0 %v1803
    %2134 = vmatpush1.bf16.msra.mxu0 %v1802
    %2135 = vmatprep.subr.bf16.mxu0 %v1828
    %2136 = vmatpush1.bf16.msra.mxu0 %v1827
    %2137 = vmatprep.subr.bf16.mxu0 %v1853
    %2138 = vmatpush1.bf16.msra.mxu0 %v1852
    %2139 = vmatprep.subr.bf16.mxu0 %v1878
    %2140 = vmatpush1.bf16.msra.mxu0 %v1877
    %2141 = vmatprep.subr.bf16.mxu0 %v1903
    %2142 = vmatpush1.bf16.msra.mxu0 %v1902
    %2143 = vmatprep.subr.bf16.mxu0 0
    %2144 = vmatpush1.bf16.msra.mxu0 0
    %2145 = vmatprep.subr.bf16.mxu0 0
    %2146 = vmatpush1.bf16.msra.mxu0 0
    %2147 = vmatprep.subr.bf16.mxu0 0
    %2148 = vmatpush1.bf16.msra.mxu0 0
    %2149 = vmatprep.subr.bf16.mxu0 0
    %2150 = vmatpush1.bf16.msra.mxu0 0
    %2151 = vmatprep.subr.bf16.mxu0 0
    %2152 = vmatpush1.bf16.msra.mxu0 0
    %2153 = vmatprep.subr.bf16.mxu0 0
    %2154 = vmatpush1.bf16.msra.mxu0 0
    %2155 = vmatprep.subr.bf16.mxu0 0
    %2156 = vmatpush1.bf16.msra.mxu0 0
    %2157 = vmatprep.subr.bf16.mxu0 0
    %2158 = vmatpush1.bf16.msra.mxu0 0
    %2159 = vmatprep.mubr.bf16.mxu0 0
    %2160 = vmatmul.mubr.bf16.gmra.mrb[0].mxu0 %v777
    %v2161 = vpop.f32.mrb[0].mxu0
    %v2162 = vadd.f32 %v997, %v2161
    %v2163 = vpop.f32.mrb[0].mxu0
    %v2164 = vadd.f32 %v1001, %v2163
    %v2165 = vpop.f32.mrb[0].mxu0
    %v2166 = vpop.f32.mrb[0].mxu0
    %2167 = vdwg.mxu0
    %2168 = vmatprep.subr.bf16.mxu0 %v1730
    %2169 = vmatpush1.bf16.msra.mxu0 %v1729
    %2170 = vmatprep.subr.bf16.mxu0 %v1755
    %2171 = vmatpush1.bf16.msra.mxu0 %v1754
    %2172 = vmatprep.subr.bf16.mxu0 %v1780
    %2173 = vmatpush1.bf16.msra.mxu0 %v1779
    %2174 = vmatprep.subr.bf16.mxu0 %v1805
    %2175 = vmatpush1.bf16.msra.mxu0 %v1804
    %2176 = vmatprep.subr.bf16.mxu0 %v1830
    %2177 = vmatpush1.bf16.msra.mxu0 %v1829
    %2178 = vmatprep.subr.bf16.mxu0 %v1855
    %2179 = vmatpush1.bf16.msra.mxu0 %v1854
    %2180 = vmatprep.subr.bf16.mxu0 %v1880
    %2181 = vmatpush1.bf16.msra.mxu0 %v1879
    %2182 = vmatprep.subr.bf16.mxu0 %v1905
    %2183 = vmatpush1.bf16.msra.mxu0 %v1904
    %2184 = vmatprep.subr.bf16.mxu0 0
    %2185 = vmatpush1.bf16.msra.mxu0 0
    %2186 = vmatprep.subr.bf16.mxu0 0
    %2187 = vmatpush1.bf16.msra.mxu0 0
    %2188 = vmatprep.subr.bf16.mxu0 0
    %2189 = vmatpush1.bf16.msra.mxu0 0
    %2190 = vmatprep.subr.bf16.mxu0 0
    %2191 = vmatpush1.bf16.msra.mxu0 0
    %2192 = vmatprep.subr.bf16.mxu0 0
    %2193 = vmatpush1.bf16.msra.mxu0 0
    %2194 = vmatprep.subr.bf16.mxu0 0
    %2195 = vmatpush1.bf16.msra.mxu0 0
    %2196 = vmatprep.subr.bf16.mxu0 0
    %2197 = vmatpush1.bf16.msra.mxu0 0
    %2198 = vmatprep.subr.bf16.mxu0 0
    %2199 = vmatpush1.bf16.msra.mxu0 0
    %2200 = vmatprep.mubr.bf16.mxu0 0
    %2201 = vmatmul.mubr.bf16.gmra.mrb[0].mxu0 %v777
    %v2202 = vpop.f32.mrb[0].mxu0
    %v2203 = vadd.f32 %v1005, %v2202
    %v2204 = vpop.f32.mrb[0].mxu0
    %v2205 = vadd.f32 %v1009, %v2204
    %v2206 = vpop.f32.mrb[0].mxu0
    %v2207 = vpop.f32.mrb[0].mxu0
    %2208 = vdwg.mxu0
    %2209 = vmatprep.subr.bf16.mxu0 %v1732
    %2210 = vmatpush1.bf16.msra.mxu0 %v1731
    %2211 = vmatprep.subr.bf16.mxu0 %v1757
    %2212 = vmatpush1.bf16.msra.mxu0 %v1756
    %2213 = vmatprep.subr.bf16.mxu0 %v1782
    %2214 = vmatpush1.bf16.msra.mxu0 %v1781
    %2215 = vmatprep.subr.bf16.mxu0 %v1807
    %2216 = vmatpush1.bf16.msra.mxu0 %v1806
    %2217 = vmatprep.subr.bf16.mxu0 %v1832
    %2218 = vmatpush1.bf16.msra.mxu0 %v1831
    %2219 = vmatprep.subr.bf16.mxu0 %v1857
    %2220 = vmatpush1.bf16.msra.mxu0 %v1856
    %2221 = vmatprep.subr.bf16.mxu0 %v1882
    %2222 = vmatpush1.bf16.msra.mxu0 %v1881
    %2223 = vmatprep.subr.bf16.mxu0 %v1907
    %2224 = vmatpush1.bf16.msra.mxu0 %v1906
    %2225 = vmatprep.subr.bf16.mxu0 0
    %2226 = vmatpush1.bf16.msra.mxu0 0
    %2227 = vmatprep.subr.bf16.mxu0 0
    %2228 = vmatpush1.bf16.msra.mxu0 0
    %2229 = vmatprep.subr.bf16.mxu0 0
    %2230 = vmatpush1.bf16.msra.mxu0 0
    %2231 = vmatprep.subr.bf16.mxu0 0
    %2232 = vmatpush1.bf16.msra.mxu0 0
    %2233 = vmatprep.subr.bf16.mxu0 0
    %2234 = vmatpush1.bf16.msra.mxu0 0
    %2235 = vmatprep.subr.bf16.mxu0 0
    %2236 = vmatpush1.bf16.msra.mxu0 0
    %2237 = vmatprep.subr.bf16.mxu0 0
    %2238 = vmatpush1.bf16.msra.mxu0 0
    %2239 = vmatprep.subr.bf16.mxu0 0
    %2240 = vmatpush1.bf16.msra.mxu0 0
    %2241 = vmatprep.mubr.bf16.mxu0 0
    %2242 = vmatmul.mubr.bf16.gmra.mrb[0].mxu0 %v777
    %v2243 = vpop.f32.mrb[0].mxu0
    %v2244 = vadd.f32 %v1013, %v2243
    %v2245 = vpop.f32.mrb[0].mxu0
    %v2246 = vadd.f32 %v1017, %v2245
    %v2247 = vpop.f32.mrb[0].mxu0
    %v2248 = vpop.f32.mrb[0].mxu0
    %2249 = vdwg.mxu0
    %2250 = vmatprep.subr.bf16.mxu0 %v1734
    %2251 = vmatpush1.bf16.msra.mxu0 %v1733
    %2252 = vmatprep.subr.bf16.mxu0 %v1759
    %2253 = vmatpush1.bf16.msra.mxu0 %v1758
    %2254 = vmatprep.subr.bf16.mxu0 %v1784
    %2255 = vmatpush1.bf16.msra.mxu0 %v1783
    %2256 = vmatprep.subr.bf16.mxu0 %v1809
    %2257 = vmatpush1.bf16.msra.mxu0 %v1808
    %2258 = vmatprep.subr.bf16.mxu0 %v1834
    %2259 = vmatpush1.bf16.msra.mxu0 %v1833
    %2260 = vmatprep.subr.bf16.mxu0 %v1859
    %2261 = vmatpush1.bf16.msra.mxu0 %v1858
    %2262 = vmatprep.subr.bf16.mxu0 %v1884
    %2263 = vmatpush1.bf16.msra.mxu0 %v1883
    %2264 = vmatprep.subr.bf16.mxu0 %v1909
    %2265 = vmatpush1.bf16.msra.mxu0 %v1908
    %2266 = vmatprep.subr.bf16.mxu0 0
    %2267 = vmatpush1.bf16.msra.mxu0 0
    %2268 = vmatprep.subr.bf16.mxu0 0
    %2269 = vmatpush1.bf16.msra.mxu0 0
    %2270 = vmatprep.subr.bf16.mxu0 0
    %2271 = vmatpush1.bf16.msra.mxu0 0
    %2272 = vmatprep.subr.bf16.mxu0 0
    %2273 = vmatpush1.bf16.msra.mxu0 0
    %2274 = vmatprep.subr.bf16.mxu0 0
    %2275 = vmatpush1.bf16.msra.mxu0 0
    %2276 = vmatprep.subr.bf16.mxu0 0
    %2277 = vmatpush1.bf16.msra.mxu0 0
    %2278 = vmatprep.subr.bf16.mxu0 0
    %2279 = vmatpush1.bf16.msra.mxu0 0
    %2280 = vmatprep.subr.bf16.mxu0 0
    %2281 = vmatpush1.bf16.msra.mxu0 0
    %2282 = vmatprep.mubr.bf16.mxu0 0
    %2283 = vmatmul.mubr.bf16.gmra.mrb[0].mxu0 %v777
    %v2284 = vpop.f32.mrb[0].mxu0
    %v2285 = vadd.f32 %v1021, %v2284
    %v2286 = vpop.f32.mrb[0].mxu0
    %v2287 = vadd.f32 %v1025, %v2286
    %v2288 = vpop.f32.mrb[0].mxu0
    %v2289 = vpop.f32.mrb[0].mxu0
    %2290 = vdwg.mxu0
    %2291 = vmatprep.subr.bf16.mxu0 %v1736
    %2292 = vmatpush1.bf16.msra.mxu0 %v1735
    %2293 = vmatprep.subr.bf16.mxu0 %v1761
    %2294 = vmatpush1.bf16.msra.mxu0 %v1760
    %2295 = vmatprep.subr.bf16.mxu0 %v1786
    %2296 = vmatpush1.bf16.msra.mxu0 %v1785
    %2297 = vmatprep.subr.bf16.mxu0 %v1811
    %2298 = vmatpush1.bf16.msra.mxu0 %v1810
    %2299 = vmatprep.subr.bf16.mxu0 %v1836
    %2300 = vmatpush1.bf16.msra.mxu0 %v1835
    %2301 = vmatprep.subr.bf16.mxu0 %v1861
    %2302 = vmatpush1.bf16.msra.mxu0 %v1860
    %2303 = vmatprep.subr.bf16.mxu0 %v1886
    %2304 = vmatpush1.bf16.msra.mxu0 %v1885
    %2305 = vmatprep.subr.bf16.mxu0 %v1911
    %2306 = vmatpush1.bf16.msra.mxu0 %v1910
    %2307 = vmatprep.subr.bf16.mxu0 0
    %2308 = vmatpush1.bf16.msra.mxu0 0
    %2309 = vmatprep.subr.bf16.mxu0 0
    %2310 = vmatpush1.bf16.msra.mxu0 0
    %2311 = vmatprep.subr.bf16.mxu0 0
    %2312 = vmatpush1.bf16.msra.mxu0 0
    %2313 = vmatprep.subr.bf16.mxu0 0
    %2314 = vmatpush1.bf16.msra.mxu0 0
    %2315 = vmatprep.subr.bf16.mxu0 0
    %2316 = vmatpush1.bf16.msra.mxu0 0
    %2317 = vmatprep.subr.bf16.mxu0 0
    %2318 = vmatpush1.bf16.msra.mxu0 0
    %2319 = vmatprep.subr.bf16.mxu0 0
    %2320 = vmatpush1.bf16.msra.mxu0 0
    %2321 = vmatprep.subr.bf16.mxu0 0
    %2322 = vmatpush1.bf16.msra.mxu0 0
    %2323 = vmatprep.mubr.bf16.mxu0 0
    %2324 = vmatmul.mubr.bf16.gmra.mrb[0].mxu0 %v777
    %v2325 = vpop.f32.mrb[0].mxu0
    %v2326 = vadd.f32 %v1029, %v2325
    %v2327 = vpop.f32.mrb[0].mxu0
    %v2328 = vadd.f32 %v1033, %v2327
    %v2329 = vpop.f32.mrb[0].mxu0
    %v2330 = vpop.f32.mrb[0].mxu0
    %2331 = vdwg.mxu0
    %2332 = vmatprep.subr.bf16.mxu0 %v1738
    %2333 = vmatpush1.bf16.msra.mxu0 %v1737
    %2334 = vmatprep.subr.bf16.mxu0 %v1763
    %2335 = vmatpush1.bf16.msra.mxu0 %v1762
    %2336 = vmatprep.subr.bf16.mxu0 %v1788
    %2337 = vmatpush1.bf16.msra.mxu0 %v1787
    %2338 = vmatprep.subr.bf16.mxu0 %v1813
    %2339 = vmatpush1.bf16.msra.mxu0 %v1812
    %2340 = vmatprep.subr.bf16.mxu0 %v1838
    %2341 = vmatpush1.bf16.msra.mxu0 %v1837
    %2342 = vmatprep.subr.bf16.mxu0 %v1863
    %2343 = vmatpush1.bf16.msra.mxu0 %v1862
    %2344 = vmatprep.subr.bf16.mxu0 %v1888
    %2345 = vmatpush1.bf16.msra.mxu0 %v1887
    %2346 = vmatprep.subr.bf16.mxu0 %v1913
    %2347 = vmatpush1.bf16.msra.mxu0 %v1912
    %2348 = vmatprep.subr.bf16.mxu0 0
    %2349 = vmatpush1.bf16.msra.mxu0 0
    %2350 = vmatprep.subr.bf16.mxu0 0
    %2351 = vmatpush1.bf16.msra.mxu0 0
    %2352 = vmatprep.subr.bf16.mxu0 0
    %2353 = vmatpush1.bf16.msra.mxu0 0
    %2354 = vmatprep.subr.bf16.mxu0 0
    %2355 = vmatpush1.bf16.msra.mxu0 0
    %2356 = vmatprep.subr.bf16.mxu0 0
    %2357 = vmatpush1.bf16.msra.mxu0 0
    %2358 = vmatprep.subr.bf16.mxu0 0
    %2359 = vmatpush1.bf16.msra.mxu0 0
    %2360 = vmatprep.subr.bf16.mxu0 0
    %2361 = vmatpush1.bf16.msra.mxu0 0
    %2362 = vmatprep.subr.bf16.mxu0 0
    %2363 = vmatpush1.bf16.msra.mxu0 0
    %2364 = vmatprep.mubr.bf16.mxu0 0
    %2365 = vmatmul.mubr.bf16.gmra.mrb[0].mxu0 %v777
    %v2366 = vpop.f32.mrb[0].mxu0
    %v2367 = vadd.f32 %v1037, %v2366
    %v2368 = vpop.f32.mrb[0].mxu0
    %v2369 = vadd.f32 %v1041, %v2368
    %v2370 = vpop.f32.mrb[0].mxu0
    %v2371 = vpop.f32.mrb[0].mxu0
    %2372 = vdwg.mxu0
    %2373 = vmatprep.subr.bf16.mxu0 %v1740
    %2374 = vmatpush1.bf16.msra.mxu0 %v1739
    %2375 = vmatprep.subr.bf16.mxu0 %v1765
    %2376 = vmatpush1.bf16.msra.mxu0 %v1764
    %2377 = vmatprep.subr.bf16.mxu0 %v1790
    %2378 = vmatpush1.bf16.msra.mxu0 %v1789
    %2379 = vmatprep.subr.bf16.mxu0 %v1815
    %2380 = vmatpush1.bf16.msra.mxu0 %v1814
    %2381 = vmatprep.subr.bf16.mxu0 %v1840
    %2382 = vmatpush1.bf16.msra.mxu0 %v1839
    %2383 = vmatprep.subr.bf16.mxu0 %v1865
    %2384 = vmatpush1.bf16.msra.mxu0 %v1864
    %2385 = vmatprep.subr.bf16.mxu0 %v1890
    %2386 = vmatpush1.bf16.msra.mxu0 %v1889
    %2387 = vmatprep.subr.bf16.mxu0 %v1915
    %2388 = vmatpush1.bf16.msra.mxu0 %v1914
    %2389 = vmatprep.subr.bf16.mxu0 0
    %2390 = vmatpush1.bf16.msra.mxu0 0
    %2391 = vmatprep.subr.bf16.mxu0 0
    %2392 = vmatpush1.bf16.msra.mxu0 0
    %2393 = vmatprep.subr.bf16.mxu0 0
    %2394 = vmatpush1.bf16.msra.mxu0 0
    %2395 = vmatprep.subr.bf16.mxu0 0
    %2396 = vmatpush1.bf16.msra.mxu0 0
    %2397 = vmatprep.subr.bf16.mxu0 0
    %2398 = vmatpush1.bf16.msra.mxu0 0
    %2399 = vmatprep.subr.bf16.mxu0 0
    %2400 = vmatpush1.bf16.msra.mxu0 0
    %2401 = vmatprep.subr.bf16.mxu0 0
    %2402 = vmatpush1.bf16.msra.mxu0 0
    %2403 = vmatprep.subr.bf16.mxu0 0
    %2404 = vmatpush1.bf16.msra.mxu0 0
    %2405 = vmatprep.mubr.bf16.mxu0 0
    %2406 = vmatmul.mubr.bf16.gmra.mrb[0].mxu0 %v777
    %v2407 = vpop.f32.mrb[0].mxu0
    %v2408 = vadd.f32 %v1045, %v2407
    %v2409 = vpop.f32.mrb[0].mxu0
    %v2410 = vadd.f32 %v1049, %v2409
    %v2411 = vpop.f32.mrb[0].mxu0
    %v2412 = vpop.f32.mrb[0].mxu0
    %2413 = vdwg.mxu0
    %2414 = vmatprep.subr.bf16.mxu0 %v1742
    %2415 = vmatpush1.bf16.msra.mxu0 %v1741
    %2416 = vmatprep.subr.bf16.mxu0 %v1767
    %2417 = vmatpush1.bf16.msra.mxu0 %v1766
    %2418 = vmatprep.subr.bf16.mxu0 %v1792
    %2419 = vmatpush1.bf16.msra.mxu0 %v1791
    %2420 = vmatprep.subr.bf16.mxu0 %v1817
    %2421 = vmatpush1.bf16.msra.mxu0 %v1816
    %2422 = vmatprep.subr.bf16.mxu0 %v1842
    %2423 = vmatpush1.bf16.msra.mxu0 %v1841
    %2424 = vmatprep.subr.bf16.mxu0 %v1867
    %2425 = vmatpush1.bf16.msra.mxu0 %v1866
    %2426 = vmatprep.subr.bf16.mxu0 %v1892
    %2427 = vmatpush1.bf16.msra.mxu0 %v1891
    %2428 = vmatprep.subr.bf16.mxu0 %v1917
    %2429 = vmatpush1.bf16.msra.mxu0 %v1916
    %2430 = vmatprep.subr.bf16.mxu0 0
    %2431 = vmatpush1.bf16.msra.mxu0 0
    %2432 = vmatprep.subr.bf16.mxu0 0
    %2433 = vmatpush1.bf16.msra.mxu0 0
    %2434 = vmatprep.subr.bf16.mxu0 0
    %2435 = vmatpush1.bf16.msra.mxu0 0
    %2436 = vmatprep.subr.bf16.mxu0 0
    %2437 = vmatpush1.bf16.msra.mxu0 0
    %2438 = vmatprep.subr.bf16.mxu0 0
    %2439 = vmatpush1.bf16.msra.mxu0 0
    %2440 = vmatprep.subr.bf16.mxu0 0
    %2441 = vmatpush1.bf16.msra.mxu0 0
    %2442 = vmatprep.subr.bf16.mxu0 0
    %2443 = vmatpush1.bf16.msra.mxu0 0
    %2444 = vmatprep.subr.bf16.mxu0 0
    %2445 = vmatpush1.bf16.msra.mxu0 0
    %2446 = vmatprep.mubr.bf16.mxu0 0
    %2447 = vmatmul.mubr.bf16.gmra.mrb[0].mxu0 %v777
    %v2448 = vpop.f32.mrb[0].mxu0
    %v2449 = vadd.f32 %v1053, %v2448
    %v2450 = vpop.f32.mrb[0].mxu0
    %v2451 = vadd.f32 %v1057, %v2450
    %v2452 = vpop.f32.mrb[0].mxu0
    %v2453 = vpop.f32.mrb[0].mxu0
    %2454 = vdwg.mxu0
    %2455 = vmatprep.subr.bf16.mxu0 %v1744
    %2456 = vmatpush1.bf16.msra.mxu0 %v1743
    %2457 = vmatprep.subr.bf16.mxu0 %v1769
    %2458 = vmatpush1.bf16.msra.mxu0 %v1768
    %2459 = vmatprep.subr.bf16.mxu0 %v1794
    %2460 = vmatpush1.bf16.msra.mxu0 %v1793
    %2461 = vmatprep.subr.bf16.mxu0 %v1819
    %2462 = vmatpush1.bf16.msra.mxu0 %v1818
    %2463 = vmatprep.subr.bf16.mxu0 %v1844
    %2464 = vmatpush1.bf16.msra.mxu0 %v1843
    %2465 = vmatprep.subr.bf16.mxu0 %v1869
    %2466 = vmatpush1.bf16.msra.mxu0 %v1868
    %2467 = vmatprep.subr.bf16.mxu0 %v1894
    %2468 = vmatpush1.bf16.msra.mxu0 %v1893
    %2469 = vmatprep.subr.bf16.mxu0 %v1919
    %2470 = vmatpush1.bf16.msra.mxu0 %v1918
    %2471 = vmatprep.subr.bf16.mxu0 0
    %2472 = vmatpush1.bf16.msra.mxu0 0
    %2473 = vmatprep.subr.bf16.mxu0 0
    %2474 = vmatpush1.bf16.msra.mxu0 0
    %2475 = vmatprep.subr.bf16.mxu0 0
    %2476 = vmatpush1.bf16.msra.mxu0 0
    %2477 = vmatprep.subr.bf16.mxu0 0
    %2478 = vmatpush1.bf16.msra.mxu0 0
    %2479 = vmatprep.subr.bf16.mxu0 0
    %2480 = vmatpush1.bf16.msra.mxu0 0
    %2481 = vmatprep.subr.bf16.mxu0 0
    %2482 = vmatpush1.bf16.msra.mxu0 0
    %2483 = vmatprep.subr.bf16.mxu0 0
    %2484 = vmatpush1.bf16.msra.mxu0 0
    %2485 = vmatprep.subr.bf16.mxu0 0
    %2486 = vmatpush1.bf16.msra.mxu0 0
    %2487 = vmatprep.mubr.bf16.mxu0 0
    %2488 = vmatmul.mubr.bf16.gmra.mrb[0].mxu0 %v777
    %v2489 = vpop.f32.mrb[0].mxu0
    %v2490 = vadd.f32 %v1061, %v2489
    %v2491 = vpop.f32.mrb[0].mxu0
    %v2492 = vadd.f32 %v1065, %v2491
    %v2493 = vpop.f32.mrb[0].mxu0
    %v2494 = vpop.f32.mrb[0].mxu0
    %2495 = vdwg.mxu0
    %2496 = vmatprep.subr.bf16.mxu0 %v1746
    %2497 = vmatpush1.bf16.msra.mxu0 %v1745
    %2498 = vmatprep.subr.bf16.mxu0 %v1771
    %2499 = vmatpush1.bf16.msra.mxu0 %v1770
    %2500 = vmatprep.subr.bf16.mxu0 %v1796
    %2501 = vmatpush1.bf16.msra.mxu0 %v1795
    %2502 = vmatprep.subr.bf16.mxu0 %v1821
    %2503 = vmatpush1.bf16.msra.mxu0 %v1820
    %2504 = vmatprep.subr.bf16.mxu0 %v1846
    %2505 = vmatpush1.bf16.msra.mxu0 %v1845
    %2506 = vmatprep.subr.bf16.mxu0 %v1871
    %2507 = vmatpush1.bf16.msra.mxu0 %v1870
    %2508 = vmatprep.subr.bf16.mxu0 %v1896
    %2509 = vmatpush1.bf16.msra.mxu0 %v1895
    %2510 = vmatprep.subr.bf16.mxu0 %v1921
    %2511 = vmatpush1.bf16.msra.mxu0 %v1920
    %2512 = vmatprep.subr.bf16.mxu0 0
    %2513 = vmatpush1.bf16.msra.mxu0 0
    %2514 = vmatprep.subr.bf16.mxu0 0
    %2515 = vmatpush1.bf16.msra.mxu0 0
    %2516 = vmatprep.subr.bf16.mxu0 0
    %2517 = vmatpush1.bf16.msra.mxu0 0
    %2518 = vmatprep.subr.bf16.mxu0 0
    %2519 = vmatpush1.bf16.msra.mxu0 0
    %2520 = vmatprep.subr.bf16.mxu0 0
    %2521 = vmatpush1.bf16.msra.mxu0 0
    %2522 = vmatprep.subr.bf16.mxu0 0
    %2523 = vmatpush1.bf16.msra.mxu0 0
    %2524 = vmatprep.subr.bf16.mxu0 0
    %2525 = vmatpush1.bf16.msra.mxu0 0
    %2526 = vmatprep.subr.bf16.mxu0 0
    %2527 = vmatpush1.bf16.msra.mxu0 0
    %2528 = vmatprep.mubr.bf16.mxu0 0
    %2529 = vmatmul.mubr.bf16.gmra.mrb[0].mxu0 %v777
    %v2530 = vpop.f32.mrb[0].mxu0
    %v2531 = vadd.f32 %v1069, %v2530
    %v2532 = vpop.f32.mrb[0].mxu0
    %v2533 = vadd.f32 %v1073, %v2532
    %v2534 = vpop.f32.mrb[0].mxu0
    %v2535 = vpop.f32.mrb[0].mxu0
    %2536 = vdwg.mxu0
    %2537 = vmatprep.subr.bf16.mxu0 %v1748
    %2538 = vmatpush1.bf16.msra.mxu0 %v1747
    %2539 = vmatprep.subr.bf16.mxu0 %v1773
    %2540 = vmatpush1.bf16.msra.mxu0 %v1772
    %2541 = vmatprep.subr.bf16.mxu0 %v1798
    %2542 = vmatpush1.bf16.msra.mxu0 %v1797
    %2543 = vmatprep.subr.bf16.mxu0 %v1823
    %2544 = vmatpush1.bf16.msra.mxu0 %v1822
    %2545 = vmatprep.subr.bf16.mxu0 %v1848
    %2546 = vmatpush1.bf16.msra.mxu0 %v1847
    %2547 = vmatprep.subr.bf16.mxu0 %v1873
    %2548 = vmatpush1.bf16.msra.mxu0 %v1872
    %2549 = vmatprep.subr.bf16.mxu0 %v1898
    %2550 = vmatpush1.bf16.msra.mxu0 %v1897
    %2551 = vmatprep.subr.bf16.mxu0 %v1923
    %2552 = vmatpush1.bf16.msra.mxu0 %v1922
    %2553 = vmatprep.subr.bf16.mxu0 0
    %2554 = vmatpush1.bf16.msra.mxu0 0
    %2555 = vmatprep.subr.bf16.mxu0 0
    %2556 = vmatpush1.bf16.msra.mxu0 0
    %2557 = vmatprep.subr.bf16.mxu0 0
    %2558 = vmatpush1.bf16.msra.mxu0 0
    %2559 = vmatprep.subr.bf16.mxu0 0
    %2560 = vmatpush1.bf16.msra.mxu0 0
    %2561 = vmatprep.subr.bf16.mxu0 0
    %2562 = vmatpush1.bf16.msra.mxu0 0
    %2563 = vmatprep.subr.bf16.mxu0 0
    %2564 = vmatpush1.bf16.msra.mxu0 0
    %2565 = vmatprep.subr.bf16.mxu0 0
    %2566 = vmatpush1.bf16.msra.mxu0 0
    %2567 = vmatprep.subr.bf16.mxu0 0
    %2568 = vmatpush1.bf16.msra.mxu0 0
    %2569 = vmatprep.mubr.bf16.mxu0 0
    %2570 = vmatmul.mubr.bf16.gmra.mrb[0].mxu0 %v777
    %v2571 = vpop.f32.mrb[0].mxu0
    %v2572 = vadd.f32 %v1077, %v2571
    %v2573 = vpop.f32.mrb[0].mxu0
    %v2574 = vadd.f32 %v1081, %v2573
    %v2575 = vpop.f32.mrb[0].mxu0
    %v2576 = vpop.f32.mrb[0].mxu0
    %2577 = vdwg.mxu0
    %2578 = vmatprep.subr.bf16.mxu0 %v1750
    %2579 = vmatpush1.bf16.msra.mxu0 %v1749
    %2580 = vmatprep.subr.bf16.mxu0 %v1775
    %2581 = vmatpush1.bf16.msra.mxu0 %v1774
    %2582 = vmatprep.subr.bf16.mxu0 %v1800
    %2583 = vmatpush1.bf16.msra.mxu0 %v1799
    %2584 = vmatprep.subr.bf16.mxu0 %v1825
    %2585 = vmatpush1.bf16.msra.mxu0 %v1824
    %2586 = vmatprep.subr.bf16.mxu0 %v1850
    %2587 = vmatpush1.bf16.msra.mxu0 %v1849
    %2588 = vmatprep.subr.bf16.mxu0 %v1875
    %2589 = vmatpush1.bf16.msra.mxu0 %v1874
    %2590 = vmatprep.subr.bf16.mxu0 %v1900
    %2591 = vmatpush1.bf16.msra.mxu0 %v1899
    %2592 = vmatprep.subr.bf16.mxu0 %v1925
    %2593 = vmatpush1.bf16.msra.mxu0 %v1924
    %2594 = vmatprep.subr.bf16.mxu0 0
    %2595 = vmatpush1.bf16.msra.mxu0 0
    %2596 = vmatprep.subr.bf16.mxu0 0
    %2597 = vmatpush1.bf16.msra.mxu0 0
    %2598 = vmatprep.subr.bf16.mxu0 0
    %2599 = vmatpush1.bf16.msra.mxu0 0
    %2600 = vmatprep.subr.bf16.mxu0 0
    %2601 = vmatpush1.bf16.msra.mxu0 0
    %2602 = vmatprep.subr.bf16.mxu0 0
    %2603 = vmatpush1.bf16.msra.mxu0 0
    %2604 = vmatprep.subr.bf16.mxu0 0
    %2605 = vmatpush1.bf16.msra.mxu0 0
    %2606 = vmatprep.subr.bf16.mxu0 0
    %2607 = vmatpush1.bf16.msra.mxu0 0
    %2608 = vmatprep.subr.bf16.mxu0 0
    %2609 = vmatpush1.bf16.msra.mxu0 0
    %2610 = vmatprep.mubr.bf16.mxu0 0
    %2611 = vmatmul.mubr.bf16.gmra.mrb[0].mxu0 %v777
    %v2612 = vpop.f32.mrb[0].mxu0
    %v2613 = vadd.f32 %v1085, %v2612
    %v2614 = vpop.f32.mrb[0].mxu0
    %v2615 = vadd.f32 %v1089, %v2614
    %v2616 = vpop.f32.mrb[0].mxu0
    %v2617 = vpop.f32.mrb[0].mxu0
    %2618 = vdwg.mxu0
    %2619 = vmatprep.subr.bf16.mxu0 0
    %2620 = vmatpush1.bf16.msra.mxu0 %v1751
    %2621 = vmatprep.subr.bf16.mxu0 0
    %2622 = vmatpush1.bf16.msra.mxu0 %v1776
    %2623 = vmatprep.subr.bf16.mxu0 0
    %2624 = vmatpush1.bf16.msra.mxu0 %v1801
    %2625 = vmatprep.subr.bf16.mxu0 0
    %2626 = vmatpush1.bf16.msra.mxu0 %v1826
    %2627 = vmatprep.subr.bf16.mxu0 0
    %2628 = vmatpush1.bf16.msra.mxu0 %v1851
    %2629 = vmatprep.subr.bf16.mxu0 0
    %2630 = vmatpush1.bf16.msra.mxu0 %v1876
    %2631 = vmatprep.subr.bf16.mxu0 0
    %2632 = vmatpush1.bf16.msra.mxu0 %v1901
    %2633 = vmatprep.subr.bf16.mxu0 0
    %2634 = vmatpush1.bf16.msra.mxu0 %v1926
    %2635 = vmatprep.subr.bf16.mxu0 0
    %2636 = vmatpush1.bf16.msra.mxu0 0
    %2637 = vmatprep.subr.bf16.mxu0 0
    %2638 = vmatpush1.bf16.msra.mxu0 0
    %2639 = vmatprep.subr.bf16.mxu0 0
    %2640 = vmatpush1.bf16.msra.mxu0 0
    %2641 = vmatprep.subr.bf16.mxu0 0
    %2642 = vmatpush1.bf16.msra.mxu0 0
    %2643 = vmatprep.subr.bf16.mxu0 0
    %2644 = vmatpush1.bf16.msra.mxu0 0
    %2645 = vmatprep.subr.bf16.mxu0 0
    %2646 = vmatpush1.bf16.msra.mxu0 0
    %2647 = vmatprep.subr.bf16.mxu0 0
    %2648 = vmatpush1.bf16.msra.mxu0 0
    %2649 = vmatprep.subr.bf16.mxu0 0
    %2650 = vmatpush1.bf16.msra.mxu0 0
    %2651 = vmatprep.mubr.bf16.mxu0 0
    %2652 = vmatmul.mubr.bf16.gmra.mrb[0].mxu0 %v777
    %v2653 = vpop.f32.mrb[0].mxu0
    %v2654 = vadd.f32 %v1093, %v2653
    %v2655 = vpop.f32.mrb[0].mxu0
    %v2656 = vpop.f32.mrb[0].mxu0
    %v2657 = vpop.f32.mrb[0].mxu0
    %2658 = vdwg.mxu0
    %v2659 = vmax.f32 %v2162, 0.0
    %v2660 = vmax.f32 %v2164, 0.0
    %v2661 = vmax.f32 %v2203, 0.0
    %v2662 = vmax.f32 %v2205, 0.0
    %v2663 = vmax.f32 %v2244, 0.0
    %v2664 = vmax.f32 %v2246, 0.0
    %v2665 = vmax.f32 %v2285, 0.0
    %v2666 = vmax.f32 %v2287, 0.0
    %v2667 = vmax.f32 %v2326, 0.0
    %v2668 = vmax.f32 %v2328, 0.0
    %v2669 = vmax.f32 %v2367, 0.0
    %v2670 = vmax.f32 %v2369, 0.0
    %v2671 = vmax.f32 %v2408, 0.0
    %v2672 = vmax.f32 %v2410, 0.0
    %v2673 = vmax.f32 %v2449, 0.0
    %v2674 = vmax.f32 %v2451, 0.0
    %v2675 = vmax.f32 %v2490, 0.0
    %v2676 = vmax.f32 %v2492, 0.0
    %v2677 = vmax.f32 %v2531, 0.0
    %v2678 = vmax.f32 %v2533, 0.0
    %v2679 = vmax.f32 %v2572, 0.0
    %v2680 = vmax.f32 %v2574, 0.0
    %v2681 = vmax.f32 %v2613, 0.0
    %v2682 = vmax.f32 %v2615, 0.0
    %v2683 = vmax.f32 %v2654, 0.0
    %v2684 = vpack.c.bf16 %v2659, %v2659
    %v2685 = vpack.c.bf16 %v2660, %v2660
    %v2686 = vpack.c.bf16 %v2661, %v2661
    %v2687 = vpack.c.bf16 %v2662, %v2662
    %v2688 = vpack.c.bf16 %v2663, %v2663
    %v2689 = vpack.c.bf16 %v2664, %v2664
    %v2690 = vpack.c.bf16 %v2665, %v2665
    %v2691 = vpack.c.bf16 %v2666, %v2666
    %v2692 = vpack.c.bf16 %v2667, %v2667
    %v2693 = vpack.c.bf16 %v2668, %v2668
    %v2694 = vpack.c.bf16 %v2669, %v2669
    %v2695 = vpack.c.bf16 %v2670, %v2670
    %v2696 = vpack.c.bf16 %v2671, %v2671
    %v2697 = vpack.c.bf16 %v2672, %v2672
    %v2698 = vpack.c.bf16 %v2673, %v2673
    %v2699 = vpack.c.bf16 %v2674, %v2674
    %v2700 = vpack.c.bf16 %v2675, %v2675
    %v2701 = vpack.c.bf16 %v2676, %v2676
    %v2702 = vpack.c.bf16 %v2677, %v2677
    %v2703 = vpack.c.bf16 %v2678, %v2678
    %v2704 = vpack.c.bf16 %v2679, %v2679
    %v2705 = vpack.c.bf16 %v2680, %v2680
    %v2706 = vpack.c.bf16 %v2681, %v2681
    %v2707 = vpack.c.bf16 %v2682, %v2682
    %v2708 = vpack.c.bf16 %v2683, %v2683
    %v2709 = vld [vmem:[#allocation7] sm:$0xff]
    %v2710 = vld [vmem:[#allocation7 + $0x8] sm:$0xff]
    %v2711 = vld [vmem:[#allocation7 + $0x10] sm:$0xff]
    %v2712 = vld [vmem:[#allocation7 + $0x18] sm:$0xff]
    %v2713 = vld [vmem:[#allocation7 + $0x20] sm:$0xff]
    %v2714 = vld [vmem:[#allocation7 + $0x28] sm:$0xff]
    %v2715 = vld [vmem:[#allocation7 + $0x30] sm:$0xff]
    %v2716 = vld [vmem:[#allocation7 + $0x38] sm:$0xff]
    %v2717 = vld [vmem:[#allocation7 + $0x40] sm:$0xff]
    %v2718 = vld [vmem:[#allocation7 + $0x48] sm:$0xff]
    %v2719 = vld [vmem:[#allocation7 + $0x50] sm:$0xff]
    %v2720 = vld [vmem:[#allocation7 + $0x58] sm:$0xff]
    %v2721 = vld [vmem:[#allocation7 + $0x60] sm:$0xff]
    %v2722 = vld [vmem:[#allocation7 + $0x68] sm:$0xff]
    %v2723 = vld [vmem:[#allocation7 + $0x70] sm:$0xff]
    %v2724 = vld [vmem:[#allocation7 + $0x78] sm:$0xff]
    %v2725 = vld [vmem:[#allocation7 + $0x80] sm:$0xff]
    %v2726 = vld [vmem:[#allocation7 + $0x88] sm:$0xff]
    %v2727 = vld [vmem:[#allocation7 + $0x90] sm:$0xff]
    %v2728 = vld [vmem:[#allocation7 + $0x98] sm:$0xff]
    %v2729 = vld [vmem:[#allocation7 + $0xa0] sm:$0xff]
    %v2730 = vld [vmem:[#allocation7 + $0xa8] sm:$0xff]
    %v2731 = vld [vmem:[#allocation7 + $0xb0] sm:$0xff]
    %v2732 = vld [vmem:[#allocation7 + $0xb8] sm:$0xff]
    %v2733 = vld [vmem:[#allocation7 + $0xc0] sm:$0xff]
    %v2734 = vld [vmem:[#allocation7 + $0xc8] sm:$0xff]
    %v2735 = vld [vmem:[#allocation7 + $0xd0] sm:$0xff]
    %v2736 = vld [vmem:[#allocation7 + $0xd8] sm:$0xff]
    %v2737 = vld [vmem:[#allocation7 + $0xe0] sm:$0xff]
    %v2738 = vld [vmem:[#allocation7 + $0xe8] sm:$0xff]
    %v2739 = vld [vmem:[#allocation7 + $0xf0] sm:$0xff]
    %v2740 = vld [vmem:[#allocation7 + $0xf8] sm:$0xff]
    %v2741 = vld [vmem:[#allocation7 + $0x100] sm:$0xff]
    %v2742 = vld [vmem:[#allocation7 + $0x108] sm:$0xff]
    %v2743 = vld [vmem:[#allocation7 + $0x110] sm:$0xff]
    %v2744 = vld [vmem:[#allocation7 + $0x118] sm:$0xff]
    %v2745 = vld [vmem:[#allocation7 + $0x120] sm:$0xff]
    %v2746 = vld [vmem:[#allocation7 + $0x128] sm:$0xff]
    %v2747 = vld [vmem:[#allocation7 + $0x130] sm:$0xff]
    %v2748 = vld [vmem:[#allocation7 + $0x138] sm:$0xff]
    %v2749 = vld [vmem:[#allocation7 + $0x140] sm:$0xff]
    %v2750 = vld [vmem:[#allocation7 + $0x148] sm:$0xff]
    %v2751 = vld [vmem:[#allocation7 + $0x150] sm:$0xff]
    %v2752 = vld [vmem:[#allocation7 + $0x158] sm:$0xff]
    %v2753 = vld [vmem:[#allocation7 + $0x160] sm:$0xff]
    %v2754 = vld [vmem:[#allocation7 + $0x168] sm:$0xff]
    %v2755 = vld [vmem:[#allocation7 + $0x170] sm:$0xff]
    %v2756 = vld [vmem:[#allocation7 + $0x178] sm:$0xff]
    %v2757 = vld [vmem:[#allocation7 + $0x180] sm:$0xff]
    %v2758 = vld [vmem:[#allocation7 + $0x188] sm:$0xff]
    %v2759 = vld [vmem:[#allocation7 + $0x190] sm:$0xff]
    %v2760 = vld [vmem:[#allocation7 + $0x198] sm:$0xff]
    %v2761 = vld [vmem:[#allocation7 + $0x1a0] sm:$0xff]
    %v2762 = vld [vmem:[#allocation7 + $0x1a8] sm:$0xff]
    %v2763 = vld [vmem:[#allocation7 + $0x1b0] sm:$0xff]
    %v2764 = vld [vmem:[#allocation7 + $0x1b8] sm:$0xff]
    %v2765 = vld [vmem:[#allocation7 + $0x1c0] sm:$0xff]
    %v2766 = vld [vmem:[#allocation7 + $0x1c8] sm:$0xff]
    %v2767 = vld [vmem:[#allocation7 + $0x1d0] sm:$0xff]
    %v2768 = vld [vmem:[#allocation7 + $0x1d8] sm:$0xff]
    %v2769 = vld [vmem:[#allocation7 + $0x1e0] sm:$0xff]
    %v2770 = vld [vmem:[#allocation7 + $0x1e8] sm:$0xff]
    %v2771 = vld [vmem:[#allocation7 + $0x1f0] sm:$0xff]
    %v2772 = vld [vmem:[#allocation7 + $0x1f8] sm:$0xff]
    %v2773 = vld [vmem:[#allocation7 + $0x200] sm:$0xff]
    %v2774 = vld [vmem:[#allocation7 + $0x208] sm:$0xff]
    %v2775 = vld [vmem:[#allocation7 + $0x210] sm:$0xff]
    %v2776 = vld [vmem:[#allocation7 + $0x218] sm:$0xff]
    %v2777 = vld [vmem:[#allocation7 + $0x220] sm:$0xff]
    %v2778 = vld [vmem:[#allocation7 + $0x228] sm:$0xff]
    %v2779 = vld [vmem:[#allocation7 + $0x230] sm:$0xff]
    %v2780 = vld [vmem:[#allocation7 + $0x238] sm:$0xff]
    %v2781 = vld [vmem:[#allocation7 + $0x240] sm:$0xff]
    %v2782 = vld [vmem:[#allocation7 + $0x248] sm:$0xff]
    %v2783 = vld [vmem:[#allocation7 + $0x250] sm:$0xff]
    %v2784 = vld [vmem:[#allocation7 + $0x258] sm:$0xff]
    %v2785 = vld [vmem:[#allocation7 + $0x260] sm:$0xff]
    %v2786 = vld [vmem:[#allocation7 + $0x268] sm:$0xff]
    %v2787 = vld [vmem:[#allocation7 + $0x270] sm:$0xff]
    %v2788 = vld [vmem:[#allocation7 + $0x278] sm:$0xff]
    %v2789 = vld [vmem:[#allocation7 + $0x280] sm:$0xff]
    %v2790 = vld [vmem:[#allocation7 + $0x288] sm:$0xff]
    %v2791 = vld [vmem:[#allocation7 + $0x290] sm:$0xff]
    %v2792 = vld [vmem:[#allocation7 + $0x298] sm:$0xff]
    %v2793 = vld [vmem:[#allocation7 + $0x2a0] sm:$0xff]
    %v2794 = vld [vmem:[#allocation7 + $0x2a8] sm:$0xff]
    %v2795 = vld [vmem:[#allocation7 + $0x2b0] sm:$0xff]
    %v2796 = vld [vmem:[#allocation7 + $0x2b8] sm:$0xff]
    %v2797 = vld [vmem:[#allocation7 + $0x2c0] sm:$0xff]
    %v2798 = vld [vmem:[#allocation7 + $0x2c8] sm:$0xff]
    %v2799 = vld [vmem:[#allocation7 + $0x2d0] sm:$0xff]
    %v2800 = vld [vmem:[#allocation7 + $0x2d8] sm:$0xff]
    %v2801 = vld [vmem:[#allocation7 + $0x2e0] sm:$0xff]
    %v2802 = vld [vmem:[#allocation7 + $0x2e8] sm:$0xff]
    %v2803 = vld [vmem:[#allocation7 + $0x2f0] sm:$0xff]
    %v2804 = vld [vmem:[#allocation7 + $0x2f8] sm:$0xff]
    %v2805 = vld [vmem:[#allocation7 + $0x300] sm:$0xff]
    %v2806 = vld [vmem:[#allocation7 + $0x308] sm:$0xff]
    %v2807 = vld [vmem:[#allocation7 + $0x310] sm:$0xff]
    %v2808 = vld [vmem:[#allocation7 + $0x318] sm:$0xff]
    %v2809 = vld [vmem:[#allocation7 + $0x320] sm:$0xff]
    %v2810 = vld [vmem:[#allocation7 + $0x328] sm:$0xff]
    %v2811 = vld [vmem:[#allocation7 + $0x330] sm:$0xff]
    %v2812 = vld [vmem:[#allocation7 + $0x338] sm:$0xff]
    %v2813 = vld [vmem:[#allocation7 + $0x340] sm:$0xff]
    %v2814 = vld [vmem:[#allocation7 + $0x348] sm:$0xff]
    %v2815 = vld [vmem:[#allocation7 + $0x350] sm:$0xff]
    %v2816 = vld [vmem:[#allocation7 + $0x358] sm:$0xff]
    %v2817 = vld [vmem:[#allocation7 + $0x360] sm:$0xff]
    %v2818 = vld [vmem:[#allocation7 + $0x368] sm:$0xff]
    %v2819 = vld [vmem:[#allocation7 + $0x370] sm:$0xff]
    %v2820 = vld [vmem:[#allocation7 + $0x378] sm:$0xff]
    %v2821 = vld [vmem:[#allocation7 + $0x380] sm:$0xff]
    %v2822 = vld [vmem:[#allocation7 + $0x388] sm:$0xff]
    %v2823 = vld [vmem:[#allocation7 + $0x390] sm:$0xff]
    %v2824 = vld [vmem:[#allocation7 + $0x398] sm:$0xff]
    %v2825 = vld [vmem:[#allocation7 + $0x3a0] sm:$0xff]
    %v2826 = vld [vmem:[#allocation7 + $0x3a8] sm:$0xff]
    %v2827 = vld [vmem:[#allocation7 + $0x3b0] sm:$0xff]
    %v2828 = vld [vmem:[#allocation7 + $0x3b8] sm:$0xff]
    %v2829 = vld [vmem:[#allocation7 + $0x3c0] sm:$0xff]
    %v2830 = vld [vmem:[#allocation7 + $0x3c8] sm:$0xff]
    %v2831 = vld [vmem:[#allocation7 + $0x3d0] sm:$0xff]
    %v2832 = vld [vmem:[#allocation7 + $0x3d8] sm:$0xff]
    %v2833 = vld [vmem:[#allocation7 + $0x3e0] sm:$0xff]
    %v2834 = vld [vmem:[#allocation7 + $0x3e8] sm:$0xff]
    %v2835 = vld [vmem:[#allocation7 + $0x3f0] sm:$0xff]
    %v2836 = vld [vmem:[#allocation7 + $0x3f8] sm:$0xff]
    %v2837 = vld [vmem:[#allocation7 + $0x400] sm:$0xff]
    %v2838 = vld [vmem:[#allocation7 + $0x408] sm:$0xff]
    %v2839 = vld [vmem:[#allocation7 + $0x410] sm:$0xff]
    %v2840 = vld [vmem:[#allocation7 + $0x418] sm:$0xff]
    %v2841 = vld [vmem:[#allocation7 + $0x420] sm:$0xff]
    %v2842 = vld [vmem:[#allocation7 + $0x428] sm:$0xff]
    %v2843 = vld [vmem:[#allocation7 + $0x430] sm:$0xff]
    %v2844 = vld [vmem:[#allocation7 + $0x438] sm:$0xff]
    %v2845 = vld [vmem:[#allocation7 + $0x440] sm:$0xff]
    %v2846 = vld [vmem:[#allocation7 + $0x448] sm:$0xff]
    %v2847 = vld [vmem:[#allocation7 + $0x450] sm:$0xff]
    %v2848 = vld [vmem:[#allocation7 + $0x458] sm:$0xff]
    %v2849 = vld [vmem:[#allocation7 + $0x460] sm:$0xff]
    %v2850 = vld [vmem:[#allocation7 + $0x468] sm:$0xff]
    %v2851 = vld [vmem:[#allocation7 + $0x470] sm:$0xff]
    %v2852 = vld [vmem:[#allocation7 + $0x478] sm:$0xff]
    %v2853 = vld [vmem:[#allocation7 + $0x480] sm:$0xff]
    %v2854 = vld [vmem:[#allocation7 + $0x488] sm:$0xff]
    %v2855 = vld [vmem:[#allocation7 + $0x490] sm:$0xff]
    %v2856 = vld [vmem:[#allocation7 + $0x498] sm:$0xff]
    %v2857 = vld [vmem:[#allocation7 + $0x4a0] sm:$0xff]
    %v2858 = vld [vmem:[#allocation7 + $0x4a8] sm:$0xff]
    %v2859 = vld [vmem:[#allocation7 + $0x4b0] sm:$0xff]
    %v2860 = vld [vmem:[#allocation7 + $0x4b8] sm:$0xff]
    %v2861 = vld [vmem:[#allocation7 + $0x4c0] sm:$0xff]
    %v2862 = vld [vmem:[#allocation7 + $0x4c8] sm:$0xff]
    %v2863 = vld [vmem:[#allocation7 + $0x4d0] sm:$0xff]
    %v2864 = vld [vmem:[#allocation7 + $0x4d8] sm:$0xff]
    %v2865 = vld [vmem:[#allocation7 + $0x4e0] sm:$0xff]
    %v2866 = vld [vmem:[#allocation7 + $0x4e8] sm:$0xff]
    %v2867 = vld [vmem:[#allocation7 + $0x4f0] sm:$0xff]
    %v2868 = vld [vmem:[#allocation7 + $0x4f8] sm:$0xff]
    %v2869 = vld [vmem:[#allocation7 + $0x500] sm:$0xff]
    %v2870 = vld [vmem:[#allocation7 + $0x508] sm:$0xff]
    %v2871 = vld [vmem:[#allocation7 + $0x510] sm:$0xff]
    %v2872 = vld [vmem:[#allocation7 + $0x518] sm:$0xff]
    %v2873 = vld [vmem:[#allocation7 + $0x520] sm:$0xff]
    %v2874 = vld [vmem:[#allocation7 + $0x528] sm:$0xff]
    %v2875 = vld [vmem:[#allocation7 + $0x530] sm:$0xff]
    %v2876 = vld [vmem:[#allocation7 + $0x538] sm:$0xff]
    %v2877 = vld [vmem:[#allocation7 + $0x540] sm:$0xff]
    %v2878 = vld [vmem:[#allocation7 + $0x548] sm:$0xff]
    %v2879 = vld [vmem:[#allocation7 + $0x550] sm:$0xff]
    %v2880 = vld [vmem:[#allocation7 + $0x558] sm:$0xff]
    %v2881 = vld [vmem:[#allocation7 + $0x560] sm:$0xff]
    %v2882 = vld [vmem:[#allocation7 + $0x568] sm:$0xff]
    %v2883 = vld [vmem:[#allocation7 + $0x570] sm:$0xff]
    %v2884 = vld [vmem:[#allocation7 + $0x578] sm:$0xff]
    %v2885 = vld [vmem:[#allocation7 + $0x580] sm:$0xff]
    %v2886 = vld [vmem:[#allocation7 + $0x588] sm:$0xff]
    %v2887 = vld [vmem:[#allocation7 + $0x590] sm:$0xff]
    %v2888 = vld [vmem:[#allocation7 + $0x598] sm:$0xff]
    %v2889 = vld [vmem:[#allocation7 + $0x5a0] sm:$0xff]
    %v2890 = vld [vmem:[#allocation7 + $0x5a8] sm:$0xff]
    %v2891 = vld [vmem:[#allocation7 + $0x5b0] sm:$0xff]
    %v2892 = vld [vmem:[#allocation7 + $0x5b8] sm:$0xff]
    %v2893 = vld [vmem:[#allocation7 + $0x5c0] sm:$0xff]
    %v2894 = vld [vmem:[#allocation7 + $0x5c8] sm:$0xff]
    %v2895 = vld [vmem:[#allocation7 + $0x5d0] sm:$0xff]
    %v2896 = vld [vmem:[#allocation7 + $0x5d8] sm:$0xff]
    %v2897 = vld [vmem:[#allocation7 + $0x5e0] sm:$0xff]
    %v2898 = vld [vmem:[#allocation7 + $0x5e8] sm:$0xff]
    %v2899 = vld [vmem:[#allocation7 + $0x5f0] sm:$0xff]
    %v2900 = vld [vmem:[#allocation7 + $0x5f8] sm:$0xff]
    %v2901 = vld [vmem:[#allocation7 + $0x600] sm:$0xff]
    %v2902 = vld [vmem:[#allocation7 + $0x608] sm:$0xff]
    %v2903 = vld [vmem:[#allocation7 + $0x610] sm:$0xff]
    %v2904 = vld [vmem:[#allocation7 + $0x618] sm:$0xff]
    %v2905 = vld [vmem:[#allocation7 + $0x620] sm:$0xff]
    %v2906 = vld [vmem:[#allocation7 + $0x628] sm:$0xff]
    %v2907 = vld [vmem:[#allocation7 + $0x630] sm:$0xff]
    %v2908 = vld [vmem:[#allocation7 + $0x638] sm:$0xff]
    %v2909 = vld [vmem:[#allocation7 + $0x640] sm:$0xff]
    %v2910 = vld [vmem:[#allocation7 + $0x648] sm:$0xff]
    %v2911 = vld [vmem:[#allocation7 + $0x650] sm:$0xff]
    %v2912 = vld [vmem:[#allocation7 + $0x658] sm:$0xff]
    %v2913 = vld [vmem:[#allocation7 + $0x660] sm:$0xff]
    %v2914 = vld [vmem:[#allocation7 + $0x668] sm:$0xff]
    %v2915 = vld [vmem:[#allocation7 + $0x670] sm:$0xff]
    %v2916 = vld [vmem:[#allocation7 + $0x678] sm:$0xff]
    %v2917 = vld [vmem:[#allocation7 + $0x680] sm:$0xff]
    %v2918 = vld [vmem:[#allocation7 + $0x688] sm:$0xff]
    %v2919 = vld [vmem:[#allocation7 + $0x690] sm:$0xff]
    %v2920 = vld [vmem:[#allocation7 + $0x698] sm:$0xff]
    %v2921 = vld [vmem:[#allocation7 + $0x6a0] sm:$0xff]
    %v2922 = vld [vmem:[#allocation7 + $0x6a8] sm:$0xff]
    %v2923 = vld [vmem:[#allocation7 + $0x6b0] sm:$0xff]
    %v2924 = vld [vmem:[#allocation7 + $0x6b8] sm:$0xff]
    %v2925 = vld [vmem:[#allocation7 + $0x6c0] sm:$0xff]
    %v2926 = vld [vmem:[#allocation7 + $0x6c8] sm:$0xff]
    %v2927 = vld [vmem:[#allocation7 + $0x6d0] sm:$0xff]
    %v2928 = vld [vmem:[#allocation7 + $0x6d8] sm:$0xff]
    %v2929 = vld [vmem:[#allocation7 + $0x6e0] sm:$0xff]
    %v2930 = vld [vmem:[#allocation7 + $0x6e8] sm:$0xff]
    %v2931 = vld [vmem:[#allocation7 + $0x6f0] sm:$0xff]
    %v2932 = vld [vmem:[#allocation7 + $0x6f8] sm:$0xff]
    %v2933 = vld [vmem:[#allocation7 + $0x700] sm:$0xff]
    %v2934 = vld [vmem:[#allocation7 + $0x708] sm:$0xff]
    %v2935 = vld [vmem:[#allocation7 + $0x710] sm:$0xff]
    %v2936 = vld [vmem:[#allocation7 + $0x718] sm:$0xff]
    %v2937 = vld [vmem:[#allocation7 + $0x720] sm:$0xff]
    %v2938 = vld [vmem:[#allocation7 + $0x728] sm:$0xff]
    %v2939 = vld [vmem:[#allocation7 + $0x730] sm:$0xff]
    %v2940 = vld [vmem:[#allocation7 + $0x738] sm:$0xff]
    %v2941 = vld [vmem:[#allocation7 + $0x740] sm:$0xff]
    %v2942 = vld [vmem:[#allocation7 + $0x748] sm:$0xff]
    %v2943 = vld [vmem:[#allocation7 + $0x750] sm:$0xff]
    %v2944 = vld [vmem:[#allocation7 + $0x758] sm:$0xff]
    %v2945 = vld [vmem:[#allocation7 + $0x760] sm:$0xff]
    %v2946 = vld [vmem:[#allocation7 + $0x768] sm:$0xff]
    %v2947 = vld [vmem:[#allocation7 + $0x770] sm:$0xff]
    %v2948 = vld [vmem:[#allocation7 + $0x778] sm:$0xff]
    %v2949 = vld [vmem:[#allocation7 + $0x780] sm:$0xff]
    %v2950 = vld [vmem:[#allocation7 + $0x788] sm:$0xff]
    %v2951 = vld [vmem:[#allocation7 + $0x790] sm:$0xff]
    %v2952 = vld [vmem:[#allocation7 + $0x798] sm:$0xff]
    %v2953 = vld [vmem:[#allocation7 + $0x7a0] sm:$0xff]
    %v2954 = vld [vmem:[#allocation7 + $0x7a8] sm:$0xff]
    %v2955 = vld [vmem:[#allocation7 + $0x7b0] sm:$0xff]
    %v2956 = vld [vmem:[#allocation7 + $0x7b8] sm:$0xff]
    %v2957 = vld [vmem:[#allocation7 + $0x7c0] sm:$0xff]
    %v2958 = vld [vmem:[#allocation7 + $0x7c8] sm:$0xff]
    %v2959 = vld [vmem:[#allocation7 + $0x7d0] sm:$0xff]
    %v2960 = vld [vmem:[#allocation7 + $0x7d8] sm:$0xff]
    %v2961 = vld [vmem:[#allocation7 + $0x7e0] sm:$0xff]
    %v2962 = vld [vmem:[#allocation7 + $0x7e8] sm:$0xff]
    %v2963 = vld [vmem:[#allocation7 + $0x7f0] sm:$0xff]
    %v2964 = vld [vmem:[#allocation7 + $0x7f8] sm:$0xff]
    %v2965 = vld [vmem:[#allocation7 + $0x800] sm:$0xff]
    %v2966 = vld [vmem:[#allocation7 + $0x808] sm:$0xff]
    %v2967 = vld [vmem:[#allocation7 + $0x810] sm:$0xff]
    %v2968 = vld [vmem:[#allocation7 + $0x818] sm:$0xff]
    %v2969 = vld [vmem:[#allocation7 + $0x820] sm:$0xff]
    %v2970 = vld [vmem:[#allocation7 + $0x828] sm:$0xff]
    %v2971 = vld [vmem:[#allocation7 + $0x830] sm:$0xff]
    %v2972 = vld [vmem:[#allocation7 + $0x838] sm:$0xff]
    %v2973 = vld [vmem:[#allocation7 + $0x840] sm:$0xff]
    %v2974 = vld [vmem:[#allocation7 + $0x848] sm:$0xff]
    %v2975 = vld [vmem:[#allocation7 + $0x850] sm:$0xff]
    %v2976 = vld [vmem:[#allocation7 + $0x858] sm:$0xff]
    %v2977 = vld [vmem:[#allocation7 + $0x860] sm:$0xff]
    %v2978 = vld [vmem:[#allocation7 + $0x868] sm:$0xff]
    %v2979 = vld [vmem:[#allocation7 + $0x870] sm:$0xff]
    %v2980 = vld [vmem:[#allocation7 + $0x878] sm:$0xff]
    %v2981 = vld [vmem:[#allocation7 + $0x880] sm:$0xff]
    %v2982 = vld [vmem:[#allocation7 + $0x888] sm:$0xff]
    %v2983 = vld [vmem:[#allocation7 + $0x890] sm:$0xff]
    %v2984 = vld [vmem:[#allocation7 + $0x898] sm:$0xff]
    %v2985 = vld [vmem:[#allocation7 + $0x8a0] sm:$0xff]
    %v2986 = vld [vmem:[#allocation7 + $0x8a8] sm:$0xff]
    %v2987 = vld [vmem:[#allocation7 + $0x8b0] sm:$0xff]
    %v2988 = vld [vmem:[#allocation7 + $0x8b8] sm:$0xff]
    %v2989 = vld [vmem:[#allocation7 + $0x8c0] sm:$0xff]
    %v2990 = vld [vmem:[#allocation7 + $0x8c8] sm:$0xff]
    %v2991 = vld [vmem:[#allocation7 + $0x8d0] sm:$0xff]
    %v2992 = vld [vmem:[#allocation7 + $0x8d8] sm:$0xff]
    %v2993 = vld [vmem:[#allocation7 + $0x8e0] sm:$0xff]
    %v2994 = vld [vmem:[#allocation7 + $0x8e8] sm:$0xff]
    %v2995 = vld [vmem:[#allocation7 + $0x8f0] sm:$0xff]
    %v2996 = vld [vmem:[#allocation7 + $0x8f8] sm:$0xff]
    %v2997 = vld [vmem:[#allocation7 + $0x900] sm:$0xff]
    %v2998 = vld [vmem:[#allocation7 + $0x908] sm:$0xff]
    %v2999 = vld [vmem:[#allocation7 + $0x910] sm:$0xff]
    %v3000 = vld [vmem:[#allocation7 + $0x918] sm:$0xff]
    %v3001 = vld [vmem:[#allocation7 + $0x920] sm:$0xff]
    %v3002 = vld [vmem:[#allocation7 + $0x928] sm:$0xff]
    %v3003 = vld [vmem:[#allocation7 + $0x930] sm:$0xff]
    %v3004 = vld [vmem:[#allocation7 + $0x938] sm:$0xff]
    %v3005 = vld [vmem:[#allocation7 + $0x940] sm:$0xff]
    %v3006 = vld [vmem:[#allocation7 + $0x948] sm:$0xff]
    %v3007 = vld [vmem:[#allocation7 + $0x950] sm:$0xff]
    %v3008 = vld [vmem:[#allocation7 + $0x958] sm:$0xff]
    %v3009 = vld [vmem:[#allocation7 + $0x960] sm:$0xff]
    %v3010 = vld [vmem:[#allocation7 + $0x968] sm:$0xff]
    %v3011 = vld [vmem:[#allocation7 + $0x970] sm:$0xff]
    %v3012 = vld [vmem:[#allocation7 + $0x978] sm:$0xff]
    %v3013 = vld [vmem:[#allocation7 + $0x980] sm:$0xff]
    %v3014 = vld [vmem:[#allocation7 + $0x988] sm:$0xff]
    %v3015 = vld [vmem:[#allocation7 + $0x990] sm:$0xff]
    %v3016 = vld [vmem:[#allocation7 + $0x998] sm:$0xff]
    %v3017 = vld [vmem:[#allocation7 + $0x9a0] sm:$0xff]
    %v3018 = vld [vmem:[#allocation7 + $0x9a8] sm:$0xff]
    %v3019 = vld [vmem:[#allocation7 + $0x9b0] sm:$0xff]
    %v3020 = vld [vmem:[#allocation7 + $0x9b8] sm:$0xff]
    %v3021 = vld [vmem:[#allocation7 + $0x9c0] sm:$0xff]
    %v3022 = vld [vmem:[#allocation7 + $0x9c8] sm:$0xff]
    %v3023 = vld [vmem:[#allocation7 + $0x9d0] sm:$0xff]
    %v3024 = vld [vmem:[#allocation7 + $0x9d8] sm:$0xff]
    %v3025 = vld [vmem:[#allocation7 + $0x9e0] sm:$0xff]
    %v3026 = vld [vmem:[#allocation7 + $0x9e8] sm:$0xff]
    %v3027 = vld [vmem:[#allocation7 + $0x9f0] sm:$0xff]
    %v3028 = vld [vmem:[#allocation7 + $0x9f8] sm:$0xff]
    %v3029 = vld [vmem:[#allocation7 + $0xa00] sm:$0xff]
    %v3030 = vld [vmem:[#allocation7 + $0xa08] sm:$0xff]
    %v3031 = vld [vmem:[#allocation7 + $0xa10] sm:$0xff]
    %v3032 = vld [vmem:[#allocation7 + $0xa18] sm:$0xff]
    %v3033 = vld [vmem:[#allocation7 + $0xa20] sm:$0xff]
    %v3034 = vld [vmem:[#allocation7 + $0xa28] sm:$0xff]
    %v3035 = vld [vmem:[#allocation7 + $0xa30] sm:$0xff]
    %v3036 = vld [vmem:[#allocation7 + $0xa38] sm:$0xff]
    %v3037 = vld [vmem:[#allocation7 + $0xa40] sm:$0xff]
    %v3038 = vld [vmem:[#allocation7 + $0xa48] sm:$0xff]
    %v3039 = vld [vmem:[#allocation7 + $0xa50] sm:$0xff]
    %v3040 = vld [vmem:[#allocation7 + $0xa58] sm:$0xff]
    %v3041 = vld [vmem:[#allocation7 + $0xa60] sm:$0xff]
    %v3042 = vld [vmem:[#allocation7 + $0xa68] sm:$0xff]
    %v3043 = vld [vmem:[#allocation7 + $0xa70] sm:$0xff]
    %v3044 = vld [vmem:[#allocation7 + $0xa78] sm:$0xff]
    %v3045 = vld [vmem:[#allocation7 + $0xa80] sm:$0xff]
    %v3046 = vld [vmem:[#allocation7 + $0xa88] sm:$0xff]
    %v3047 = vld [vmem:[#allocation7 + $0xa90] sm:$0xff]
    %v3048 = vld [vmem:[#allocation7 + $0xa98] sm:$0xff]
    %v3049 = vld [vmem:[#allocation7 + $0xaa0] sm:$0xff]
    %v3050 = vld [vmem:[#allocation7 + $0xaa8] sm:$0xff]
    %v3051 = vld [vmem:[#allocation7 + $0xab0] sm:$0xff]
    %v3052 = vld [vmem:[#allocation7 + $0xab8] sm:$0xff]
    %v3053 = vld [vmem:[#allocation7 + $0xac0] sm:$0xff]
    %v3054 = vld [vmem:[#allocation7 + $0xac8] sm:$0xff]
    %v3055 = vld [vmem:[#allocation7 + $0xad0] sm:$0xff]
    %v3056 = vld [vmem:[#allocation7 + $0xad8] sm:$0xff]
    %v3057 = vld [vmem:[#allocation7 + $0xae0] sm:$0xff]
    %v3058 = vld [vmem:[#allocation7 + $0xae8] sm:$0xff]
    %v3059 = vld [vmem:[#allocation7 + $0xaf0] sm:$0xff]
    %v3060 = vld [vmem:[#allocation7 + $0xaf8] sm:$0xff]
    %v3061 = vld [vmem:[#allocation7 + $0xb00] sm:$0xff]
    %v3062 = vld [vmem:[#allocation7 + $0xb08] sm:$0xff]
    %v3063 = vld [vmem:[#allocation7 + $0xb10] sm:$0xff]
    %v3064 = vld [vmem:[#allocation7 + $0xb18] sm:$0xff]
    %v3065 = vld [vmem:[#allocation7 + $0xb20] sm:$0xff]
    %v3066 = vld [vmem:[#allocation7 + $0xb28] sm:$0xff]
    %v3067 = vld [vmem:[#allocation7 + $0xb30] sm:$0xff]
    %v3068 = vld [vmem:[#allocation7 + $0xb38] sm:$0xff]
    %v3069 = vld [vmem:[#allocation7 + $0xb40] sm:$0xff]
    %v3070 = vld [vmem:[#allocation7 + $0xb48] sm:$0xff]
    %v3071 = vld [vmem:[#allocation7 + $0xb50] sm:$0xff]
    %v3072 = vld [vmem:[#allocation7 + $0xb58] sm:$0xff]
    %v3073 = vld [vmem:[#allocation7 + $0xb60] sm:$0xff]
    %v3074 = vld [vmem:[#allocation7 + $0xb68] sm:$0xff]
    %v3075 = vld [vmem:[#allocation7 + $0xb70] sm:$0xff]
    %v3076 = vld [vmem:[#allocation7 + $0xb78] sm:$0xff]
    %v3077 = vld [vmem:[#allocation7 + $0xb80] sm:$0xff]
    %v3078 = vld [vmem:[#allocation7 + $0xb88] sm:$0xff]
    %v3079 = vld [vmem:[#allocation7 + $0xb90] sm:$0xff]
    %v3080 = vld [vmem:[#allocation7 + $0xb98] sm:$0xff]
    %v3081 = vld [vmem:[#allocation7 + $0xba0] sm:$0xff]
    %v3082 = vld [vmem:[#allocation7 + $0xba8] sm:$0xff]
    %v3083 = vld [vmem:[#allocation7 + $0xbb0] sm:$0xff]
    %v3084 = vld [vmem:[#allocation7 + $0xbb8] sm:$0xff]
    %v3085 = vld [vmem:[#allocation7 + $0xbc0] sm:$0xff]
    %v3086 = vld [vmem:[#allocation7 + $0xbc8] sm:$0xff]
    %v3087 = vld [vmem:[#allocation7 + $0xbd0] sm:$0xff]
    %v3088 = vld [vmem:[#allocation7 + $0xbd8] sm:$0xff]
    %v3089 = vld [vmem:[#allocation7 + $0xbe0] sm:$0xff]
    %v3090 = vld [vmem:[#allocation7 + $0xbe8] sm:$0xff]
    %v3091 = vld [vmem:[#allocation7 + $0xbf0] sm:$0xff]
    %v3092 = vld [vmem:[#allocation7 + $0xbf8] sm:$0xff]
    %v3093 = vld [vmem:[#allocation7 + $0xc00] sm:$0xff]
    %v3094 = vld [vmem:[#allocation7 + $0xc08] sm:$0xff]
    %v3095 = vld [vmem:[#allocation7 + $0xc10] sm:$0xff]
    %v3096 = vld [vmem:[#allocation7 + $0xc18] sm:$0xff]
    %v3097 = vld [vmem:[#allocation7 + $0xc20] sm:$0xff]
    %v3098 = vld [vmem:[#allocation7 + $0xc28] sm:$0xff]
    %v3099 = vld [vmem:[#allocation7 + $0xc30] sm:$0xff]
    %v3100 = vld [vmem:[#allocation7 + $0xc38] sm:$0xff]
    %v3101 = vld [vmem:[#allocation7 + $0xc40] sm:$0xff]
    %v3102 = vld [vmem:[#allocation7 + $0xc48] sm:$0xff]
    %v3103 = vld [vmem:[#allocation7 + $0xc50] sm:$0xff]
    %v3104 = vld [vmem:[#allocation7 + $0xc58] sm:$0xff]
    %v3105 = vld [vmem:[#allocation7 + $0xc60] sm:$0xff]
    %v3106 = vld [vmem:[#allocation7 + $0xc68] sm:$0xff]
    %v3107 = vld [vmem:[#allocation7 + $0xc70] sm:$0xff]
    %v3108 = vld [vmem:[#allocation7 + $0xc78] sm:$0xff]
    %v3109 = vld [vmem:[#allocation7 + $0xc80] sm:$0xff]
    %v3110 = vld [vmem:[#allocation7 + $0xc88] sm:$0xff]
    %v3111 = vld [vmem:[#allocation7 + $0xc90] sm:$0xff]
    %v3112 = vld [vmem:[#allocation7 + $0xc98] sm:$0xff]
    %v3113 = vld [vmem:[#allocation7 + $0xca0] sm:$0xff]
    %v3114 = vld [vmem:[#allocation7 + $0xca8] sm:$0xff]
    %v3115 = vld [vmem:[#allocation7 + $0xcb0] sm:$0xff]
    %v3116 = vld [vmem:[#allocation7 + $0xcb8] sm:$0xff]
    %v3117 = vld [vmem:[#allocation7 + $0xcc0] sm:$0xff]
    %v3118 = vld [vmem:[#allocation7 + $0xcc8] sm:$0xff]
    %v3119 = vld [vmem:[#allocation7 + $0xcd0] sm:$0xff]
    %v3120 = vld [vmem:[#allocation7 + $0xcd8] sm:$0xff]
    %v3121 = vld [vmem:[#allocation7 + $0xce0] sm:$0xff]
    %v3122 = vld [vmem:[#allocation7 + $0xce8] sm:$0xff]
    %v3123 = vld [vmem:[#allocation7 + $0xcf0] sm:$0xff]
    %v3124 = vld [vmem:[#allocation7 + $0xcf8] sm:$0xff]
    %v3125 = vld [vmem:[#allocation7 + $0xd00] sm:$0xff]
    %v3126 = vld [vmem:[#allocation7 + $0xd08] sm:$0xff]
    %v3127 = vld [vmem:[#allocation7 + $0xd10] sm:$0xff]
    %v3128 = vld [vmem:[#allocation7 + $0xd18] sm:$0xff]
    %v3129 = vld [vmem:[#allocation7 + $0xd20] sm:$0xff]
    %v3130 = vld [vmem:[#allocation7 + $0xd28] sm:$0xff]
    %v3131 = vld [vmem:[#allocation7 + $0xd30] sm:$0xff]
    %v3132 = vld [vmem:[#allocation7 + $0xd38] sm:$0xff]
    %v3133 = vld [vmem:[#allocation7 + $0xd40] sm:$0xff]
    %v3134 = vld [vmem:[#allocation7 + $0xd48] sm:$0xff]
    %v3135 = vld [vmem:[#allocation7 + $0xd50] sm:$0xff]
    %v3136 = vld [vmem:[#allocation7 + $0xd58] sm:$0xff]
    %v3137 = vld [vmem:[#allocation7 + $0xd60] sm:$0xff]
    %v3138 = vld [vmem:[#allocation7 + $0xd68] sm:$0xff]
    %v3139 = vld [vmem:[#allocation7 + $0xd70] sm:$0xff]
    %v3140 = vld [vmem:[#allocation7 + $0xd78] sm:$0xff]
    %v3141 = vld [vmem:[#allocation7 + $0xd80] sm:$0xff]
    %v3142 = vld [vmem:[#allocation7 + $0xd88] sm:$0xff]
    %v3143 = vld [vmem:[#allocation7 + $0xd90] sm:$0xff]
    %v3144 = vld [vmem:[#allocation7 + $0xd98] sm:$0xff]
    %v3145 = vld [vmem:[#allocation7 + $0xda0] sm:$0xff]
    %v3146 = vld [vmem:[#allocation7 + $0xda8] sm:$0xff]
    %v3147 = vld [vmem:[#allocation7 + $0xdb0] sm:$0xff]
    %v3148 = vld [vmem:[#allocation7 + $0xdb8] sm:$0xff]
    %v3149 = vld [vmem:[#allocation7 + $0xdc0] sm:$0xff]
    %v3150 = vld [vmem:[#allocation7 + $0xdc8] sm:$0xff]
    %v3151 = vld [vmem:[#allocation7 + $0xdd0] sm:$0xff]
    %v3152 = vld [vmem:[#allocation7 + $0xdd8] sm:$0xff]
    %v3153 = vld [vmem:[#allocation7 + $0xde0] sm:$0xff]
    %v3154 = vld [vmem:[#allocation7 + $0xde8] sm:$0xff]
    %v3155 = vld [vmem:[#allocation7 + $0xdf0] sm:$0xff]
    %v3156 = vld [vmem:[#allocation7 + $0xdf8] sm:$0xff]
    %v3157 = vld [vmem:[#allocation7 + $0xe00] sm:$0xff]
    %v3158 = vld [vmem:[#allocation7 + $0xe08] sm:$0xff]
    %v3159 = vld [vmem:[#allocation7 + $0xe10] sm:$0xff]
    %v3160 = vld [vmem:[#allocation7 + $0xe18] sm:$0xff]
    %v3161 = vld [vmem:[#allocation7 + $0xe20] sm:$0xff]
    %v3162 = vld [vmem:[#allocation7 + $0xe28] sm:$0xff]
    %v3163 = vld [vmem:[#allocation7 + $0xe30] sm:$0xff]
    %v3164 = vld [vmem:[#allocation7 + $0xe38] sm:$0xff]
    %v3165 = vld [vmem:[#allocation7 + $0xe40] sm:$0xff]
    %v3166 = vld [vmem:[#allocation7 + $0xe48] sm:$0xff]
    %v3167 = vld [vmem:[#allocation7 + $0xe50] sm:$0xff]
    %v3168 = vld [vmem:[#allocation7 + $0xe58] sm:$0xff]
    %v3169 = vld [vmem:[#allocation7 + $0xe60] sm:$0xff]
    %v3170 = vld [vmem:[#allocation7 + $0xe68] sm:$0xff]
    %v3171 = vld [vmem:[#allocation7 + $0xe70] sm:$0xff]
    %v3172 = vld [vmem:[#allocation7 + $0xe78] sm:$0xff]
    %v3173 = vld [vmem:[#allocation7 + $0xe80] sm:$0xff]
    %v3174 = vld [vmem:[#allocation7 + $0xe88] sm:$0xff]
    %v3175 = vld [vmem:[#allocation7 + $0xe90] sm:$0xff]
    %v3176 = vld [vmem:[#allocation7 + $0xe98] sm:$0xff]
    %v3177 = vld [vmem:[#allocation7 + $0xea0] sm:$0xff]
    %v3178 = vld [vmem:[#allocation7 + $0xea8] sm:$0xff]
    %v3179 = vld [vmem:[#allocation7 + $0xeb0] sm:$0xff]
    %v3180 = vld [vmem:[#allocation7 + $0xeb8] sm:$0xff]
    %v3181 = vld [vmem:[#allocation7 + $0xec0] sm:$0xff]
    %v3182 = vld [vmem:[#allocation7 + $0xec8] sm:$0xff]
    %v3183 = vld [vmem:[#allocation7 + $0xed0] sm:$0xff]
    %v3184 = vld [vmem:[#allocation7 + $0xed8] sm:$0xff]
    %v3185 = vld [vmem:[#allocation7 + $0xee0] sm:$0xff]
    %v3186 = vld [vmem:[#allocation7 + $0xee8] sm:$0xff]
    %v3187 = vld [vmem:[#allocation7 + $0xef0] sm:$0xff]
    %v3188 = vld [vmem:[#allocation7 + $0xef8] sm:$0xff]
    %v3189 = vld [vmem:[#allocation7 + $0xf00] sm:$0xff]
    %v3190 = vld [vmem:[#allocation7 + $0xf08] sm:$0xff]
    %v3191 = vld [vmem:[#allocation7 + $0xf10] sm:$0xff]
    %v3192 = vld [vmem:[#allocation7 + $0xf18] sm:$0xff]
    %v3193 = vld [vmem:[#allocation7 + $0xf20] sm:$0xff]
    %v3194 = vld [vmem:[#allocation7 + $0xf28] sm:$0xff]
    %v3195 = vld [vmem:[#allocation7 + $0xf30] sm:$0xff]
    %v3196 = vld [vmem:[#allocation7 + $0xf38] sm:$0xff]
    %v3197 = vld [vmem:[#allocation7 + $0xf40] sm:$0xff]
    %v3198 = vld [vmem:[#allocation7 + $0xf48] sm:$0xff]
    %v3199 = vld [vmem:[#allocation7 + $0xf50] sm:$0xff]
    %v3200 = vld [vmem:[#allocation7 + $0xf58] sm:$0xff]
    %v3201 = vld [vmem:[#allocation7 + $0xf60] sm:$0xff]
    %v3202 = vld [vmem:[#allocation7 + $0xf68] sm:$0xff]
    %v3203 = vld [vmem:[#allocation7 + $0xf70] sm:$0xff]
    %v3204 = vld [vmem:[#allocation7 + $0xf78] sm:$0xff]
    %v3205 = vld [vmem:[#allocation7 + $0xf80] sm:$0xff]
    %v3206 = vld [vmem:[#allocation7 + $0xf88] sm:$0xff]
    %v3207 = vld [vmem:[#allocation7 + $0xf90] sm:$0xff]
    %v3208 = vld [vmem:[#allocation7 + $0xf98] sm:$0xff]
    %v3209 = vld [vmem:[#allocation7 + $0xfa0] sm:$0xff]
    %v3210 = vld [vmem:[#allocation7 + $0xfa8] sm:$0xff]
    %v3211 = vld [vmem:[#allocation7 + $0xfb0] sm:$0xff]
    %v3212 = vld [vmem:[#allocation7 + $0xfb8] sm:$0xff]
    %v3213 = vld [vmem:[#allocation7 + $0xfc0] sm:$0xff]
    %v3214 = vld [vmem:[#allocation7 + $0xfc8] sm:$0xff]
    %v3215 = vld [vmem:[#allocation7 + $0xfd0] sm:$0xff]
    %v3216 = vld [vmem:[#allocation7 + $0xfd8] sm:$0xff]
    %v3217 = vld [vmem:[#allocation7 + $0xfe0] sm:$0xff]
    %v3218 = vld [vmem:[#allocation7 + $0xfe8] sm:$0xff]
    %v3219 = vld [vmem:[#allocation7 + $0xff0] sm:$0xff]
    %v3220 = vld [vmem:[#allocation7 + $0xff8] sm:$0xff]
    %v3221 = vld [vmem:[#allocation7 + $0x1000] sm:$0xff]
    %v3222 = vld [vmem:[#allocation7 + $0x1008] sm:$0xff]
    %v3223 = vld [vmem:[#allocation7 + $0x1010] sm:$0xff]
    %v3224 = vld [vmem:[#allocation7 + $0x1018] sm:$0xff]
    %v3225 = vld [vmem:[#allocation7 + $0x1020] sm:$0xff]
    %v3226 = vld [vmem:[#allocation7 + $0x1028] sm:$0xff]
    %v3227 = vld [vmem:[#allocation7 + $0x1030] sm:$0xff]
    %v3228 = vld [vmem:[#allocation7 + $0x1038] sm:$0xff]
    %v3229 = vld [vmem:[#allocation7 + $0x1040] sm:$0xff]
    %v3230 = vld [vmem:[#allocation7 + $0x1048] sm:$0xff]
    %v3231 = vld [vmem:[#allocation7 + $0x1050] sm:$0xff]
    %v3232 = vld [vmem:[#allocation7 + $0x1058] sm:$0xff]
    %v3233 = vld [vmem:[#allocation7 + $0x1060] sm:$0xff]
    %v3234 = vld [vmem:[#allocation7 + $0x1068] sm:$0xff]
    %v3235 = vld [vmem:[#allocation7 + $0x1070] sm:$0xff]
    %v3236 = vld [vmem:[#allocation7 + $0x1078] sm:$0xff]
    %v3237 = vld [vmem:[#allocation7 + $0x1080] sm:$0xff]
    %v3238 = vld [vmem:[#allocation7 + $0x1088] sm:$0xff]
    %v3239 = vld [vmem:[#allocation7 + $0x1090] sm:$0xff]
    %v3240 = vld [vmem:[#allocation7 + $0x1098] sm:$0xff]
    %v3241 = vld [vmem:[#allocation7 + $0x10a0] sm:$0xff]
    %v3242 = vld [vmem:[#allocation7 + $0x10a8] sm:$0xff]
    %v3243 = vld [vmem:[#allocation7 + $0x10b0] sm:$0xff]
    %v3244 = vld [vmem:[#allocation7 + $0x10b8] sm:$0xff]
    %v3245 = vld [vmem:[#allocation7 + $0x10c0] sm:$0xff]
    %v3246 = vld [vmem:[#allocation7 + $0x10c8] sm:$0xff]
    %v3247 = vld [vmem:[#allocation7 + $0x10d0] sm:$0xff]
    %v3248 = vld [vmem:[#allocation7 + $0x10d8] sm:$0xff]
    %v3249 = vld [vmem:[#allocation7 + $0x10e0] sm:$0xff]
    %v3250 = vld [vmem:[#allocation7 + $0x10e8] sm:$0xff]
    %v3251 = vld [vmem:[#allocation7 + $0x10f0] sm:$0xff]
    %v3252 = vld [vmem:[#allocation7 + $0x10f8] sm:$0xff]
    %v3253 = vld [vmem:[#allocation7 + $0x1100] sm:$0xff]
    %v3254 = vld [vmem:[#allocation7 + $0x1108] sm:$0xff]
    %v3255 = vld [vmem:[#allocation7 + $0x1110] sm:$0xff]
    %v3256 = vld [vmem:[#allocation7 + $0x1118] sm:$0xff]
    %v3257 = vld [vmem:[#allocation7 + $0x1120] sm:$0xff]
    %v3258 = vld [vmem:[#allocation7 + $0x1128] sm:$0xff]
    %v3259 = vld [vmem:[#allocation7 + $0x1130] sm:$0xff]
    %v3260 = vld [vmem:[#allocation7 + $0x1138] sm:$0xff]
    %v3261 = vld [vmem:[#allocation7 + $0x1140] sm:$0xff]
    %v3262 = vld [vmem:[#allocation7 + $0x1148] sm:$0xff]
    %v3263 = vld [vmem:[#allocation7 + $0x1150] sm:$0xff]
    %v3264 = vld [vmem:[#allocation7 + $0x1158] sm:$0xff]
    %v3265 = vld [vmem:[#allocation7 + $0x1160] sm:$0xff]
    %v3266 = vld [vmem:[#allocation7 + $0x1168] sm:$0xff]
    %v3267 = vld [vmem:[#allocation7 + $0x1170] sm:$0xff]
    %v3268 = vld [vmem:[#allocation7 + $0x1178] sm:$0xff]
    %v3269 = vld [vmem:[#allocation7 + $0x1180] sm:$0xff]
    %v3270 = vld [vmem:[#allocation7 + $0x1188] sm:$0xff]
    %v3271 = vld [vmem:[#allocation7 + $0x1190] sm:$0xff]
    %v3272 = vld [vmem:[#allocation7 + $0x1198] sm:$0xff]
    %v3273 = vld [vmem:[#allocation7 + $0x11a0] sm:$0xff]
    %v3274 = vld [vmem:[#allocation7 + $0x11a8] sm:$0xff]
    %v3275 = vld [vmem:[#allocation7 + $0x11b0] sm:$0xff]
    %v3276 = vld [vmem:[#allocation7 + $0x11b8] sm:$0xff]
    %v3277 = vld [vmem:[#allocation7 + $0x11c0] sm:$0xff]
    %v3278 = vld [vmem:[#allocation7 + $0x11c8] sm:$0xff]
    %v3279 = vld [vmem:[#allocation7 + $0x11d0] sm:$0xff]
    %v3280 = vld [vmem:[#allocation7 + $0x11d8] sm:$0xff]
    %v3281 = vld [vmem:[#allocation7 + $0x11e0] sm:$0xff]
    %v3282 = vld [vmem:[#allocation7 + $0x11e8] sm:$0xff]
    %v3283 = vld [vmem:[#allocation7 + $0x11f0] sm:$0xff]
    %v3284 = vld [vmem:[#allocation7 + $0x11f8] sm:$0xff]
    %v3285 = vld [vmem:[#allocation7 + $0x1200] sm:$0xff]
    %v3286 = vld [vmem:[#allocation7 + $0x1208] sm:$0xff]
    %v3287 = vld [vmem:[#allocation7 + $0x1210] sm:$0xff]
    %v3288 = vld [vmem:[#allocation7 + $0x1218] sm:$0xff]
    %v3289 = vld [vmem:[#allocation7 + $0x1220] sm:$0xff]
    %v3290 = vld [vmem:[#allocation7 + $0x1228] sm:$0xff]
    %v3291 = vld [vmem:[#allocation7 + $0x1230] sm:$0xff]
    %v3292 = vld [vmem:[#allocation7 + $0x1238] sm:$0xff]
    %v3293 = vld [vmem:[#allocation7 + $0x1240] sm:$0xff]
    %v3294 = vld [vmem:[#allocation7 + $0x1248] sm:$0xff]
    %v3295 = vld [vmem:[#allocation7 + $0x1250] sm:$0xff]
    %v3296 = vld [vmem:[#allocation7 + $0x1258] sm:$0xff]
    %v3297 = vld [vmem:[#allocation7 + $0x1260] sm:$0xff]
    %v3298 = vld [vmem:[#allocation7 + $0x1268] sm:$0xff]
    %v3299 = vld [vmem:[#allocation7 + $0x1270] sm:$0xff]
    %v3300 = vld [vmem:[#allocation7 + $0x1278] sm:$0xff]
    %v3301 = vld [vmem:[#allocation7 + $0x1280] sm:$0xff]
    %v3302 = vld [vmem:[#allocation7 + $0x1288] sm:$0xff]
    %v3303 = vld [vmem:[#allocation7 + $0x1290] sm:$0xff]
    %v3304 = vld [vmem:[#allocation7 + $0x1298] sm:$0xff]
    %v3305 = vld [vmem:[#allocation7 + $0x12a0] sm:$0xff]
    %v3306 = vld [vmem:[#allocation7 + $0x12a8] sm:$0xff]
    %v3307 = vld [vmem:[#allocation7 + $0x12b0] sm:$0xff]
    %v3308 = vld [vmem:[#allocation7 + $0x12b8] sm:$0xff]
    %v3309 = vld [vmem:[#allocation7 + $0x12c0] sm:$0xff]
    %v3310 = vld [vmem:[#allocation7 + $0x12c8] sm:$0xff]
    %v3311 = vld [vmem:[#allocation7 + $0x12d0] sm:$0xff]
    %v3312 = vld [vmem:[#allocation7 + $0x12d8] sm:$0xff]
    %v3313 = vld [vmem:[#allocation7 + $0x12e0] sm:$0xff]
    %v3314 = vld [vmem:[#allocation7 + $0x12e8] sm:$0xff]
    %v3315 = vld [vmem:[#allocation7 + $0x12f0] sm:$0xff]
    %v3316 = vld [vmem:[#allocation7 + $0x12f8] sm:$0xff]
    %v3317 = vld [vmem:[#allocation7 + $0x1300] sm:$0xff]
    %v3318 = vld [vmem:[#allocation7 + $0x1308] sm:$0xff]
    %v3319 = vld [vmem:[#allocation7 + $0x1310] sm:$0xff]
    %v3320 = vld [vmem:[#allocation7 + $0x1318] sm:$0xff]
    %v3321 = vld [vmem:[#allocation7 + $0x1320] sm:$0xff]
    %v3322 = vld [vmem:[#allocation7 + $0x1328] sm:$0xff]
    %v3323 = vld [vmem:[#allocation7 + $0x1330] sm:$0xff]
    %v3324 = vld [vmem:[#allocation7 + $0x1338] sm:$0xff]
    %v3325 = vld [vmem:[#allocation7 + $0x1340] sm:$0xff]
    %v3326 = vld [vmem:[#allocation7 + $0x1348] sm:$0xff]
    %v3327 = vld [vmem:[#allocation7 + $0x1350] sm:$0xff]
    %v3328 = vld [vmem:[#allocation7 + $0x1358] sm:$0xff]
    %v3329 = vld [vmem:[#allocation7 + $0x1360] sm:$0xff]
    %v3330 = vld [vmem:[#allocation7 + $0x1368] sm:$0xff]
    %v3331 = vld [vmem:[#allocation7 + $0x1370] sm:$0xff]
    %v3332 = vld [vmem:[#allocation7 + $0x1378] sm:$0xff]
    %v3333 = vld [vmem:[#allocation7 + $0x1380] sm:$0xff]
    %v3334 = vld [vmem:[#allocation7 + $0x1388] sm:$0xff]
    %v3335 = vld [vmem:[#allocation7 + $0x1390] sm:$0xff]
    %v3336 = vld [vmem:[#allocation7 + $0x1398] sm:$0xff]
    %v3337 = vld [vmem:[#allocation7 + $0x13a0] sm:$0xff]
    %v3338 = vld [vmem:[#allocation7 + $0x13a8] sm:$0xff]
    %v3339 = vld [vmem:[#allocation7 + $0x13b0] sm:$0xff]
    %v3340 = vld [vmem:[#allocation7 + $0x13b8] sm:$0xff]
    %v3341 = vld [vmem:[#allocation7 + $0x13c0] sm:$0xff]
    %v3342 = vld [vmem:[#allocation7 + $0x13c8] sm:$0xff]
    %v3343 = vld [vmem:[#allocation7 + $0x13d0] sm:$0xff]
    %v3344 = vld [vmem:[#allocation7 + $0x13d8] sm:$0xff]
    %v3345 = vld [vmem:[#allocation7 + $0x13e0] sm:$0xff]
    %v3346 = vld [vmem:[#allocation7 + $0x13e8] sm:$0xff]
    %v3347 = vld [vmem:[#allocation7 + $0x13f0] sm:$0xff]
    %v3348 = vld [vmem:[#allocation7 + $0x13f8] sm:$0xff]
    %v3349 = vld [vmem:[#allocation7 + $0x1400] sm:$0xff]
    %v3350 = vld [vmem:[#allocation7 + $0x1408] sm:$0xff]
    %v3351 = vld [vmem:[#allocation7 + $0x1410] sm:$0xff]
    %v3352 = vld [vmem:[#allocation7 + $0x1418] sm:$0xff]
    %v3353 = vld [vmem:[#allocation7 + $0x1420] sm:$0xff]
    %v3354 = vld [vmem:[#allocation7 + $0x1428] sm:$0xff]
    %v3355 = vld [vmem:[#allocation7 + $0x1430] sm:$0xff]
    %v3356 = vld [vmem:[#allocation7 + $0x1438] sm:$0xff]
    %v3357 = vld [vmem:[#allocation7 + $0x1440] sm:$0xff]
    %v3358 = vld [vmem:[#allocation7 + $0x1448] sm:$0xff]
    %v3359 = vld [vmem:[#allocation7 + $0x1450] sm:$0xff]
    %v3360 = vld [vmem:[#allocation7 + $0x1458] sm:$0xff]
    %v3361 = vld [vmem:[#allocation7 + $0x1460] sm:$0xff]
    %v3362 = vld [vmem:[#allocation7 + $0x1468] sm:$0xff]
    %v3363 = vld [vmem:[#allocation7 + $0x1470] sm:$0xff]
    %v3364 = vld [vmem:[#allocation7 + $0x1478] sm:$0xff]
    %v3365 = vld [vmem:[#allocation7 + $0x1480] sm:$0xff]
    %v3366 = vld [vmem:[#allocation7 + $0x1488] sm:$0xff]
    %v3367 = vld [vmem:[#allocation7 + $0x1490] sm:$0xff]
    %v3368 = vld [vmem:[#allocation7 + $0x1498] sm:$0xff]
    %v3369 = vld [vmem:[#allocation7 + $0x14a0] sm:$0xff]
    %v3370 = vld [vmem:[#allocation7 + $0x14a8] sm:$0xff]
    %v3371 = vld [vmem:[#allocation7 + $0x14b0] sm:$0xff]
    %v3372 = vld [vmem:[#allocation7 + $0x14b8] sm:$0xff]
    %v3373 = vld [vmem:[#allocation7 + $0x14c0] sm:$0xff]
    %v3374 = vld [vmem:[#allocation7 + $0x14c8] sm:$0xff]
    %v3375 = vld [vmem:[#allocation7 + $0x14d0] sm:$0xff]
    %v3376 = vld [vmem:[#allocation7 + $0x14d8] sm:$0xff]
    %v3377 = vld [vmem:[#allocation7 + $0x14e0] sm:$0xff]
    %v3378 = vld [vmem:[#allocation7 + $0x14e8] sm:$0xff]
    %v3379 = vld [vmem:[#allocation7 + $0x14f0] sm:$0xff]
    %v3380 = vld [vmem:[#allocation7 + $0x14f8] sm:$0xff]
    %v3381 = vld [vmem:[#allocation7 + $0x1500] sm:$0xff]
    %v3382 = vld [vmem:[#allocation7 + $0x1508] sm:$0xff]
    %v3383 = vld [vmem:[#allocation7 + $0x1510] sm:$0xff]
    %v3384 = vld [vmem:[#allocation7 + $0x1518] sm:$0xff]
    %v3385 = vld [vmem:[#allocation7 + $0x1520] sm:$0xff]
    %v3386 = vld [vmem:[#allocation7 + $0x1528] sm:$0xff]
    %v3387 = vld [vmem:[#allocation7 + $0x1530] sm:$0xff]
    %v3388 = vld [vmem:[#allocation7 + $0x1538] sm:$0xff]
    %v3389 = vld [vmem:[#allocation7 + $0x1540] sm:$0xff]
    %v3390 = vld [vmem:[#allocation7 + $0x1548] sm:$0xff]
    %v3391 = vld [vmem:[#allocation7 + $0x1550] sm:$0xff]
    %v3392 = vld [vmem:[#allocation7 + $0x1558] sm:$0xff]
    %v3393 = vld [vmem:[#allocation7 + $0x1560] sm:$0xff]
    %v3394 = vld [vmem:[#allocation7 + $0x1568] sm:$0xff]
    %v3395 = vld [vmem:[#allocation7 + $0x1570] sm:$0xff]
    %v3396 = vld [vmem:[#allocation7 + $0x1578] sm:$0xff]
    %v3397 = vld [vmem:[#allocation7 + $0x1580] sm:$0xff]
    %v3398 = vld [vmem:[#allocation7 + $0x1588] sm:$0xff]
    %v3399 = vld [vmem:[#allocation7 + $0x1590] sm:$0xff]
    %v3400 = vld [vmem:[#allocation7 + $0x1598] sm:$0xff]
    %v3401 = vld [vmem:[#allocation7 + $0x15a0] sm:$0xff]
    %v3402 = vld [vmem:[#allocation7 + $0x15a8] sm:$0xff]
    %v3403 = vld [vmem:[#allocation7 + $0x15b0] sm:$0xff]
    %v3404 = vld [vmem:[#allocation7 + $0x15b8] sm:$0xff]
    %v3405 = vld [vmem:[#allocation7 + $0x15c0] sm:$0xff]
    %v3406 = vld [vmem:[#allocation7 + $0x15c8] sm:$0xff]
    %v3407 = vld [vmem:[#allocation7 + $0x15d0] sm:$0xff]
    %v3408 = vld [vmem:[#allocation7 + $0x15d8] sm:$0xff]
    %v3409 = vld [vmem:[#allocation7 + $0x15e0] sm:$0xff]
    %v3410 = vld [vmem:[#allocation7 + $0x15e8] sm:$0xff]
    %v3411 = vld [vmem:[#allocation7 + $0x15f0] sm:$0xff]
    %v3412 = vld [vmem:[#allocation7 + $0x15f8] sm:$0xff]
    %v3413 = vld [vmem:[#allocation7 + $0x1600] sm:$0xff]
    %v3414 = vld [vmem:[#allocation7 + $0x1608] sm:$0xff]
    %v3415 = vld [vmem:[#allocation7 + $0x1610] sm:$0xff]
    %v3416 = vld [vmem:[#allocation7 + $0x1618] sm:$0xff]
    %v3417 = vld [vmem:[#allocation7 + $0x1620] sm:$0xff]
    %v3418 = vld [vmem:[#allocation7 + $0x1628] sm:$0xff]
    %v3419 = vld [vmem:[#allocation7 + $0x1630] sm:$0xff]
    %v3420 = vld [vmem:[#allocation7 + $0x1638] sm:$0xff]
    %v3421 = vld [vmem:[#allocation7 + $0x1640] sm:$0xff]
    %v3422 = vld [vmem:[#allocation7 + $0x1648] sm:$0xff]
    %v3423 = vld [vmem:[#allocation7 + $0x1650] sm:$0xff]
    %v3424 = vld [vmem:[#allocation7 + $0x1658] sm:$0xff]
    %v3425 = vld [vmem:[#allocation7 + $0x1660] sm:$0xff]
    %v3426 = vld [vmem:[#allocation7 + $0x1668] sm:$0xff]
    %v3427 = vld [vmem:[#allocation7 + $0x1670] sm:$0xff]
    %v3428 = vld [vmem:[#allocation7 + $0x1678] sm:$0xff]
    %v3429 = vld [vmem:[#allocation7 + $0x1680] sm:$0xff]
    %v3430 = vld [vmem:[#allocation7 + $0x1688] sm:$0xff]
    %v3431 = vld [vmem:[#allocation7 + $0x1690] sm:$0xff]
    %v3432 = vld [vmem:[#allocation7 + $0x1698] sm:$0xff]
    %v3433 = vld [vmem:[#allocation7 + $0x16a0] sm:$0xff]
    %v3434 = vld [vmem:[#allocation7 + $0x16a8] sm:$0xff]
    %v3435 = vld [vmem:[#allocation7 + $0x16b0] sm:$0xff]
    %v3436 = vld [vmem:[#allocation7 + $0x16b8] sm:$0xff]
    %v3437 = vld [vmem:[#allocation7 + $0x16c0] sm:$0xff]
    %v3438 = vld [vmem:[#allocation7 + $0x16c8] sm:$0xff]
    %v3439 = vld [vmem:[#allocation7 + $0x16d0] sm:$0xff]
    %v3440 = vld [vmem:[#allocation7 + $0x16d8] sm:$0xff]
    %v3441 = vld [vmem:[#allocation7 + $0x16e0] sm:$0xff]
    %v3442 = vld [vmem:[#allocation7 + $0x16e8] sm:$0xff]
    %v3443 = vld [vmem:[#allocation7 + $0x16f0] sm:$0xff]
    %v3444 = vld [vmem:[#allocation7 + $0x16f8] sm:$0xff]
    %v3445 = vld [vmem:[#allocation7 + $0x1700] sm:$0xff]
    %v3446 = vld [vmem:[#allocation7 + $0x1708] sm:$0xff]
    %v3447 = vld [vmem:[#allocation7 + $0x1710] sm:$0xff]
    %v3448 = vld [vmem:[#allocation7 + $0x1718] sm:$0xff]
    %v3449 = vld [vmem:[#allocation7 + $0x1720] sm:$0xff]
    %v3450 = vld [vmem:[#allocation7 + $0x1728] sm:$0xff]
    %v3451 = vld [vmem:[#allocation7 + $0x1730] sm:$0xff]
    %v3452 = vld [vmem:[#allocation7 + $0x1738] sm:$0xff]
    %v3453 = vld [vmem:[#allocation7 + $0x1740] sm:$0xff]
    %v3454 = vld [vmem:[#allocation7 + $0x1748] sm:$0xff]
    %v3455 = vld [vmem:[#allocation7 + $0x1750] sm:$0xff]
    %v3456 = vld [vmem:[#allocation7 + $0x1758] sm:$0xff]
    %v3457 = vld [vmem:[#allocation7 + $0x1760] sm:$0xff]
    %v3458 = vld [vmem:[#allocation7 + $0x1768] sm:$0xff]
    %v3459 = vld [vmem:[#allocation7 + $0x1770] sm:$0xff]
    %v3460 = vld [vmem:[#allocation7 + $0x1778] sm:$0xff]
    %v3461 = vld [vmem:[#allocation7 + $0x1780] sm:$0xff]
    %v3462 = vld [vmem:[#allocation7 + $0x1788] sm:$0xff]
    %v3463 = vld [vmem:[#allocation7 + $0x1790] sm:$0xff]
    %v3464 = vld [vmem:[#allocation7 + $0x1798] sm:$0xff]
    %v3465 = vld [vmem:[#allocation7 + $0x17a0] sm:$0xff]
    %v3466 = vld [vmem:[#allocation7 + $0x17a8] sm:$0xff]
    %v3467 = vld [vmem:[#allocation7 + $0x17b0] sm:$0xff]
    %v3468 = vld [vmem:[#allocation7 + $0x17b8] sm:$0xff]
    %v3469 = vld [vmem:[#allocation7 + $0x17c0] sm:$0xff]
    %v3470 = vld [vmem:[#allocation7 + $0x17c8] sm:$0xff]
    %v3471 = vld [vmem:[#allocation7 + $0x17d0] sm:$0xff]
    %v3472 = vld [vmem:[#allocation7 + $0x17d8] sm:$0xff]
    %v3473 = vld [vmem:[#allocation7 + $0x17e0] sm:$0xff]
    %v3474 = vld [vmem:[#allocation7 + $0x17e8] sm:$0xff]
    %v3475 = vld [vmem:[#allocation7 + $0x17f0] sm:$0xff]
    %v3476 = vld [vmem:[#allocation7 + $0x17f8] sm:$0xff]
    %v3477 = vld [vmem:[#allocation7 + $0x1800] sm:$0xff]
    %v3478 = vld [vmem:[#allocation7 + $0x1808] sm:$0xff]
    %v3479 = vld [vmem:[#allocation7 + $0x1810] sm:$0xff]
    %v3480 = vld [vmem:[#allocation7 + $0x1818] sm:$0xff]
    %v3481 = vld [vmem:[#allocation7 + $0x1820] sm:$0xff]
    %v3482 = vld [vmem:[#allocation7 + $0x1828] sm:$0xff]
    %v3483 = vld [vmem:[#allocation7 + $0x1830] sm:$0xff]
    %v3484 = vld [vmem:[#allocation7 + $0x1838] sm:$0xff]
    %v3485 = vld [vmem:[#allocation7 + $0x1840] sm:$0xff]
    %v3486 = vld [vmem:[#allocation7 + $0x1848] sm:$0xff]
    %v3487 = vld [vmem:[#allocation7 + $0x1850] sm:$0xff]
    %v3488 = vld [vmem:[#allocation7 + $0x1858] sm:$0xff]
    %v3489 = vld [vmem:[#allocation7 + $0x1860] sm:$0xff]
    %v3490 = vld [vmem:[#allocation7 + $0x1868] sm:$0xff]
    %v3491 = vld [vmem:[#allocation7 + $0x1870] sm:$0xff]
    %v3492 = vld [vmem:[#allocation7 + $0x1878] sm:$0xff]
    %v3493 = vld [vmem:[#allocation7 + $0x1880] sm:$0xff]
    %v3494 = vld [vmem:[#allocation7 + $0x1888] sm:$0xff]
    %v3495 = vld [vmem:[#allocation7 + $0x1890] sm:$0xff]
    %v3496 = vld [vmem:[#allocation7 + $0x1898] sm:$0xff]
    %v3497 = vld [vmem:[#allocation7 + $0x18a0] sm:$0xff]
    %v3498 = vld [vmem:[#allocation7 + $0x18a8] sm:$0xff]
    %v3499 = vld [vmem:[#allocation7 + $0x18b0] sm:$0xff]
    %v3500 = vld [vmem:[#allocation7 + $0x18b8] sm:$0xff]
    %v3501 = vld [vmem:[#allocation7 + $0x18c0] sm:$0xff]
    %v3502 = vld [vmem:[#allocation7 + $0x18c8] sm:$0xff]
    %v3503 = vld [vmem:[#allocation7 + $0x18d0] sm:$0xff]
    %v3504 = vld [vmem:[#allocation7 + $0x18d8] sm:$0xff]
    %v3505 = vld [vmem:[#allocation7 + $0x18e0] sm:$0xff]
    %v3506 = vld [vmem:[#allocation7 + $0x18e8] sm:$0xff]
    %v3507 = vld [vmem:[#allocation7 + $0x18f0] sm:$0xff]
    %v3508 = vld [vmem:[#allocation7 + $0x18f8] sm:$0xff]
    %v3509 = vld [vmem:[#allocation7 + $0x1900] sm:$0xff]
    %v3510 = vld [vmem:[#allocation7 + $0x1908] sm:$0xff]
    %v3511 = vld [vmem:[#allocation7 + $0x1910] sm:$0xff]
    %v3512 = vld [vmem:[#allocation7 + $0x1918] sm:$0xff]
    %v3513 = vld [vmem:[#allocation7 + $0x1920] sm:$0xff]
    %v3514 = vld [vmem:[#allocation7 + $0x1928] sm:$0xff]
    %v3515 = vld [vmem:[#allocation7 + $0x1930] sm:$0xff]
    %v3516 = vld [vmem:[#allocation7 + $0x1938] sm:$0xff]
    %v3517 = vld [vmem:[#allocation7 + $0x1940] sm:$0xff]
    %v3518 = vld [vmem:[#allocation7 + $0x1948] sm:$0xff]
    %v3519 = vld [vmem:[#allocation7 + $0x1950] sm:$0xff]
    %v3520 = vld [vmem:[#allocation7 + $0x1958] sm:$0xff]
    %v3521 = vld [vmem:[#allocation7 + $0x1960] sm:$0xff]
    %v3522 = vld [vmem:[#allocation7 + $0x1968] sm:$0xff]
    %v3523 = vld [vmem:[#allocation7 + $0x1970] sm:$0xff]
    %v3524 = vld [vmem:[#allocation7 + $0x1978] sm:$0xff]
    %v3525 = vld [vmem:[#allocation7 + $0x1980] sm:$0xff]
    %v3526 = vld [vmem:[#allocation7 + $0x1988] sm:$0xff]
    %v3527 = vld [vmem:[#allocation7 + $0x1990] sm:$0xff]
    %v3528 = vld [vmem:[#allocation7 + $0x1998] sm:$0xff]
    %v3529 = vld [vmem:[#allocation7 + $0x19a0] sm:$0xff]
    %v3530 = vld [vmem:[#allocation7 + $0x19a8] sm:$0xff]
    %v3531 = vld [vmem:[#allocation7 + $0x19b0] sm:$0xff]
    %v3532 = vld [vmem:[#allocation7 + $0x19b8] sm:$0xff]
    %v3533 = vld [vmem:[#allocation7 + $0x19c0] sm:$0xff]
    %v3534 = vld [vmem:[#allocation7 + $0x19c8] sm:$0xff]
    %v3535 = vld [vmem:[#allocation7 + $0x19d0] sm:$0xff]
    %v3536 = vld [vmem:[#allocation7 + $0x19d8] sm:$0xff]
    %v3537 = vld [vmem:[#allocation7 + $0x19e0] sm:$0xff]
    %v3538 = vld [vmem:[#allocation7 + $0x19e8] sm:$0xff]
    %v3539 = vld [vmem:[#allocation7 + $0x19f0] sm:$0xff]
    %v3540 = vld [vmem:[#allocation7 + $0x19f8] sm:$0xff]
    %v3541 = vld [vmem:[#allocation7 + $0x1a00] sm:$0xff]
    %v3542 = vld [vmem:[#allocation7 + $0x1a08] sm:$0xff]
    %v3543 = vld [vmem:[#allocation7 + $0x1a10] sm:$0xff]
    %v3544 = vld [vmem:[#allocation7 + $0x1a18] sm:$0xff]
    %v3545 = vld [vmem:[#allocation7 + $0x1a20] sm:$0xff]
    %v3546 = vld [vmem:[#allocation7 + $0x1a28] sm:$0xff]
    %v3547 = vld [vmem:[#allocation7 + $0x1a30] sm:$0xff]
    %v3548 = vld [vmem:[#allocation7 + $0x1a38] sm:$0xff]
    %v3549 = vld [vmem:[#allocation7 + $0x1a40] sm:$0xff]
    %v3550 = vld [vmem:[#allocation7 + $0x1a48] sm:$0xff]
    %v3551 = vld [vmem:[#allocation7 + $0x1a50] sm:$0xff]
    %v3552 = vld [vmem:[#allocation7 + $0x1a58] sm:$0xff]
    %v3553 = vld [vmem:[#allocation7 + $0x1a60] sm:$0xff]
    %v3554 = vld [vmem:[#allocation7 + $0x1a68] sm:$0xff]
    %v3555 = vld [vmem:[#allocation7 + $0x1a70] sm:$0xff]
    %v3556 = vld [vmem:[#allocation7 + $0x1a78] sm:$0xff]
    %v3557 = vld [vmem:[#allocation7 + $0x1a80] sm:$0xff]
    %v3558 = vld [vmem:[#allocation7 + $0x1a88] sm:$0xff]
    %v3559 = vld [vmem:[#allocation7 + $0x1a90] sm:$0xff]
    %v3560 = vld [vmem:[#allocation7 + $0x1a98] sm:$0xff]
    %v3561 = vld [vmem:[#allocation7 + $0x1aa0] sm:$0xff]
    %v3562 = vld [vmem:[#allocation7 + $0x1aa8] sm:$0xff]
    %v3563 = vld [vmem:[#allocation7 + $0x1ab0] sm:$0xff]
    %v3564 = vld [vmem:[#allocation7 + $0x1ab8] sm:$0xff]
    %v3565 = vld [vmem:[#allocation7 + $0x1ac0] sm:$0xff]
    %v3566 = vld [vmem:[#allocation7 + $0x1ac8] sm:$0xff]
    %v3567 = vld [vmem:[#allocation7 + $0x1ad0] sm:$0xff]
    %v3568 = vld [vmem:[#allocation7 + $0x1ad8] sm:$0xff]
    %v3569 = vld [vmem:[#allocation7 + $0x1ae0] sm:$0xff]
    %v3570 = vld [vmem:[#allocation7 + $0x1ae8] sm:$0xff]
    %v3571 = vld [vmem:[#allocation7 + $0x1af0] sm:$0xff]
    %v3572 = vld [vmem:[#allocation7 + $0x1af8] sm:$0xff]
    %v3573 = vld [vmem:[#allocation7 + $0x1b00] sm:$0xff]
    %v3574 = vld [vmem:[#allocation7 + $0x1b08] sm:$0xff]
    %v3575 = vld [vmem:[#allocation7 + $0x1b10] sm:$0xff]
    %v3576 = vld [vmem:[#allocation7 + $0x1b18] sm:$0xff]
    %v3577 = vld [vmem:[#allocation7 + $0x1b20] sm:$0xff]
    %v3578 = vld [vmem:[#allocation7 + $0x1b28] sm:$0xff]
    %v3579 = vld [vmem:[#allocation7 + $0x1b30] sm:$0xff]
    %v3580 = vld [vmem:[#allocation7 + $0x1b38] sm:$0xff]
    %v3581 = vld [vmem:[#allocation7 + $0x1b40] sm:$0xff]
    %v3582 = vld [vmem:[#allocation7 + $0x1b48] sm:$0xff]
    %v3583 = vld [vmem:[#allocation7 + $0x1b50] sm:$0xff]
    %v3584 = vld [vmem:[#allocation7 + $0x1b58] sm:$0xff]
    %v3585 = vld [vmem:[#allocation7 + $0x1b60] sm:$0xff]
    %v3586 = vld [vmem:[#allocation7 + $0x1b68] sm:$0xff]
    %v3587 = vld [vmem:[#allocation7 + $0x1b70] sm:$0xff]
    %v3588 = vld [vmem:[#allocation7 + $0x1b78] sm:$0xff]
    %v3589 = vld [vmem:[#allocation7 + $0x1b80] sm:$0xff]
    %v3590 = vld [vmem:[#allocation7 + $0x1b88] sm:$0xff]
    %v3591 = vld [vmem:[#allocation7 + $0x1b90] sm:$0xff]
    %v3592 = vld [vmem:[#allocation7 + $0x1b98] sm:$0xff]
    %v3593 = vld [vmem:[#allocation7 + $0x1ba0] sm:$0xff]
    %v3594 = vld [vmem:[#allocation7 + $0x1ba8] sm:$0xff]
    %v3595 = vld [vmem:[#allocation7 + $0x1bb0] sm:$0xff]
    %v3596 = vld [vmem:[#allocation7 + $0x1bb8] sm:$0xff]
    %v3597 = vld [vmem:[#allocation7 + $0x1bc0] sm:$0xff]
    %v3598 = vld [vmem:[#allocation7 + $0x1bc8] sm:$0xff]
    %v3599 = vld [vmem:[#allocation7 + $0x1bd0] sm:$0xff]
    %v3600 = vld [vmem:[#allocation7 + $0x1bd8] sm:$0xff]
    %v3601 = vld [vmem:[#allocation7 + $0x1be0] sm:$0xff]
    %v3602 = vld [vmem:[#allocation7 + $0x1be8] sm:$0xff]
    %v3603 = vld [vmem:[#allocation7 + $0x1bf0] sm:$0xff]
    %v3604 = vld [vmem:[#allocation7 + $0x1bf8] sm:$0xff]
    %v3605 = vld [vmem:[#allocation7 + $0x1c00] sm:$0xff]
    %v3606 = vld [vmem:[#allocation7 + $0x1c08] sm:$0xff]
    %v3607 = vld [vmem:[#allocation7 + $0x1c10] sm:$0xff]
    %v3608 = vld [vmem:[#allocation7 + $0x1c18] sm:$0xff]
    %v3609 = vld [vmem:[#allocation7 + $0x1c20] sm:$0xff]
    %v3610 = vld [vmem:[#allocation7 + $0x1c28] sm:$0xff]
    %v3611 = vld [vmem:[#allocation7 + $0x1c30] sm:$0xff]
    %v3612 = vld [vmem:[#allocation7 + $0x1c38] sm:$0xff]
    %v3613 = vld [vmem:[#allocation7 + $0x1c40] sm:$0xff]
    %v3614 = vld [vmem:[#allocation7 + $0x1c48] sm:$0xff]
    %v3615 = vld [vmem:[#allocation7 + $0x1c50] sm:$0xff]
    %v3616 = vld [vmem:[#allocation7 + $0x1c58] sm:$0xff]
    %v3617 = vld [vmem:[#allocation7 + $0x1c60] sm:$0xff]
    %v3618 = vld [vmem:[#allocation7 + $0x1c68] sm:$0xff]
    %v3619 = vld [vmem:[#allocation7 + $0x1c70] sm:$0xff]
    %v3620 = vld [vmem:[#allocation7 + $0x1c78] sm:$0xff]
    %v3621 = vld [vmem:[#allocation7 + $0x1c80] sm:$0xff]
    %v3622 = vld [vmem:[#allocation7 + $0x1c88] sm:$0xff]
    %v3623 = vld [vmem:[#allocation7 + $0x1c90] sm:$0xff]
    %v3624 = vld [vmem:[#allocation7 + $0x1c98] sm:$0xff]
    %v3625 = vld [vmem:[#allocation7 + $0x1ca0] sm:$0xff]
    %v3626 = vld [vmem:[#allocation7 + $0x1ca8] sm:$0xff]
    %v3627 = vld [vmem:[#allocation7 + $0x1cb0] sm:$0xff]
    %v3628 = vld [vmem:[#allocation7 + $0x1cb8] sm:$0xff]
    %v3629 = vld [vmem:[#allocation7 + $0x1cc0] sm:$0xff]
    %v3630 = vld [vmem:[#allocation7 + $0x1cc8] sm:$0xff]
    %v3631 = vld [vmem:[#allocation7 + $0x1cd0] sm:$0xff]
    %v3632 = vld [vmem:[#allocation7 + $0x1cd8] sm:$0xff]
    %v3633 = vld [vmem:[#allocation7 + $0x1ce0] sm:$0xff]
    %v3634 = vld [vmem:[#allocation7 + $0x1ce8] sm:$0xff]
    %v3635 = vld [vmem:[#allocation7 + $0x1cf0] sm:$0xff]
    %v3636 = vld [vmem:[#allocation7 + $0x1cf8] sm:$0xff]
    %v3637 = vld [vmem:[#allocation7 + $0x1d00] sm:$0xff]
    %v3638 = vld [vmem:[#allocation7 + $0x1d08] sm:$0xff]
    %v3639 = vld [vmem:[#allocation7 + $0x1d10] sm:$0xff]
    %v3640 = vld [vmem:[#allocation7 + $0x1d18] sm:$0xff]
    %v3641 = vld [vmem:[#allocation7 + $0x1d20] sm:$0xff]
    %v3642 = vld [vmem:[#allocation7 + $0x1d28] sm:$0xff]
    %v3643 = vld [vmem:[#allocation7 + $0x1d30] sm:$0xff]
    %v3644 = vld [vmem:[#allocation7 + $0x1d38] sm:$0xff]
    %v3645 = vld [vmem:[#allocation7 + $0x1d40] sm:$0xff]
    %v3646 = vld [vmem:[#allocation7 + $0x1d48] sm:$0xff]
    %v3647 = vld [vmem:[#allocation7 + $0x1d50] sm:$0xff]
    %v3648 = vld [vmem:[#allocation7 + $0x1d58] sm:$0xff]
    %v3649 = vld [vmem:[#allocation7 + $0x1d60] sm:$0xff]
    %v3650 = vld [vmem:[#allocation7 + $0x1d68] sm:$0xff]
    %v3651 = vld [vmem:[#allocation7 + $0x1d70] sm:$0xff]
    %v3652 = vld [vmem:[#allocation7 + $0x1d78] sm:$0xff]
    %v3653 = vld [vmem:[#allocation7 + $0x1d80] sm:$0xff]
    %v3654 = vld [vmem:[#allocation7 + $0x1d88] sm:$0xff]
    %v3655 = vld [vmem:[#allocation7 + $0x1d90] sm:$0xff]
    %v3656 = vld [vmem:[#allocation7 + $0x1d98] sm:$0xff]
    %v3657 = vld [vmem:[#allocation7 + $0x1da0] sm:$0xff]
    %v3658 = vld [vmem:[#allocation7 + $0x1da8] sm:$0xff]
    %v3659 = vld [vmem:[#allocation7 + $0x1db0] sm:$0xff]
    %v3660 = vld [vmem:[#allocation7 + $0x1db8] sm:$0xff]
    %v3661 = vld [vmem:[#allocation7 + $0x1dc0] sm:$0xff]
    %v3662 = vld [vmem:[#allocation7 + $0x1dc8] sm:$0xff]
    %v3663 = vld [vmem:[#allocation7 + $0x1dd0] sm:$0xff]
    %v3664 = vld [vmem:[#allocation7 + $0x1dd8] sm:$0xff]
    %v3665 = vld [vmem:[#allocation7 + $0x1de0] sm:$0xff]
    %v3666 = vld [vmem:[#allocation7 + $0x1de8] sm:$0xff]
    %v3667 = vld [vmem:[#allocation7 + $0x1df0] sm:$0xff]
    %v3668 = vld [vmem:[#allocation7 + $0x1df8] sm:$0xff]
    %v3669 = vld [vmem:[#allocation7 + $0x1e00] sm:$0xff]
    %v3670 = vld [vmem:[#allocation7 + $0x1e08] sm:$0xff]
    %v3671 = vld [vmem:[#allocation7 + $0x1e10] sm:$0xff]
    %v3672 = vld [vmem:[#allocation7 + $0x1e18] sm:$0xff]
    %v3673 = vld [vmem:[#allocation7 + $0x1e20] sm:$0xff]
    %v3674 = vld [vmem:[#allocation7 + $0x1e28] sm:$0xff]
    %v3675 = vld [vmem:[#allocation7 + $0x1e30] sm:$0xff]
    %v3676 = vld [vmem:[#allocation7 + $0x1e38] sm:$0xff]
    %v3677 = vld [vmem:[#allocation7 + $0x1e40] sm:$0xff]
    %v3678 = vld [vmem:[#allocation7 + $0x1e48] sm:$0xff]
    %v3679 = vld [vmem:[#allocation7 + $0x1e50] sm:$0xff]
    %v3680 = vld [vmem:[#allocation7 + $0x1e58] sm:$0xff]
    %v3681 = vld [vmem:[#allocation7 + $0x1e60] sm:$0xff]
    %v3682 = vld [vmem:[#allocation7 + $0x1e68] sm:$0xff]
    %v3683 = vld [vmem:[#allocation7 + $0x1e70] sm:$0xff]
    %v3684 = vld [vmem:[#allocation7 + $0x1e78] sm:$0xff]
    %v3685 = vld [vmem:[#allocation7 + $0x1e80] sm:$0xff]
    %v3686 = vld [vmem:[#allocation7 + $0x1e88] sm:$0xff]
    %v3687 = vld [vmem:[#allocation7 + $0x1e90] sm:$0xff]
    %v3688 = vld [vmem:[#allocation7 + $0x1e98] sm:$0xff]
    %v3689 = vld [vmem:[#allocation7 + $0x1ea0] sm:$0xff]
    %v3690 = vld [vmem:[#allocation7 + $0x1ea8] sm:$0xff]
    %v3691 = vld [vmem:[#allocation7 + $0x1eb0] sm:$0xff]
    %v3692 = vld [vmem:[#allocation7 + $0x1eb8] sm:$0xff]
    %v3693 = vld [vmem:[#allocation7 + $0x1ec0] sm:$0xff]
    %v3694 = vld [vmem:[#allocation7 + $0x1ec8] sm:$0xff]
    %v3695 = vld [vmem:[#allocation7 + $0x1ed0] sm:$0xff]
    %v3696 = vld [vmem:[#allocation7 + $0x1ed8] sm:$0xff]
    %v3697 = vld [vmem:[#allocation7 + $0x1ee0] sm:$0xff]
    %v3698 = vld [vmem:[#allocation7 + $0x1ee8] sm:$0xff]
    %v3699 = vld [vmem:[#allocation7 + $0x1ef0] sm:$0xff]
    %v3700 = vld [vmem:[#allocation7 + $0x1ef8] sm:$0xff]
    %v3701 = vld [vmem:[#allocation7 + $0x1f00] sm:$0xff]
    %v3702 = vld [vmem:[#allocation7 + $0x1f08] sm:$0xff]
    %v3703 = vld [vmem:[#allocation7 + $0x1f10] sm:$0xff]
    %v3704 = vld [vmem:[#allocation7 + $0x1f18] sm:$0xff]
    %v3705 = vld [vmem:[#allocation7 + $0x1f20] sm:$0xff]
    %v3706 = vld [vmem:[#allocation7 + $0x1f28] sm:$0xff]
    %v3707 = vld [vmem:[#allocation7 + $0x1f30] sm:$0xff]
    %v3708 = vld [vmem:[#allocation7 + $0x1f38] sm:$0xff]
    %v3709 = vld [vmem:[#allocation7 + $0x1f40] sm:$0xff]
    %v3710 = vld [vmem:[#allocation7 + $0x1f48] sm:$0xff]
    %v3711 = vld [vmem:[#allocation7 + $0x1f50] sm:$0xff]
    %v3712 = vld [vmem:[#allocation7 + $0x1f58] sm:$0xff]
    %v3713 = vld [vmem:[#allocation7 + $0x1f60] sm:$0xff]
    %v3714 = vld [vmem:[#allocation7 + $0x1f68] sm:$0xff]
    %v3715 = vld [vmem:[#allocation7 + $0x1f70] sm:$0xff]
    %v3716 = vld [vmem:[#allocation7 + $0x1f78] sm:$0xff]
    %v3717 = vld [vmem:[#allocation7 + $0x1f80] sm:$0xff]
    %v3718 = vld [vmem:[#allocation7 + $0x1f88] sm:$0xff]
    %v3719 = vld [vmem:[#allocation7 + $0x1f90] sm:$0xff]
    %v3720 = vld [vmem:[#allocation7 + $0x1f98] sm:$0xff]
    %v3721 = vld [vmem:[#allocation7 + $0x1fa0] sm:$0xff]
    %v3722 = vld [vmem:[#allocation7 + $0x1fa8] sm:$0xff]
    %v3723 = vld [vmem:[#allocation7 + $0x1fb0] sm:$0xff]
    %v3724 = vld [vmem:[#allocation7 + $0x1fb8] sm:$0xff]
    %v3725 = vld [vmem:[#allocation7 + $0x1fc0] sm:$0xff]
    %v3726 = vld [vmem:[#allocation7 + $0x1fc8] sm:$0xff]
    %v3727 = vld [vmem:[#allocation7 + $0x1fd0] sm:$0xff]
    %v3728 = vld [vmem:[#allocation7 + $0x1fd8] sm:$0xff]
    %v3729 = vld [vmem:[#allocation7 + $0x1fe0] sm:$0xff]
    %v3730 = vld [vmem:[#allocation7 + $0x1fe8] sm:$0xff]
    %v3731 = vld [vmem:[#allocation7 + $0x1ff0] sm:$0xff]
    %v3732 = vld [vmem:[#allocation7 + $0x1ff8] sm:$0xff]
    %v3733 = vld [vmem:[#allocation7 + $0x2000] sm:$0xff]
    %v3734 = vld [vmem:[#allocation7 + $0x2008] sm:$0xff]
    %v3735 = vld [vmem:[#allocation7 + $0x2010] sm:$0xff]
    %v3736 = vld [vmem:[#allocation7 + $0x2018] sm:$0xff]
    %v3737 = vld [vmem:[#allocation7 + $0x2020] sm:$0xff]
    %v3738 = vld [vmem:[#allocation7 + $0x2028] sm:$0xff]
    %v3739 = vld [vmem:[#allocation7 + $0x2030] sm:$0xff]
    %v3740 = vld [vmem:[#allocation7 + $0x2038] sm:$0xff]
    %v3741 = vld [vmem:[#allocation7 + $0x2040] sm:$0xff]
    %v3742 = vld [vmem:[#allocation7 + $0x2048] sm:$0xff]
    %v3743 = vld [vmem:[#allocation7 + $0x2050] sm:$0xff]
    %v3744 = vld [vmem:[#allocation7 + $0x2058] sm:$0xff]
    %v3745 = vld [vmem:[#allocation7 + $0x2060] sm:$0xff]
    %v3746 = vld [vmem:[#allocation7 + $0x2068] sm:$0xff]
    %v3747 = vld [vmem:[#allocation7 + $0x2070] sm:$0xff]
    %v3748 = vld [vmem:[#allocation7 + $0x2078] sm:$0xff]
    %v3749 = vld [vmem:[#allocation7 + $0x2080] sm:$0xff]
    %v3750 = vld [vmem:[#allocation7 + $0x2088] sm:$0xff]
    %v3751 = vld [vmem:[#allocation7 + $0x2090] sm:$0xff]
    %v3752 = vld [vmem:[#allocation7 + $0x2098] sm:$0xff]
    %v3753 = vld [vmem:[#allocation7 + $0x20a0] sm:$0xff]
    %v3754 = vld [vmem:[#allocation7 + $0x20a8] sm:$0xff]
    %v3755 = vld [vmem:[#allocation7 + $0x20b0] sm:$0xff]
    %v3756 = vld [vmem:[#allocation7 + $0x20b8] sm:$0xff]
    %v3757 = vld [vmem:[#allocation7 + $0x20c0] sm:$0xff]
    %v3758 = vld [vmem:[#allocation7 + $0x20c8] sm:$0xff]
    %v3759 = vld [vmem:[#allocation7 + $0x20d0] sm:$0xff]
    %v3760 = vld [vmem:[#allocation7 + $0x20d8] sm:$0xff]
    %v3761 = vld [vmem:[#allocation7 + $0x20e0] sm:$0xff]
    %v3762 = vld [vmem:[#allocation7 + $0x20e8] sm:$0xff]
    %v3763 = vld [vmem:[#allocation7 + $0x20f0] sm:$0xff]
    %v3764 = vld [vmem:[#allocation7 + $0x20f8] sm:$0xff]
    %v3765 = vld [vmem:[#allocation7 + $0x2100] sm:$0xff]
    %v3766 = vld [vmem:[#allocation7 + $0x2108] sm:$0xff]
    %v3767 = vld [vmem:[#allocation7 + $0x2110] sm:$0xff]
    %v3768 = vld [vmem:[#allocation7 + $0x2118] sm:$0xff]
    %v3769 = vld [vmem:[#allocation7 + $0x2120] sm:$0xff]
    %v3770 = vld [vmem:[#allocation7 + $0x2128] sm:$0xff]
    %v3771 = vld [vmem:[#allocation7 + $0x2130] sm:$0xff]
    %v3772 = vld [vmem:[#allocation7 + $0x2138] sm:$0xff]
    %v3773 = vld [vmem:[#allocation7 + $0x2140] sm:$0xff]
    %v3774 = vld [vmem:[#allocation7 + $0x2148] sm:$0xff]
    %v3775 = vld [vmem:[#allocation7 + $0x2150] sm:$0xff]
    %v3776 = vld [vmem:[#allocation7 + $0x2158] sm:$0xff]
    %v3777 = vld [vmem:[#allocation7 + $0x2160] sm:$0xff]
    %v3778 = vld [vmem:[#allocation7 + $0x2168] sm:$0xff]
    %v3779 = vld [vmem:[#allocation7 + $0x2170] sm:$0xff]
    %v3780 = vld [vmem:[#allocation7 + $0x2178] sm:$0xff]
    %v3781 = vld [vmem:[#allocation7 + $0x2180] sm:$0xff]
    %v3782 = vld [vmem:[#allocation7 + $0x2188] sm:$0xff]
    %v3783 = vld [vmem:[#allocation7 + $0x2190] sm:$0xff]
    %v3784 = vld [vmem:[#allocation7 + $0x2198] sm:$0xff]
    %v3785 = vld [vmem:[#allocation7 + $0x21a0] sm:$0xff]
    %v3786 = vld [vmem:[#allocation7 + $0x21a8] sm:$0xff]
    %v3787 = vld [vmem:[#allocation7 + $0x21b0] sm:$0xff]
    %v3788 = vld [vmem:[#allocation7 + $0x21b8] sm:$0xff]
    %v3789 = vld [vmem:[#allocation7 + $0x21c0] sm:$0xff]
    %v3790 = vld [vmem:[#allocation7 + $0x21c8] sm:$0xff]
    %v3791 = vld [vmem:[#allocation7 + $0x21d0] sm:$0xff]
    %v3792 = vld [vmem:[#allocation7 + $0x21d8] sm:$0xff]
    %v3793 = vld [vmem:[#allocation7 + $0x21e0] sm:$0xff]
    %v3794 = vld [vmem:[#allocation7 + $0x21e8] sm:$0xff]
    %v3795 = vld [vmem:[#allocation7 + $0x21f0] sm:$0xff]
    %v3796 = vld [vmem:[#allocation7 + $0x21f8] sm:$0xff]
    %v3797 = vld [vmem:[#allocation7 + $0x2200] sm:$0xff]
    %v3798 = vld [vmem:[#allocation7 + $0x2208] sm:$0xff]
    %v3799 = vld [vmem:[#allocation7 + $0x2210] sm:$0xff]
    %v3800 = vld [vmem:[#allocation7 + $0x2218] sm:$0xff]
    %v3801 = vld [vmem:[#allocation7 + $0x2220] sm:$0xff]
    %v3802 = vld [vmem:[#allocation7 + $0x2228] sm:$0xff]
    %v3803 = vld [vmem:[#allocation7 + $0x2230] sm:$0xff]
    %v3804 = vld [vmem:[#allocation7 + $0x2238] sm:$0xff]
    %v3805 = vld [vmem:[#allocation7 + $0x2240] sm:$0xff]
    %v3806 = vld [vmem:[#allocation7 + $0x2248] sm:$0xff]
    %v3807 = vld [vmem:[#allocation7 + $0x2250] sm:$0xff]
    %v3808 = vld [vmem:[#allocation7 + $0x2258] sm:$0xff]
    %v3809 = vld [vmem:[#allocation7 + $0x2260] sm:$0xff]
    %v3810 = vld [vmem:[#allocation7 + $0x2268] sm:$0xff]
    %v3811 = vld [vmem:[#allocation7 + $0x2270] sm:$0xff]
    %v3812 = vld [vmem:[#allocation7 + $0x2278] sm:$0xff]
    %v3813 = vld [vmem:[#allocation7 + $0x2280] sm:$0xff]
    %v3814 = vld [vmem:[#allocation7 + $0x2288] sm:$0xff]
    %v3815 = vld [vmem:[#allocation7 + $0x2290] sm:$0xff]
    %v3816 = vld [vmem:[#allocation7 + $0x2298] sm:$0xff]
    %v3817 = vld [vmem:[#allocation7 + $0x22a0] sm:$0xff]
    %v3818 = vld [vmem:[#allocation7 + $0x22a8] sm:$0xff]
    %v3819 = vld [vmem:[#allocation7 + $0x22b0] sm:$0xff]
    %v3820 = vld [vmem:[#allocation7 + $0x22b8] sm:$0xff]
    %v3821 = vld [vmem:[#allocation7 + $0x22c0] sm:$0xff]
    %v3822 = vld [vmem:[#allocation7 + $0x22c8] sm:$0xff]
    %v3823 = vld [vmem:[#allocation7 + $0x22d0] sm:$0xff]
    %v3824 = vld [vmem:[#allocation7 + $0x22d8] sm:$0xff]
    %v3825 = vld [vmem:[#allocation7 + $0x22e0] sm:$0xff]
    %v3826 = vld [vmem:[#allocation7 + $0x22e8] sm:$0xff]
    %v3827 = vld [vmem:[#allocation7 + $0x22f0] sm:$0xff]
    %v3828 = vld [vmem:[#allocation7 + $0x22f8] sm:$0xff]
    %v3829 = vld [vmem:[#allocation7 + $0x2300] sm:$0xff]
    %v3830 = vld [vmem:[#allocation7 + $0x2308] sm:$0xff]
    %v3831 = vld [vmem:[#allocation7 + $0x2310] sm:$0xff]
    %v3832 = vld [vmem:[#allocation7 + $0x2318] sm:$0xff]
    %v3833 = vld [vmem:[#allocation7 + $0x2320] sm:$0xff]
    %v3834 = vld [vmem:[#allocation7 + $0x2328] sm:$0xff]
    %v3835 = vld [vmem:[#allocation7 + $0x2330] sm:$0xff]
    %v3836 = vld [vmem:[#allocation7 + $0x2338] sm:$0xff]
    %v3837 = vld [vmem:[#allocation7 + $0x2340] sm:$0xff]
    %v3838 = vld [vmem:[#allocation7 + $0x2348] sm:$0xff]
    %v3839 = vld [vmem:[#allocation7 + $0x2350] sm:$0xff]
    %v3840 = vld [vmem:[#allocation7 + $0x2358] sm:$0xff]
    %v3841 = vld [vmem:[#allocation7 + $0x2360] sm:$0xff]
    %v3842 = vld [vmem:[#allocation7 + $0x2368] sm:$0xff]
    %v3843 = vld [vmem:[#allocation7 + $0x2370] sm:$0xff]
    %v3844 = vld [vmem:[#allocation7 + $0x2378] sm:$0xff]
    %v3845 = vld [vmem:[#allocation7 + $0x2380] sm:$0xff]
    %v3846 = vld [vmem:[#allocation7 + $0x2388] sm:$0xff]
    %v3847 = vld [vmem:[#allocation7 + $0x2390] sm:$0xff]
    %v3848 = vld [vmem:[#allocation7 + $0x2398] sm:$0xff]
    %v3849 = vld [vmem:[#allocation7 + $0x23a0] sm:$0xff]
    %v3850 = vld [vmem:[#allocation7 + $0x23a8] sm:$0xff]
    %v3851 = vld [vmem:[#allocation7 + $0x23b0] sm:$0xff]
    %v3852 = vld [vmem:[#allocation7 + $0x23b8] sm:$0xff]
    %v3853 = vld [vmem:[#allocation7 + $0x23c0] sm:$0xff]
    %v3854 = vld [vmem:[#allocation7 + $0x23c8] sm:$0xff]
    %v3855 = vld [vmem:[#allocation7 + $0x23d0] sm:$0xff]
    %v3856 = vld [vmem:[#allocation7 + $0x23d8] sm:$0xff]
    %v3857 = vld [vmem:[#allocation7 + $0x23e0] sm:$0xff]
    %v3858 = vld [vmem:[#allocation7 + $0x23e8] sm:$0xff]
    %v3859 = vld [vmem:[#allocation7 + $0x23f0] sm:$0xff]
    %v3860 = vld [vmem:[#allocation7 + $0x23f8] sm:$0xff]
    %v3861 = vld [vmem:[#allocation7 + $0x2400] sm:$0xff]
    %v3862 = vld [vmem:[#allocation7 + $0x2408] sm:$0xff]
    %v3863 = vld [vmem:[#allocation7 + $0x2410] sm:$0xff]
    %v3864 = vld [vmem:[#allocation7 + $0x2418] sm:$0xff]
    %v3865 = vld [vmem:[#allocation7 + $0x2420] sm:$0xff]
    %v3866 = vld [vmem:[#allocation7 + $0x2428] sm:$0xff]
    %v3867 = vld [vmem:[#allocation7 + $0x2430] sm:$0xff]
    %v3868 = vld [vmem:[#allocation7 + $0x2438] sm:$0xff]
    %v3869 = vld [vmem:[#allocation7 + $0x2440] sm:$0xff]
    %v3870 = vld [vmem:[#allocation7 + $0x2448] sm:$0xff]
    %v3871 = vld [vmem:[#allocation7 + $0x2450] sm:$0xff]
    %v3872 = vld [vmem:[#allocation7 + $0x2458] sm:$0xff]
    %v3873 = vld [vmem:[#allocation7 + $0x2460] sm:$0xff]
    %v3874 = vld [vmem:[#allocation7 + $0x2468] sm:$0xff]
    %v3875 = vld [vmem:[#allocation7 + $0x2470] sm:$0xff]
    %v3876 = vld [vmem:[#allocation7 + $0x2478] sm:$0xff]
    %v3877 = vld [vmem:[#allocation7 + $0x2480] sm:$0xff]
    %v3878 = vld [vmem:[#allocation7 + $0x2488] sm:$0xff]
    %v3879 = vld [vmem:[#allocation7 + $0x2490] sm:$0xff]
    %v3880 = vld [vmem:[#allocation7 + $0x2498] sm:$0xff]
    %v3881 = vld [vmem:[#allocation7 + $0x24a0] sm:$0xff]
    %v3882 = vld [vmem:[#allocation7 + $0x24a8] sm:$0xff]
    %v3883 = vld [vmem:[#allocation7 + $0x24b0] sm:$0xff]
    %v3884 = vld [vmem:[#allocation7 + $0x24b8] sm:$0xff]
    %v3885 = vld [vmem:[#allocation7 + $0x24c0] sm:$0xff]
    %v3886 = vld [vmem:[#allocation7 + $0x24c8] sm:$0xff]
    %v3887 = vld [vmem:[#allocation7 + $0x24d0] sm:$0xff]
    %v3888 = vld [vmem:[#allocation7 + $0x24d8] sm:$0xff]
    %v3889 = vld [vmem:[#allocation7 + $0x24e0] sm:$0xff]
    %v3890 = vld [vmem:[#allocation7 + $0x24e8] sm:$0xff]
    %v3891 = vld [vmem:[#allocation7 + $0x24f0] sm:$0xff]
    %v3892 = vld [vmem:[#allocation7 + $0x24f8] sm:$0xff]
    %v3893 = vld [vmem:[#allocation7 + $0x2500] sm:$0xff]
    %v3894 = vld [vmem:[#allocation7 + $0x2508] sm:$0xff]
    %v3895 = vld [vmem:[#allocation7 + $0x2510] sm:$0xff]
    %v3896 = vld [vmem:[#allocation7 + $0x2518] sm:$0xff]
    %v3897 = vld [vmem:[#allocation7 + $0x2520] sm:$0xff]
    %v3898 = vld [vmem:[#allocation7 + $0x2528] sm:$0xff]
    %v3899 = vld [vmem:[#allocation7 + $0x2530] sm:$0xff]
    %v3900 = vld [vmem:[#allocation7 + $0x2538] sm:$0xff]
    %v3901 = vld [vmem:[#allocation7 + $0x2540] sm:$0xff]
    %v3902 = vld [vmem:[#allocation7 + $0x2548] sm:$0xff]
    %v3903 = vld [vmem:[#allocation7 + $0x2550] sm:$0xff]
    %v3904 = vld [vmem:[#allocation7 + $0x2558] sm:$0xff]
    %v3905 = vld [vmem:[#allocation7 + $0x2560] sm:$0xff]
    %v3906 = vld [vmem:[#allocation7 + $0x2568] sm:$0xff]
    %v3907 = vld [vmem:[#allocation7 + $0x2570] sm:$0xff]
    %v3908 = vld [vmem:[#allocation7 + $0x2578] sm:$0xff]
    %v3909 = vld [vmem:[#allocation9] sm:$0x3f]
    %v3911 = vlaneseq
    %v3912 = vshrl.u32 %v3911, 7
    %v3913 = vsub.s32 0, %v3912
    %v3914 = vrot.slane %v3909, %v3913
    %v3915 = vlaneseq
    %v3916 = vshrl.u32 %v3915, 7
    %v3917 = vsub.s32 1, %v3916
    %v3918 = vrot.slane %v3909, %v3917
    %v3919 = vlaneseq
    %v3920 = vshrl.u32 %v3919, 7
    %v3921 = vsub.s32 2, %v3920
    %v3922 = vrot.slane %v3909, %v3921
    %v3923 = vlaneseq
    %v3924 = vshrl.u32 %v3923, 7
    %v3925 = vsub.s32 3, %v3924
    %v3926 = vrot.slane %v3909, %v3925
    %v3927 = vlaneseq
    %v3928 = vshrl.u32 %v3927, 7
    %v3929 = vsub.s32 4, %v3928
    %v3930 = vrot.slane %v3909, %v3929
    %v3931 = vlaneseq
    %v3932 = vshrl.u32 %v3931, 7
    %v3933 = vsub.s32 5, %v3932
    %v3934 = vrot.slane %v3909, %v3933
    %v5141 = vunpack.c.l.b16 %v2709
    %v5142 = vunpack.c.h.b16 %v2709
    %v5143 = vunpack.c.l.b16 %v2710
    %v5144 = vunpack.c.h.b16 %v2710
    %v5145 = vunpack.c.l.b16 %v2711
    %v5146 = vunpack.c.h.b16 %v2711
    %v5147 = vunpack.c.l.b16 %v2712
    %v5148 = vunpack.c.h.b16 %v2712
    %v5149 = vunpack.c.l.b16 %v2713
    %v5150 = vunpack.c.h.b16 %v2713
    %v5151 = vunpack.c.l.b16 %v2714
    %v5152 = vunpack.c.h.b16 %v2714
    %v5153 = vunpack.c.l.b16 %v2715
    %v5154 = vunpack.c.h.b16 %v2715
    %v5155 = vunpack.c.l.b16 %v2716
    %v5156 = vunpack.c.h.b16 %v2716
    %v5157 = vunpack.c.l.b16 %v2717
    %v5158 = vunpack.c.h.b16 %v2717
    %v5159 = vunpack.c.l.b16 %v2718
    %v5160 = vunpack.c.h.b16 %v2718
    %v5161 = vunpack.c.l.b16 %v2719
    %v5162 = vunpack.c.h.b16 %v2719
    %v5163 = vunpack.c.l.b16 %v2720
    %v5164 = vunpack.c.h.b16 %v2720
    %v5165 = vunpack.c.l.b16 %v2721
    %v5166 = vunpack.c.h.b16 %v2721
    %v5167 = vunpack.c.l.b16 %v2722
    %v5168 = vunpack.c.h.b16 %v2722
    %v5169 = vunpack.c.l.b16 %v2723
    %v5170 = vunpack.c.h.b16 %v2723
    %v5171 = vunpack.c.l.b16 %v2724
    %v5172 = vunpack.c.h.b16 %v2724
    %v5173 = vunpack.c.l.b16 %v2725
    %v5174 = vunpack.c.h.b16 %v2725
    %v5175 = vunpack.c.l.b16 %v2726
    %v5176 = vunpack.c.h.b16 %v2726
    %v5177 = vunpack.c.l.b16 %v2727
    %v5178 = vunpack.c.h.b16 %v2727
    %v5179 = vunpack.c.l.b16 %v2728
    %v5180 = vunpack.c.h.b16 %v2728
    %v5181 = vunpack.c.l.b16 %v2729
    %v5182 = vunpack.c.h.b16 %v2729
    %v5183 = vunpack.c.l.b16 %v2730
    %v5184 = vunpack.c.h.b16 %v2730
    %v5185 = vunpack.c.l.b16 %v2731
    %v5186 = vunpack.c.h.b16 %v2731
    %v5187 = vunpack.c.l.b16 %v2732
    %v5188 = vunpack.c.h.b16 %v2732
    %v5189 = vunpack.c.l.b16 %v2733
    %v5190 = vunpack.c.h.b16 %v2733
    %v5191 = vunpack.c.l.b16 %v2734
    %v5192 = vunpack.c.h.b16 %v2734
    %v5193 = vunpack.c.l.b16 %v2735
    %v5194 = vunpack.c.h.b16 %v2735
    %v5195 = vunpack.c.l.b16 %v2736
    %v5196 = vunpack.c.h.b16 %v2736
    %v5197 = vunpack.c.l.b16 %v2737
    %v5198 = vunpack.c.h.b16 %v2737
    %v5199 = vunpack.c.l.b16 %v2738
    %v5200 = vunpack.c.h.b16 %v2738
    %v5201 = vunpack.c.l.b16 %v2739
    %v5202 = vunpack.c.h.b16 %v2739
    %v5203 = vunpack.c.l.b16 %v2740
    %v5204 = vunpack.c.h.b16 %v2740
    %v5205 = vunpack.c.l.b16 %v2741
    %v5206 = vunpack.c.h.b16 %v2741
    %v5207 = vunpack.c.l.b16 %v2742
    %v5208 = vunpack.c.h.b16 %v2742
    %v5209 = vunpack.c.l.b16 %v2743
    %v5210 = vunpack.c.h.b16 %v2743
    %v5211 = vunpack.c.l.b16 %v2744
    %v5212 = vunpack.c.h.b16 %v2744
    %v5213 = vunpack.c.l.b16 %v2745
    %v5214 = vunpack.c.h.b16 %v2745
    %v5215 = vunpack.c.l.b16 %v2746
    %v5216 = vunpack.c.h.b16 %v2746
    %v5217 = vunpack.c.l.b16 %v2747
    %v5218 = vunpack.c.h.b16 %v2747
    %v5219 = vunpack.c.l.b16 %v2748
    %v5220 = vunpack.c.h.b16 %v2748
    %v5221 = vunpack.c.l.b16 %v2749
    %v5222 = vunpack.c.h.b16 %v2749
    %v5223 = vunpack.c.l.b16 %v2750
    %v5224 = vunpack.c.h.b16 %v2750
    %v5225 = vunpack.c.l.b16 %v2751
    %v5226 = vunpack.c.h.b16 %v2751
    %v5227 = vunpack.c.l.b16 %v2752
    %v5228 = vunpack.c.h.b16 %v2752
    %v5229 = vunpack.c.l.b16 %v2753
    %v5230 = vunpack.c.h.b16 %v2753
    %v5231 = vunpack.c.l.b16 %v2754
    %v5232 = vunpack.c.h.b16 %v2754
    %v5233 = vunpack.c.l.b16 %v2755
    %v5234 = vunpack.c.h.b16 %v2755
    %v5235 = vunpack.c.l.b16 %v2756
    %v5236 = vunpack.c.h.b16 %v2756
    %v5237 = vunpack.c.l.b16 %v2757
    %v5238 = vunpack.c.h.b16 %v2757
    %v5239 = vunpack.c.l.b16 %v2758
    %v5240 = vunpack.c.h.b16 %v2758
    %v5241 = vunpack.c.l.b16 %v2759
    %v5242 = vunpack.c.h.b16 %v2759
    %v5243 = vunpack.c.l.b16 %v2760
    %v5244 = vunpack.c.h.b16 %v2760
    %v5245 = vunpack.c.l.b16 %v2761
    %v5246 = vunpack.c.h.b16 %v2761
    %v5247 = vunpack.c.l.b16 %v2762
    %v5248 = vunpack.c.h.b16 %v2762
    %v5249 = vunpack.c.l.b16 %v2763
    %v5250 = vunpack.c.h.b16 %v2763
    %v5251 = vunpack.c.l.b16 %v2764
    %v5252 = vunpack.c.h.b16 %v2764
    %v5253 = vunpack.c.l.b16 %v2765
    %v5254 = vunpack.c.h.b16 %v2765
    %v5255 = vunpack.c.l.b16 %v2766
    %v5256 = vunpack.c.h.b16 %v2766
    %v5257 = vunpack.c.l.b16 %v2767
    %v5258 = vunpack.c.h.b16 %v2767
    %v5259 = vunpack.c.l.b16 %v2768
    %v5260 = vunpack.c.h.b16 %v2768
    %v5261 = vunpack.c.l.b16 %v2769
    %v5262 = vunpack.c.h.b16 %v2769
    %v5263 = vunpack.c.l.b16 %v2770
    %v5264 = vunpack.c.h.b16 %v2770
    %v5265 = vunpack.c.l.b16 %v2771
    %v5266 = vunpack.c.h.b16 %v2771
    %v5267 = vunpack.c.l.b16 %v2772
    %v5268 = vunpack.c.h.b16 %v2772
    %v5269 = vunpack.c.l.b16 %v2773
    %v5270 = vunpack.c.h.b16 %v2773
    %v5271 = vunpack.c.l.b16 %v2774
    %v5272 = vunpack.c.h.b16 %v2774
    %v5273 = vunpack.c.l.b16 %v2775
    %v5274 = vunpack.c.h.b16 %v2775
    %v5275 = vunpack.c.l.b16 %v2776
    %v5276 = vunpack.c.h.b16 %v2776
    %v5277 = vunpack.c.l.b16 %v2777
    %v5278 = vunpack.c.h.b16 %v2777
    %v5279 = vunpack.c.l.b16 %v2778
    %v5280 = vunpack.c.h.b16 %v2778
    %v5281 = vunpack.c.l.b16 %v2779
    %v5282 = vunpack.c.h.b16 %v2779
    %v5283 = vunpack.c.l.b16 %v2780
    %v5284 = vunpack.c.h.b16 %v2780
    %v5285 = vunpack.c.l.b16 %v2781
    %v5286 = vunpack.c.h.b16 %v2781
    %v5287 = vunpack.c.l.b16 %v2782
    %v5288 = vunpack.c.h.b16 %v2782
    %v5289 = vunpack.c.l.b16 %v2783
    %v5290 = vunpack.c.h.b16 %v2783
    %v5291 = vunpack.c.l.b16 %v2784
    %v5292 = vunpack.c.h.b16 %v2784
    %v5293 = vunpack.c.l.b16 %v2785
    %v5294 = vunpack.c.h.b16 %v2785
    %v5295 = vunpack.c.l.b16 %v2786
    %v5296 = vunpack.c.h.b16 %v2786
    %v5297 = vunpack.c.l.b16 %v2787
    %v5298 = vunpack.c.h.b16 %v2787
    %v5299 = vunpack.c.l.b16 %v2788
    %v5300 = vunpack.c.h.b16 %v2788
    %v5301 = vunpack.c.l.b16 %v2789
    %v5302 = vunpack.c.h.b16 %v2789
    %v5303 = vunpack.c.l.b16 %v2790
    %v5304 = vunpack.c.h.b16 %v2790
    %v5305 = vunpack.c.l.b16 %v2791
    %v5306 = vunpack.c.h.b16 %v2791
    %v5307 = vunpack.c.l.b16 %v2792
    %v5308 = vunpack.c.h.b16 %v2792
    %v5309 = vunpack.c.l.b16 %v2793
    %v5310 = vunpack.c.h.b16 %v2793
    %v5311 = vunpack.c.l.b16 %v2794
    %v5312 = vunpack.c.h.b16 %v2794
    %v5313 = vunpack.c.l.b16 %v2795
    %v5314 = vunpack.c.h.b16 %v2795
    %v5315 = vunpack.c.l.b16 %v2796
    %v5316 = vunpack.c.h.b16 %v2796
    %v5317 = vunpack.c.l.b16 %v2797
    %v5318 = vunpack.c.h.b16 %v2797
    %v5319 = vunpack.c.l.b16 %v2798
    %v5320 = vunpack.c.h.b16 %v2798
    %v5321 = vunpack.c.l.b16 %v2799
    %v5322 = vunpack.c.h.b16 %v2799
    %v5323 = vunpack.c.l.b16 %v2800
    %v5324 = vunpack.c.h.b16 %v2800
    %v5325 = vunpack.c.l.b16 %v2801
    %v5326 = vunpack.c.h.b16 %v2801
    %v5327 = vunpack.c.l.b16 %v2802
    %v5328 = vunpack.c.h.b16 %v2802
    %v5329 = vunpack.c.l.b16 %v2803
    %v5330 = vunpack.c.h.b16 %v2803
    %v5331 = vunpack.c.l.b16 %v2804
    %v5332 = vunpack.c.h.b16 %v2804
    %v5333 = vunpack.c.l.b16 %v2805
    %v5334 = vunpack.c.h.b16 %v2805
    %v5335 = vunpack.c.l.b16 %v2806
    %v5336 = vunpack.c.h.b16 %v2806
    %v5337 = vunpack.c.l.b16 %v2807
    %v5338 = vunpack.c.h.b16 %v2807
    %v5339 = vunpack.c.l.b16 %v2808
    %v5340 = vunpack.c.h.b16 %v2808
    %v5341 = vunpack.c.l.b16 %v2809
    %v5342 = vunpack.c.h.b16 %v2809
    %v5343 = vunpack.c.l.b16 %v2810
    %v5344 = vunpack.c.h.b16 %v2810
    %v5345 = vunpack.c.l.b16 %v2811
    %v5346 = vunpack.c.h.b16 %v2811
    %v5347 = vunpack.c.l.b16 %v2812
    %v5348 = vunpack.c.h.b16 %v2812
    %v5349 = vunpack.c.l.b16 %v2813
    %v5350 = vunpack.c.h.b16 %v2813
    %v5351 = vunpack.c.l.b16 %v2814
    %v5352 = vunpack.c.h.b16 %v2814
    %v5353 = vunpack.c.l.b16 %v2815
    %v5354 = vunpack.c.h.b16 %v2815
    %v5355 = vunpack.c.l.b16 %v2816
    %v5356 = vunpack.c.h.b16 %v2816
    %v5357 = vunpack.c.l.b16 %v2817
    %v5358 = vunpack.c.h.b16 %v2817
    %v5359 = vunpack.c.l.b16 %v2818
    %v5360 = vunpack.c.h.b16 %v2818
    %v5361 = vunpack.c.l.b16 %v2819
    %v5362 = vunpack.c.h.b16 %v2819
    %v5363 = vunpack.c.l.b16 %v2820
    %v5364 = vunpack.c.h.b16 %v2820
    %v5365 = vunpack.c.l.b16 %v2821
    %v5366 = vunpack.c.h.b16 %v2821
    %v5367 = vunpack.c.l.b16 %v2822
    %v5368 = vunpack.c.h.b16 %v2822
    %v5369 = vunpack.c.l.b16 %v2823
    %v5370 = vunpack.c.h.b16 %v2823
    %v5371 = vunpack.c.l.b16 %v2824
    %v5372 = vunpack.c.h.b16 %v2824
    %v5373 = vunpack.c.l.b16 %v2825
    %v5374 = vunpack.c.h.b16 %v2825
    %v5375 = vunpack.c.l.b16 %v2826
    %v5376 = vunpack.c.h.b16 %v2826
    %v5377 = vunpack.c.l.b16 %v2827
    %v5378 = vunpack.c.h.b16 %v2827
    %v5379 = vunpack.c.l.b16 %v2828
    %v5380 = vunpack.c.h.b16 %v2828
    %v5381 = vunpack.c.l.b16 %v2829
    %v5382 = vunpack.c.h.b16 %v2829
    %v5383 = vunpack.c.l.b16 %v2830
    %v5384 = vunpack.c.h.b16 %v2830
    %v5385 = vunpack.c.l.b16 %v2831
    %v5386 = vunpack.c.h.b16 %v2831
    %v5387 = vunpack.c.l.b16 %v2832
    %v5388 = vunpack.c.h.b16 %v2832
    %v5389 = vunpack.c.l.b16 %v2833
    %v5390 = vunpack.c.h.b16 %v2833
    %v5391 = vunpack.c.l.b16 %v2834
    %v5392 = vunpack.c.h.b16 %v2834
    %v5393 = vunpack.c.l.b16 %v2835
    %v5394 = vunpack.c.h.b16 %v2835
    %v5395 = vunpack.c.l.b16 %v2836
    %v5396 = vunpack.c.h.b16 %v2836
    %v5397 = vunpack.c.l.b16 %v2837
    %v5398 = vunpack.c.h.b16 %v2837
    %v5399 = vunpack.c.l.b16 %v2838
    %v5400 = vunpack.c.h.b16 %v2838
    %v5401 = vunpack.c.l.b16 %v2839
    %v5402 = vunpack.c.h.b16 %v2839
    %v5403 = vunpack.c.l.b16 %v2840
    %v5404 = vunpack.c.h.b16 %v2840
    %v5405 = vunpack.c.l.b16 %v2841
    %v5406 = vunpack.c.h.b16 %v2841
    %v5407 = vunpack.c.l.b16 %v2842
    %v5408 = vunpack.c.h.b16 %v2842
    %v5409 = vunpack.c.l.b16 %v2843
    %v5410 = vunpack.c.h.b16 %v2843
    %v5411 = vunpack.c.l.b16 %v2844
    %v5412 = vunpack.c.h.b16 %v2844
    %v5413 = vunpack.c.l.b16 %v2845
    %v5414 = vunpack.c.h.b16 %v2845
    %v5415 = vunpack.c.l.b16 %v2846
    %v5416 = vunpack.c.h.b16 %v2846
    %v5417 = vunpack.c.l.b16 %v2847
    %v5418 = vunpack.c.h.b16 %v2847
    %v5419 = vunpack.c.l.b16 %v2848
    %v5420 = vunpack.c.h.b16 %v2848
    %v5421 = vunpack.c.l.b16 %v2849
    %v5422 = vunpack.c.h.b16 %v2849
    %v5423 = vunpack.c.l.b16 %v2850
    %v5424 = vunpack.c.h.b16 %v2850
    %v5425 = vunpack.c.l.b16 %v2851
    %v5426 = vunpack.c.h.b16 %v2851
    %v5427 = vunpack.c.l.b16 %v2852
    %v5428 = vunpack.c.h.b16 %v2852
    %v5429 = vunpack.c.l.b16 %v2853
    %v5430 = vunpack.c.h.b16 %v2853
    %v5431 = vunpack.c.l.b16 %v2854
    %v5432 = vunpack.c.h.b16 %v2854
    %v5433 = vunpack.c.l.b16 %v2855
    %v5434 = vunpack.c.h.b16 %v2855
    %v5435 = vunpack.c.l.b16 %v2856
    %v5436 = vunpack.c.h.b16 %v2856
    %v5437 = vunpack.c.l.b16 %v2857
    %v5438 = vunpack.c.h.b16 %v2857
    %v5439 = vunpack.c.l.b16 %v2858
    %v5440 = vunpack.c.h.b16 %v2858
    %v5441 = vunpack.c.l.b16 %v2859
    %v5442 = vunpack.c.h.b16 %v2859
    %v5443 = vunpack.c.l.b16 %v2860
    %v5444 = vunpack.c.h.b16 %v2860
    %v5445 = vunpack.c.l.b16 %v2861
    %v5446 = vunpack.c.h.b16 %v2861
    %v5447 = vunpack.c.l.b16 %v2862
    %v5448 = vunpack.c.h.b16 %v2862
    %v5449 = vunpack.c.l.b16 %v2863
    %v5450 = vunpack.c.h.b16 %v2863
    %v5451 = vunpack.c.l.b16 %v2864
    %v5452 = vunpack.c.h.b16 %v2864
    %v5453 = vunpack.c.l.b16 %v2865
    %v5454 = vunpack.c.h.b16 %v2865
    %v5455 = vunpack.c.l.b16 %v2866
    %v5456 = vunpack.c.h.b16 %v2866
    %v5457 = vunpack.c.l.b16 %v2867
    %v5458 = vunpack.c.h.b16 %v2867
    %v5459 = vunpack.c.l.b16 %v2868
    %v5460 = vunpack.c.h.b16 %v2868
    %v5461 = vunpack.c.l.b16 %v2869
    %v5462 = vunpack.c.h.b16 %v2869
    %v5463 = vunpack.c.l.b16 %v2870
    %v5464 = vunpack.c.h.b16 %v2870
    %v5465 = vunpack.c.l.b16 %v2871
    %v5466 = vunpack.c.h.b16 %v2871
    %v5467 = vunpack.c.l.b16 %v2872
    %v5468 = vunpack.c.h.b16 %v2872
    %v5469 = vunpack.c.l.b16 %v2873
    %v5470 = vunpack.c.h.b16 %v2873
    %v5471 = vunpack.c.l.b16 %v2874
    %v5472 = vunpack.c.h.b16 %v2874
    %v5473 = vunpack.c.l.b16 %v2875
    %v5474 = vunpack.c.h.b16 %v2875
    %v5475 = vunpack.c.l.b16 %v2876
    %v5476 = vunpack.c.h.b16 %v2876
    %v5477 = vunpack.c.l.b16 %v2877
    %v5478 = vunpack.c.h.b16 %v2877
    %v5479 = vunpack.c.l.b16 %v2878
    %v5480 = vunpack.c.h.b16 %v2878
    %v5481 = vunpack.c.l.b16 %v2879
    %v5482 = vunpack.c.h.b16 %v2879
    %v5483 = vunpack.c.l.b16 %v2880
    %v5484 = vunpack.c.h.b16 %v2880
    %v5485 = vunpack.c.l.b16 %v2881
    %v5486 = vunpack.c.h.b16 %v2881
    %v5487 = vunpack.c.l.b16 %v2882
    %v5488 = vunpack.c.h.b16 %v2882
    %v5489 = vunpack.c.l.b16 %v2883
    %v5490 = vunpack.c.h.b16 %v2883
    %v5491 = vunpack.c.l.b16 %v2884
    %v5492 = vunpack.c.h.b16 %v2884
    %v5493 = vunpack.c.l.b16 %v2885
    %v5494 = vunpack.c.h.b16 %v2885
    %v5495 = vunpack.c.l.b16 %v2886
    %v5496 = vunpack.c.h.b16 %v2886
    %v5497 = vunpack.c.l.b16 %v2887
    %v5498 = vunpack.c.h.b16 %v2887
    %v5499 = vunpack.c.l.b16 %v2888
    %v5500 = vunpack.c.h.b16 %v2888
    %v5501 = vunpack.c.l.b16 %v2889
    %v5502 = vunpack.c.h.b16 %v2889
    %v5503 = vunpack.c.l.b16 %v2890
    %v5504 = vunpack.c.h.b16 %v2890
    %v5505 = vunpack.c.l.b16 %v2891
    %v5506 = vunpack.c.h.b16 %v2891
    %v5507 = vunpack.c.l.b16 %v2892
    %v5508 = vunpack.c.h.b16 %v2892
    %v5509 = vunpack.c.l.b16 %v2893
    %v5510 = vunpack.c.h.b16 %v2893
    %v5511 = vunpack.c.l.b16 %v2894
    %v5512 = vunpack.c.h.b16 %v2894
    %v5513 = vunpack.c.l.b16 %v2895
    %v5514 = vunpack.c.h.b16 %v2895
    %v5515 = vunpack.c.l.b16 %v2896
    %v5516 = vunpack.c.h.b16 %v2896
    %v5517 = vunpack.c.l.b16 %v2897
    %v5518 = vunpack.c.h.b16 %v2897
    %v5519 = vunpack.c.l.b16 %v2898
    %v5520 = vunpack.c.h.b16 %v2898
    %v5521 = vunpack.c.l.b16 %v2899
    %v5522 = vunpack.c.h.b16 %v2899
    %v5523 = vunpack.c.l.b16 %v2900
    %v5524 = vunpack.c.h.b16 %v2900
    %v5525 = vunpack.c.l.b16 %v2901
    %v5526 = vunpack.c.h.b16 %v2901
    %v5527 = vunpack.c.l.b16 %v2902
    %v5528 = vunpack.c.h.b16 %v2902
    %v5529 = vunpack.c.l.b16 %v2903
    %v5530 = vunpack.c.h.b16 %v2903
    %v5531 = vunpack.c.l.b16 %v2904
    %v5532 = vunpack.c.h.b16 %v2904
    %v5533 = vunpack.c.l.b16 %v2905
    %v5534 = vunpack.c.h.b16 %v2905
    %v5535 = vunpack.c.l.b16 %v2906
    %v5536 = vunpack.c.h.b16 %v2906
    %v5537 = vunpack.c.l.b16 %v2907
    %v5538 = vunpack.c.h.b16 %v2907
    %v5539 = vunpack.c.l.b16 %v2908
    %v5540 = vunpack.c.h.b16 %v2908
    %v5541 = vunpack.c.l.b16 %v2909
    %v5542 = vunpack.c.h.b16 %v2909
    %v5543 = vunpack.c.l.b16 %v2910
    %v5544 = vunpack.c.h.b16 %v2910
    %v5545 = vunpack.c.l.b16 %v2911
    %v5546 = vunpack.c.h.b16 %v2911
    %v5547 = vunpack.c.l.b16 %v2912
    %v5548 = vunpack.c.h.b16 %v2912
    %v5549 = vunpack.c.l.b16 %v2913
    %v5550 = vunpack.c.h.b16 %v2913
    %v5551 = vunpack.c.l.b16 %v2914
    %v5552 = vunpack.c.h.b16 %v2914
    %v5553 = vunpack.c.l.b16 %v2915
    %v5554 = vunpack.c.h.b16 %v2915
    %v5555 = vunpack.c.l.b16 %v2916
    %v5556 = vunpack.c.h.b16 %v2916
    %v5557 = vunpack.c.l.b16 %v2917
    %v5558 = vunpack.c.h.b16 %v2917
    %v5559 = vunpack.c.l.b16 %v2918
    %v5560 = vunpack.c.h.b16 %v2918
    %v5561 = vunpack.c.l.b16 %v2919
    %v5562 = vunpack.c.h.b16 %v2919
    %v5563 = vunpack.c.l.b16 %v2920
    %v5564 = vunpack.c.h.b16 %v2920
    %v5565 = vunpack.c.l.b16 %v2921
    %v5566 = vunpack.c.h.b16 %v2921
    %v5567 = vunpack.c.l.b16 %v2922
    %v5568 = vunpack.c.h.b16 %v2922
    %v5569 = vunpack.c.l.b16 %v2923
    %v5570 = vunpack.c.h.b16 %v2923
    %v5571 = vunpack.c.l.b16 %v2924
    %v5572 = vunpack.c.h.b16 %v2924
    %v5573 = vunpack.c.l.b16 %v2925
    %v5574 = vunpack.c.h.b16 %v2925
    %v5575 = vunpack.c.l.b16 %v2926
    %v5576 = vunpack.c.h.b16 %v2926
    %v5577 = vunpack.c.l.b16 %v2927
    %v5578 = vunpack.c.h.b16 %v2927
    %v5579 = vunpack.c.l.b16 %v2928
    %v5580 = vunpack.c.h.b16 %v2928
    %v5581 = vunpack.c.l.b16 %v2929
    %v5582 = vunpack.c.h.b16 %v2929
    %v5583 = vunpack.c.l.b16 %v2930
    %v5584 = vunpack.c.h.b16 %v2930
    %v5585 = vunpack.c.l.b16 %v2931
    %v5586 = vunpack.c.h.b16 %v2931
    %v5587 = vunpack.c.l.b16 %v2932
    %v5588 = vunpack.c.h.b16 %v2932
    %v5589 = vunpack.c.l.b16 %v2933
    %v5590 = vunpack.c.h.b16 %v2933
    %v5591 = vunpack.c.l.b16 %v2934
    %v5592 = vunpack.c.h.b16 %v2934
    %v5593 = vunpack.c.l.b16 %v2935
    %v5594 = vunpack.c.h.b16 %v2935
    %v5595 = vunpack.c.l.b16 %v2936
    %v5596 = vunpack.c.h.b16 %v2936
    %v5597 = vunpack.c.l.b16 %v2937
    %v5598 = vunpack.c.h.b16 %v2937
    %v5599 = vunpack.c.l.b16 %v2938
    %v5600 = vunpack.c.h.b16 %v2938
    %v5601 = vunpack.c.l.b16 %v2939
    %v5602 = vunpack.c.h.b16 %v2939
    %v5603 = vunpack.c.l.b16 %v2940
    %v5604 = vunpack.c.h.b16 %v2940
    %v5605 = vunpack.c.l.b16 %v2941
    %v5606 = vunpack.c.h.b16 %v2941
    %v5607 = vunpack.c.l.b16 %v2942
    %v5608 = vunpack.c.h.b16 %v2942
    %v5609 = vunpack.c.l.b16 %v2943
    %v5610 = vunpack.c.h.b16 %v2943
    %v5611 = vunpack.c.l.b16 %v2944
    %v5612 = vunpack.c.h.b16 %v2944
    %v5613 = vunpack.c.l.b16 %v2945
    %v5614 = vunpack.c.h.b16 %v2945
    %v5615 = vunpack.c.l.b16 %v2946
    %v5616 = vunpack.c.h.b16 %v2946
    %v5617 = vunpack.c.l.b16 %v2947
    %v5618 = vunpack.c.h.b16 %v2947
    %v5619 = vunpack.c.l.b16 %v2948
    %v5620 = vunpack.c.h.b16 %v2948
    %v5621 = vunpack.c.l.b16 %v2949
    %v5622 = vunpack.c.h.b16 %v2949
    %v5623 = vunpack.c.l.b16 %v2950
    %v5624 = vunpack.c.h.b16 %v2950
    %v5625 = vunpack.c.l.b16 %v2951
    %v5626 = vunpack.c.h.b16 %v2951
    %v5627 = vunpack.c.l.b16 %v2952
    %v5628 = vunpack.c.h.b16 %v2952
    %v5629 = vunpack.c.l.b16 %v2953
    %v5630 = vunpack.c.h.b16 %v2953
    %v5631 = vunpack.c.l.b16 %v2954
    %v5632 = vunpack.c.h.b16 %v2954
    %v5633 = vunpack.c.l.b16 %v2955
    %v5634 = vunpack.c.h.b16 %v2955
    %v5635 = vunpack.c.l.b16 %v2956
    %v5636 = vunpack.c.h.b16 %v2956
    %v5637 = vunpack.c.l.b16 %v2957
    %v5638 = vunpack.c.h.b16 %v2957
    %v5639 = vunpack.c.l.b16 %v2958
    %v5640 = vunpack.c.h.b16 %v2958
    %v5641 = vunpack.c.l.b16 %v2959
    %v5642 = vunpack.c.h.b16 %v2959
    %v5643 = vunpack.c.l.b16 %v2960
    %v5644 = vunpack.c.h.b16 %v2960
    %v5645 = vunpack.c.l.b16 %v2961
    %v5646 = vunpack.c.h.b16 %v2961
    %v5647 = vunpack.c.l.b16 %v2962
    %v5648 = vunpack.c.h.b16 %v2962
    %v5649 = vunpack.c.l.b16 %v2963
    %v5650 = vunpack.c.h.b16 %v2963
    %v5651 = vunpack.c.l.b16 %v2964
    %v5652 = vunpack.c.h.b16 %v2964
    %v5653 = vunpack.c.l.b16 %v2965
    %v5654 = vunpack.c.h.b16 %v2965
    %v5655 = vunpack.c.l.b16 %v2966
    %v5656 = vunpack.c.h.b16 %v2966
    %v5657 = vunpack.c.l.b16 %v2967
    %v5658 = vunpack.c.h.b16 %v2967
    %v5659 = vunpack.c.l.b16 %v2968
    %v5660 = vunpack.c.h.b16 %v2968
    %v5661 = vunpack.c.l.b16 %v2969
    %v5662 = vunpack.c.h.b16 %v2969
    %v5663 = vunpack.c.l.b16 %v2970
    %v5664 = vunpack.c.h.b16 %v2970
    %v5665 = vunpack.c.l.b16 %v2971
    %v5666 = vunpack.c.h.b16 %v2971
    %v5667 = vunpack.c.l.b16 %v2972
    %v5668 = vunpack.c.h.b16 %v2972
    %v5669 = vunpack.c.l.b16 %v2973
    %v5670 = vunpack.c.h.b16 %v2973
    %v5671 = vunpack.c.l.b16 %v2974
    %v5672 = vunpack.c.h.b16 %v2974
    %v5673 = vunpack.c.l.b16 %v2975
    %v5674 = vunpack.c.h.b16 %v2975
    %v5675 = vunpack.c.l.b16 %v2976
    %v5676 = vunpack.c.h.b16 %v2976
    %v5677 = vunpack.c.l.b16 %v2977
    %v5678 = vunpack.c.h.b16 %v2977
    %v5679 = vunpack.c.l.b16 %v2978
    %v5680 = vunpack.c.h.b16 %v2978
    %v5681 = vunpack.c.l.b16 %v2979
    %v5682 = vunpack.c.h.b16 %v2979
    %v5683 = vunpack.c.l.b16 %v2980
    %v5684 = vunpack.c.h.b16 %v2980
    %v5685 = vunpack.c.l.b16 %v2981
    %v5686 = vunpack.c.h.b16 %v2981
    %v5687 = vunpack.c.l.b16 %v2982
    %v5688 = vunpack.c.h.b16 %v2982
    %v5689 = vunpack.c.l.b16 %v2983
    %v5690 = vunpack.c.h.b16 %v2983
    %v5691 = vunpack.c.l.b16 %v2984
    %v5692 = vunpack.c.h.b16 %v2984
    %v5693 = vunpack.c.l.b16 %v2985
    %v5694 = vunpack.c.h.b16 %v2985
    %v5695 = vunpack.c.l.b16 %v2986
    %v5696 = vunpack.c.h.b16 %v2986
    %v5697 = vunpack.c.l.b16 %v2987
    %v5698 = vunpack.c.h.b16 %v2987
    %v5699 = vunpack.c.l.b16 %v2988
    %v5700 = vunpack.c.h.b16 %v2988
    %v5701 = vunpack.c.l.b16 %v2989
    %v5702 = vunpack.c.h.b16 %v2989
    %v5703 = vunpack.c.l.b16 %v2990
    %v5704 = vunpack.c.h.b16 %v2990
    %v5705 = vunpack.c.l.b16 %v2991
    %v5706 = vunpack.c.h.b16 %v2991
    %v5707 = vunpack.c.l.b16 %v2992
    %v5708 = vunpack.c.h.b16 %v2992
    %v5709 = vunpack.c.l.b16 %v2993
    %v5710 = vunpack.c.h.b16 %v2993
    %v5711 = vunpack.c.l.b16 %v2994
    %v5712 = vunpack.c.h.b16 %v2994
    %v5713 = vunpack.c.l.b16 %v2995
    %v5714 = vunpack.c.h.b16 %v2995
    %v5715 = vunpack.c.l.b16 %v2996
    %v5716 = vunpack.c.h.b16 %v2996
    %v5717 = vunpack.c.l.b16 %v2997
    %v5718 = vunpack.c.h.b16 %v2997
    %v5719 = vunpack.c.l.b16 %v2998
    %v5720 = vunpack.c.h.b16 %v2998
    %v5721 = vunpack.c.l.b16 %v2999
    %v5722 = vunpack.c.h.b16 %v2999
    %v5723 = vunpack.c.l.b16 %v3000
    %v5724 = vunpack.c.h.b16 %v3000
    %v5725 = vunpack.c.l.b16 %v3001
    %v5726 = vunpack.c.h.b16 %v3001
    %v5727 = vunpack.c.l.b16 %v3002
    %v5728 = vunpack.c.h.b16 %v3002
    %v5729 = vunpack.c.l.b16 %v3003
    %v5730 = vunpack.c.h.b16 %v3003
    %v5731 = vunpack.c.l.b16 %v3004
    %v5732 = vunpack.c.h.b16 %v3004
    %v5733 = vunpack.c.l.b16 %v3005
    %v5734 = vunpack.c.h.b16 %v3005
    %v5735 = vunpack.c.l.b16 %v3006
    %v5736 = vunpack.c.h.b16 %v3006
    %v5737 = vunpack.c.l.b16 %v3007
    %v5738 = vunpack.c.h.b16 %v3007
    %v5739 = vunpack.c.l.b16 %v3008
    %v5740 = vunpack.c.h.b16 %v3008
    %v5741 = vunpack.c.l.b16 %v3009
    %v5742 = vunpack.c.h.b16 %v3009
    %v5743 = vunpack.c.l.b16 %v3010
    %v5744 = vunpack.c.h.b16 %v3010
    %v5745 = vunpack.c.l.b16 %v3011
    %v5746 = vunpack.c.h.b16 %v3011
    %v5747 = vunpack.c.l.b16 %v3012
    %v5748 = vunpack.c.h.b16 %v3012
    %v5749 = vunpack.c.l.b16 %v3013
    %v5750 = vunpack.c.h.b16 %v3013
    %v5751 = vunpack.c.l.b16 %v3014
    %v5752 = vunpack.c.h.b16 %v3014
    %v5753 = vunpack.c.l.b16 %v3015
    %v5754 = vunpack.c.h.b16 %v3015
    %v5755 = vunpack.c.l.b16 %v3016
    %v5756 = vunpack.c.h.b16 %v3016
    %v5757 = vunpack.c.l.b16 %v3017
    %v5758 = vunpack.c.h.b16 %v3017
    %v5759 = vunpack.c.l.b16 %v3018
    %v5760 = vunpack.c.h.b16 %v3018
    %v5761 = vunpack.c.l.b16 %v3019
    %v5762 = vunpack.c.h.b16 %v3019
    %v5763 = vunpack.c.l.b16 %v3020
    %v5764 = vunpack.c.h.b16 %v3020
    %v5765 = vunpack.c.l.b16 %v3021
    %v5766 = vunpack.c.h.b16 %v3021
    %v5767 = vunpack.c.l.b16 %v3022
    %v5768 = vunpack.c.h.b16 %v3022
    %v5769 = vunpack.c.l.b16 %v3023
    %v5770 = vunpack.c.h.b16 %v3023
    %v5771 = vunpack.c.l.b16 %v3024
    %v5772 = vunpack.c.h.b16 %v3024
    %v5773 = vunpack.c.l.b16 %v3025
    %v5774 = vunpack.c.h.b16 %v3025
    %v5775 = vunpack.c.l.b16 %v3026
    %v5776 = vunpack.c.h.b16 %v3026
    %v5777 = vunpack.c.l.b16 %v3027
    %v5778 = vunpack.c.h.b16 %v3027
    %v5779 = vunpack.c.l.b16 %v3028
    %v5780 = vunpack.c.h.b16 %v3028
    %v5781 = vunpack.c.l.b16 %v3029
    %v5782 = vunpack.c.h.b16 %v3029
    %v5783 = vunpack.c.l.b16 %v3030
    %v5784 = vunpack.c.h.b16 %v3030
    %v5785 = vunpack.c.l.b16 %v3031
    %v5786 = vunpack.c.h.b16 %v3031
    %v5787 = vunpack.c.l.b16 %v3032
    %v5788 = vunpack.c.h.b16 %v3032
    %v5789 = vunpack.c.l.b16 %v3033
    %v5790 = vunpack.c.h.b16 %v3033
    %v5791 = vunpack.c.l.b16 %v3034
    %v5792 = vunpack.c.h.b16 %v3034
    %v5793 = vunpack.c.l.b16 %v3035
    %v5794 = vunpack.c.h.b16 %v3035
    %v5795 = vunpack.c.l.b16 %v3036
    %v5796 = vunpack.c.h.b16 %v3036
    %v5797 = vunpack.c.l.b16 %v3037
    %v5798 = vunpack.c.h.b16 %v3037
    %v5799 = vunpack.c.l.b16 %v3038
    %v5800 = vunpack.c.h.b16 %v3038
    %v5801 = vunpack.c.l.b16 %v3039
    %v5802 = vunpack.c.h.b16 %v3039
    %v5803 = vunpack.c.l.b16 %v3040
    %v5804 = vunpack.c.h.b16 %v3040
    %v5805 = vunpack.c.l.b16 %v3041
    %v5806 = vunpack.c.h.b16 %v3041
    %v5807 = vunpack.c.l.b16 %v3042
    %v5808 = vunpack.c.h.b16 %v3042
    %v5809 = vunpack.c.l.b16 %v3043
    %v5810 = vunpack.c.h.b16 %v3043
    %v5811 = vunpack.c.l.b16 %v3044
    %v5812 = vunpack.c.h.b16 %v3044
    %v5813 = vunpack.c.l.b16 %v3045
    %v5814 = vunpack.c.h.b16 %v3045
    %v5815 = vunpack.c.l.b16 %v3046
    %v5816 = vunpack.c.h.b16 %v3046
    %v5817 = vunpack.c.l.b16 %v3047
    %v5818 = vunpack.c.h.b16 %v3047
    %v5819 = vunpack.c.l.b16 %v3048
    %v5820 = vunpack.c.h.b16 %v3048
    %v5821 = vunpack.c.l.b16 %v3049
    %v5822 = vunpack.c.h.b16 %v3049
    %v5823 = vunpack.c.l.b16 %v3050
    %v5824 = vunpack.c.h.b16 %v3050
    %v5825 = vunpack.c.l.b16 %v3051
    %v5826 = vunpack.c.h.b16 %v3051
    %v5827 = vunpack.c.l.b16 %v3052
    %v5828 = vunpack.c.h.b16 %v3052
    %v5829 = vunpack.c.l.b16 %v3053
    %v5830 = vunpack.c.h.b16 %v3053
    %v5831 = vunpack.c.l.b16 %v3054
    %v5832 = vunpack.c.h.b16 %v3054
    %v5833 = vunpack.c.l.b16 %v3055
    %v5834 = vunpack.c.h.b16 %v3055
    %v5835 = vunpack.c.l.b16 %v3056
    %v5836 = vunpack.c.h.b16 %v3056
    %v5837 = vunpack.c.l.b16 %v3057
    %v5838 = vunpack.c.h.b16 %v3057
    %v5839 = vunpack.c.l.b16 %v3058
    %v5840 = vunpack.c.h.b16 %v3058
    %v5841 = vunpack.c.l.b16 %v3059
    %v5842 = vunpack.c.h.b16 %v3059
    %v5843 = vunpack.c.l.b16 %v3060
    %v5844 = vunpack.c.h.b16 %v3060
    %v5845 = vunpack.c.l.b16 %v3061
    %v5846 = vunpack.c.h.b16 %v3061
    %v5847 = vunpack.c.l.b16 %v3062
    %v5848 = vunpack.c.h.b16 %v3062
    %v5849 = vunpack.c.l.b16 %v3063
    %v5850 = vunpack.c.h.b16 %v3063
    %v5851 = vunpack.c.l.b16 %v3064
    %v5852 = vunpack.c.h.b16 %v3064
    %v5853 = vunpack.c.l.b16 %v3065
    %v5854 = vunpack.c.h.b16 %v3065
    %v5855 = vunpack.c.l.b16 %v3066
    %v5856 = vunpack.c.h.b16 %v3066
    %v5857 = vunpack.c.l.b16 %v3067
    %v5858 = vunpack.c.h.b16 %v3067
    %v5859 = vunpack.c.l.b16 %v3068
    %v5860 = vunpack.c.h.b16 %v3068
    %v5861 = vunpack.c.l.b16 %v3069
    %v5862 = vunpack.c.h.b16 %v3069
    %v5863 = vunpack.c.l.b16 %v3070
    %v5864 = vunpack.c.h.b16 %v3070
    %v5865 = vunpack.c.l.b16 %v3071
    %v5866 = vunpack.c.h.b16 %v3071
    %v5867 = vunpack.c.l.b16 %v3072
    %v5868 = vunpack.c.h.b16 %v3072
    %v5869 = vunpack.c.l.b16 %v3073
    %v5870 = vunpack.c.h.b16 %v3073
    %v5871 = vunpack.c.l.b16 %v3074
    %v5872 = vunpack.c.h.b16 %v3074
    %v5873 = vunpack.c.l.b16 %v3075
    %v5874 = vunpack.c.h.b16 %v3075
    %v5875 = vunpack.c.l.b16 %v3076
    %v5876 = vunpack.c.h.b16 %v3076
    %v5877 = vunpack.c.l.b16 %v3077
    %v5878 = vunpack.c.h.b16 %v3077
    %v5879 = vunpack.c.l.b16 %v3078
    %v5880 = vunpack.c.h.b16 %v3078
    %v5881 = vunpack.c.l.b16 %v3079
    %v5882 = vunpack.c.h.b16 %v3079
    %v5883 = vunpack.c.l.b16 %v3080
    %v5884 = vunpack.c.h.b16 %v3080
    %v5885 = vunpack.c.l.b16 %v3081
    %v5886 = vunpack.c.h.b16 %v3081
    %v5887 = vunpack.c.l.b16 %v3082
    %v5888 = vunpack.c.h.b16 %v3082
    %v5889 = vunpack.c.l.b16 %v3083
    %v5890 = vunpack.c.h.b16 %v3083
    %v5891 = vunpack.c.l.b16 %v3084
    %v5892 = vunpack.c.h.b16 %v3084
    %v5893 = vunpack.c.l.b16 %v3085
    %v5894 = vunpack.c.h.b16 %v3085
    %v5895 = vunpack.c.l.b16 %v3086
    %v5896 = vunpack.c.h.b16 %v3086
    %v5897 = vunpack.c.l.b16 %v3087
    %v5898 = vunpack.c.h.b16 %v3087
    %v5899 = vunpack.c.l.b16 %v3088
    %v5900 = vunpack.c.h.b16 %v3088
    %v5901 = vunpack.c.l.b16 %v3089
    %v5902 = vunpack.c.h.b16 %v3089
    %v5903 = vunpack.c.l.b16 %v3090
    %v5904 = vunpack.c.h.b16 %v3090
    %v5905 = vunpack.c.l.b16 %v3091
    %v5906 = vunpack.c.h.b16 %v3091
    %v5907 = vunpack.c.l.b16 %v3092
    %v5908 = vunpack.c.h.b16 %v3092
    %v5909 = vunpack.c.l.b16 %v3093
    %v5910 = vunpack.c.h.b16 %v3093
    %v5911 = vunpack.c.l.b16 %v3094
    %v5912 = vunpack.c.h.b16 %v3094
    %v5913 = vunpack.c.l.b16 %v3095
    %v5914 = vunpack.c.h.b16 %v3095
    %v5915 = vunpack.c.l.b16 %v3096
    %v5916 = vunpack.c.h.b16 %v3096
    %v5917 = vunpack.c.l.b16 %v3097
    %v5918 = vunpack.c.h.b16 %v3097
    %v5919 = vunpack.c.l.b16 %v3098
    %v5920 = vunpack.c.h.b16 %v3098
    %v5921 = vunpack.c.l.b16 %v3099
    %v5922 = vunpack.c.h.b16 %v3099
    %v5923 = vunpack.c.l.b16 %v3100
    %v5924 = vunpack.c.h.b16 %v3100
    %v5925 = vunpack.c.l.b16 %v3101
    %v5926 = vunpack.c.h.b16 %v3101
    %v5927 = vunpack.c.l.b16 %v3102
    %v5928 = vunpack.c.h.b16 %v3102
    %v5929 = vunpack.c.l.b16 %v3103
    %v5930 = vunpack.c.h.b16 %v3103
    %v5931 = vunpack.c.l.b16 %v3104
    %v5932 = vunpack.c.h.b16 %v3104
    %v5933 = vunpack.c.l.b16 %v3105
    %v5934 = vunpack.c.h.b16 %v3105
    %v5935 = vunpack.c.l.b16 %v3106
    %v5936 = vunpack.c.h.b16 %v3106
    %v5937 = vunpack.c.l.b16 %v3107
    %v5938 = vunpack.c.h.b16 %v3107
    %v5939 = vunpack.c.l.b16 %v3108
    %v5940 = vunpack.c.h.b16 %v3108
    %v5941 = vunpack.c.l.b16 %v3109
    %v5942 = vunpack.c.h.b16 %v3109
    %v5943 = vunpack.c.l.b16 %v3110
    %v5944 = vunpack.c.h.b16 %v3110
    %v5945 = vunpack.c.l.b16 %v3111
    %v5946 = vunpack.c.h.b16 %v3111
    %v5947 = vunpack.c.l.b16 %v3112
    %v5948 = vunpack.c.h.b16 %v3112
    %v5949 = vunpack.c.l.b16 %v3113
    %v5950 = vunpack.c.h.b16 %v3113
    %v5951 = vunpack.c.l.b16 %v3114
    %v5952 = vunpack.c.h.b16 %v3114
    %v5953 = vunpack.c.l.b16 %v3115
    %v5954 = vunpack.c.h.b16 %v3115
    %v5955 = vunpack.c.l.b16 %v3116
    %v5956 = vunpack.c.h.b16 %v3116
    %v5957 = vunpack.c.l.b16 %v3117
    %v5958 = vunpack.c.h.b16 %v3117
    %v5959 = vunpack.c.l.b16 %v3118
    %v5960 = vunpack.c.h.b16 %v3118
    %v5961 = vunpack.c.l.b16 %v3119
    %v5962 = vunpack.c.h.b16 %v3119
    %v5963 = vunpack.c.l.b16 %v3120
    %v5964 = vunpack.c.h.b16 %v3120
    %v5965 = vunpack.c.l.b16 %v3121
    %v5966 = vunpack.c.h.b16 %v3121
    %v5967 = vunpack.c.l.b16 %v3122
    %v5968 = vunpack.c.h.b16 %v3122
    %v5969 = vunpack.c.l.b16 %v3123
    %v5970 = vunpack.c.h.b16 %v3123
    %v5971 = vunpack.c.l.b16 %v3124
    %v5972 = vunpack.c.h.b16 %v3124
    %v5973 = vunpack.c.l.b16 %v3125
    %v5974 = vunpack.c.h.b16 %v3125
    %v5975 = vunpack.c.l.b16 %v3126
    %v5976 = vunpack.c.h.b16 %v3126
    %v5977 = vunpack.c.l.b16 %v3127
    %v5978 = vunpack.c.h.b16 %v3127
    %v5979 = vunpack.c.l.b16 %v3128
    %v5980 = vunpack.c.h.b16 %v3128
    %v5981 = vunpack.c.l.b16 %v3129
    %v5982 = vunpack.c.h.b16 %v3129
    %v5983 = vunpack.c.l.b16 %v3130
    %v5984 = vunpack.c.h.b16 %v3130
    %v5985 = vunpack.c.l.b16 %v3131
    %v5986 = vunpack.c.h.b16 %v3131
    %v5987 = vunpack.c.l.b16 %v3132
    %v5988 = vunpack.c.h.b16 %v3132
    %v5989 = vunpack.c.l.b16 %v3133
    %v5990 = vunpack.c.h.b16 %v3133
    %v5991 = vunpack.c.l.b16 %v3134
    %v5992 = vunpack.c.h.b16 %v3134
    %v5993 = vunpack.c.l.b16 %v3135
    %v5994 = vunpack.c.h.b16 %v3135
    %v5995 = vunpack.c.l.b16 %v3136
    %v5996 = vunpack.c.h.b16 %v3136
    %v5997 = vunpack.c.l.b16 %v3137
    %v5998 = vunpack.c.h.b16 %v3137
    %v5999 = vunpack.c.l.b16 %v3138
    %v6000 = vunpack.c.h.b16 %v3138
    %v6001 = vunpack.c.l.b16 %v3139
    %v6002 = vunpack.c.h.b16 %v3139
    %v6003 = vunpack.c.l.b16 %v3140
    %v6004 = vunpack.c.h.b16 %v3140
    %v6005 = vunpack.c.l.b16 %v3141
    %v6006 = vunpack.c.h.b16 %v3141
    %v6007 = vunpack.c.l.b16 %v3142
    %v6008 = vunpack.c.h.b16 %v3142
    %v6009 = vunpack.c.l.b16 %v3143
    %v6010 = vunpack.c.h.b16 %v3143
    %v6011 = vunpack.c.l.b16 %v3144
    %v6012 = vunpack.c.h.b16 %v3144
    %v6013 = vunpack.c.l.b16 %v3145
    %v6014 = vunpack.c.h.b16 %v3145
    %v6015 = vunpack.c.l.b16 %v3146
    %v6016 = vunpack.c.h.b16 %v3146
    %v6017 = vunpack.c.l.b16 %v3147
    %v6018 = vunpack.c.h.b16 %v3147
    %v6019 = vunpack.c.l.b16 %v3148
    %v6020 = vunpack.c.h.b16 %v3148
    %v6021 = vunpack.c.l.b16 %v3149
    %v6022 = vunpack.c.h.b16 %v3149
    %v6023 = vunpack.c.l.b16 %v3150
    %v6024 = vunpack.c.h.b16 %v3150
    %v6025 = vunpack.c.l.b16 %v3151
    %v6026 = vunpack.c.h.b16 %v3151
    %v6027 = vunpack.c.l.b16 %v3152
    %v6028 = vunpack.c.h.b16 %v3152
    %v6029 = vunpack.c.l.b16 %v3153
    %v6030 = vunpack.c.h.b16 %v3153
    %v6031 = vunpack.c.l.b16 %v3154
    %v6032 = vunpack.c.h.b16 %v3154
    %v6033 = vunpack.c.l.b16 %v3155
    %v6034 = vunpack.c.h.b16 %v3155
    %v6035 = vunpack.c.l.b16 %v3156
    %v6036 = vunpack.c.h.b16 %v3156
    %v6037 = vunpack.c.l.b16 %v3157
    %v6038 = vunpack.c.h.b16 %v3157
    %v6039 = vunpack.c.l.b16 %v3158
    %v6040 = vunpack.c.h.b16 %v3158
    %v6041 = vunpack.c.l.b16 %v3159
    %v6042 = vunpack.c.h.b16 %v3159
    %v6043 = vunpack.c.l.b16 %v3160
    %v6044 = vunpack.c.h.b16 %v3160
    %v6045 = vunpack.c.l.b16 %v3161
    %v6046 = vunpack.c.h.b16 %v3161
    %v6047 = vunpack.c.l.b16 %v3162
    %v6048 = vunpack.c.h.b16 %v3162
    %v6049 = vunpack.c.l.b16 %v3163
    %v6050 = vunpack.c.h.b16 %v3163
    %v6051 = vunpack.c.l.b16 %v3164
    %v6052 = vunpack.c.h.b16 %v3164
    %v6053 = vunpack.c.l.b16 %v3165
    %v6054 = vunpack.c.h.b16 %v3165
    %v6055 = vunpack.c.l.b16 %v3166
    %v6056 = vunpack.c.h.b16 %v3166
    %v6057 = vunpack.c.l.b16 %v3167
    %v6058 = vunpack.c.h.b16 %v3167
    %v6059 = vunpack.c.l.b16 %v3168
    %v6060 = vunpack.c.h.b16 %v3168
    %v6061 = vunpack.c.l.b16 %v3169
    %v6062 = vunpack.c.h.b16 %v3169
    %v6063 = vunpack.c.l.b16 %v3170
    %v6064 = vunpack.c.h.b16 %v3170
    %v6065 = vunpack.c.l.b16 %v3171
    %v6066 = vunpack.c.h.b16 %v3171
    %v6067 = vunpack.c.l.b16 %v3172
    %v6068 = vunpack.c.h.b16 %v3172
    %v6069 = vunpack.c.l.b16 %v3173
    %v6070 = vunpack.c.h.b16 %v3173
    %v6071 = vunpack.c.l.b16 %v3174
    %v6072 = vunpack.c.h.b16 %v3174
    %v6073 = vunpack.c.l.b16 %v3175
    %v6074 = vunpack.c.h.b16 %v3175
    %v6075 = vunpack.c.l.b16 %v3176
    %v6076 = vunpack.c.h.b16 %v3176
    %v6077 = vunpack.c.l.b16 %v3177
    %v6078 = vunpack.c.h.b16 %v3177
    %v6079 = vunpack.c.l.b16 %v3178
    %v6080 = vunpack.c.h.b16 %v3178
    %v6081 = vunpack.c.l.b16 %v3179
    %v6082 = vunpack.c.h.b16 %v3179
    %v6083 = vunpack.c.l.b16 %v3180
    %v6084 = vunpack.c.h.b16 %v3180
    %v6085 = vunpack.c.l.b16 %v3181
    %v6086 = vunpack.c.h.b16 %v3181
    %v6087 = vunpack.c.l.b16 %v3182
    %v6088 = vunpack.c.h.b16 %v3182
    %v6089 = vunpack.c.l.b16 %v3183
    %v6090 = vunpack.c.h.b16 %v3183
    %v6091 = vunpack.c.l.b16 %v3184
    %v6092 = vunpack.c.h.b16 %v3184
    %v6093 = vunpack.c.l.b16 %v3185
    %v6094 = vunpack.c.h.b16 %v3185
    %v6095 = vunpack.c.l.b16 %v3186
    %v6096 = vunpack.c.h.b16 %v3186
    %v6097 = vunpack.c.l.b16 %v3187
    %v6098 = vunpack.c.h.b16 %v3187
    %v6099 = vunpack.c.l.b16 %v3188
    %v6100 = vunpack.c.h.b16 %v3188
    %v6101 = vunpack.c.l.b16 %v3189
    %v6102 = vunpack.c.h.b16 %v3189
    %v6103 = vunpack.c.l.b16 %v3190
    %v6104 = vunpack.c.h.b16 %v3190
    %v6105 = vunpack.c.l.b16 %v3191
    %v6106 = vunpack.c.h.b16 %v3191
    %v6107 = vunpack.c.l.b16 %v3192
    %v6108 = vunpack.c.h.b16 %v3192
    %v6109 = vunpack.c.l.b16 %v3193
    %v6110 = vunpack.c.h.b16 %v3193
    %v6111 = vunpack.c.l.b16 %v3194
    %v6112 = vunpack.c.h.b16 %v3194
    %v6113 = vunpack.c.l.b16 %v3195
    %v6114 = vunpack.c.h.b16 %v3195
    %v6115 = vunpack.c.l.b16 %v3196
    %v6116 = vunpack.c.h.b16 %v3196
    %v6117 = vunpack.c.l.b16 %v3197
    %v6118 = vunpack.c.h.b16 %v3197
    %v6119 = vunpack.c.l.b16 %v3198
    %v6120 = vunpack.c.h.b16 %v3198
    %v6121 = vunpack.c.l.b16 %v3199
    %v6122 = vunpack.c.h.b16 %v3199
    %v6123 = vunpack.c.l.b16 %v3200
    %v6124 = vunpack.c.h.b16 %v3200
    %v6125 = vunpack.c.l.b16 %v3201
    %v6126 = vunpack.c.h.b16 %v3201
    %v6127 = vunpack.c.l.b16 %v3202
    %v6128 = vunpack.c.h.b16 %v3202
    %v6129 = vunpack.c.l.b16 %v3203
    %v6130 = vunpack.c.h.b16 %v3203
    %v6131 = vunpack.c.l.b16 %v3204
    %v6132 = vunpack.c.h.b16 %v3204
    %v6133 = vunpack.c.l.b16 %v3205
    %v6134 = vunpack.c.h.b16 %v3205
    %v6135 = vunpack.c.l.b16 %v3206
    %v6136 = vunpack.c.h.b16 %v3206
    %v6137 = vunpack.c.l.b16 %v3207
    %v6138 = vunpack.c.h.b16 %v3207
    %v6139 = vunpack.c.l.b16 %v3208
    %v6140 = vunpack.c.h.b16 %v3208
    %v6141 = vunpack.c.l.b16 %v3209
    %v6142 = vunpack.c.h.b16 %v3209
    %v6143 = vunpack.c.l.b16 %v3210
    %v6144 = vunpack.c.h.b16 %v3210
    %v6145 = vunpack.c.l.b16 %v3211
    %v6146 = vunpack.c.h.b16 %v3211
    %v6147 = vunpack.c.l.b16 %v3212
    %v6148 = vunpack.c.h.b16 %v3212
    %v6149 = vunpack.c.l.b16 %v3213
    %v6150 = vunpack.c.h.b16 %v3213
    %v6151 = vunpack.c.l.b16 %v3214
    %v6152 = vunpack.c.h.b16 %v3214
    %v6153 = vunpack.c.l.b16 %v3215
    %v6154 = vunpack.c.h.b16 %v3215
    %v6155 = vunpack.c.l.b16 %v3216
    %v6156 = vunpack.c.h.b16 %v3216
    %v6157 = vunpack.c.l.b16 %v3217
    %v6158 = vunpack.c.h.b16 %v3217
    %v6159 = vunpack.c.l.b16 %v3218
    %v6160 = vunpack.c.h.b16 %v3218
    %v6161 = vunpack.c.l.b16 %v3219
    %v6162 = vunpack.c.h.b16 %v3219
    %v6163 = vunpack.c.l.b16 %v3220
    %v6164 = vunpack.c.h.b16 %v3220
    %v6165 = vunpack.c.l.b16 %v3221
    %v6166 = vunpack.c.h.b16 %v3221
    %v6167 = vunpack.c.l.b16 %v3222
    %v6168 = vunpack.c.h.b16 %v3222
    %v6169 = vunpack.c.l.b16 %v3223
    %v6170 = vunpack.c.h.b16 %v3223
    %v6171 = vunpack.c.l.b16 %v3224
    %v6172 = vunpack.c.h.b16 %v3224
    %v6173 = vunpack.c.l.b16 %v3225
    %v6174 = vunpack.c.h.b16 %v3225
    %v6175 = vunpack.c.l.b16 %v3226
    %v6176 = vunpack.c.h.b16 %v3226
    %v6177 = vunpack.c.l.b16 %v3227
    %v6178 = vunpack.c.h.b16 %v3227
    %v6179 = vunpack.c.l.b16 %v3228
    %v6180 = vunpack.c.h.b16 %v3228
    %v6181 = vunpack.c.l.b16 %v3229
    %v6182 = vunpack.c.h.b16 %v3229
    %v6183 = vunpack.c.l.b16 %v3230
    %v6184 = vunpack.c.h.b16 %v3230
    %v6185 = vunpack.c.l.b16 %v3231
    %v6186 = vunpack.c.h.b16 %v3231
    %v6187 = vunpack.c.l.b16 %v3232
    %v6188 = vunpack.c.h.b16 %v3232
    %v6189 = vunpack.c.l.b16 %v3233
    %v6190 = vunpack.c.h.b16 %v3233
    %v6191 = vunpack.c.l.b16 %v3234
    %v6192 = vunpack.c.h.b16 %v3234
    %v6193 = vunpack.c.l.b16 %v3235
    %v6194 = vunpack.c.h.b16 %v3235
    %v6195 = vunpack.c.l.b16 %v3236
    %v6196 = vunpack.c.h.b16 %v3236
    %v6197 = vunpack.c.l.b16 %v3237
    %v6198 = vunpack.c.h.b16 %v3237
    %v6199 = vunpack.c.l.b16 %v3238
    %v6200 = vunpack.c.h.b16 %v3238
    %v6201 = vunpack.c.l.b16 %v3239
    %v6202 = vunpack.c.h.b16 %v3239
    %v6203 = vunpack.c.l.b16 %v3240
    %v6204 = vunpack.c.h.b16 %v3240
    %v6205 = vunpack.c.l.b16 %v3241
    %v6206 = vunpack.c.h.b16 %v3241
    %v6207 = vunpack.c.l.b16 %v3242
    %v6208 = vunpack.c.h.b16 %v3242
    %v6209 = vunpack.c.l.b16 %v3243
    %v6210 = vunpack.c.h.b16 %v3243
    %v6211 = vunpack.c.l.b16 %v3244
    %v6212 = vunpack.c.h.b16 %v3244
    %v6213 = vunpack.c.l.b16 %v3245
    %v6214 = vunpack.c.h.b16 %v3245
    %v6215 = vunpack.c.l.b16 %v3246
    %v6216 = vunpack.c.h.b16 %v3246
    %v6217 = vunpack.c.l.b16 %v3247
    %v6218 = vunpack.c.h.b16 %v3247
    %v6219 = vunpack.c.l.b16 %v3248
    %v6220 = vunpack.c.h.b16 %v3248
    %v6221 = vunpack.c.l.b16 %v3249
    %v6222 = vunpack.c.h.b16 %v3249
    %v6223 = vunpack.c.l.b16 %v3250
    %v6224 = vunpack.c.h.b16 %v3250
    %v6225 = vunpack.c.l.b16 %v3251
    %v6226 = vunpack.c.h.b16 %v3251
    %v6227 = vunpack.c.l.b16 %v3252
    %v6228 = vunpack.c.h.b16 %v3252
    %v6229 = vunpack.c.l.b16 %v3253
    %v6230 = vunpack.c.h.b16 %v3253
    %v6231 = vunpack.c.l.b16 %v3254
    %v6232 = vunpack.c.h.b16 %v3254
    %v6233 = vunpack.c.l.b16 %v3255
    %v6234 = vunpack.c.h.b16 %v3255
    %v6235 = vunpack.c.l.b16 %v3256
    %v6236 = vunpack.c.h.b16 %v3256
    %v6237 = vunpack.c.l.b16 %v3257
    %v6238 = vunpack.c.h.b16 %v3257
    %v6239 = vunpack.c.l.b16 %v3258
    %v6240 = vunpack.c.h.b16 %v3258
    %v6241 = vunpack.c.l.b16 %v3259
    %v6242 = vunpack.c.h.b16 %v3259
    %v6243 = vunpack.c.l.b16 %v3260
    %v6244 = vunpack.c.h.b16 %v3260
    %v6245 = vunpack.c.l.b16 %v3261
    %v6246 = vunpack.c.h.b16 %v3261
    %v6247 = vunpack.c.l.b16 %v3262
    %v6248 = vunpack.c.h.b16 %v3262
    %v6249 = vunpack.c.l.b16 %v3263
    %v6250 = vunpack.c.h.b16 %v3263
    %v6251 = vunpack.c.l.b16 %v3264
    %v6252 = vunpack.c.h.b16 %v3264
    %v6253 = vunpack.c.l.b16 %v3265
    %v6254 = vunpack.c.h.b16 %v3265
    %v6255 = vunpack.c.l.b16 %v3266
    %v6256 = vunpack.c.h.b16 %v3266
    %v6257 = vunpack.c.l.b16 %v3267
    %v6258 = vunpack.c.h.b16 %v3267
    %v6259 = vunpack.c.l.b16 %v3268
    %v6260 = vunpack.c.h.b16 %v3268
    %v6261 = vunpack.c.l.b16 %v3269
    %v6262 = vunpack.c.h.b16 %v3269
    %v6263 = vunpack.c.l.b16 %v3270
    %v6264 = vunpack.c.h.b16 %v3270
    %v6265 = vunpack.c.l.b16 %v3271
    %v6266 = vunpack.c.h.b16 %v3271
    %v6267 = vunpack.c.l.b16 %v3272
    %v6268 = vunpack.c.h.b16 %v3272
    %v6269 = vunpack.c.l.b16 %v3273
    %v6270 = vunpack.c.h.b16 %v3273
    %v6271 = vunpack.c.l.b16 %v3274
    %v6272 = vunpack.c.h.b16 %v3274
    %v6273 = vunpack.c.l.b16 %v3275
    %v6274 = vunpack.c.h.b16 %v3275
    %v6275 = vunpack.c.l.b16 %v3276
    %v6276 = vunpack.c.h.b16 %v3276
    %v6277 = vunpack.c.l.b16 %v3277
    %v6278 = vunpack.c.h.b16 %v3277
    %v6279 = vunpack.c.l.b16 %v3278
    %v6280 = vunpack.c.h.b16 %v3278
    %v6281 = vunpack.c.l.b16 %v3279
    %v6282 = vunpack.c.h.b16 %v3279
    %v6283 = vunpack.c.l.b16 %v3280
    %v6284 = vunpack.c.h.b16 %v3280
    %v6285 = vunpack.c.l.b16 %v3281
    %v6286 = vunpack.c.h.b16 %v3281
    %v6287 = vunpack.c.l.b16 %v3282
    %v6288 = vunpack.c.h.b16 %v3282
    %v6289 = vunpack.c.l.b16 %v3283
    %v6290 = vunpack.c.h.b16 %v3283
    %v6291 = vunpack.c.l.b16 %v3284
    %v6292 = vunpack.c.h.b16 %v3284
    %v6293 = vunpack.c.l.b16 %v3285
    %v6294 = vunpack.c.h.b16 %v3285
    %v6295 = vunpack.c.l.b16 %v3286
    %v6296 = vunpack.c.h.b16 %v3286
    %v6297 = vunpack.c.l.b16 %v3287
    %v6298 = vunpack.c.h.b16 %v3287
    %v6299 = vunpack.c.l.b16 %v3288
    %v6300 = vunpack.c.h.b16 %v3288
    %v6301 = vunpack.c.l.b16 %v3289
    %v6302 = vunpack.c.h.b16 %v3289
    %v6303 = vunpack.c.l.b16 %v3290
    %v6304 = vunpack.c.h.b16 %v3290
    %v6305 = vunpack.c.l.b16 %v3291
    %v6306 = vunpack.c.h.b16 %v3291
    %v6307 = vunpack.c.l.b16 %v3292
    %v6308 = vunpack.c.h.b16 %v3292
    %v6309 = vunpack.c.l.b16 %v3293
    %v6310 = vunpack.c.h.b16 %v3293
    %v6311 = vunpack.c.l.b16 %v3294
    %v6312 = vunpack.c.h.b16 %v3294
    %v6313 = vunpack.c.l.b16 %v3295
    %v6314 = vunpack.c.h.b16 %v3295
    %v6315 = vunpack.c.l.b16 %v3296
    %v6316 = vunpack.c.h.b16 %v3296
    %v6317 = vunpack.c.l.b16 %v3297
    %v6318 = vunpack.c.h.b16 %v3297
    %v6319 = vunpack.c.l.b16 %v3298
    %v6320 = vunpack.c.h.b16 %v3298
    %v6321 = vunpack.c.l.b16 %v3299
    %v6322 = vunpack.c.h.b16 %v3299
    %v6323 = vunpack.c.l.b16 %v3300
    %v6324 = vunpack.c.h.b16 %v3300
    %v6325 = vunpack.c.l.b16 %v3301
    %v6326 = vunpack.c.h.b16 %v3301
    %v6327 = vunpack.c.l.b16 %v3302
    %v6328 = vunpack.c.h.b16 %v3302
    %v6329 = vunpack.c.l.b16 %v3303
    %v6330 = vunpack.c.h.b16 %v3303
    %v6331 = vunpack.c.l.b16 %v3304
    %v6332 = vunpack.c.h.b16 %v3304
    %v6333 = vunpack.c.l.b16 %v3305
    %v6334 = vunpack.c.h.b16 %v3305
    %v6335 = vunpack.c.l.b16 %v3306
    %v6336 = vunpack.c.h.b16 %v3306
    %v6337 = vunpack.c.l.b16 %v3307
    %v6338 = vunpack.c.h.b16 %v3307
    %v6339 = vunpack.c.l.b16 %v3308
    %v6340 = vunpack.c.h.b16 %v3308
    %v6341 = vunpack.c.l.b16 %v3309
    %v6342 = vunpack.c.h.b16 %v3309
    %v6343 = vunpack.c.l.b16 %v3310
    %v6344 = vunpack.c.h.b16 %v3310
    %v6345 = vunpack.c.l.b16 %v3311
    %v6346 = vunpack.c.h.b16 %v3311
    %v6347 = vunpack.c.l.b16 %v3312
    %v6348 = vunpack.c.h.b16 %v3312
    %v6349 = vunpack.c.l.b16 %v3313
    %v6350 = vunpack.c.h.b16 %v3313
    %v6351 = vunpack.c.l.b16 %v3314
    %v6352 = vunpack.c.h.b16 %v3314
    %v6353 = vunpack.c.l.b16 %v3315
    %v6354 = vunpack.c.h.b16 %v3315
    %v6355 = vunpack.c.l.b16 %v3316
    %v6356 = vunpack.c.h.b16 %v3316
    %v6357 = vunpack.c.l.b16 %v3317
    %v6358 = vunpack.c.h.b16 %v3317
    %v6359 = vunpack.c.l.b16 %v3318
    %v6360 = vunpack.c.h.b16 %v3318
    %v6361 = vunpack.c.l.b16 %v3319
    %v6362 = vunpack.c.h.b16 %v3319
    %v6363 = vunpack.c.l.b16 %v3320
    %v6364 = vunpack.c.h.b16 %v3320
    %v6365 = vunpack.c.l.b16 %v3321
    %v6366 = vunpack.c.h.b16 %v3321
    %v6367 = vunpack.c.l.b16 %v3322
    %v6368 = vunpack.c.h.b16 %v3322
    %v6369 = vunpack.c.l.b16 %v3323
    %v6370 = vunpack.c.h.b16 %v3323
    %v6371 = vunpack.c.l.b16 %v3324
    %v6372 = vunpack.c.h.b16 %v3324
    %v6373 = vunpack.c.l.b16 %v3325
    %v6374 = vunpack.c.h.b16 %v3325
    %v6375 = vunpack.c.l.b16 %v3326
    %v6376 = vunpack.c.h.b16 %v3326
    %v6377 = vunpack.c.l.b16 %v3327
    %v6378 = vunpack.c.h.b16 %v3327
    %v6379 = vunpack.c.l.b16 %v3328
    %v6380 = vunpack.c.h.b16 %v3328
    %v6381 = vunpack.c.l.b16 %v3329
    %v6382 = vunpack.c.h.b16 %v3329
    %v6383 = vunpack.c.l.b16 %v3330
    %v6384 = vunpack.c.h.b16 %v3330
    %v6385 = vunpack.c.l.b16 %v3331
    %v6386 = vunpack.c.h.b16 %v3331
    %v6387 = vunpack.c.l.b16 %v3332
    %v6388 = vunpack.c.h.b16 %v3332
    %v6389 = vunpack.c.l.b16 %v3333
    %v6390 = vunpack.c.h.b16 %v3333
    %v6391 = vunpack.c.l.b16 %v3334
    %v6392 = vunpack.c.h.b16 %v3334
    %v6393 = vunpack.c.l.b16 %v3335
    %v6394 = vunpack.c.h.b16 %v3335
    %v6395 = vunpack.c.l.b16 %v3336
    %v6396 = vunpack.c.h.b16 %v3336
    %v6397 = vunpack.c.l.b16 %v3337
    %v6398 = vunpack.c.h.b16 %v3337
    %v6399 = vunpack.c.l.b16 %v3338
    %v6400 = vunpack.c.h.b16 %v3338
    %v6401 = vunpack.c.l.b16 %v3339
    %v6402 = vunpack.c.h.b16 %v3339
    %v6403 = vunpack.c.l.b16 %v3340
    %v6404 = vunpack.c.h.b16 %v3340
    %v6405 = vunpack.c.l.b16 %v3341
    %v6406 = vunpack.c.h.b16 %v3341
    %v6407 = vunpack.c.l.b16 %v3342
    %v6408 = vunpack.c.h.b16 %v3342
    %v6409 = vunpack.c.l.b16 %v3343
    %v6410 = vunpack.c.h.b16 %v3343
    %v6411 = vunpack.c.l.b16 %v3344
    %v6412 = vunpack.c.h.b16 %v3344
    %v6413 = vunpack.c.l.b16 %v3345
    %v6414 = vunpack.c.h.b16 %v3345
    %v6415 = vunpack.c.l.b16 %v3346
    %v6416 = vunpack.c.h.b16 %v3346
    %v6417 = vunpack.c.l.b16 %v3347
    %v6418 = vunpack.c.h.b16 %v3347
    %v6419 = vunpack.c.l.b16 %v3348
    %v6420 = vunpack.c.h.b16 %v3348
    %v6421 = vunpack.c.l.b16 %v3349
    %v6422 = vunpack.c.h.b16 %v3349
    %v6423 = vunpack.c.l.b16 %v3350
    %v6424 = vunpack.c.h.b16 %v3350
    %v6425 = vunpack.c.l.b16 %v3351
    %v6426 = vunpack.c.h.b16 %v3351
    %v6427 = vunpack.c.l.b16 %v3352
    %v6428 = vunpack.c.h.b16 %v3352
    %v6429 = vunpack.c.l.b16 %v3353
    %v6430 = vunpack.c.h.b16 %v3353
    %v6431 = vunpack.c.l.b16 %v3354
    %v6432 = vunpack.c.h.b16 %v3354
    %v6433 = vunpack.c.l.b16 %v3355
    %v6434 = vunpack.c.h.b16 %v3355
    %v6435 = vunpack.c.l.b16 %v3356
    %v6436 = vunpack.c.h.b16 %v3356
    %v6437 = vunpack.c.l.b16 %v3357
    %v6438 = vunpack.c.h.b16 %v3357
    %v6439 = vunpack.c.l.b16 %v3358
    %v6440 = vunpack.c.h.b16 %v3358
    %v6441 = vunpack.c.l.b16 %v3359
    %v6442 = vunpack.c.h.b16 %v3359
    %v6443 = vunpack.c.l.b16 %v3360
    %v6444 = vunpack.c.h.b16 %v3360
    %v6445 = vunpack.c.l.b16 %v3361
    %v6446 = vunpack.c.h.b16 %v3361
    %v6447 = vunpack.c.l.b16 %v3362
    %v6448 = vunpack.c.h.b16 %v3362
    %v6449 = vunpack.c.l.b16 %v3363
    %v6450 = vunpack.c.h.b16 %v3363
    %v6451 = vunpack.c.l.b16 %v3364
    %v6452 = vunpack.c.h.b16 %v3364
    %v6453 = vunpack.c.l.b16 %v3365
    %v6454 = vunpack.c.h.b16 %v3365
    %v6455 = vunpack.c.l.b16 %v3366
    %v6456 = vunpack.c.h.b16 %v3366
    %v6457 = vunpack.c.l.b16 %v3367
    %v6458 = vunpack.c.h.b16 %v3367
    %v6459 = vunpack.c.l.b16 %v3368
    %v6460 = vunpack.c.h.b16 %v3368
    %v6461 = vunpack.c.l.b16 %v3369
    %v6462 = vunpack.c.h.b16 %v3369
    %v6463 = vunpack.c.l.b16 %v3370
    %v6464 = vunpack.c.h.b16 %v3370
    %v6465 = vunpack.c.l.b16 %v3371
    %v6466 = vunpack.c.h.b16 %v3371
    %v6467 = vunpack.c.l.b16 %v3372
    %v6468 = vunpack.c.h.b16 %v3372
    %v6469 = vunpack.c.l.b16 %v3373
    %v6470 = vunpack.c.h.b16 %v3373
    %v6471 = vunpack.c.l.b16 %v3374
    %v6472 = vunpack.c.h.b16 %v3374
    %v6473 = vunpack.c.l.b16 %v3375
    %v6474 = vunpack.c.h.b16 %v3375
    %v6475 = vunpack.c.l.b16 %v3376
    %v6476 = vunpack.c.h.b16 %v3376
    %v6477 = vunpack.c.l.b16 %v3377
    %v6478 = vunpack.c.h.b16 %v3377
    %v6479 = vunpack.c.l.b16 %v3378
    %v6480 = vunpack.c.h.b16 %v3378
    %v6481 = vunpack.c.l.b16 %v3379
    %v6482 = vunpack.c.h.b16 %v3379
    %v6483 = vunpack.c.l.b16 %v3380
    %v6484 = vunpack.c.h.b16 %v3380
    %v6485 = vunpack.c.l.b16 %v3381
    %v6486 = vunpack.c.h.b16 %v3381
    %v6487 = vunpack.c.l.b16 %v3382
    %v6488 = vunpack.c.h.b16 %v3382
    %v6489 = vunpack.c.l.b16 %v3383
    %v6490 = vunpack.c.h.b16 %v3383
    %v6491 = vunpack.c.l.b16 %v3384
    %v6492 = vunpack.c.h.b16 %v3384
    %v6493 = vunpack.c.l.b16 %v3385
    %v6494 = vunpack.c.h.b16 %v3385
    %v6495 = vunpack.c.l.b16 %v3386
    %v6496 = vunpack.c.h.b16 %v3386
    %v6497 = vunpack.c.l.b16 %v3387
    %v6498 = vunpack.c.h.b16 %v3387
    %v6499 = vunpack.c.l.b16 %v3388
    %v6500 = vunpack.c.h.b16 %v3388
    %v6501 = vunpack.c.l.b16 %v3389
    %v6502 = vunpack.c.h.b16 %v3389
    %v6503 = vunpack.c.l.b16 %v3390
    %v6504 = vunpack.c.h.b16 %v3390
    %v6505 = vunpack.c.l.b16 %v3391
    %v6506 = vunpack.c.h.b16 %v3391
    %v6507 = vunpack.c.l.b16 %v3392
    %v6508 = vunpack.c.h.b16 %v3392
    %v6509 = vunpack.c.l.b16 %v3393
    %v6510 = vunpack.c.h.b16 %v3393
    %v6511 = vunpack.c.l.b16 %v3394
    %v6512 = vunpack.c.h.b16 %v3394
    %v6513 = vunpack.c.l.b16 %v3395
    %v6514 = vunpack.c.h.b16 %v3395
    %v6515 = vunpack.c.l.b16 %v3396
    %v6516 = vunpack.c.h.b16 %v3396
    %v6517 = vunpack.c.l.b16 %v3397
    %v6518 = vunpack.c.h.b16 %v3397
    %v6519 = vunpack.c.l.b16 %v3398
    %v6520 = vunpack.c.h.b16 %v3398
    %v6521 = vunpack.c.l.b16 %v3399
    %v6522 = vunpack.c.h.b16 %v3399
    %v6523 = vunpack.c.l.b16 %v3400
    %v6524 = vunpack.c.h.b16 %v3400
    %v6525 = vunpack.c.l.b16 %v3401
    %v6526 = vunpack.c.h.b16 %v3401
    %v6527 = vunpack.c.l.b16 %v3402
    %v6528 = vunpack.c.h.b16 %v3402
    %v6529 = vunpack.c.l.b16 %v3403
    %v6530 = vunpack.c.h.b16 %v3403
    %v6531 = vunpack.c.l.b16 %v3404
    %v6532 = vunpack.c.h.b16 %v3404
    %v6533 = vunpack.c.l.b16 %v3405
    %v6534 = vunpack.c.h.b16 %v3405
    %v6535 = vunpack.c.l.b16 %v3406
    %v6536 = vunpack.c.h.b16 %v3406
    %v6537 = vunpack.c.l.b16 %v3407
    %v6538 = vunpack.c.h.b16 %v3407
    %v6539 = vunpack.c.l.b16 %v3408
    %v6540 = vunpack.c.h.b16 %v3408
    %v6541 = vunpack.c.l.b16 %v3409
    %v6542 = vunpack.c.h.b16 %v3409
    %v6543 = vunpack.c.l.b16 %v3410
    %v6544 = vunpack.c.h.b16 %v3410
    %v6545 = vunpack.c.l.b16 %v3411
    %v6546 = vunpack.c.h.b16 %v3411
    %v6547 = vunpack.c.l.b16 %v3412
    %v6548 = vunpack.c.h.b16 %v3412
    %v6549 = vunpack.c.l.b16 %v3413
    %v6550 = vunpack.c.h.b16 %v3413
    %v6551 = vunpack.c.l.b16 %v3414
    %v6552 = vunpack.c.h.b16 %v3414
    %v6553 = vunpack.c.l.b16 %v3415
    %v6554 = vunpack.c.h.b16 %v3415
    %v6555 = vunpack.c.l.b16 %v3416
    %v6556 = vunpack.c.h.b16 %v3416
    %v6557 = vunpack.c.l.b16 %v3417
    %v6558 = vunpack.c.h.b16 %v3417
    %v6559 = vunpack.c.l.b16 %v3418
    %v6560 = vunpack.c.h.b16 %v3418
    %v6561 = vunpack.c.l.b16 %v3419
    %v6562 = vunpack.c.h.b16 %v3419
    %v6563 = vunpack.c.l.b16 %v3420
    %v6564 = vunpack.c.h.b16 %v3420
    %v6565 = vunpack.c.l.b16 %v3421
    %v6566 = vunpack.c.h.b16 %v3421
    %v6567 = vunpack.c.l.b16 %v3422
    %v6568 = vunpack.c.h.b16 %v3422
    %v6569 = vunpack.c.l.b16 %v3423
    %v6570 = vunpack.c.h.b16 %v3423
    %v6571 = vunpack.c.l.b16 %v3424
    %v6572 = vunpack.c.h.b16 %v3424
    %v6573 = vunpack.c.l.b16 %v3425
    %v6574 = vunpack.c.h.b16 %v3425
    %v6575 = vunpack.c.l.b16 %v3426
    %v6576 = vunpack.c.h.b16 %v3426
    %v6577 = vunpack.c.l.b16 %v3427
    %v6578 = vunpack.c.h.b16 %v3427
    %v6579 = vunpack.c.l.b16 %v3428
    %v6580 = vunpack.c.h.b16 %v3428
    %v6581 = vunpack.c.l.b16 %v3429
    %v6582 = vunpack.c.h.b16 %v3429
    %v6583 = vunpack.c.l.b16 %v3430
    %v6584 = vunpack.c.h.b16 %v3430
    %v6585 = vunpack.c.l.b16 %v3431
    %v6586 = vunpack.c.h.b16 %v3431
    %v6587 = vunpack.c.l.b16 %v3432
    %v6588 = vunpack.c.h.b16 %v3432
    %v6589 = vunpack.c.l.b16 %v3433
    %v6590 = vunpack.c.h.b16 %v3433
    %v6591 = vunpack.c.l.b16 %v3434
    %v6592 = vunpack.c.h.b16 %v3434
    %v6593 = vunpack.c.l.b16 %v3435
    %v6594 = vunpack.c.h.b16 %v3435
    %v6595 = vunpack.c.l.b16 %v3436
    %v6596 = vunpack.c.h.b16 %v3436
    %v6597 = vunpack.c.l.b16 %v3437
    %v6598 = vunpack.c.h.b16 %v3437
    %v6599 = vunpack.c.l.b16 %v3438
    %v6600 = vunpack.c.h.b16 %v3438
    %v6601 = vunpack.c.l.b16 %v3439
    %v6602 = vunpack.c.h.b16 %v3439
    %v6603 = vunpack.c.l.b16 %v3440
    %v6604 = vunpack.c.h.b16 %v3440
    %v6605 = vunpack.c.l.b16 %v3441
    %v6606 = vunpack.c.h.b16 %v3441
    %v6607 = vunpack.c.l.b16 %v3442
    %v6608 = vunpack.c.h.b16 %v3442
    %v6609 = vunpack.c.l.b16 %v3443
    %v6610 = vunpack.c.h.b16 %v3443
    %v6611 = vunpack.c.l.b16 %v3444
    %v6612 = vunpack.c.h.b16 %v3444
    %v6613 = vunpack.c.l.b16 %v3445
    %v6614 = vunpack.c.h.b16 %v3445
    %v6615 = vunpack.c.l.b16 %v3446
    %v6616 = vunpack.c.h.b16 %v3446
    %v6617 = vunpack.c.l.b16 %v3447
    %v6618 = vunpack.c.h.b16 %v3447
    %v6619 = vunpack.c.l.b16 %v3448
    %v6620 = vunpack.c.h.b16 %v3448
    %v6621 = vunpack.c.l.b16 %v3449
    %v6622 = vunpack.c.h.b16 %v3449
    %v6623 = vunpack.c.l.b16 %v3450
    %v6624 = vunpack.c.h.b16 %v3450
    %v6625 = vunpack.c.l.b16 %v3451
    %v6626 = vunpack.c.h.b16 %v3451
    %v6627 = vunpack.c.l.b16 %v3452
    %v6628 = vunpack.c.h.b16 %v3452
    %v6629 = vunpack.c.l.b16 %v3453
    %v6630 = vunpack.c.h.b16 %v3453
    %v6631 = vunpack.c.l.b16 %v3454
    %v6632 = vunpack.c.h.b16 %v3454
    %v6633 = vunpack.c.l.b16 %v3455
    %v6634 = vunpack.c.h.b16 %v3455
    %v6635 = vunpack.c.l.b16 %v3456
    %v6636 = vunpack.c.h.b16 %v3456
    %v6637 = vunpack.c.l.b16 %v3457
    %v6638 = vunpack.c.h.b16 %v3457
    %v6639 = vunpack.c.l.b16 %v3458
    %v6640 = vunpack.c.h.b16 %v3458
    %v6641 = vunpack.c.l.b16 %v3459
    %v6642 = vunpack.c.h.b16 %v3459
    %v6643 = vunpack.c.l.b16 %v3460
    %v6644 = vunpack.c.h.b16 %v3460
    %v6645 = vunpack.c.l.b16 %v3461
    %v6646 = vunpack.c.h.b16 %v3461
    %v6647 = vunpack.c.l.b16 %v3462
    %v6648 = vunpack.c.h.b16 %v3462
    %v6649 = vunpack.c.l.b16 %v3463
    %v6650 = vunpack.c.h.b16 %v3463
    %v6651 = vunpack.c.l.b16 %v3464
    %v6652 = vunpack.c.h.b16 %v3464
    %v6653 = vunpack.c.l.b16 %v3465
    %v6654 = vunpack.c.h.b16 %v3465
    %v6655 = vunpack.c.l.b16 %v3466
    %v6656 = vunpack.c.h.b16 %v3466
    %v6657 = vunpack.c.l.b16 %v3467
    %v6658 = vunpack.c.h.b16 %v3467
    %v6659 = vunpack.c.l.b16 %v3468
    %v6660 = vunpack.c.h.b16 %v3468
    %v6661 = vunpack.c.l.b16 %v3469
    %v6662 = vunpack.c.h.b16 %v3469
    %v6663 = vunpack.c.l.b16 %v3470
    %v6664 = vunpack.c.h.b16 %v3470
    %v6665 = vunpack.c.l.b16 %v3471
    %v6666 = vunpack.c.h.b16 %v3471
    %v6667 = vunpack.c.l.b16 %v3472
    %v6668 = vunpack.c.h.b16 %v3472
    %v6669 = vunpack.c.l.b16 %v3473
    %v6670 = vunpack.c.h.b16 %v3473
    %v6671 = vunpack.c.l.b16 %v3474
    %v6672 = vunpack.c.h.b16 %v3474
    %v6673 = vunpack.c.l.b16 %v3475
    %v6674 = vunpack.c.h.b16 %v3475
    %v6675 = vunpack.c.l.b16 %v3476
    %v6676 = vunpack.c.h.b16 %v3476
    %v6677 = vunpack.c.l.b16 %v3477
    %v6678 = vunpack.c.h.b16 %v3477
    %v6679 = vunpack.c.l.b16 %v3478
    %v6680 = vunpack.c.h.b16 %v3478
    %v6681 = vunpack.c.l.b16 %v3479
    %v6682 = vunpack.c.h.b16 %v3479
    %v6683 = vunpack.c.l.b16 %v3480
    %v6684 = vunpack.c.h.b16 %v3480
    %v6685 = vunpack.c.l.b16 %v3481
    %v6686 = vunpack.c.h.b16 %v3481
    %v6687 = vunpack.c.l.b16 %v3482
    %v6688 = vunpack.c.h.b16 %v3482
    %v6689 = vunpack.c.l.b16 %v3483
    %v6690 = vunpack.c.h.b16 %v3483
    %v6691 = vunpack.c.l.b16 %v3484
    %v6692 = vunpack.c.h.b16 %v3484
    %v6693 = vunpack.c.l.b16 %v3485
    %v6694 = vunpack.c.h.b16 %v3485
    %v6695 = vunpack.c.l.b16 %v3486
    %v6696 = vunpack.c.h.b16 %v3486
    %v6697 = vunpack.c.l.b16 %v3487
    %v6698 = vunpack.c.h.b16 %v3487
    %v6699 = vunpack.c.l.b16 %v3488
    %v6700 = vunpack.c.h.b16 %v3488
    %v6701 = vunpack.c.l.b16 %v3489
    %v6702 = vunpack.c.h.b16 %v3489
    %v6703 = vunpack.c.l.b16 %v3490
    %v6704 = vunpack.c.h.b16 %v3490
    %v6705 = vunpack.c.l.b16 %v3491
    %v6706 = vunpack.c.h.b16 %v3491
    %v6707 = vunpack.c.l.b16 %v3492
    %v6708 = vunpack.c.h.b16 %v3492
    %v6709 = vunpack.c.l.b16 %v3493
    %v6710 = vunpack.c.h.b16 %v3493
    %v6711 = vunpack.c.l.b16 %v3494
    %v6712 = vunpack.c.h.b16 %v3494
    %v6713 = vunpack.c.l.b16 %v3495
    %v6714 = vunpack.c.h.b16 %v3495
    %v6715 = vunpack.c.l.b16 %v3496
    %v6716 = vunpack.c.h.b16 %v3496
    %v6717 = vunpack.c.l.b16 %v3497
    %v6718 = vunpack.c.h.b16 %v3497
    %v6719 = vunpack.c.l.b16 %v3498
    %v6720 = vunpack.c.h.b16 %v3498
    %v6721 = vunpack.c.l.b16 %v3499
    %v6722 = vunpack.c.h.b16 %v3499
    %v6723 = vunpack.c.l.b16 %v3500
    %v6724 = vunpack.c.h.b16 %v3500
    %v6725 = vunpack.c.l.b16 %v3501
    %v6726 = vunpack.c.h.b16 %v3501
    %v6727 = vunpack.c.l.b16 %v3502
    %v6728 = vunpack.c.h.b16 %v3502
    %v6729 = vunpack.c.l.b16 %v3503
    %v6730 = vunpack.c.h.b16 %v3503
    %v6731 = vunpack.c.l.b16 %v3504
    %v6732 = vunpack.c.h.b16 %v3504
    %v6733 = vunpack.c.l.b16 %v3505
    %v6734 = vunpack.c.h.b16 %v3505
    %v6735 = vunpack.c.l.b16 %v3506
    %v6736 = vunpack.c.h.b16 %v3506
    %v6737 = vunpack.c.l.b16 %v3507
    %v6738 = vunpack.c.h.b16 %v3507
    %v6739 = vunpack.c.l.b16 %v3508
    %v6740 = vunpack.c.h.b16 %v3508
    %v6741 = vunpack.c.l.b16 %v3509
    %v6742 = vunpack.c.h.b16 %v3509
    %v6743 = vunpack.c.l.b16 %v3510
    %v6744 = vunpack.c.h.b16 %v3510
    %v6745 = vunpack.c.l.b16 %v3511
    %v6746 = vunpack.c.h.b16 %v3511
    %v6747 = vunpack.c.l.b16 %v3512
    %v6748 = vunpack.c.h.b16 %v3512
    %v6749 = vunpack.c.l.b16 %v3513
    %v6750 = vunpack.c.h.b16 %v3513
    %v6751 = vunpack.c.l.b16 %v3514
    %v6752 = vunpack.c.h.b16 %v3514
    %v6753 = vunpack.c.l.b16 %v3515
    %v6754 = vunpack.c.h.b16 %v3515
    %v6755 = vunpack.c.l.b16 %v3516
    %v6756 = vunpack.c.h.b16 %v3516
    %v6757 = vunpack.c.l.b16 %v3517
    %v6758 = vunpack.c.h.b16 %v3517
    %v6759 = vunpack.c.l.b16 %v3518
    %v6760 = vunpack.c.h.b16 %v3518
    %v6761 = vunpack.c.l.b16 %v3519
    %v6762 = vunpack.c.h.b16 %v3519
    %v6763 = vunpack.c.l.b16 %v3520
    %v6764 = vunpack.c.h.b16 %v3520
    %v6765 = vunpack.c.l.b16 %v3521
    %v6766 = vunpack.c.h.b16 %v3521
    %v6767 = vunpack.c.l.b16 %v3522
    %v6768 = vunpack.c.h.b16 %v3522
    %v6769 = vunpack.c.l.b16 %v3523
    %v6770 = vunpack.c.h.b16 %v3523
    %v6771 = vunpack.c.l.b16 %v3524
    %v6772 = vunpack.c.h.b16 %v3524
    %v6773 = vunpack.c.l.b16 %v3525
    %v6774 = vunpack.c.h.b16 %v3525
    %v6775 = vunpack.c.l.b16 %v3526
    %v6776 = vunpack.c.h.b16 %v3526
    %v6777 = vunpack.c.l.b16 %v3527
    %v6778 = vunpack.c.h.b16 %v3527
    %v6779 = vunpack.c.l.b16 %v3528
    %v6780 = vunpack.c.h.b16 %v3528
    %v6781 = vunpack.c.l.b16 %v3529
    %v6782 = vunpack.c.h.b16 %v3529
    %v6783 = vunpack.c.l.b16 %v3530
    %v6784 = vunpack.c.h.b16 %v3530
    %v6785 = vunpack.c.l.b16 %v3531
    %v6786 = vunpack.c.h.b16 %v3531
    %v6787 = vunpack.c.l.b16 %v3532
    %v6788 = vunpack.c.h.b16 %v3532
    %v6789 = vunpack.c.l.b16 %v3533
    %v6790 = vunpack.c.h.b16 %v3533
    %v6791 = vunpack.c.l.b16 %v3534
    %v6792 = vunpack.c.h.b16 %v3534
    %v6793 = vunpack.c.l.b16 %v3535
    %v6794 = vunpack.c.h.b16 %v3535
    %v6795 = vunpack.c.l.b16 %v3536
    %v6796 = vunpack.c.h.b16 %v3536
    %v6797 = vunpack.c.l.b16 %v3537
    %v6798 = vunpack.c.h.b16 %v3537
    %v6799 = vunpack.c.l.b16 %v3538
    %v6800 = vunpack.c.h.b16 %v3538
    %v6801 = vunpack.c.l.b16 %v3539
    %v6802 = vunpack.c.h.b16 %v3539
    %v6803 = vunpack.c.l.b16 %v3540
    %v6804 = vunpack.c.h.b16 %v3540
    %v6805 = vunpack.c.l.b16 %v3541
    %v6806 = vunpack.c.h.b16 %v3541
    %v6807 = vunpack.c.l.b16 %v3542
    %v6808 = vunpack.c.h.b16 %v3542
    %v6809 = vunpack.c.l.b16 %v3543
    %v6810 = vunpack.c.h.b16 %v3543
    %v6811 = vunpack.c.l.b16 %v3544
    %v6812 = vunpack.c.h.b16 %v3544
    %v6813 = vunpack.c.l.b16 %v3545
    %v6814 = vunpack.c.h.b16 %v3545
    %v6815 = vunpack.c.l.b16 %v3546
    %v6816 = vunpack.c.h.b16 %v3546
    %v6817 = vunpack.c.l.b16 %v3547
    %v6818 = vunpack.c.h.b16 %v3547
    %v6819 = vunpack.c.l.b16 %v3548
    %v6820 = vunpack.c.h.b16 %v3548
    %v6821 = vunpack.c.l.b16 %v3549
    %v6822 = vunpack.c.h.b16 %v3549
    %v6823 = vunpack.c.l.b16 %v3550
    %v6824 = vunpack.c.h.b16 %v3550
    %v6825 = vunpack.c.l.b16 %v3551
    %v6826 = vunpack.c.h.b16 %v3551
    %v6827 = vunpack.c.l.b16 %v3552
    %v6828 = vunpack.c.h.b16 %v3552
    %v6829 = vunpack.c.l.b16 %v3553
    %v6830 = vunpack.c.h.b16 %v3553
    %v6831 = vunpack.c.l.b16 %v3554
    %v6832 = vunpack.c.h.b16 %v3554
    %v6833 = vunpack.c.l.b16 %v3555
    %v6834 = vunpack.c.h.b16 %v3555
    %v6835 = vunpack.c.l.b16 %v3556
    %v6836 = vunpack.c.h.b16 %v3556
    %v6837 = vunpack.c.l.b16 %v3557
    %v6838 = vunpack.c.h.b16 %v3557
    %v6839 = vunpack.c.l.b16 %v3558
    %v6840 = vunpack.c.h.b16 %v3558
    %v6841 = vunpack.c.l.b16 %v3559
    %v6842 = vunpack.c.h.b16 %v3559
    %v6843 = vunpack.c.l.b16 %v3560
    %v6844 = vunpack.c.h.b16 %v3560
    %v6845 = vunpack.c.l.b16 %v3561
    %v6846 = vunpack.c.h.b16 %v3561
    %v6847 = vunpack.c.l.b16 %v3562
    %v6848 = vunpack.c.h.b16 %v3562
    %v6849 = vunpack.c.l.b16 %v3563
    %v6850 = vunpack.c.h.b16 %v3563
    %v6851 = vunpack.c.l.b16 %v3564
    %v6852 = vunpack.c.h.b16 %v3564
    %v6853 = vunpack.c.l.b16 %v3565
    %v6854 = vunpack.c.h.b16 %v3565
    %v6855 = vunpack.c.l.b16 %v3566
    %v6856 = vunpack.c.h.b16 %v3566
    %v6857 = vunpack.c.l.b16 %v3567
    %v6858 = vunpack.c.h.b16 %v3567
    %v6859 = vunpack.c.l.b16 %v3568
    %v6860 = vunpack.c.h.b16 %v3568
    %v6861 = vunpack.c.l.b16 %v3569
    %v6862 = vunpack.c.h.b16 %v3569
    %v6863 = vunpack.c.l.b16 %v3570
    %v6864 = vunpack.c.h.b16 %v3570
    %v6865 = vunpack.c.l.b16 %v3571
    %v6866 = vunpack.c.h.b16 %v3571
    %v6867 = vunpack.c.l.b16 %v3572
    %v6868 = vunpack.c.h.b16 %v3572
    %v6869 = vunpack.c.l.b16 %v3573
    %v6870 = vunpack.c.h.b16 %v3573
    %v6871 = vunpack.c.l.b16 %v3574
    %v6872 = vunpack.c.h.b16 %v3574
    %v6873 = vunpack.c.l.b16 %v3575
    %v6874 = vunpack.c.h.b16 %v3575
    %v6875 = vunpack.c.l.b16 %v3576
    %v6876 = vunpack.c.h.b16 %v3576
    %v6877 = vunpack.c.l.b16 %v3577
    %v6878 = vunpack.c.h.b16 %v3577
    %v6879 = vunpack.c.l.b16 %v3578
    %v6880 = vunpack.c.h.b16 %v3578
    %v6881 = vunpack.c.l.b16 %v3579
    %v6882 = vunpack.c.h.b16 %v3579
    %v6883 = vunpack.c.l.b16 %v3580
    %v6884 = vunpack.c.h.b16 %v3580
    %v6885 = vunpack.c.l.b16 %v3581
    %v6886 = vunpack.c.h.b16 %v3581
    %v6887 = vunpack.c.l.b16 %v3582
    %v6888 = vunpack.c.h.b16 %v3582
    %v6889 = vunpack.c.l.b16 %v3583
    %v6890 = vunpack.c.h.b16 %v3583
    %v6891 = vunpack.c.l.b16 %v3584
    %v6892 = vunpack.c.h.b16 %v3584
    %v6893 = vunpack.c.l.b16 %v3585
    %v6894 = vunpack.c.h.b16 %v3585
    %v6895 = vunpack.c.l.b16 %v3586
    %v6896 = vunpack.c.h.b16 %v3586
    %v6897 = vunpack.c.l.b16 %v3587
    %v6898 = vunpack.c.h.b16 %v3587
    %v6899 = vunpack.c.l.b16 %v3588
    %v6900 = vunpack.c.h.b16 %v3588
    %v6901 = vunpack.c.l.b16 %v3589
    %v6902 = vunpack.c.h.b16 %v3589
    %v6903 = vunpack.c.l.b16 %v3590
    %v6904 = vunpack.c.h.b16 %v3590
    %v6905 = vunpack.c.l.b16 %v3591
    %v6906 = vunpack.c.h.b16 %v3591
    %v6907 = vunpack.c.l.b16 %v3592
    %v6908 = vunpack.c.h.b16 %v3592
    %v6909 = vunpack.c.l.b16 %v3593
    %v6910 = vunpack.c.h.b16 %v3593
    %v6911 = vunpack.c.l.b16 %v3594
    %v6912 = vunpack.c.h.b16 %v3594
    %v6913 = vunpack.c.l.b16 %v3595
    %v6914 = vunpack.c.h.b16 %v3595
    %v6915 = vunpack.c.l.b16 %v3596
    %v6916 = vunpack.c.h.b16 %v3596
    %v6917 = vunpack.c.l.b16 %v3597
    %v6918 = vunpack.c.h.b16 %v3597
    %v6919 = vunpack.c.l.b16 %v3598
    %v6920 = vunpack.c.h.b16 %v3598
    %v6921 = vunpack.c.l.b16 %v3599
    %v6922 = vunpack.c.h.b16 %v3599
    %v6923 = vunpack.c.l.b16 %v3600
    %v6924 = vunpack.c.h.b16 %v3600
    %v6925 = vunpack.c.l.b16 %v3601
    %v6926 = vunpack.c.h.b16 %v3601
    %v6927 = vunpack.c.l.b16 %v3602
    %v6928 = vunpack.c.h.b16 %v3602
    %v6929 = vunpack.c.l.b16 %v3603
    %v6930 = vunpack.c.h.b16 %v3603
    %v6931 = vunpack.c.l.b16 %v3604
    %v6932 = vunpack.c.h.b16 %v3604
    %v6933 = vunpack.c.l.b16 %v3605
    %v6934 = vunpack.c.h.b16 %v3605
    %v6935 = vunpack.c.l.b16 %v3606
    %v6936 = vunpack.c.h.b16 %v3606
    %v6937 = vunpack.c.l.b16 %v3607
    %v6938 = vunpack.c.h.b16 %v3607
    %v6939 = vunpack.c.l.b16 %v3608
    %v6940 = vunpack.c.h.b16 %v3608
    %v6941 = vunpack.c.l.b16 %v3609
    %v6942 = vunpack.c.h.b16 %v3609
    %v6943 = vunpack.c.l.b16 %v3610
    %v6944 = vunpack.c.h.b16 %v3610
    %v6945 = vunpack.c.l.b16 %v3611
    %v6946 = vunpack.c.h.b16 %v3611
    %v6947 = vunpack.c.l.b16 %v3612
    %v6948 = vunpack.c.h.b16 %v3612
    %v6949 = vunpack.c.l.b16 %v3613
    %v6950 = vunpack.c.h.b16 %v3613
    %v6951 = vunpack.c.l.b16 %v3614
    %v6952 = vunpack.c.h.b16 %v3614
    %v6953 = vunpack.c.l.b16 %v3615
    %v6954 = vunpack.c.h.b16 %v3615
    %v6955 = vunpack.c.l.b16 %v3616
    %v6956 = vunpack.c.h.b16 %v3616
    %v6957 = vunpack.c.l.b16 %v3617
    %v6958 = vunpack.c.h.b16 %v3617
    %v6959 = vunpack.c.l.b16 %v3618
    %v6960 = vunpack.c.h.b16 %v3618
    %v6961 = vunpack.c.l.b16 %v3619
    %v6962 = vunpack.c.h.b16 %v3619
    %v6963 = vunpack.c.l.b16 %v3620
    %v6964 = vunpack.c.h.b16 %v3620
    %v6965 = vunpack.c.l.b16 %v3621
    %v6966 = vunpack.c.h.b16 %v3621
    %v6967 = vunpack.c.l.b16 %v3622
    %v6968 = vunpack.c.h.b16 %v3622
    %v6969 = vunpack.c.l.b16 %v3623
    %v6970 = vunpack.c.h.b16 %v3623
    %v6971 = vunpack.c.l.b16 %v3624
    %v6972 = vunpack.c.h.b16 %v3624
    %v6973 = vunpack.c.l.b16 %v3625
    %v6974 = vunpack.c.h.b16 %v3625
    %v6975 = vunpack.c.l.b16 %v3626
    %v6976 = vunpack.c.h.b16 %v3626
    %v6977 = vunpack.c.l.b16 %v3627
    %v6978 = vunpack.c.h.b16 %v3627
    %v6979 = vunpack.c.l.b16 %v3628
    %v6980 = vunpack.c.h.b16 %v3628
    %v6981 = vunpack.c.l.b16 %v3629
    %v6982 = vunpack.c.h.b16 %v3629
    %v6983 = vunpack.c.l.b16 %v3630
    %v6984 = vunpack.c.h.b16 %v3630
    %v6985 = vunpack.c.l.b16 %v3631
    %v6986 = vunpack.c.h.b16 %v3631
    %v6987 = vunpack.c.l.b16 %v3632
    %v6988 = vunpack.c.h.b16 %v3632
    %v6989 = vunpack.c.l.b16 %v3633
    %v6990 = vunpack.c.h.b16 %v3633
    %v6991 = vunpack.c.l.b16 %v3634
    %v6992 = vunpack.c.h.b16 %v3634
    %v6993 = vunpack.c.l.b16 %v3635
    %v6994 = vunpack.c.h.b16 %v3635
    %v6995 = vunpack.c.l.b16 %v3636
    %v6996 = vunpack.c.h.b16 %v3636
    %v6997 = vunpack.c.l.b16 %v3637
    %v6998 = vunpack.c.h.b16 %v3637
    %v6999 = vunpack.c.l.b16 %v3638
    %v7000 = vunpack.c.h.b16 %v3638
    %v7001 = vunpack.c.l.b16 %v3639
    %v7002 = vunpack.c.h.b16 %v3639
    %v7003 = vunpack.c.l.b16 %v3640
    %v7004 = vunpack.c.h.b16 %v3640
    %v7005 = vunpack.c.l.b16 %v3641
    %v7006 = vunpack.c.h.b16 %v3641
    %v7007 = vunpack.c.l.b16 %v3642
    %v7008 = vunpack.c.h.b16 %v3642
    %v7009 = vunpack.c.l.b16 %v3643
    %v7010 = vunpack.c.h.b16 %v3643
    %v7011 = vunpack.c.l.b16 %v3644
    %v7012 = vunpack.c.h.b16 %v3644
    %v7013 = vunpack.c.l.b16 %v3645
    %v7014 = vunpack.c.h.b16 %v3645
    %v7015 = vunpack.c.l.b16 %v3646
    %v7016 = vunpack.c.h.b16 %v3646
    %v7017 = vunpack.c.l.b16 %v3647
    %v7018 = vunpack.c.h.b16 %v3647
    %v7019 = vunpack.c.l.b16 %v3648
    %v7020 = vunpack.c.h.b16 %v3648
    %v7021 = vunpack.c.l.b16 %v3649
    %v7022 = vunpack.c.h.b16 %v3649
    %v7023 = vunpack.c.l.b16 %v3650
    %v7024 = vunpack.c.h.b16 %v3650
    %v7025 = vunpack.c.l.b16 %v3651
    %v7026 = vunpack.c.h.b16 %v3651
    %v7027 = vunpack.c.l.b16 %v3652
    %v7028 = vunpack.c.h.b16 %v3652
    %v7029 = vunpack.c.l.b16 %v3653
    %v7030 = vunpack.c.h.b16 %v3653
    %v7031 = vunpack.c.l.b16 %v3654
    %v7032 = vunpack.c.h.b16 %v3654
    %v7033 = vunpack.c.l.b16 %v3655
    %v7034 = vunpack.c.h.b16 %v3655
    %v7035 = vunpack.c.l.b16 %v3656
    %v7036 = vunpack.c.h.b16 %v3656
    %v7037 = vunpack.c.l.b16 %v3657
    %v7038 = vunpack.c.h.b16 %v3657
    %v7039 = vunpack.c.l.b16 %v3658
    %v7040 = vunpack.c.h.b16 %v3658
    %v7041 = vunpack.c.l.b16 %v3659
    %v7042 = vunpack.c.h.b16 %v3659
    %v7043 = vunpack.c.l.b16 %v3660
    %v7044 = vunpack.c.h.b16 %v3660
    %v7045 = vunpack.c.l.b16 %v3661
    %v7046 = vunpack.c.h.b16 %v3661
    %v7047 = vunpack.c.l.b16 %v3662
    %v7048 = vunpack.c.h.b16 %v3662
    %v7049 = vunpack.c.l.b16 %v3663
    %v7050 = vunpack.c.h.b16 %v3663
    %v7051 = vunpack.c.l.b16 %v3664
    %v7052 = vunpack.c.h.b16 %v3664
    %v7053 = vunpack.c.l.b16 %v3665
    %v7054 = vunpack.c.h.b16 %v3665
    %v7055 = vunpack.c.l.b16 %v3666
    %v7056 = vunpack.c.h.b16 %v3666
    %v7057 = vunpack.c.l.b16 %v3667
    %v7058 = vunpack.c.h.b16 %v3667
    %v7059 = vunpack.c.l.b16 %v3668
    %v7060 = vunpack.c.h.b16 %v3668
    %v7061 = vunpack.c.l.b16 %v3669
    %v7062 = vunpack.c.h.b16 %v3669
    %v7063 = vunpack.c.l.b16 %v3670
    %v7064 = vunpack.c.h.b16 %v3670
    %v7065 = vunpack.c.l.b16 %v3671
    %v7066 = vunpack.c.h.b16 %v3671
    %v7067 = vunpack.c.l.b16 %v3672
    %v7068 = vunpack.c.h.b16 %v3672
    %v7069 = vunpack.c.l.b16 %v3673
    %v7070 = vunpack.c.h.b16 %v3673
    %v7071 = vunpack.c.l.b16 %v3674
    %v7072 = vunpack.c.h.b16 %v3674
    %v7073 = vunpack.c.l.b16 %v3675
    %v7074 = vunpack.c.h.b16 %v3675
    %v7075 = vunpack.c.l.b16 %v3676
    %v7076 = vunpack.c.h.b16 %v3676
    %v7077 = vunpack.c.l.b16 %v3677
    %v7078 = vunpack.c.h.b16 %v3677
    %v7079 = vunpack.c.l.b16 %v3678
    %v7080 = vunpack.c.h.b16 %v3678
    %v7081 = vunpack.c.l.b16 %v3679
    %v7082 = vunpack.c.h.b16 %v3679
    %v7083 = vunpack.c.l.b16 %v3680
    %v7084 = vunpack.c.h.b16 %v3680
    %v7085 = vunpack.c.l.b16 %v3681
    %v7086 = vunpack.c.h.b16 %v3681
    %v7087 = vunpack.c.l.b16 %v3682
    %v7088 = vunpack.c.h.b16 %v3682
    %v7089 = vunpack.c.l.b16 %v3683
    %v7090 = vunpack.c.h.b16 %v3683
    %v7091 = vunpack.c.l.b16 %v3684
    %v7092 = vunpack.c.h.b16 %v3684
    %v7093 = vunpack.c.l.b16 %v3685
    %v7094 = vunpack.c.h.b16 %v3685
    %v7095 = vunpack.c.l.b16 %v3686
    %v7096 = vunpack.c.h.b16 %v3686
    %v7097 = vunpack.c.l.b16 %v3687
    %v7098 = vunpack.c.h.b16 %v3687
    %v7099 = vunpack.c.l.b16 %v3688
    %v7100 = vunpack.c.h.b16 %v3688
    %v7101 = vunpack.c.l.b16 %v3689
    %v7102 = vunpack.c.h.b16 %v3689
    %v7103 = vunpack.c.l.b16 %v3690
    %v7104 = vunpack.c.h.b16 %v3690
    %v7105 = vunpack.c.l.b16 %v3691
    %v7106 = vunpack.c.h.b16 %v3691
    %v7107 = vunpack.c.l.b16 %v3692
    %v7108 = vunpack.c.h.b16 %v3692
    %v7109 = vunpack.c.l.b16 %v3693
    %v7110 = vunpack.c.h.b16 %v3693
    %v7111 = vunpack.c.l.b16 %v3694
    %v7112 = vunpack.c.h.b16 %v3694
    %v7113 = vunpack.c.l.b16 %v3695
    %v7114 = vunpack.c.h.b16 %v3695
    %v7115 = vunpack.c.l.b16 %v3696
    %v7116 = vunpack.c.h.b16 %v3696
    %v7117 = vunpack.c.l.b16 %v3697
    %v7118 = vunpack.c.h.b16 %v3697
    %v7119 = vunpack.c.l.b16 %v3698
    %v7120 = vunpack.c.h.b16 %v3698
    %v7121 = vunpack.c.l.b16 %v3699
    %v7122 = vunpack.c.h.b16 %v3699
    %v7123 = vunpack.c.l.b16 %v3700
    %v7124 = vunpack.c.h.b16 %v3700
    %v7125 = vunpack.c.l.b16 %v3701
    %v7126 = vunpack.c.h.b16 %v3701
    %v7127 = vunpack.c.l.b16 %v3702
    %v7128 = vunpack.c.h.b16 %v3702
    %v7129 = vunpack.c.l.b16 %v3703
    %v7130 = vunpack.c.h.b16 %v3703
    %v7131 = vunpack.c.l.b16 %v3704
    %v7132 = vunpack.c.h.b16 %v3704
    %v7133 = vunpack.c.l.b16 %v3705
    %v7134 = vunpack.c.h.b16 %v3705
    %v7135 = vunpack.c.l.b16 %v3706
    %v7136 = vunpack.c.h.b16 %v3706
    %v7137 = vunpack.c.l.b16 %v3707
    %v7138 = vunpack.c.h.b16 %v3707
    %v7139 = vunpack.c.l.b16 %v3708
    %v7140 = vunpack.c.h.b16 %v3708
    %v7141 = vunpack.c.l.b16 %v3709
    %v7142 = vunpack.c.h.b16 %v3709
    %v7143 = vunpack.c.l.b16 %v3710
    %v7144 = vunpack.c.h.b16 %v3710
    %v7145 = vunpack.c.l.b16 %v3711
    %v7146 = vunpack.c.h.b16 %v3711
    %v7147 = vunpack.c.l.b16 %v3712
    %v7148 = vunpack.c.h.b16 %v3712
    %v7149 = vunpack.c.l.b16 %v3713
    %v7150 = vunpack.c.h.b16 %v3713
    %v7151 = vunpack.c.l.b16 %v3714
    %v7152 = vunpack.c.h.b16 %v3714
    %v7153 = vunpack.c.l.b16 %v3715
    %v7154 = vunpack.c.h.b16 %v3715
    %v7155 = vunpack.c.l.b16 %v3716
    %v7156 = vunpack.c.h.b16 %v3716
    %v7157 = vunpack.c.l.b16 %v3717
    %v7158 = vunpack.c.h.b16 %v3717
    %v7159 = vunpack.c.l.b16 %v3718
    %v7160 = vunpack.c.h.b16 %v3718
    %v7161 = vunpack.c.l.b16 %v3719
    %v7162 = vunpack.c.h.b16 %v3719
    %v7163 = vunpack.c.l.b16 %v3720
    %v7164 = vunpack.c.h.b16 %v3720
    %v7165 = vunpack.c.l.b16 %v3721
    %v7166 = vunpack.c.h.b16 %v3721
    %v7167 = vunpack.c.l.b16 %v3722
    %v7168 = vunpack.c.h.b16 %v3722
    %v7169 = vunpack.c.l.b16 %v3723
    %v7170 = vunpack.c.h.b16 %v3723
    %v7171 = vunpack.c.l.b16 %v3724
    %v7172 = vunpack.c.h.b16 %v3724
    %v7173 = vunpack.c.l.b16 %v3725
    %v7174 = vunpack.c.h.b16 %v3725
    %v7175 = vunpack.c.l.b16 %v3726
    %v7176 = vunpack.c.h.b16 %v3726
    %v7177 = vunpack.c.l.b16 %v3727
    %v7178 = vunpack.c.h.b16 %v3727
    %v7179 = vunpack.c.l.b16 %v3728
    %v7180 = vunpack.c.h.b16 %v3728
    %v7181 = vunpack.c.l.b16 %v3729
    %v7182 = vunpack.c.h.b16 %v3729
    %v7183 = vunpack.c.l.b16 %v3730
    %v7184 = vunpack.c.h.b16 %v3730
    %v7185 = vunpack.c.l.b16 %v3731
    %v7186 = vunpack.c.h.b16 %v3731
    %v7187 = vunpack.c.l.b16 %v3732
    %v7188 = vunpack.c.h.b16 %v3732
    %v7189 = vunpack.c.l.b16 %v3733
    %v7190 = vunpack.c.h.b16 %v3733
    %v7191 = vunpack.c.l.b16 %v3734
    %v7192 = vunpack.c.h.b16 %v3734
    %v7193 = vunpack.c.l.b16 %v3735
    %v7194 = vunpack.c.h.b16 %v3735
    %v7195 = vunpack.c.l.b16 %v3736
    %v7196 = vunpack.c.h.b16 %v3736
    %v7197 = vunpack.c.l.b16 %v3737
    %v7198 = vunpack.c.h.b16 %v3737
    %v7199 = vunpack.c.l.b16 %v3738
    %v7200 = vunpack.c.h.b16 %v3738
    %v7201 = vunpack.c.l.b16 %v3739
    %v7202 = vunpack.c.h.b16 %v3739
    %v7203 = vunpack.c.l.b16 %v3740
    %v7204 = vunpack.c.h.b16 %v3740
    %v7205 = vunpack.c.l.b16 %v3741
    %v7206 = vunpack.c.h.b16 %v3741
    %v7207 = vunpack.c.l.b16 %v3742
    %v7208 = vunpack.c.h.b16 %v3742
    %v7209 = vunpack.c.l.b16 %v3743
    %v7210 = vunpack.c.h.b16 %v3743
    %v7211 = vunpack.c.l.b16 %v3744
    %v7212 = vunpack.c.h.b16 %v3744
    %v7213 = vunpack.c.l.b16 %v3745
    %v7214 = vunpack.c.h.b16 %v3745
    %v7215 = vunpack.c.l.b16 %v3746
    %v7216 = vunpack.c.h.b16 %v3746
    %v7217 = vunpack.c.l.b16 %v3747
    %v7218 = vunpack.c.h.b16 %v3747
    %v7219 = vunpack.c.l.b16 %v3748
    %v7220 = vunpack.c.h.b16 %v3748
    %v7221 = vunpack.c.l.b16 %v3749
    %v7222 = vunpack.c.h.b16 %v3749
    %v7223 = vunpack.c.l.b16 %v3750
    %v7224 = vunpack.c.h.b16 %v3750
    %v7225 = vunpack.c.l.b16 %v3751
    %v7226 = vunpack.c.h.b16 %v3751
    %v7227 = vunpack.c.l.b16 %v3752
    %v7228 = vunpack.c.h.b16 %v3752
    %v7229 = vunpack.c.l.b16 %v3753
    %v7230 = vunpack.c.h.b16 %v3753
    %v7231 = vunpack.c.l.b16 %v3754
    %v7232 = vunpack.c.h.b16 %v3754
    %v7233 = vunpack.c.l.b16 %v3755
    %v7234 = vunpack.c.h.b16 %v3755
    %v7235 = vunpack.c.l.b16 %v3756
    %v7236 = vunpack.c.h.b16 %v3756
    %v7237 = vunpack.c.l.b16 %v3757
    %v7238 = vunpack.c.h.b16 %v3757
    %v7239 = vunpack.c.l.b16 %v3758
    %v7240 = vunpack.c.h.b16 %v3758
    %v7241 = vunpack.c.l.b16 %v3759
    %v7242 = vunpack.c.h.b16 %v3759
    %v7243 = vunpack.c.l.b16 %v3760
    %v7244 = vunpack.c.h.b16 %v3760
    %v7245 = vunpack.c.l.b16 %v3761
    %v7246 = vunpack.c.h.b16 %v3761
    %v7247 = vunpack.c.l.b16 %v3762
    %v7248 = vunpack.c.h.b16 %v3762
    %v7249 = vunpack.c.l.b16 %v3763
    %v7250 = vunpack.c.h.b16 %v3763
    %v7251 = vunpack.c.l.b16 %v3764
    %v7252 = vunpack.c.h.b16 %v3764
    %v7253 = vunpack.c.l.b16 %v3765
    %v7254 = vunpack.c.h.b16 %v3765
    %v7255 = vunpack.c.l.b16 %v3766
    %v7256 = vunpack.c.h.b16 %v3766
    %v7257 = vunpack.c.l.b16 %v3767
    %v7258 = vunpack.c.h.b16 %v3767
    %v7259 = vunpack.c.l.b16 %v3768
    %v7260 = vunpack.c.h.b16 %v3768
    %v7261 = vunpack.c.l.b16 %v3769
    %v7262 = vunpack.c.h.b16 %v3769
    %v7263 = vunpack.c.l.b16 %v3770
    %v7264 = vunpack.c.h.b16 %v3770
    %v7265 = vunpack.c.l.b16 %v3771
    %v7266 = vunpack.c.h.b16 %v3771
    %v7267 = vunpack.c.l.b16 %v3772
    %v7268 = vunpack.c.h.b16 %v3772
    %v7269 = vunpack.c.l.b16 %v3773
    %v7270 = vunpack.c.h.b16 %v3773
    %v7271 = vunpack.c.l.b16 %v3774
    %v7272 = vunpack.c.h.b16 %v3774
    %v7273 = vunpack.c.l.b16 %v3775
    %v7274 = vunpack.c.h.b16 %v3775
    %v7275 = vunpack.c.l.b16 %v3776
    %v7276 = vunpack.c.h.b16 %v3776
    %v7277 = vunpack.c.l.b16 %v3777
    %v7278 = vunpack.c.h.b16 %v3777
    %v7279 = vunpack.c.l.b16 %v3778
    %v7280 = vunpack.c.h.b16 %v3778
    %v7281 = vunpack.c.l.b16 %v3779
    %v7282 = vunpack.c.h.b16 %v3779
    %v7283 = vunpack.c.l.b16 %v3780
    %v7284 = vunpack.c.h.b16 %v3780
    %v7285 = vunpack.c.l.b16 %v3781
    %v7286 = vunpack.c.h.b16 %v3781
    %v7287 = vunpack.c.l.b16 %v3782
    %v7288 = vunpack.c.h.b16 %v3782
    %v7289 = vunpack.c.l.b16 %v3783
    %v7290 = vunpack.c.h.b16 %v3783
    %v7291 = vunpack.c.l.b16 %v3784
    %v7292 = vunpack.c.h.b16 %v3784
    %v7293 = vunpack.c.l.b16 %v3785
    %v7294 = vunpack.c.h.b16 %v3785
    %v7295 = vunpack.c.l.b16 %v3786
    %v7296 = vunpack.c.h.b16 %v3786
    %v7297 = vunpack.c.l.b16 %v3787
    %v7298 = vunpack.c.h.b16 %v3787
    %v7299 = vunpack.c.l.b16 %v3788
    %v7300 = vunpack.c.h.b16 %v3788
    %v7301 = vunpack.c.l.b16 %v3789
    %v7302 = vunpack.c.h.b16 %v3789
    %v7303 = vunpack.c.l.b16 %v3790
    %v7304 = vunpack.c.h.b16 %v3790
    %v7305 = vunpack.c.l.b16 %v3791
    %v7306 = vunpack.c.h.b16 %v3791
    %v7307 = vunpack.c.l.b16 %v3792
    %v7308 = vunpack.c.h.b16 %v3792
    %v7309 = vunpack.c.l.b16 %v3793
    %v7310 = vunpack.c.h.b16 %v3793
    %v7311 = vunpack.c.l.b16 %v3794
    %v7312 = vunpack.c.h.b16 %v3794
    %v7313 = vunpack.c.l.b16 %v3795
    %v7314 = vunpack.c.h.b16 %v3795
    %v7315 = vunpack.c.l.b16 %v3796
    %v7316 = vunpack.c.h.b16 %v3796
    %v7317 = vunpack.c.l.b16 %v3797
    %v7318 = vunpack.c.h.b16 %v3797
    %v7319 = vunpack.c.l.b16 %v3798
    %v7320 = vunpack.c.h.b16 %v3798
    %v7321 = vunpack.c.l.b16 %v3799
    %v7322 = vunpack.c.h.b16 %v3799
    %v7323 = vunpack.c.l.b16 %v3800
    %v7324 = vunpack.c.h.b16 %v3800
    %v7325 = vunpack.c.l.b16 %v3801
    %v7326 = vunpack.c.h.b16 %v3801
    %v7327 = vunpack.c.l.b16 %v3802
    %v7328 = vunpack.c.h.b16 %v3802
    %v7329 = vunpack.c.l.b16 %v3803
    %v7330 = vunpack.c.h.b16 %v3803
    %v7331 = vunpack.c.l.b16 %v3804
    %v7332 = vunpack.c.h.b16 %v3804
    %v7333 = vunpack.c.l.b16 %v3805
    %v7334 = vunpack.c.h.b16 %v3805
    %v7335 = vunpack.c.l.b16 %v3806
    %v7336 = vunpack.c.h.b16 %v3806
    %v7337 = vunpack.c.l.b16 %v3807
    %v7338 = vunpack.c.h.b16 %v3807
    %v7339 = vunpack.c.l.b16 %v3808
    %v7340 = vunpack.c.h.b16 %v3808
    %v7341 = vunpack.c.l.b16 %v3809
    %v7342 = vunpack.c.h.b16 %v3809
    %v7343 = vunpack.c.l.b16 %v3810
    %v7344 = vunpack.c.h.b16 %v3810
    %v7345 = vunpack.c.l.b16 %v3811
    %v7346 = vunpack.c.h.b16 %v3811
    %v7347 = vunpack.c.l.b16 %v3812
    %v7348 = vunpack.c.h.b16 %v3812
    %v7349 = vunpack.c.l.b16 %v3813
    %v7350 = vunpack.c.h.b16 %v3813
    %v7351 = vunpack.c.l.b16 %v3814
    %v7352 = vunpack.c.h.b16 %v3814
    %v7353 = vunpack.c.l.b16 %v3815
    %v7354 = vunpack.c.h.b16 %v3815
    %v7355 = vunpack.c.l.b16 %v3816
    %v7356 = vunpack.c.h.b16 %v3816
    %v7357 = vunpack.c.l.b16 %v3817
    %v7358 = vunpack.c.h.b16 %v3817
    %v7359 = vunpack.c.l.b16 %v3818
    %v7360 = vunpack.c.h.b16 %v3818
    %v7361 = vunpack.c.l.b16 %v3819
    %v7362 = vunpack.c.h.b16 %v3819
    %v7363 = vunpack.c.l.b16 %v3820
    %v7364 = vunpack.c.h.b16 %v3820
    %v7365 = vunpack.c.l.b16 %v3821
    %v7366 = vunpack.c.h.b16 %v3821
    %v7367 = vunpack.c.l.b16 %v3822
    %v7368 = vunpack.c.h.b16 %v3822
    %v7369 = vunpack.c.l.b16 %v3823
    %v7370 = vunpack.c.h.b16 %v3823
    %v7371 = vunpack.c.l.b16 %v3824
    %v7372 = vunpack.c.h.b16 %v3824
    %v7373 = vunpack.c.l.b16 %v3825
    %v7374 = vunpack.c.h.b16 %v3825
    %v7375 = vunpack.c.l.b16 %v3826
    %v7376 = vunpack.c.h.b16 %v3826
    %v7377 = vunpack.c.l.b16 %v3827
    %v7378 = vunpack.c.h.b16 %v3827
    %v7379 = vunpack.c.l.b16 %v3828
    %v7380 = vunpack.c.h.b16 %v3828
    %v7381 = vunpack.c.l.b16 %v3829
    %v7382 = vunpack.c.h.b16 %v3829
    %v7383 = vunpack.c.l.b16 %v3830
    %v7384 = vunpack.c.h.b16 %v3830
    %v7385 = vunpack.c.l.b16 %v3831
    %v7386 = vunpack.c.h.b16 %v3831
    %v7387 = vunpack.c.l.b16 %v3832
    %v7388 = vunpack.c.h.b16 %v3832
    %v7389 = vunpack.c.l.b16 %v3833
    %v7390 = vunpack.c.h.b16 %v3833
    %v7391 = vunpack.c.l.b16 %v3834
    %v7392 = vunpack.c.h.b16 %v3834
    %v7393 = vunpack.c.l.b16 %v3835
    %v7394 = vunpack.c.h.b16 %v3835
    %v7395 = vunpack.c.l.b16 %v3836
    %v7396 = vunpack.c.h.b16 %v3836
    %v7397 = vunpack.c.l.b16 %v3837
    %v7398 = vunpack.c.h.b16 %v3837
    %v7399 = vunpack.c.l.b16 %v3838
    %v7400 = vunpack.c.h.b16 %v3838
    %v7401 = vunpack.c.l.b16 %v3839
    %v7402 = vunpack.c.h.b16 %v3839
    %v7403 = vunpack.c.l.b16 %v3840
    %v7404 = vunpack.c.h.b16 %v3840
    %v7405 = vunpack.c.l.b16 %v3841
    %v7406 = vunpack.c.h.b16 %v3841
    %v7407 = vunpack.c.l.b16 %v3842
    %v7408 = vunpack.c.h.b16 %v3842
    %v7409 = vunpack.c.l.b16 %v3843
    %v7410 = vunpack.c.h.b16 %v3843
    %v7411 = vunpack.c.l.b16 %v3844
    %v7412 = vunpack.c.h.b16 %v3844
    %v7413 = vunpack.c.l.b16 %v3845
    %v7414 = vunpack.c.h.b16 %v3845
    %v7415 = vunpack.c.l.b16 %v3846
    %v7416 = vunpack.c.h.b16 %v3846
    %v7417 = vunpack.c.l.b16 %v3847
    %v7418 = vunpack.c.h.b16 %v3847
    %v7419 = vunpack.c.l.b16 %v3848
    %v7420 = vunpack.c.h.b16 %v3848
    %v7421 = vunpack.c.l.b16 %v3849
    %v7422 = vunpack.c.h.b16 %v3849
    %v7423 = vunpack.c.l.b16 %v3850
    %v7424 = vunpack.c.h.b16 %v3850
    %v7425 = vunpack.c.l.b16 %v3851
    %v7426 = vunpack.c.h.b16 %v3851
    %v7427 = vunpack.c.l.b16 %v3852
    %v7428 = vunpack.c.h.b16 %v3852
    %v7429 = vunpack.c.l.b16 %v3853
    %v7430 = vunpack.c.h.b16 %v3853
    %v7431 = vunpack.c.l.b16 %v3854
    %v7432 = vunpack.c.h.b16 %v3854
    %v7433 = vunpack.c.l.b16 %v3855
    %v7434 = vunpack.c.h.b16 %v3855
    %v7435 = vunpack.c.l.b16 %v3856
    %v7436 = vunpack.c.h.b16 %v3856
    %v7437 = vunpack.c.l.b16 %v3857
    %v7438 = vunpack.c.h.b16 %v3857
    %v7439 = vunpack.c.l.b16 %v3858
    %v7440 = vunpack.c.h.b16 %v3858
    %v7441 = vunpack.c.l.b16 %v3859
    %v7442 = vunpack.c.h.b16 %v3859
    %v7443 = vunpack.c.l.b16 %v3860
    %v7444 = vunpack.c.h.b16 %v3860
    %v7445 = vunpack.c.l.b16 %v3861
    %v7446 = vunpack.c.h.b16 %v3861
    %v7447 = vunpack.c.l.b16 %v3862
    %v7448 = vunpack.c.h.b16 %v3862
    %v7449 = vunpack.c.l.b16 %v3863
    %v7450 = vunpack.c.h.b16 %v3863
    %v7451 = vunpack.c.l.b16 %v3864
    %v7452 = vunpack.c.h.b16 %v3864
    %v7453 = vunpack.c.l.b16 %v3865
    %v7454 = vunpack.c.h.b16 %v3865
    %v7455 = vunpack.c.l.b16 %v3866
    %v7456 = vunpack.c.h.b16 %v3866
    %v7457 = vunpack.c.l.b16 %v3867
    %v7458 = vunpack.c.h.b16 %v3867
    %v7459 = vunpack.c.l.b16 %v3868
    %v7460 = vunpack.c.h.b16 %v3868
    %v7461 = vunpack.c.l.b16 %v3869
    %v7462 = vunpack.c.h.b16 %v3869
    %v7463 = vunpack.c.l.b16 %v3870
    %v7464 = vunpack.c.h.b16 %v3870
    %v7465 = vunpack.c.l.b16 %v3871
    %v7466 = vunpack.c.h.b16 %v3871
    %v7467 = vunpack.c.l.b16 %v3872
    %v7468 = vunpack.c.h.b16 %v3872
    %v7469 = vunpack.c.l.b16 %v3873
    %v7470 = vunpack.c.h.b16 %v3873
    %v7471 = vunpack.c.l.b16 %v3874
    %v7472 = vunpack.c.h.b16 %v3874
    %v7473 = vunpack.c.l.b16 %v3875
    %v7474 = vunpack.c.h.b16 %v3875
    %v7475 = vunpack.c.l.b16 %v3876
    %v7476 = vunpack.c.h.b16 %v3876
    %v7477 = vunpack.c.l.b16 %v3877
    %v7478 = vunpack.c.h.b16 %v3877
    %v7479 = vunpack.c.l.b16 %v3878
    %v7480 = vunpack.c.h.b16 %v3878
    %v7481 = vunpack.c.l.b16 %v3879
    %v7482 = vunpack.c.h.b16 %v3879
    %v7483 = vunpack.c.l.b16 %v3880
    %v7484 = vunpack.c.h.b16 %v3880
    %v7485 = vunpack.c.l.b16 %v3881
    %v7486 = vunpack.c.h.b16 %v3881
    %v7487 = vunpack.c.l.b16 %v3882
    %v7488 = vunpack.c.h.b16 %v3882
    %v7489 = vunpack.c.l.b16 %v3883
    %v7490 = vunpack.c.h.b16 %v3883
    %v7491 = vunpack.c.l.b16 %v3884
    %v7492 = vunpack.c.h.b16 %v3884
    %v7493 = vunpack.c.l.b16 %v3885
    %v7494 = vunpack.c.h.b16 %v3885
    %v7495 = vunpack.c.l.b16 %v3886
    %v7496 = vunpack.c.h.b16 %v3886
    %v7497 = vunpack.c.l.b16 %v3887
    %v7498 = vunpack.c.h.b16 %v3887
    %v7499 = vunpack.c.l.b16 %v3888
    %v7500 = vunpack.c.h.b16 %v3888
    %v7501 = vunpack.c.l.b16 %v3889
    %v7502 = vunpack.c.h.b16 %v3889
    %v7503 = vunpack.c.l.b16 %v3890
    %v7504 = vunpack.c.h.b16 %v3890
    %v7505 = vunpack.c.l.b16 %v3891
    %v7506 = vunpack.c.h.b16 %v3891
    %v7507 = vunpack.c.l.b16 %v3892
    %v7508 = vunpack.c.h.b16 %v3892
    %v7509 = vunpack.c.l.b16 %v3893
    %v7510 = vunpack.c.h.b16 %v3893
    %v7511 = vunpack.c.l.b16 %v3894
    %v7512 = vunpack.c.h.b16 %v3894
    %v7513 = vunpack.c.l.b16 %v3895
    %v7514 = vunpack.c.h.b16 %v3895
    %v7515 = vunpack.c.l.b16 %v3896
    %v7516 = vunpack.c.h.b16 %v3896
    %v7517 = vunpack.c.l.b16 %v3897
    %v7518 = vunpack.c.h.b16 %v3897
    %v7519 = vunpack.c.l.b16 %v3898
    %v7520 = vunpack.c.h.b16 %v3898
    %v7521 = vunpack.c.l.b16 %v3899
    %v7522 = vunpack.c.h.b16 %v3899
    %v7523 = vunpack.c.l.b16 %v3900
    %v7524 = vunpack.c.h.b16 %v3900
    %v7525 = vunpack.c.l.b16 %v3901
    %v7526 = vunpack.c.h.b16 %v3901
    %v7527 = vunpack.c.l.b16 %v3902
    %v7528 = vunpack.c.h.b16 %v3902
    %v7529 = vunpack.c.l.b16 %v3903
    %v7530 = vunpack.c.h.b16 %v3903
    %v7531 = vunpack.c.l.b16 %v3904
    %v7532 = vunpack.c.h.b16 %v3904
    %v7533 = vunpack.c.l.b16 %v3905
    %v7534 = vunpack.c.h.b16 %v3905
    %v7535 = vunpack.c.l.b16 %v3906
    %v7536 = vunpack.c.h.b16 %v3906
    %v7537 = vunpack.c.l.b16 %v3907
    %v7538 = vunpack.c.h.b16 %v3907
    %v7539 = vunpack.c.l.b16 %v3908
    %v7540 = vunpack.c.h.b16 %v3908
    %v7541 = vpack.c.b16 %v5147, %v5141
    %v7542 = vpack.c.b16 %v5148, %v5142
    %v7543 = vpack.c.b16 %v5149, %v5143
    %v7544 = vpack.c.b16 %v5150, %v5144
    %v7545 = vpack.c.b16 %v5151, %v5145
    %v7546 = vpack.c.b16 %v5152, %v5146
    %v7547 = vpack.c.b16 %v5159, %v5153
    %v7548 = vpack.c.b16 %v5160, %v5154
    %v7549 = vpack.c.b16 %v5161, %v5155
    %v7550 = vpack.c.b16 %v5162, %v5156
    %v7551 = vpack.c.b16 %v5163, %v5157
    %v7552 = vpack.c.b16 %v5164, %v5158
    %v7553 = vpack.c.b16 %v5171, %v5165
    %v7554 = vpack.c.b16 %v5172, %v5166
    %v7555 = vpack.c.b16 %v5173, %v5167
    %v7556 = vpack.c.b16 %v5174, %v5168
    %v7557 = vpack.c.b16 %v5175, %v5169
    %v7558 = vpack.c.b16 %v5176, %v5170
    %v7559 = vpack.c.b16 %v5183, %v5177
    %v7560 = vpack.c.b16 %v5184, %v5178
    %v7561 = vpack.c.b16 %v5185, %v5179
    %v7562 = vpack.c.b16 %v5186, %v5180
    %v7563 = vpack.c.b16 %v5187, %v5181
    %v7564 = vpack.c.b16 %v5188, %v5182
    %v7565 = vpack.c.b16 %v5195, %v5189
    %v7566 = vpack.c.b16 %v5196, %v5190
    %v7567 = vpack.c.b16 %v5197, %v5191
    %v7568 = vpack.c.b16 %v5198, %v5192
    %v7569 = vpack.c.b16 %v5199, %v5193
    %v7570 = vpack.c.b16 %v5200, %v5194
    %v7571 = vpack.c.b16 %v5207, %v5201
    %v7572 = vpack.c.b16 %v5208, %v5202
    %v7573 = vpack.c.b16 %v5209, %v5203
    %v7574 = vpack.c.b16 %v5210, %v5204
    %v7575 = vpack.c.b16 %v5211, %v5205
    %v7576 = vpack.c.b16 %v5212, %v5206
    %v7577 = vpack.c.b16 %v5219, %v5213
    %v7578 = vpack.c.b16 %v5220, %v5214
    %v7579 = vpack.c.b16 %v5221, %v5215
    %v7580 = vpack.c.b16 %v5222, %v5216
    %v7581 = vpack.c.b16 %v5223, %v5217
    %v7582 = vpack.c.b16 %v5224, %v5218
    %v7583 = vpack.c.b16 %v5231, %v5225
    %v7584 = vpack.c.b16 %v5232, %v5226
    %v7585 = vpack.c.b16 %v5233, %v5227
    %v7586 = vpack.c.b16 %v5234, %v5228
    %v7587 = vpack.c.b16 %v5235, %v5229
    %v7588 = vpack.c.b16 %v5236, %v5230
    %v7589 = vpack.c.b16 %v5243, %v5237
    %v7590 = vpack.c.b16 %v5244, %v5238
    %v7591 = vpack.c.b16 %v5245, %v5239
    %v7592 = vpack.c.b16 %v5246, %v5240
    %v7593 = vpack.c.b16 %v5247, %v5241
    %v7594 = vpack.c.b16 %v5248, %v5242
    %v7595 = vpack.c.b16 %v5255, %v5249
    %v7596 = vpack.c.b16 %v5256, %v5250
    %v7597 = vpack.c.b16 %v5257, %v5251
    %v7598 = vpack.c.b16 %v5258, %v5252
    %v7599 = vpack.c.b16 %v5259, %v5253
    %v7600 = vpack.c.b16 %v5260, %v5254
    %v7601 = vpack.c.b16 %v5267, %v5261
    %v7602 = vpack.c.b16 %v5268, %v5262
    %v7603 = vpack.c.b16 %v5269, %v5263
    %v7604 = vpack.c.b16 %v5270, %v5264
    %v7605 = vpack.c.b16 %v5271, %v5265
    %v7606 = vpack.c.b16 %v5272, %v5266
    %v7607 = vpack.c.b16 %v5279, %v5273
    %v7608 = vpack.c.b16 %v5280, %v5274
    %v7609 = vpack.c.b16 %v5281, %v5275
    %v7610 = vpack.c.b16 %v5282, %v5276
    %v7611 = vpack.c.b16 %v5283, %v5277
    %v7612 = vpack.c.b16 %v5284, %v5278
    %v7613 = vpack.c.b16 %v5291, %v5285
    %v7614 = vpack.c.b16 %v5292, %v5286
    %v7615 = vpack.c.b16 %v5293, %v5287
    %v7616 = vpack.c.b16 %v5294, %v5288
    %v7617 = vpack.c.b16 %v5295, %v5289
    %v7618 = vpack.c.b16 %v5296, %v5290
    %v7619 = vpack.c.b16 %v5303, %v5297
    %v7620 = vpack.c.b16 %v5304, %v5298
    %v7621 = vpack.c.b16 %v5305, %v5299
    %v7622 = vpack.c.b16 %v5306, %v5300
    %v7623 = vpack.c.b16 %v5307, %v5301
    %v7624 = vpack.c.b16 %v5308, %v5302
    %v7625 = vpack.c.b16 %v5315, %v5309
    %v7626 = vpack.c.b16 %v5316, %v5310
    %v7627 = vpack.c.b16 %v5317, %v5311
    %v7628 = vpack.c.b16 %v5318, %v5312
    %v7629 = vpack.c.b16 %v5319, %v5313
    %v7630 = vpack.c.b16 %v5320, %v5314
    %v7631 = vpack.c.b16 %v5327, %v5321
    %v7632 = vpack.c.b16 %v5328, %v5322
    %v7633 = vpack.c.b16 %v5329, %v5323
    %v7634 = vpack.c.b16 %v5330, %v5324
    %v7635 = vpack.c.b16 %v5331, %v5325
    %v7636 = vpack.c.b16 %v5332, %v5326
    %v7637 = vpack.c.b16 %v5339, %v5333
    %v7638 = vpack.c.b16 %v5340, %v5334
    %v7639 = vpack.c.b16 %v5341, %v5335
    %v7640 = vpack.c.b16 %v5342, %v5336
    %v7641 = vpack.c.b16 %v5343, %v5337
    %v7642 = vpack.c.b16 %v5344, %v5338
    %v7643 = vpack.c.b16 %v5351, %v5345
    %v7644 = vpack.c.b16 %v5352, %v5346
    %v7645 = vpack.c.b16 %v5353, %v5347
    %v7646 = vpack.c.b16 %v5354, %v5348
    %v7647 = vpack.c.b16 %v5355, %v5349
    %v7648 = vpack.c.b16 %v5356, %v5350
    %v7649 = vpack.c.b16 %v5363, %v5357
    %v7650 = vpack.c.b16 %v5364, %v5358
    %v7651 = vpack.c.b16 %v5365, %v5359
    %v7652 = vpack.c.b16 %v5366, %v5360
    %v7653 = vpack.c.b16 %v5367, %v5361
    %v7654 = vpack.c.b16 %v5368, %v5362
    %v7655 = vpack.c.b16 %v5375, %v5369
    %v7656 = vpack.c.b16 %v5376, %v5370
    %v7657 = vpack.c.b16 %v5377, %v5371
    %v7658 = vpack.c.b16 %v5378, %v5372
    %v7659 = vpack.c.b16 %v5379, %v5373
    %v7660 = vpack.c.b16 %v5380, %v5374
    %v7661 = vpack.c.b16 %v5387, %v5381
    %v7662 = vpack.c.b16 %v5388, %v5382
    %v7663 = vpack.c.b16 %v5389, %v5383
    %v7664 = vpack.c.b16 %v5390, %v5384
    %v7665 = vpack.c.b16 %v5391, %v5385
    %v7666 = vpack.c.b16 %v5392, %v5386
    %v7667 = vpack.c.b16 %v5399, %v5393
    %v7668 = vpack.c.b16 %v5400, %v5394
    %v7669 = vpack.c.b16 %v5401, %v5395
    %v7670 = vpack.c.b16 %v5402, %v5396
    %v7671 = vpack.c.b16 %v5403, %v5397
    %v7672 = vpack.c.b16 %v5404, %v5398
    %v7673 = vpack.c.b16 %v5411, %v5405
    %v7674 = vpack.c.b16 %v5412, %v5406
    %v7675 = vpack.c.b16 %v5413, %v5407
    %v7676 = vpack.c.b16 %v5414, %v5408
    %v7677 = vpack.c.b16 %v5415, %v5409
    %v7678 = vpack.c.b16 %v5416, %v5410
    %v7679 = vpack.c.b16 %v5423, %v5417
    %v7680 = vpack.c.b16 %v5424, %v5418
    %v7681 = vpack.c.b16 %v5425, %v5419
    %v7682 = vpack.c.b16 %v5426, %v5420
    %v7683 = vpack.c.b16 %v5427, %v5421
    %v7684 = vpack.c.b16 %v5428, %v5422
    %v7685 = vpack.c.b16 %v5435, %v5429
    %v7686 = vpack.c.b16 %v5436, %v5430
    %v7687 = vpack.c.b16 %v5437, %v5431
    %v7688 = vpack.c.b16 %v5438, %v5432
    %v7689 = vpack.c.b16 %v5439, %v5433
    %v7690 = vpack.c.b16 %v5440, %v5434
    %v7691 = vpack.c.b16 %v5447, %v5441
    %v7692 = vpack.c.b16 %v5448, %v5442
    %v7693 = vpack.c.b16 %v5449, %v5443
    %v7694 = vpack.c.b16 %v5450, %v5444
    %v7695 = vpack.c.b16 %v5451, %v5445
    %v7696 = vpack.c.b16 %v5452, %v5446
    %v7697 = vpack.c.b16 %v5459, %v5453
    %v7698 = vpack.c.b16 %v5460, %v5454
    %v7699 = vpack.c.b16 %v5461, %v5455
    %v7700 = vpack.c.b16 %v5462, %v5456
    %v7701 = vpack.c.b16 %v5463, %v5457
    %v7702 = vpack.c.b16 %v5464, %v5458
    %v7703 = vpack.c.b16 %v5471, %v5465
    %v7704 = vpack.c.b16 %v5472, %v5466
    %v7705 = vpack.c.b16 %v5473, %v5467
    %v7706 = vpack.c.b16 %v5474, %v5468
    %v7707 = vpack.c.b16 %v5475, %v5469
    %v7708 = vpack.c.b16 %v5476, %v5470
    %v7709 = vpack.c.b16 %v5483, %v5477
    %v7710 = vpack.c.b16 %v5484, %v5478
    %v7711 = vpack.c.b16 %v5485, %v5479
    %v7712 = vpack.c.b16 %v5486, %v5480
    %v7713 = vpack.c.b16 %v5487, %v5481
    %v7714 = vpack.c.b16 %v5488, %v5482
    %v7715 = vpack.c.b16 %v5495, %v5489
    %v7716 = vpack.c.b16 %v5496, %v5490
    %v7717 = vpack.c.b16 %v5497, %v5491
    %v7718 = vpack.c.b16 %v5498, %v5492
    %v7719 = vpack.c.b16 %v5499, %v5493
    %v7720 = vpack.c.b16 %v5500, %v5494
    %v7721 = vpack.c.b16 %v5507, %v5501
    %v7722 = vpack.c.b16 %v5508, %v5502
    %v7723 = vpack.c.b16 %v5509, %v5503
    %v7724 = vpack.c.b16 %v5510, %v5504
    %v7725 = vpack.c.b16 %v5511, %v5505
    %v7726 = vpack.c.b16 %v5512, %v5506
    %v7727 = vpack.c.b16 %v5519, %v5513
    %v7728 = vpack.c.b16 %v5520, %v5514
    %v7729 = vpack.c.b16 %v5521, %v5515
    %v7730 = vpack.c.b16 %v5522, %v5516
    %v7731 = vpack.c.b16 %v5523, %v5517
    %v7732 = vpack.c.b16 %v5524, %v5518
    %v7733 = vpack.c.b16 %v5531, %v5525
    %v7734 = vpack.c.b16 %v5532, %v5526
    %v7735 = vpack.c.b16 %v5533, %v5527
    %v7736 = vpack.c.b16 %v5534, %v5528
    %v7737 = vpack.c.b16 %v5535, %v5529
    %v7738 = vpack.c.b16 %v5536, %v5530
    %v7739 = vpack.c.b16 %v5543, %v5537
    %v7740 = vpack.c.b16 %v5544, %v5538
    %v7741 = vpack.c.b16 %v5545, %v5539
    %v7742 = vpack.c.b16 %v5546, %v5540
    %v7743 = vpack.c.b16 %v5547, %v5541
    %v7744 = vpack.c.b16 %v5548, %v5542
    %v7745 = vpack.c.b16 %v5555, %v5549
    %v7746 = vpack.c.b16 %v5556, %v5550
    %v7747 = vpack.c.b16 %v5557, %v5551
    %v7748 = vpack.c.b16 %v5558, %v5552
    %v7749 = vpack.c.b16 %v5559, %v5553
    %v7750 = vpack.c.b16 %v5560, %v5554
    %v7751 = vpack.c.b16 %v5567, %v5561
    %v7752 = vpack.c.b16 %v5568, %v5562
    %v7753 = vpack.c.b16 %v5569, %v5563
    %v7754 = vpack.c.b16 %v5570, %v5564
    %v7755 = vpack.c.b16 %v5571, %v5565
    %v7756 = vpack.c.b16 %v5572, %v5566
    %v7757 = vpack.c.b16 %v5579, %v5573
    %v7758 = vpack.c.b16 %v5580, %v5574
    %v7759 = vpack.c.b16 %v5581, %v5575
    %v7760 = vpack.c.b16 %v5582, %v5576
    %v7761 = vpack.c.b16 %v5583, %v5577
    %v7762 = vpack.c.b16 %v5584, %v5578
    %v7763 = vpack.c.b16 %v5591, %v5585
    %v7764 = vpack.c.b16 %v5592, %v5586
    %v7765 = vpack.c.b16 %v5593, %v5587
    %v7766 = vpack.c.b16 %v5594, %v5588
    %v7767 = vpack.c.b16 %v5595, %v5589
    %v7768 = vpack.c.b16 %v5596, %v5590
    %v7769 = vpack.c.b16 %v5603, %v5597
    %v7770 = vpack.c.b16 %v5604, %v5598
    %v7771 = vpack.c.b16 %v5605, %v5599
    %v7772 = vpack.c.b16 %v5606, %v5600
    %v7773 = vpack.c.b16 %v5607, %v5601
    %v7774 = vpack.c.b16 %v5608, %v5602
    %v7775 = vpack.c.b16 %v5615, %v5609
    %v7776 = vpack.c.b16 %v5616, %v5610
    %v7777 = vpack.c.b16 %v5617, %v5611
    %v7778 = vpack.c.b16 %v5618, %v5612
    %v7779 = vpack.c.b16 %v5619, %v5613
    %v7780 = vpack.c.b16 %v5620, %v5614
    %v7781 = vpack.c.b16 %v5627, %v5621
    %v7782 = vpack.c.b16 %v5628, %v5622
    %v7783 = vpack.c.b16 %v5629, %v5623
    %v7784 = vpack.c.b16 %v5630, %v5624
    %v7785 = vpack.c.b16 %v5631, %v5625
    %v7786 = vpack.c.b16 %v5632, %v5626
    %v7787 = vpack.c.b16 %v5639, %v5633
    %v7788 = vpack.c.b16 %v5640, %v5634
    %v7789 = vpack.c.b16 %v5641, %v5635
    %v7790 = vpack.c.b16 %v5642, %v5636
    %v7791 = vpack.c.b16 %v5643, %v5637
    %v7792 = vpack.c.b16 %v5644, %v5638
    %v7793 = vpack.c.b16 %v5651, %v5645
    %v7794 = vpack.c.b16 %v5652, %v5646
    %v7795 = vpack.c.b16 %v5653, %v5647
    %v7796 = vpack.c.b16 %v5654, %v5648
    %v7797 = vpack.c.b16 %v5655, %v5649
    %v7798 = vpack.c.b16 %v5656, %v5650
    %v7799 = vpack.c.b16 %v5663, %v5657
    %v7800 = vpack.c.b16 %v5664, %v5658
    %v7801 = vpack.c.b16 %v5665, %v5659
    %v7802 = vpack.c.b16 %v5666, %v5660
    %v7803 = vpack.c.b16 %v5667, %v5661
    %v7804 = vpack.c.b16 %v5668, %v5662
    %v7805 = vpack.c.b16 %v5675, %v5669
    %v7806 = vpack.c.b16 %v5676, %v5670
    %v7807 = vpack.c.b16 %v5677, %v5671
    %v7808 = vpack.c.b16 %v5678, %v5672
    %v7809 = vpack.c.b16 %v5679, %v5673
    %v7810 = vpack.c.b16 %v5680, %v5674
    %v7811 = vpack.c.b16 %v5687, %v5681
    %v7812 = vpack.c.b16 %v5688, %v5682
    %v7813 = vpack.c.b16 %v5689, %v5683
    %v7814 = vpack.c.b16 %v5690, %v5684
    %v7815 = vpack.c.b16 %v5691, %v5685
    %v7816 = vpack.c.b16 %v5692, %v5686
    %v7817 = vpack.c.b16 %v5699, %v5693
    %v7818 = vpack.c.b16 %v5700, %v5694
    %v7819 = vpack.c.b16 %v5701, %v5695
    %v7820 = vpack.c.b16 %v5702, %v5696
    %v7821 = vpack.c.b16 %v5703, %v5697
    %v7822 = vpack.c.b16 %v5704, %v5698
    %v7823 = vpack.c.b16 %v5711, %v5705
    %v7824 = vpack.c.b16 %v5712, %v5706
    %v7825 = vpack.c.b16 %v5713, %v5707
    %v7826 = vpack.c.b16 %v5714, %v5708
    %v7827 = vpack.c.b16 %v5715, %v5709
    %v7828 = vpack.c.b16 %v5716, %v5710
    %v7829 = vpack.c.b16 %v5723, %v5717
    %v7830 = vpack.c.b16 %v5724, %v5718
    %v7831 = vpack.c.b16 %v5725, %v5719
    %v7832 = vpack.c.b16 %v5726, %v5720
    %v7833 = vpack.c.b16 %v5727, %v5721
    %v7834 = vpack.c.b16 %v5728, %v5722
    %v7835 = vpack.c.b16 %v5735, %v5729
    %v7836 = vpack.c.b16 %v5736, %v5730
    %v7837 = vpack.c.b16 %v5737, %v5731
    %v7838 = vpack.c.b16 %v5738, %v5732
    %v7839 = vpack.c.b16 %v5739, %v5733
    %v7840 = vpack.c.b16 %v5740, %v5734
    %v7841 = vpack.c.b16 %v5747, %v5741
    %v7842 = vpack.c.b16 %v5748, %v5742
    %v7843 = vpack.c.b16 %v5749, %v5743
    %v7844 = vpack.c.b16 %v5750, %v5744
    %v7845 = vpack.c.b16 %v5751, %v5745
    %v7846 = vpack.c.b16 %v5752, %v5746
    %v7847 = vpack.c.b16 %v5759, %v5753
    %v7848 = vpack.c.b16 %v5760, %v5754
    %v7849 = vpack.c.b16 %v5761, %v5755
    %v7850 = vpack.c.b16 %v5762, %v5756
    %v7851 = vpack.c.b16 %v5763, %v5757
    %v7852 = vpack.c.b16 %v5764, %v5758
    %v7853 = vpack.c.b16 %v5771, %v5765
    %v7854 = vpack.c.b16 %v5772, %v5766
    %v7855 = vpack.c.b16 %v5773, %v5767
    %v7856 = vpack.c.b16 %v5774, %v5768
    %v7857 = vpack.c.b16 %v5775, %v5769
    %v7858 = vpack.c.b16 %v5776, %v5770
    %v7859 = vpack.c.b16 %v5783, %v5777
    %v7860 = vpack.c.b16 %v5784, %v5778
    %v7861 = vpack.c.b16 %v5785, %v5779
    %v7862 = vpack.c.b16 %v5786, %v5780
    %v7863 = vpack.c.b16 %v5787, %v5781
    %v7864 = vpack.c.b16 %v5788, %v5782
    %v7865 = vpack.c.b16 %v5795, %v5789
    %v7866 = vpack.c.b16 %v5796, %v5790
    %v7867 = vpack.c.b16 %v5797, %v5791
    %v7868 = vpack.c.b16 %v5798, %v5792
    %v7869 = vpack.c.b16 %v5799, %v5793
    %v7870 = vpack.c.b16 %v5800, %v5794
    %v7871 = vpack.c.b16 %v5807, %v5801
    %v7872 = vpack.c.b16 %v5808, %v5802
    %v7873 = vpack.c.b16 %v5809, %v5803
    %v7874 = vpack.c.b16 %v5810, %v5804
    %v7875 = vpack.c.b16 %v5811, %v5805
    %v7876 = vpack.c.b16 %v5812, %v5806
    %v7877 = vpack.c.b16 %v5819, %v5813
    %v7878 = vpack.c.b16 %v5820, %v5814
    %v7879 = vpack.c.b16 %v5821, %v5815
    %v7880 = vpack.c.b16 %v5822, %v5816
    %v7881 = vpack.c.b16 %v5823, %v5817
    %v7882 = vpack.c.b16 %v5824, %v5818
    %v7883 = vpack.c.b16 %v5831, %v5825
    %v7884 = vpack.c.b16 %v5832, %v5826
    %v7885 = vpack.c.b16 %v5833, %v5827
    %v7886 = vpack.c.b16 %v5834, %v5828
    %v7887 = vpack.c.b16 %v5835, %v5829
    %v7888 = vpack.c.b16 %v5836, %v5830
    %v7889 = vpack.c.b16 %v5843, %v5837
    %v7890 = vpack.c.b16 %v5844, %v5838
    %v7891 = vpack.c.b16 %v5845, %v5839
    %v7892 = vpack.c.b16 %v5846, %v5840
    %v7893 = vpack.c.b16 %v5847, %v5841
    %v7894 = vpack.c.b16 %v5848, %v5842
    %v7895 = vpack.c.b16 %v5855, %v5849
    %v7896 = vpack.c.b16 %v5856, %v5850
    %v7897 = vpack.c.b16 %v5857, %v5851
    %v7898 = vpack.c.b16 %v5858, %v5852
    %v7899 = vpack.c.b16 %v5859, %v5853
    %v7900 = vpack.c.b16 %v5860, %v5854
    %v7901 = vpack.c.b16 %v5867, %v5861
    %v7902 = vpack.c.b16 %v5868, %v5862
    %v7903 = vpack.c.b16 %v5869, %v5863
    %v7904 = vpack.c.b16 %v5870, %v5864
    %v7905 = vpack.c.b16 %v5871, %v5865
    %v7906 = vpack.c.b16 %v5872, %v5866
    %v7907 = vpack.c.b16 %v5879, %v5873
    %v7908 = vpack.c.b16 %v5880, %v5874
    %v7909 = vpack.c.b16 %v5881, %v5875
    %v7910 = vpack.c.b16 %v5882, %v5876
    %v7911 = vpack.c.b16 %v5883, %v5877
    %v7912 = vpack.c.b16 %v5884, %v5878
    %v7913 = vpack.c.b16 %v5891, %v5885
    %v7914 = vpack.c.b16 %v5892, %v5886
    %v7915 = vpack.c.b16 %v5893, %v5887
    %v7916 = vpack.c.b16 %v5894, %v5888
    %v7917 = vpack.c.b16 %v5895, %v5889
    %v7918 = vpack.c.b16 %v5896, %v5890
    %v7919 = vpack.c.b16 %v5903, %v5897
    %v7920 = vpack.c.b16 %v5904, %v5898
    %v7921 = vpack.c.b16 %v5905, %v5899
    %v7922 = vpack.c.b16 %v5906, %v5900
    %v7923 = vpack.c.b16 %v5907, %v5901
    %v7924 = vpack.c.b16 %v5908, %v5902
    %v7925 = vpack.c.b16 %v5915, %v5909
    %v7926 = vpack.c.b16 %v5916, %v5910
    %v7927 = vpack.c.b16 %v5917, %v5911
    %v7928 = vpack.c.b16 %v5918, %v5912
    %v7929 = vpack.c.b16 %v5919, %v5913
    %v7930 = vpack.c.b16 %v5920, %v5914
    %v7931 = vpack.c.b16 %v5927, %v5921
    %v7932 = vpack.c.b16 %v5928, %v5922
    %v7933 = vpack.c.b16 %v5929, %v5923
    %v7934 = vpack.c.b16 %v5930, %v5924
    %v7935 = vpack.c.b16 %v5931, %v5925
    %v7936 = vpack.c.b16 %v5932, %v5926
    %v7937 = vpack.c.b16 %v5939, %v5933
    %v7938 = vpack.c.b16 %v5940, %v5934
    %v7939 = vpack.c.b16 %v5941, %v5935
    %v7940 = vpack.c.b16 %v5942, %v5936
    %v7941 = vpack.c.b16 %v5943, %v5937
    %v7942 = vpack.c.b16 %v5944, %v5938
    %v7943 = vpack.c.b16 %v5951, %v5945
    %v7944 = vpack.c.b16 %v5952, %v5946
    %v7945 = vpack.c.b16 %v5953, %v5947
    %v7946 = vpack.c.b16 %v5954, %v5948
    %v7947 = vpack.c.b16 %v5955, %v5949
    %v7948 = vpack.c.b16 %v5956, %v5950
    %v7949 = vpack.c.b16 %v5963, %v5957
    %v7950 = vpack.c.b16 %v5964, %v5958
    %v7951 = vpack.c.b16 %v5965, %v5959
    %v7952 = vpack.c.b16 %v5966, %v5960
    %v7953 = vpack.c.b16 %v5967, %v5961
    %v7954 = vpack.c.b16 %v5968, %v5962
    %v7955 = vpack.c.b16 %v5975, %v5969
    %v7956 = vpack.c.b16 %v5976, %v5970
    %v7957 = vpack.c.b16 %v5977, %v5971
    %v7958 = vpack.c.b16 %v5978, %v5972
    %v7959 = vpack.c.b16 %v5979, %v5973
    %v7960 = vpack.c.b16 %v5980, %v5974
    %v7961 = vpack.c.b16 %v5987, %v5981
    %v7962 = vpack.c.b16 %v5988, %v5982
    %v7963 = vpack.c.b16 %v5989, %v5983
    %v7964 = vpack.c.b16 %v5990, %v5984
    %v7965 = vpack.c.b16 %v5991, %v5985
    %v7966 = vpack.c.b16 %v5992, %v5986
    %v7967 = vpack.c.b16 %v5999, %v5993
    %v7968 = vpack.c.b16 %v6000, %v5994
    %v7969 = vpack.c.b16 %v6001, %v5995
    %v7970 = vpack.c.b16 %v6002, %v5996
    %v7971 = vpack.c.b16 %v6003, %v5997
    %v7972 = vpack.c.b16 %v6004, %v5998
    %v7973 = vpack.c.b16 %v6011, %v6005
    %v7974 = vpack.c.b16 %v6012, %v6006
    %v7975 = vpack.c.b16 %v6013, %v6007
    %v7976 = vpack.c.b16 %v6014, %v6008
    %v7977 = vpack.c.b16 %v6015, %v6009
    %v7978 = vpack.c.b16 %v6016, %v6010
    %v7979 = vpack.c.b16 %v6023, %v6017
    %v7980 = vpack.c.b16 %v6024, %v6018
    %v7981 = vpack.c.b16 %v6025, %v6019
    %v7982 = vpack.c.b16 %v6026, %v6020
    %v7983 = vpack.c.b16 %v6027, %v6021
    %v7984 = vpack.c.b16 %v6028, %v6022
    %v7985 = vpack.c.b16 %v6035, %v6029
    %v7986 = vpack.c.b16 %v6036, %v6030
    %v7987 = vpack.c.b16 %v6037, %v6031
    %v7988 = vpack.c.b16 %v6038, %v6032
    %v7989 = vpack.c.b16 %v6039, %v6033
    %v7990 = vpack.c.b16 %v6040, %v6034
    %v7991 = vpack.c.b16 %v6047, %v6041
    %v7992 = vpack.c.b16 %v6048, %v6042
    %v7993 = vpack.c.b16 %v6049, %v6043
    %v7994 = vpack.c.b16 %v6050, %v6044
    %v7995 = vpack.c.b16 %v6051, %v6045
    %v7996 = vpack.c.b16 %v6052, %v6046
    %v7997 = vpack.c.b16 %v6059, %v6053
    %v7998 = vpack.c.b16 %v6060, %v6054
    %v7999 = vpack.c.b16 %v6061, %v6055
    %v8000 = vpack.c.b16 %v6062, %v6056
    %v8001 = vpack.c.b16 %v6063, %v6057
    %v8002 = vpack.c.b16 %v6064, %v6058
    %v8003 = vpack.c.b16 %v6071, %v6065
    %v8004 = vpack.c.b16 %v6072, %v6066
    %v8005 = vpack.c.b16 %v6073, %v6067
    %v8006 = vpack.c.b16 %v6074, %v6068
    %v8007 = vpack.c.b16 %v6075, %v6069
    %v8008 = vpack.c.b16 %v6076, %v6070
    %v8009 = vpack.c.b16 %v6083, %v6077
    %v8010 = vpack.c.b16 %v6084, %v6078
    %v8011 = vpack.c.b16 %v6085, %v6079
    %v8012 = vpack.c.b16 %v6086, %v6080
    %v8013 = vpack.c.b16 %v6087, %v6081
    %v8014 = vpack.c.b16 %v6088, %v6082
    %v8015 = vpack.c.b16 %v6095, %v6089
    %v8016 = vpack.c.b16 %v6096, %v6090
    %v8017 = vpack.c.b16 %v6097, %v6091
    %v8018 = vpack.c.b16 %v6098, %v6092
    %v8019 = vpack.c.b16 %v6099, %v6093
    %v8020 = vpack.c.b16 %v6100, %v6094
    %v8021 = vpack.c.b16 %v6107, %v6101
    %v8022 = vpack.c.b16 %v6108, %v6102
    %v8023 = vpack.c.b16 %v6109, %v6103
    %v8024 = vpack.c.b16 %v6110, %v6104
    %v8025 = vpack.c.b16 %v6111, %v6105
    %v8026 = vpack.c.b16 %v6112, %v6106
    %v8027 = vpack.c.b16 %v6119, %v6113
    %v8028 = vpack.c.b16 %v6120, %v6114
    %v8029 = vpack.c.b16 %v6121, %v6115
    %v8030 = vpack.c.b16 %v6122, %v6116
    %v8031 = vpack.c.b16 %v6123, %v6117
    %v8032 = vpack.c.b16 %v6124, %v6118
    %v8033 = vpack.c.b16 %v6131, %v6125
    %v8034 = vpack.c.b16 %v6132, %v6126
    %v8035 = vpack.c.b16 %v6133, %v6127
    %v8036 = vpack.c.b16 %v6134, %v6128
    %v8037 = vpack.c.b16 %v6135, %v6129
    %v8038 = vpack.c.b16 %v6136, %v6130
    %v8039 = vpack.c.b16 %v6143, %v6137
    %v8040 = vpack.c.b16 %v6144, %v6138
    %v8041 = vpack.c.b16 %v6145, %v6139
    %v8042 = vpack.c.b16 %v6146, %v6140
    %v8043 = vpack.c.b16 %v6147, %v6141
    %v8044 = vpack.c.b16 %v6148, %v6142
    %v8045 = vpack.c.b16 %v6155, %v6149
    %v8046 = vpack.c.b16 %v6156, %v6150
    %v8047 = vpack.c.b16 %v6157, %v6151
    %v8048 = vpack.c.b16 %v6158, %v6152
    %v8049 = vpack.c.b16 %v6159, %v6153
    %v8050 = vpack.c.b16 %v6160, %v6154
    %v8051 = vpack.c.b16 %v6167, %v6161
    %v8052 = vpack.c.b16 %v6168, %v6162
    %v8053 = vpack.c.b16 %v6169, %v6163
    %v8054 = vpack.c.b16 %v6170, %v6164
    %v8055 = vpack.c.b16 %v6171, %v6165
    %v8056 = vpack.c.b16 %v6172, %v6166
    %v8057 = vpack.c.b16 %v6179, %v6173
    %v8058 = vpack.c.b16 %v6180, %v6174
    %v8059 = vpack.c.b16 %v6181, %v6175
    %v8060 = vpack.c.b16 %v6182, %v6176
    %v8061 = vpack.c.b16 %v6183, %v6177
    %v8062 = vpack.c.b16 %v6184, %v6178
    %v8063 = vpack.c.b16 %v6191, %v6185
    %v8064 = vpack.c.b16 %v6192, %v6186
    %v8065 = vpack.c.b16 %v6193, %v6187
    %v8066 = vpack.c.b16 %v6194, %v6188
    %v8067 = vpack.c.b16 %v6195, %v6189
    %v8068 = vpack.c.b16 %v6196, %v6190
    %v8069 = vpack.c.b16 %v6203, %v6197
    %v8070 = vpack.c.b16 %v6204, %v6198
    %v8071 = vpack.c.b16 %v6205, %v6199
    %v8072 = vpack.c.b16 %v6206, %v6200
    %v8073 = vpack.c.b16 %v6207, %v6201
    %v8074 = vpack.c.b16 %v6208, %v6202
    %v8075 = vpack.c.b16 %v6215, %v6209
    %v8076 = vpack.c.b16 %v6216, %v6210
    %v8077 = vpack.c.b16 %v6217, %v6211
    %v8078 = vpack.c.b16 %v6218, %v6212
    %v8079 = vpack.c.b16 %v6219, %v6213
    %v8080 = vpack.c.b16 %v6220, %v6214
    %v8081 = vpack.c.b16 %v6227, %v6221
    %v8082 = vpack.c.b16 %v6228, %v6222
    %v8083 = vpack.c.b16 %v6229, %v6223
    %v8084 = vpack.c.b16 %v6230, %v6224
    %v8085 = vpack.c.b16 %v6231, %v6225
    %v8086 = vpack.c.b16 %v6232, %v6226
    %v8087 = vpack.c.b16 %v6239, %v6233
    %v8088 = vpack.c.b16 %v6240, %v6234
    %v8089 = vpack.c.b16 %v6241, %v6235
    %v8090 = vpack.c.b16 %v6242, %v6236
    %v8091 = vpack.c.b16 %v6243, %v6237
    %v8092 = vpack.c.b16 %v6244, %v6238
    %v8093 = vpack.c.b16 %v6251, %v6245
    %v8094 = vpack.c.b16 %v6252, %v6246
    %v8095 = vpack.c.b16 %v6253, %v6247
    %v8096 = vpack.c.b16 %v6254, %v6248
    %v8097 = vpack.c.b16 %v6255, %v6249
    %v8098 = vpack.c.b16 %v6256, %v6250
    %v8099 = vpack.c.b16 %v6263, %v6257
    %v8100 = vpack.c.b16 %v6264, %v6258
    %v8101 = vpack.c.b16 %v6265, %v6259
    %v8102 = vpack.c.b16 %v6266, %v6260
    %v8103 = vpack.c.b16 %v6267, %v6261
    %v8104 = vpack.c.b16 %v6268, %v6262
    %v8105 = vpack.c.b16 %v6275, %v6269
    %v8106 = vpack.c.b16 %v6276, %v6270
    %v8107 = vpack.c.b16 %v6277, %v6271
    %v8108 = vpack.c.b16 %v6278, %v6272
    %v8109 = vpack.c.b16 %v6279, %v6273
    %v8110 = vpack.c.b16 %v6280, %v6274
    %v8111 = vpack.c.b16 %v6287, %v6281
    %v8112 = vpack.c.b16 %v6288, %v6282
    %v8113 = vpack.c.b16 %v6289, %v6283
    %v8114 = vpack.c.b16 %v6290, %v6284
    %v8115 = vpack.c.b16 %v6291, %v6285
    %v8116 = vpack.c.b16 %v6292, %v6286
    %v8117 = vpack.c.b16 %v6299, %v6293
    %v8118 = vpack.c.b16 %v6300, %v6294
    %v8119 = vpack.c.b16 %v6301, %v6295
    %v8120 = vpack.c.b16 %v6302, %v6296
    %v8121 = vpack.c.b16 %v6303, %v6297
    %v8122 = vpack.c.b16 %v6304, %v6298
    %v8123 = vpack.c.b16 %v6311, %v6305
    %v8124 = vpack.c.b16 %v6312, %v6306
    %v8125 = vpack.c.b16 %v6313, %v6307
    %v8126 = vpack.c.b16 %v6314, %v6308
    %v8127 = vpack.c.b16 %v6315, %v6309
    %v8128 = vpack.c.b16 %v6316, %v6310
    %v8129 = vpack.c.b16 %v6323, %v6317
    %v8130 = vpack.c.b16 %v6324, %v6318
    %v8131 = vpack.c.b16 %v6325, %v6319
    %v8132 = vpack.c.b16 %v6326, %v6320
    %v8133 = vpack.c.b16 %v6327, %v6321
    %v8134 = vpack.c.b16 %v6328, %v6322
    %v8135 = vpack.c.b16 %v6335, %v6329
    %v8136 = vpack.c.b16 %v6336, %v6330
    %v8137 = vpack.c.b16 %v6337, %v6331
    %v8138 = vpack.c.b16 %v6338, %v6332
    %v8139 = vpack.c.b16 %v6339, %v6333
    %v8140 = vpack.c.b16 %v6340, %v6334
    %v8141 = vpack.c.b16 %v6347, %v6341
    %v8142 = vpack.c.b16 %v6348, %v6342
    %v8143 = vpack.c.b16 %v6349, %v6343
    %v8144 = vpack.c.b16 %v6350, %v6344
    %v8145 = vpack.c.b16 %v6351, %v6345
    %v8146 = vpack.c.b16 %v6352, %v6346
    %v8147 = vpack.c.b16 %v6359, %v6353
    %v8148 = vpack.c.b16 %v6360, %v6354
    %v8149 = vpack.c.b16 %v6361, %v6355
    %v8150 = vpack.c.b16 %v6362, %v6356
    %v8151 = vpack.c.b16 %v6363, %v6357
    %v8152 = vpack.c.b16 %v6364, %v6358
    %v8153 = vpack.c.b16 %v6371, %v6365
    %v8154 = vpack.c.b16 %v6372, %v6366
    %v8155 = vpack.c.b16 %v6373, %v6367
    %v8156 = vpack.c.b16 %v6374, %v6368
    %v8157 = vpack.c.b16 %v6375, %v6369
    %v8158 = vpack.c.b16 %v6376, %v6370
    %v8159 = vpack.c.b16 %v6383, %v6377
    %v8160 = vpack.c.b16 %v6384, %v6378
    %v8161 = vpack.c.b16 %v6385, %v6379
    %v8162 = vpack.c.b16 %v6386, %v6380
    %v8163 = vpack.c.b16 %v6387, %v6381
    %v8164 = vpack.c.b16 %v6388, %v6382
    %v8165 = vpack.c.b16 %v6395, %v6389
    %v8166 = vpack.c.b16 %v6396, %v6390
    %v8167 = vpack.c.b16 %v6397, %v6391
    %v8168 = vpack.c.b16 %v6398, %v6392
    %v8169 = vpack.c.b16 %v6399, %v6393
    %v8170 = vpack.c.b16 %v6400, %v6394
    %v8171 = vpack.c.b16 %v6407, %v6401
    %v8172 = vpack.c.b16 %v6408, %v6402
    %v8173 = vpack.c.b16 %v6409, %v6403
    %v8174 = vpack.c.b16 %v6410, %v6404
    %v8175 = vpack.c.b16 %v6411, %v6405
    %v8176 = vpack.c.b16 %v6412, %v6406
    %v8177 = vpack.c.b16 %v6419, %v6413
    %v8178 = vpack.c.b16 %v6420, %v6414
    %v8179 = vpack.c.b16 %v6421, %v6415
    %v8180 = vpack.c.b16 %v6422, %v6416
    %v8181 = vpack.c.b16 %v6423, %v6417
    %v8182 = vpack.c.b16 %v6424, %v6418
    %v8183 = vpack.c.b16 %v6431, %v6425
    %v8184 = vpack.c.b16 %v6432, %v6426
    %v8185 = vpack.c.b16 %v6433, %v6427
    %v8186 = vpack.c.b16 %v6434, %v6428
    %v8187 = vpack.c.b16 %v6435, %v6429
    %v8188 = vpack.c.b16 %v6436, %v6430
    %v8189 = vpack.c.b16 %v6443, %v6437
    %v8190 = vpack.c.b16 %v6444, %v6438
    %v8191 = vpack.c.b16 %v6445, %v6439
    %v8192 = vpack.c.b16 %v6446, %v6440
    %v8193 = vpack.c.b16 %v6447, %v6441
    %v8194 = vpack.c.b16 %v6448, %v6442
    %v8195 = vpack.c.b16 %v6455, %v6449
    %v8196 = vpack.c.b16 %v6456, %v6450
    %v8197 = vpack.c.b16 %v6457, %v6451
    %v8198 = vpack.c.b16 %v6458, %v6452
    %v8199 = vpack.c.b16 %v6459, %v6453
    %v8200 = vpack.c.b16 %v6460, %v6454
    %v8201 = vpack.c.b16 %v6467, %v6461
    %v8202 = vpack.c.b16 %v6468, %v6462
    %v8203 = vpack.c.b16 %v6469, %v6463
    %v8204 = vpack.c.b16 %v6470, %v6464
    %v8205 = vpack.c.b16 %v6471, %v6465
    %v8206 = vpack.c.b16 %v6472, %v6466
    %v8207 = vpack.c.b16 %v6479, %v6473
    %v8208 = vpack.c.b16 %v6480, %v6474
    %v8209 = vpack.c.b16 %v6481, %v6475
    %v8210 = vpack.c.b16 %v6482, %v6476
    %v8211 = vpack.c.b16 %v6483, %v6477
    %v8212 = vpack.c.b16 %v6484, %v6478
    %v8213 = vpack.c.b16 %v6491, %v6485
    %v8214 = vpack.c.b16 %v6492, %v6486
    %v8215 = vpack.c.b16 %v6493, %v6487
    %v8216 = vpack.c.b16 %v6494, %v6488
    %v8217 = vpack.c.b16 %v6495, %v6489
    %v8218 = vpack.c.b16 %v6496, %v6490
    %v8219 = vpack.c.b16 %v6503, %v6497
    %v8220 = vpack.c.b16 %v6504, %v6498
    %v8221 = vpack.c.b16 %v6505, %v6499
    %v8222 = vpack.c.b16 %v6506, %v6500
    %v8223 = vpack.c.b16 %v6507, %v6501
    %v8224 = vpack.c.b16 %v6508, %v6502
    %v8225 = vpack.c.b16 %v6515, %v6509
    %v8226 = vpack.c.b16 %v6516, %v6510
    %v8227 = vpack.c.b16 %v6517, %v6511
    %v8228 = vpack.c.b16 %v6518, %v6512
    %v8229 = vpack.c.b16 %v6519, %v6513
    %v8230 = vpack.c.b16 %v6520, %v6514
    %v8231 = vpack.c.b16 %v6527, %v6521
    %v8232 = vpack.c.b16 %v6528, %v6522
    %v8233 = vpack.c.b16 %v6529, %v6523
    %v8234 = vpack.c.b16 %v6530, %v6524
    %v8235 = vpack.c.b16 %v6531, %v6525
    %v8236 = vpack.c.b16 %v6532, %v6526
    %v8237 = vpack.c.b16 %v6539, %v6533
    %v8238 = vpack.c.b16 %v6540, %v6534
    %v8239 = vpack.c.b16 %v6541, %v6535
    %v8240 = vpack.c.b16 %v6542, %v6536
    %v8241 = vpack.c.b16 %v6543, %v6537
    %v8242 = vpack.c.b16 %v6544, %v6538
    %v8243 = vpack.c.b16 %v6551, %v6545
    %v8244 = vpack.c.b16 %v6552, %v6546
    %v8245 = vpack.c.b16 %v6553, %v6547
    %v8246 = vpack.c.b16 %v6554, %v6548
    %v8247 = vpack.c.b16 %v6555, %v6549
    %v8248 = vpack.c.b16 %v6556, %v6550
    %v8249 = vpack.c.b16 %v6563, %v6557
    %v8250 = vpack.c.b16 %v6564, %v6558
    %v8251 = vpack.c.b16 %v6565, %v6559
    %v8252 = vpack.c.b16 %v6566, %v6560
    %v8253 = vpack.c.b16 %v6567, %v6561
    %v8254 = vpack.c.b16 %v6568, %v6562
    %v8255 = vpack.c.b16 %v6575, %v6569
    %v8256 = vpack.c.b16 %v6576, %v6570
    %v8257 = vpack.c.b16 %v6577, %v6571
    %v8258 = vpack.c.b16 %v6578, %v6572
    %v8259 = vpack.c.b16 %v6579, %v6573
    %v8260 = vpack.c.b16 %v6580, %v6574
    %v8261 = vpack.c.b16 %v6587, %v6581
    %v8262 = vpack.c.b16 %v6588, %v6582
    %v8263 = vpack.c.b16 %v6589, %v6583
    %v8264 = vpack.c.b16 %v6590, %v6584
    %v8265 = vpack.c.b16 %v6591, %v6585
    %v8266 = vpack.c.b16 %v6592, %v6586
    %v8267 = vpack.c.b16 %v6599, %v6593
    %v8268 = vpack.c.b16 %v6600, %v6594
    %v8269 = vpack.c.b16 %v6601, %v6595
    %v8270 = vpack.c.b16 %v6602, %v6596
    %v8271 = vpack.c.b16 %v6603, %v6597
    %v8272 = vpack.c.b16 %v6604, %v6598
    %v8273 = vpack.c.b16 %v6611, %v6605
    %v8274 = vpack.c.b16 %v6612, %v6606
    %v8275 = vpack.c.b16 %v6613, %v6607
    %v8276 = vpack.c.b16 %v6614, %v6608
    %v8277 = vpack.c.b16 %v6615, %v6609
    %v8278 = vpack.c.b16 %v6616, %v6610
    %v8279 = vpack.c.b16 %v6623, %v6617
    %v8280 = vpack.c.b16 %v6624, %v6618
    %v8281 = vpack.c.b16 %v6625, %v6619
    %v8282 = vpack.c.b16 %v6626, %v6620
    %v8283 = vpack.c.b16 %v6627, %v6621
    %v8284 = vpack.c.b16 %v6628, %v6622
    %v8285 = vpack.c.b16 %v6635, %v6629
    %v8286 = vpack.c.b16 %v6636, %v6630
    %v8287 = vpack.c.b16 %v6637, %v6631
    %v8288 = vpack.c.b16 %v6638, %v6632
    %v8289 = vpack.c.b16 %v6639, %v6633
    %v8290 = vpack.c.b16 %v6640, %v6634
    %v8291 = vpack.c.b16 %v6647, %v6641
    %v8292 = vpack.c.b16 %v6648, %v6642
    %v8293 = vpack.c.b16 %v6649, %v6643
    %v8294 = vpack.c.b16 %v6650, %v6644
    %v8295 = vpack.c.b16 %v6651, %v6645
    %v8296 = vpack.c.b16 %v6652, %v6646
    %v8297 = vpack.c.b16 %v6659, %v6653
    %v8298 = vpack.c.b16 %v6660, %v6654
    %v8299 = vpack.c.b16 %v6661, %v6655
    %v8300 = vpack.c.b16 %v6662, %v6656
    %v8301 = vpack.c.b16 %v6663, %v6657
    %v8302 = vpack.c.b16 %v6664, %v6658
    %v8303 = vpack.c.b16 %v6671, %v6665
    %v8304 = vpack.c.b16 %v6672, %v6666
    %v8305 = vpack.c.b16 %v6673, %v6667
    %v8306 = vpack.c.b16 %v6674, %v6668
    %v8307 = vpack.c.b16 %v6675, %v6669
    %v8308 = vpack.c.b16 %v6676, %v6670
    %v8309 = vpack.c.b16 %v6683, %v6677
    %v8310 = vpack.c.b16 %v6684, %v6678
    %v8311 = vpack.c.b16 %v6685, %v6679
    %v8312 = vpack.c.b16 %v6686, %v6680
    %v8313 = vpack.c.b16 %v6687, %v6681
    %v8314 = vpack.c.b16 %v6688, %v6682
    %v8315 = vpack.c.b16 %v6695, %v6689
    %v8316 = vpack.c.b16 %v6696, %v6690
    %v8317 = vpack.c.b16 %v6697, %v6691
    %v8318 = vpack.c.b16 %v6698, %v6692
    %v8319 = vpack.c.b16 %v6699, %v6693
    %v8320 = vpack.c.b16 %v6700, %v6694
    %v8321 = vpack.c.b16 %v6707, %v6701
    %v8322 = vpack.c.b16 %v6708, %v6702
    %v8323 = vpack.c.b16 %v6709, %v6703
    %v8324 = vpack.c.b16 %v6710, %v6704
    %v8325 = vpack.c.b16 %v6711, %v6705
    %v8326 = vpack.c.b16 %v6712, %v6706
    %v8327 = vpack.c.b16 %v6719, %v6713
    %v8328 = vpack.c.b16 %v6720, %v6714
    %v8329 = vpack.c.b16 %v6721, %v6715
    %v8330 = vpack.c.b16 %v6722, %v6716
    %v8331 = vpack.c.b16 %v6723, %v6717
    %v8332 = vpack.c.b16 %v6724, %v6718
    %v8333 = vpack.c.b16 %v6731, %v6725
    %v8334 = vpack.c.b16 %v6732, %v6726
    %v8335 = vpack.c.b16 %v6733, %v6727
    %v8336 = vpack.c.b16 %v6734, %v6728
    %v8337 = vpack.c.b16 %v6735, %v6729
    %v8338 = vpack.c.b16 %v6736, %v6730
    %v8339 = vpack.c.b16 %v6743, %v6737
    %v8340 = vpack.c.b16 %v6744, %v6738
    %v8341 = vpack.c.b16 %v6745, %v6739
    %v8342 = vpack.c.b16 %v6746, %v6740
    %v8343 = vpack.c.b16 %v6747, %v6741
    %v8344 = vpack.c.b16 %v6748, %v6742
    %v8345 = vpack.c.b16 %v6755, %v6749
    %v8346 = vpack.c.b16 %v6756, %v6750
    %v8347 = vpack.c.b16 %v6757, %v6751
    %v8348 = vpack.c.b16 %v6758, %v6752
    %v8349 = vpack.c.b16 %v6759, %v6753
    %v8350 = vpack.c.b16 %v6760, %v6754
    %v8351 = vpack.c.b16 %v6767, %v6761
    %v8352 = vpack.c.b16 %v6768, %v6762
    %v8353 = vpack.c.b16 %v6769, %v6763
    %v8354 = vpack.c.b16 %v6770, %v6764
    %v8355 = vpack.c.b16 %v6771, %v6765
    %v8356 = vpack.c.b16 %v6772, %v6766
    %v8357 = vpack.c.b16 %v6779, %v6773
    %v8358 = vpack.c.b16 %v6780, %v6774
    %v8359 = vpack.c.b16 %v6781, %v6775
    %v8360 = vpack.c.b16 %v6782, %v6776
    %v8361 = vpack.c.b16 %v6783, %v6777
    %v8362 = vpack.c.b16 %v6784, %v6778
    %v8363 = vpack.c.b16 %v6791, %v6785
    %v8364 = vpack.c.b16 %v6792, %v6786
    %v8365 = vpack.c.b16 %v6793, %v6787
    %v8366 = vpack.c.b16 %v6794, %v6788
    %v8367 = vpack.c.b16 %v6795, %v6789
    %v8368 = vpack.c.b16 %v6796, %v6790
    %v8369 = vpack.c.b16 %v6803, %v6797
    %v8370 = vpack.c.b16 %v6804, %v6798
    %v8371 = vpack.c.b16 %v6805, %v6799
    %v8372 = vpack.c.b16 %v6806, %v6800
    %v8373 = vpack.c.b16 %v6807, %v6801
    %v8374 = vpack.c.b16 %v6808, %v6802
    %v8375 = vpack.c.b16 %v6815, %v6809
    %v8376 = vpack.c.b16 %v6816, %v6810
    %v8377 = vpack.c.b16 %v6817, %v6811
    %v8378 = vpack.c.b16 %v6818, %v6812
    %v8379 = vpack.c.b16 %v6819, %v6813
    %v8380 = vpack.c.b16 %v6820, %v6814
    %v8381 = vpack.c.b16 %v6827, %v6821
    %v8382 = vpack.c.b16 %v6828, %v6822
    %v8383 = vpack.c.b16 %v6829, %v6823
    %v8384 = vpack.c.b16 %v6830, %v6824
    %v8385 = vpack.c.b16 %v6831, %v6825
    %v8386 = vpack.c.b16 %v6832, %v6826
    %v8387 = vpack.c.b16 %v6839, %v6833
    %v8388 = vpack.c.b16 %v6840, %v6834
    %v8389 = vpack.c.b16 %v6841, %v6835
    %v8390 = vpack.c.b16 %v6842, %v6836
    %v8391 = vpack.c.b16 %v6843, %v6837
    %v8392 = vpack.c.b16 %v6844, %v6838
    %v8393 = vpack.c.b16 %v6851, %v6845
    %v8394 = vpack.c.b16 %v6852, %v6846
    %v8395 = vpack.c.b16 %v6853, %v6847
    %v8396 = vpack.c.b16 %v6854, %v6848
    %v8397 = vpack.c.b16 %v6855, %v6849
    %v8398 = vpack.c.b16 %v6856, %v6850
    %v8399 = vpack.c.b16 %v6863, %v6857
    %v8400 = vpack.c.b16 %v6864, %v6858
    %v8401 = vpack.c.b16 %v6865, %v6859
    %v8402 = vpack.c.b16 %v6866, %v6860
    %v8403 = vpack.c.b16 %v6867, %v6861
    %v8404 = vpack.c.b16 %v6868, %v6862
    %v8405 = vpack.c.b16 %v6875, %v6869
    %v8406 = vpack.c.b16 %v6876, %v6870
    %v8407 = vpack.c.b16 %v6877, %v6871
    %v8408 = vpack.c.b16 %v6878, %v6872
    %v8409 = vpack.c.b16 %v6879, %v6873
    %v8410 = vpack.c.b16 %v6880, %v6874
    %v8411 = vpack.c.b16 %v6887, %v6881
    %v8412 = vpack.c.b16 %v6888, %v6882
    %v8413 = vpack.c.b16 %v6889, %v6883
    %v8414 = vpack.c.b16 %v6890, %v6884
    %v8415 = vpack.c.b16 %v6891, %v6885
    %v8416 = vpack.c.b16 %v6892, %v6886
    %v8417 = vpack.c.b16 %v6899, %v6893
    %v8418 = vpack.c.b16 %v6900, %v6894
    %v8419 = vpack.c.b16 %v6901, %v6895
    %v8420 = vpack.c.b16 %v6902, %v6896
    %v8421 = vpack.c.b16 %v6903, %v6897
    %v8422 = vpack.c.b16 %v6904, %v6898
    %v8423 = vpack.c.b16 %v6911, %v6905
    %v8424 = vpack.c.b16 %v6912, %v6906
    %v8425 = vpack.c.b16 %v6913, %v6907
    %v8426 = vpack.c.b16 %v6914, %v6908
    %v8427 = vpack.c.b16 %v6915, %v6909
    %v8428 = vpack.c.b16 %v6916, %v6910
    %v8429 = vpack.c.b16 %v6923, %v6917
    %v8430 = vpack.c.b16 %v6924, %v6918
    %v8431 = vpack.c.b16 %v6925, %v6919
    %v8432 = vpack.c.b16 %v6926, %v6920
    %v8433 = vpack.c.b16 %v6927, %v6921
    %v8434 = vpack.c.b16 %v6928, %v6922
    %v8435 = vpack.c.b16 %v6935, %v6929
    %v8436 = vpack.c.b16 %v6936, %v6930
    %v8437 = vpack.c.b16 %v6937, %v6931
    %v8438 = vpack.c.b16 %v6938, %v6932
    %v8439 = vpack.c.b16 %v6939, %v6933
    %v8440 = vpack.c.b16 %v6940, %v6934
    %v8441 = vpack.c.b16 %v6947, %v6941
    %v8442 = vpack.c.b16 %v6948, %v6942
    %v8443 = vpack.c.b16 %v6949, %v6943
    %v8444 = vpack.c.b16 %v6950, %v6944
    %v8445 = vpack.c.b16 %v6951, %v6945
    %v8446 = vpack.c.b16 %v6952, %v6946
    %v8447 = vpack.c.b16 %v6959, %v6953
    %v8448 = vpack.c.b16 %v6960, %v6954
    %v8449 = vpack.c.b16 %v6961, %v6955
    %v8450 = vpack.c.b16 %v6962, %v6956
    %v8451 = vpack.c.b16 %v6963, %v6957
    %v8452 = vpack.c.b16 %v6964, %v6958
    %v8453 = vpack.c.b16 %v6971, %v6965
    %v8454 = vpack.c.b16 %v6972, %v6966
    %v8455 = vpack.c.b16 %v6973, %v6967
    %v8456 = vpack.c.b16 %v6974, %v6968
    %v8457 = vpack.c.b16 %v6975, %v6969
    %v8458 = vpack.c.b16 %v6976, %v6970
    %v8459 = vpack.c.b16 %v6983, %v6977
    %v8460 = vpack.c.b16 %v6984, %v6978
    %v8461 = vpack.c.b16 %v6985, %v6979
    %v8462 = vpack.c.b16 %v6986, %v6980
    %v8463 = vpack.c.b16 %v6987, %v6981
    %v8464 = vpack.c.b16 %v6988, %v6982
    %v8465 = vpack.c.b16 %v6995, %v6989
    %v8466 = vpack.c.b16 %v6996, %v6990
    %v8467 = vpack.c.b16 %v6997, %v6991
    %v8468 = vpack.c.b16 %v6998, %v6992
    %v8469 = vpack.c.b16 %v6999, %v6993
    %v8470 = vpack.c.b16 %v7000, %v6994
    %v8471 = vpack.c.b16 %v7007, %v7001
    %v8472 = vpack.c.b16 %v7008, %v7002
    %v8473 = vpack.c.b16 %v7009, %v7003
    %v8474 = vpack.c.b16 %v7010, %v7004
    %v8475 = vpack.c.b16 %v7011, %v7005
    %v8476 = vpack.c.b16 %v7012, %v7006
    %v8477 = vpack.c.b16 %v7019, %v7013
    %v8478 = vpack.c.b16 %v7020, %v7014
    %v8479 = vpack.c.b16 %v7021, %v7015
    %v8480 = vpack.c.b16 %v7022, %v7016
    %v8481 = vpack.c.b16 %v7023, %v7017
    %v8482 = vpack.c.b16 %v7024, %v7018
    %v8483 = vpack.c.b16 %v7031, %v7025
    %v8484 = vpack.c.b16 %v7032, %v7026
    %v8485 = vpack.c.b16 %v7033, %v7027
    %v8486 = vpack.c.b16 %v7034, %v7028
    %v8487 = vpack.c.b16 %v7035, %v7029
    %v8488 = vpack.c.b16 %v7036, %v7030
    %v8489 = vpack.c.b16 %v7043, %v7037
    %v8490 = vpack.c.b16 %v7044, %v7038
    %v8491 = vpack.c.b16 %v7045, %v7039
    %v8492 = vpack.c.b16 %v7046, %v7040
    %v8493 = vpack.c.b16 %v7047, %v7041
    %v8494 = vpack.c.b16 %v7048, %v7042
    %v8495 = vpack.c.b16 %v7055, %v7049
    %v8496 = vpack.c.b16 %v7056, %v7050
    %v8497 = vpack.c.b16 %v7057, %v7051
    %v8498 = vpack.c.b16 %v7058, %v7052
    %v8499 = vpack.c.b16 %v7059, %v7053
    %v8500 = vpack.c.b16 %v7060, %v7054
    %v8501 = vpack.c.b16 %v7067, %v7061
    %v8502 = vpack.c.b16 %v7068, %v7062
    %v8503 = vpack.c.b16 %v7069, %v7063
    %v8504 = vpack.c.b16 %v7070, %v7064
    %v8505 = vpack.c.b16 %v7071, %v7065
    %v8506 = vpack.c.b16 %v7072, %v7066
    %v8507 = vpack.c.b16 %v7079, %v7073
    %v8508 = vpack.c.b16 %v7080, %v7074
    %v8509 = vpack.c.b16 %v7081, %v7075
    %v8510 = vpack.c.b16 %v7082, %v7076
    %v8511 = vpack.c.b16 %v7083, %v7077
    %v8512 = vpack.c.b16 %v7084, %v7078
    %v8513 = vpack.c.b16 %v7091, %v7085
    %v8514 = vpack.c.b16 %v7092, %v7086
    %v8515 = vpack.c.b16 %v7093, %v7087
    %v8516 = vpack.c.b16 %v7094, %v7088
    %v8517 = vpack.c.b16 %v7095, %v7089
    %v8518 = vpack.c.b16 %v7096, %v7090
    %v8519 = vpack.c.b16 %v7103, %v7097
    %v8520 = vpack.c.b16 %v7104, %v7098
    %v8521 = vpack.c.b16 %v7105, %v7099
    %v8522 = vpack.c.b16 %v7106, %v7100
    %v8523 = vpack.c.b16 %v7107, %v7101
    %v8524 = vpack.c.b16 %v7108, %v7102
    %v8525 = vpack.c.b16 %v7115, %v7109
    %v8526 = vpack.c.b16 %v7116, %v7110
    %v8527 = vpack.c.b16 %v7117, %v7111
    %v8528 = vpack.c.b16 %v7118, %v7112
    %v8529 = vpack.c.b16 %v7119, %v7113
    %v8530 = vpack.c.b16 %v7120, %v7114
    %v8531 = vpack.c.b16 %v7127, %v7121
    %v8532 = vpack.c.b16 %v7128, %v7122
    %v8533 = vpack.c.b16 %v7129, %v7123
    %v8534 = vpack.c.b16 %v7130, %v7124
    %v8535 = vpack.c.b16 %v7131, %v7125
    %v8536 = vpack.c.b16 %v7132, %v7126
    %v8537 = vpack.c.b16 %v7139, %v7133
    %v8538 = vpack.c.b16 %v7140, %v7134
    %v8539 = vpack.c.b16 %v7141, %v7135
    %v8540 = vpack.c.b16 %v7142, %v7136
    %v8541 = vpack.c.b16 %v7143, %v7137
    %v8542 = vpack.c.b16 %v7144, %v7138
    %v8543 = vpack.c.b16 %v7151, %v7145
    %v8544 = vpack.c.b16 %v7152, %v7146
    %v8545 = vpack.c.b16 %v7153, %v7147
    %v8546 = vpack.c.b16 %v7154, %v7148
    %v8547 = vpack.c.b16 %v7155, %v7149
    %v8548 = vpack.c.b16 %v7156, %v7150
    %v8549 = vpack.c.b16 %v7163, %v7157
    %v8550 = vpack.c.b16 %v7164, %v7158
    %v8551 = vpack.c.b16 %v7165, %v7159
    %v8552 = vpack.c.b16 %v7166, %v7160
    %v8553 = vpack.c.b16 %v7167, %v7161
    %v8554 = vpack.c.b16 %v7168, %v7162
    %v8555 = vpack.c.b16 %v7175, %v7169
    %v8556 = vpack.c.b16 %v7176, %v7170
    %v8557 = vpack.c.b16 %v7177, %v7171
    %v8558 = vpack.c.b16 %v7178, %v7172
    %v8559 = vpack.c.b16 %v7179, %v7173
    %v8560 = vpack.c.b16 %v7180, %v7174
    %v8561 = vpack.c.b16 %v7187, %v7181
    %v8562 = vpack.c.b16 %v7188, %v7182
    %v8563 = vpack.c.b16 %v7189, %v7183
    %v8564 = vpack.c.b16 %v7190, %v7184
    %v8565 = vpack.c.b16 %v7191, %v7185
    %v8566 = vpack.c.b16 %v7192, %v7186
    %v8567 = vpack.c.b16 %v7199, %v7193
    %v8568 = vpack.c.b16 %v7200, %v7194
    %v8569 = vpack.c.b16 %v7201, %v7195
    %v8570 = vpack.c.b16 %v7202, %v7196
    %v8571 = vpack.c.b16 %v7203, %v7197
    %v8572 = vpack.c.b16 %v7204, %v7198
    %v8573 = vpack.c.b16 %v7211, %v7205
    %v8574 = vpack.c.b16 %v7212, %v7206
    %v8575 = vpack.c.b16 %v7213, %v7207
    %v8576 = vpack.c.b16 %v7214, %v7208
    %v8577 = vpack.c.b16 %v7215, %v7209
    %v8578 = vpack.c.b16 %v7216, %v7210
    %v8579 = vpack.c.b16 %v7223, %v7217
    %v8580 = vpack.c.b16 %v7224, %v7218
    %v8581 = vpack.c.b16 %v7225, %v7219
    %v8582 = vpack.c.b16 %v7226, %v7220
    %v8583 = vpack.c.b16 %v7227, %v7221
    %v8584 = vpack.c.b16 %v7228, %v7222
    %v8585 = vpack.c.b16 %v7235, %v7229
    %v8586 = vpack.c.b16 %v7236, %v7230
    %v8587 = vpack.c.b16 %v7237, %v7231
    %v8588 = vpack.c.b16 %v7238, %v7232
    %v8589 = vpack.c.b16 %v7239, %v7233
    %v8590 = vpack.c.b16 %v7240, %v7234
    %v8591 = vpack.c.b16 %v7247, %v7241
    %v8592 = vpack.c.b16 %v7248, %v7242
    %v8593 = vpack.c.b16 %v7249, %v7243
    %v8594 = vpack.c.b16 %v7250, %v7244
    %v8595 = vpack.c.b16 %v7251, %v7245
    %v8596 = vpack.c.b16 %v7252, %v7246
    %v8597 = vpack.c.b16 %v7259, %v7253
    %v8598 = vpack.c.b16 %v7260, %v7254
    %v8599 = vpack.c.b16 %v7261, %v7255
    %v8600 = vpack.c.b16 %v7262, %v7256
    %v8601 = vpack.c.b16 %v7263, %v7257
    %v8602 = vpack.c.b16 %v7264, %v7258
    %v8603 = vpack.c.b16 %v7271, %v7265
    %v8604 = vpack.c.b16 %v7272, %v7266
    %v8605 = vpack.c.b16 %v7273, %v7267
    %v8606 = vpack.c.b16 %v7274, %v7268
    %v8607 = vpack.c.b16 %v7275, %v7269
    %v8608 = vpack.c.b16 %v7276, %v7270
    %v8609 = vpack.c.b16 %v7283, %v7277
    %v8610 = vpack.c.b16 %v7284, %v7278
    %v8611 = vpack.c.b16 %v7285, %v7279
    %v8612 = vpack.c.b16 %v7286, %v7280
    %v8613 = vpack.c.b16 %v7287, %v7281
    %v8614 = vpack.c.b16 %v7288, %v7282
    %v8615 = vpack.c.b16 %v7295, %v7289
    %v8616 = vpack.c.b16 %v7296, %v7290
    %v8617 = vpack.c.b16 %v7297, %v7291
    %v8618 = vpack.c.b16 %v7298, %v7292
    %v8619 = vpack.c.b16 %v7299, %v7293
    %v8620 = vpack.c.b16 %v7300, %v7294
    %v8621 = vpack.c.b16 %v7307, %v7301
    %v8622 = vpack.c.b16 %v7308, %v7302
    %v8623 = vpack.c.b16 %v7309, %v7303
    %v8624 = vpack.c.b16 %v7310, %v7304
    %v8625 = vpack.c.b16 %v7311, %v7305
    %v8626 = vpack.c.b16 %v7312, %v7306
    %v8627 = vpack.c.b16 %v7319, %v7313
    %v8628 = vpack.c.b16 %v7320, %v7314
    %v8629 = vpack.c.b16 %v7321, %v7315
    %v8630 = vpack.c.b16 %v7322, %v7316
    %v8631 = vpack.c.b16 %v7323, %v7317
    %v8632 = vpack.c.b16 %v7324, %v7318
    %v8633 = vpack.c.b16 %v7331, %v7325
    %v8634 = vpack.c.b16 %v7332, %v7326
    %v8635 = vpack.c.b16 %v7333, %v7327
    %v8636 = vpack.c.b16 %v7334, %v7328
    %v8637 = vpack.c.b16 %v7335, %v7329
    %v8638 = vpack.c.b16 %v7336, %v7330
    %v8639 = vpack.c.b16 %v7343, %v7337
    %v8640 = vpack.c.b16 %v7344, %v7338
    %v8641 = vpack.c.b16 %v7345, %v7339
    %v8642 = vpack.c.b16 %v7346, %v7340
    %v8643 = vpack.c.b16 %v7347, %v7341
    %v8644 = vpack.c.b16 %v7348, %v7342
    %v8645 = vpack.c.b16 %v7355, %v7349
    %v8646 = vpack.c.b16 %v7356, %v7350
    %v8647 = vpack.c.b16 %v7357, %v7351
    %v8648 = vpack.c.b16 %v7358, %v7352
    %v8649 = vpack.c.b16 %v7359, %v7353
    %v8650 = vpack.c.b16 %v7360, %v7354
    %v8651 = vpack.c.b16 %v7367, %v7361
    %v8652 = vpack.c.b16 %v7368, %v7362
    %v8653 = vpack.c.b16 %v7369, %v7363
    %v8654 = vpack.c.b16 %v7370, %v7364
    %v8655 = vpack.c.b16 %v7371, %v7365
    %v8656 = vpack.c.b16 %v7372, %v7366
    %v8657 = vpack.c.b16 %v7379, %v7373
    %v8658 = vpack.c.b16 %v7380, %v7374
    %v8659 = vpack.c.b16 %v7381, %v7375
    %v8660 = vpack.c.b16 %v7382, %v7376
    %v8661 = vpack.c.b16 %v7383, %v7377
    %v8662 = vpack.c.b16 %v7384, %v7378
    %v8663 = vpack.c.b16 %v7391, %v7385
    %v8664 = vpack.c.b16 %v7392, %v7386
    %v8665 = vpack.c.b16 %v7393, %v7387
    %v8666 = vpack.c.b16 %v7394, %v7388
    %v8667 = vpack.c.b16 %v7395, %v7389
    %v8668 = vpack.c.b16 %v7396, %v7390
    %v8669 = vpack.c.b16 %v7403, %v7397
    %v8670 = vpack.c.b16 %v7404, %v7398
    %v8671 = vpack.c.b16 %v7405, %v7399
    %v8672 = vpack.c.b16 %v7406, %v7400
    %v8673 = vpack.c.b16 %v7407, %v7401
    %v8674 = vpack.c.b16 %v7408, %v7402
    %v8675 = vpack.c.b16 %v7415, %v7409
    %v8676 = vpack.c.b16 %v7416, %v7410
    %v8677 = vpack.c.b16 %v7417, %v7411
    %v8678 = vpack.c.b16 %v7418, %v7412
    %v8679 = vpack.c.b16 %v7419, %v7413
    %v8680 = vpack.c.b16 %v7420, %v7414
    %v8681 = vpack.c.b16 %v7427, %v7421
    %v8682 = vpack.c.b16 %v7428, %v7422
    %v8683 = vpack.c.b16 %v7429, %v7423
    %v8684 = vpack.c.b16 %v7430, %v7424
    %v8685 = vpack.c.b16 %v7431, %v7425
    %v8686 = vpack.c.b16 %v7432, %v7426
    %v8687 = vpack.c.b16 %v7439, %v7433
    %v8688 = vpack.c.b16 %v7440, %v7434
    %v8689 = vpack.c.b16 %v7441, %v7435
    %v8690 = vpack.c.b16 %v7442, %v7436
    %v8691 = vpack.c.b16 %v7443, %v7437
    %v8692 = vpack.c.b16 %v7444, %v7438
    %v8693 = vpack.c.b16 %v7451, %v7445
    %v8694 = vpack.c.b16 %v7452, %v7446
    %v8695 = vpack.c.b16 %v7453, %v7447
    %v8696 = vpack.c.b16 %v7454, %v7448
    %v8697 = vpack.c.b16 %v7455, %v7449
    %v8698 = vpack.c.b16 %v7456, %v7450
    %v8699 = vpack.c.b16 %v7463, %v7457
    %v8700 = vpack.c.b16 %v7464, %v7458
    %v8701 = vpack.c.b16 %v7465, %v7459
    %v8702 = vpack.c.b16 %v7466, %v7460
    %v8703 = vpack.c.b16 %v7467, %v7461
    %v8704 = vpack.c.b16 %v7468, %v7462
    %v8705 = vpack.c.b16 %v7475, %v7469
    %v8706 = vpack.c.b16 %v7476, %v7470
    %v8707 = vpack.c.b16 %v7477, %v7471
    %v8708 = vpack.c.b16 %v7478, %v7472
    %v8709 = vpack.c.b16 %v7479, %v7473
    %v8710 = vpack.c.b16 %v7480, %v7474
    %v8711 = vpack.c.b16 %v7487, %v7481
    %v8712 = vpack.c.b16 %v7488, %v7482
    %v8713 = vpack.c.b16 %v7489, %v7483
    %v8714 = vpack.c.b16 %v7490, %v7484
    %v8715 = vpack.c.b16 %v7491, %v7485
    %v8716 = vpack.c.b16 %v7492, %v7486
    %v8717 = vpack.c.b16 %v7499, %v7493
    %v8718 = vpack.c.b16 %v7500, %v7494
    %v8719 = vpack.c.b16 %v7501, %v7495
    %v8720 = vpack.c.b16 %v7502, %v7496
    %v8721 = vpack.c.b16 %v7503, %v7497
    %v8722 = vpack.c.b16 %v7504, %v7498
    %v8723 = vpack.c.b16 %v7511, %v7505
    %v8724 = vpack.c.b16 %v7512, %v7506
    %v8725 = vpack.c.b16 %v7513, %v7507
    %v8726 = vpack.c.b16 %v7514, %v7508
    %v8727 = vpack.c.b16 %v7515, %v7509
    %v8728 = vpack.c.b16 %v7516, %v7510
    %v8729 = vpack.c.b16 %v7523, %v7517
    %v8730 = vpack.c.b16 %v7524, %v7518
    %v8731 = vpack.c.b16 %v7525, %v7519
    %v8732 = vpack.c.b16 %v7526, %v7520
    %v8733 = vpack.c.b16 %v7527, %v7521
    %v8734 = vpack.c.b16 %v7528, %v7522
    %v8735 = vpack.c.b16 %v7535, %v7529
    %v8736 = vpack.c.b16 %v7536, %v7530
    %v8737 = vpack.c.b16 %v7537, %v7531
    %v8738 = vpack.c.b16 %v7538, %v7532
    %v8739 = vpack.c.b16 %v7539, %v7533
    %v8740 = vpack.c.b16 %v7540, %v7534
    %9941 = vmatprep.subr.bf16.mxu0 %v7542
    %9942 = vmatpush1.bf16.msra.mxu0 %v7541
    %9943 = vmatprep.subr.bf16.mxu0 %v7548
    %9944 = vmatpush1.bf16.msra.mxu0 %v7547
    %9945 = vmatprep.subr.bf16.mxu0 %v7554
    %9946 = vmatpush1.bf16.msra.mxu0 %v7553
    %9947 = vmatprep.subr.bf16.mxu0 %v7560
    %9948 = vmatpush1.bf16.msra.mxu0 %v7559
    %9949 = vmatprep.subr.bf16.mxu0 %v7566
    %9950 = vmatpush1.bf16.msra.mxu0 %v7565
    %9951 = vmatprep.subr.bf16.mxu0 %v7572
    %9952 = vmatpush1.bf16.msra.mxu0 %v7571
    %9953 = vmatprep.subr.bf16.mxu0 %v7578
    %9954 = vmatpush1.bf16.msra.mxu0 %v7577
    %9955 = vmatprep.subr.bf16.mxu0 %v7584
    %9956 = vmatpush1.bf16.msra.mxu0 %v7583
    %9957 = vmatprep.subr.bf16.mxu0 %v7590
    %9958 = vmatpush1.bf16.msra.mxu0 %v7589
    %9959 = vmatprep.subr.bf16.mxu0 %v7596
    %9960 = vmatpush1.bf16.msra.mxu0 %v7595
    %9961 = vmatprep.subr.bf16.mxu0 %v7602
    %9962 = vmatpush1.bf16.msra.mxu0 %v7601
    %9963 = vmatprep.subr.bf16.mxu0 %v7608
    %9964 = vmatpush1.bf16.msra.mxu0 %v7607
    %9965 = vmatprep.subr.bf16.mxu0 %v7614
    %9966 = vmatpush1.bf16.msra.mxu0 %v7613
    %9967 = vmatprep.subr.bf16.mxu0 %v7620
    %9968 = vmatpush1.bf16.msra.mxu0 %v7619
    %9969 = vmatprep.subr.bf16.mxu0 %v7626
    %9970 = vmatpush1.bf16.msra.mxu0 %v7625
    %9971 = vmatprep.subr.bf16.mxu0 %v7632
    %9972 = vmatpush1.bf16.msra.mxu0 %v7631
    %9973 = vmatprep.mubr.bf16.mxu0 %v2685
    %9974 = vmatmul.mubr.bf16.gmra.mrb[0].mxu0 %v2684
    %v9975 = vpop.f32.mrb[0].mxu0
    %v9976 = vadd.f32 %v3914, %v9975
    %v9977 = vpop.f32.mrb[0].mxu0
    %v9978 = vadd.f32 %v3918, %v9977
    %v9979 = vpop.f32.mrb[0].mxu0
    %v9980 = vpop.f32.mrb[0].mxu0
    %9981 = vdwg.mxu0
    %9982 = vmatprep.subr.bf16.mxu0 %v7638
    %9983 = vmatpush1.bf16.msra.mxu0 %v7637
    %9984 = vmatprep.subr.bf16.mxu0 %v7644
    %9985 = vmatpush1.bf16.msra.mxu0 %v7643
    %9986 = vmatprep.subr.bf16.mxu0 %v7650
    %9987 = vmatpush1.bf16.msra.mxu0 %v7649
    %9988 = vmatprep.subr.bf16.mxu0 %v7656
    %9989 = vmatpush1.bf16.msra.mxu0 %v7655
    %9990 = vmatprep.subr.bf16.mxu0 %v7662
    %9991 = vmatpush1.bf16.msra.mxu0 %v7661
    %9992 = vmatprep.subr.bf16.mxu0 %v7668
    %9993 = vmatpush1.bf16.msra.mxu0 %v7667
    %9994 = vmatprep.subr.bf16.mxu0 %v7674
    %9995 = vmatpush1.bf16.msra.mxu0 %v7673
    %9996 = vmatprep.subr.bf16.mxu0 %v7680
    %9997 = vmatpush1.bf16.msra.mxu0 %v7679
    %9998 = vmatprep.subr.bf16.mxu0 %v7686
    %9999 = vmatpush1.bf16.msra.mxu0 %v7685
    %10000 = vmatprep.subr.bf16.mxu0 %v7692
    %10001 = vmatpush1.bf16.msra.mxu0 %v7691
    %10002 = vmatprep.subr.bf16.mxu0 %v7698
    %10003 = vmatpush1.bf16.msra.mxu0 %v7697
    %10004 = vmatprep.subr.bf16.mxu0 %v7704
    %10005 = vmatpush1.bf16.msra.mxu0 %v7703
    %10006 = vmatprep.subr.bf16.mxu0 %v7710
    %10007 = vmatpush1.bf16.msra.mxu0 %v7709
    %10008 = vmatprep.subr.bf16.mxu0 %v7716
    %10009 = vmatpush1.bf16.msra.mxu0 %v7715
    %10010 = vmatprep.subr.bf16.mxu0 %v7722
    %10011 = vmatpush1.bf16.msra.mxu0 %v7721
    %10012 = vmatprep.subr.bf16.mxu0 %v7728
    %10013 = vmatpush1.bf16.msra.mxu0 %v7727
    %10014 = vmatprep.mubr.bf16.mxu0 %v2687
    %10015 = vmatmul.mubr.bf16.gmra.mrb[0].mxu0 %v2686
    %v10016 = vpop.f32.mrb[0].mxu0
    %v10017 = vadd.f32 %v9976, %v10016
    %v10018 = vpop.f32.mrb[0].mxu0
    %v10019 = vadd.f32 %v9978, %v10018
    %v10020 = vpop.f32.mrb[0].mxu0
    %v10021 = vpop.f32.mrb[0].mxu0
    %10022 = vdwg.mxu0
    %10023 = vmatprep.subr.bf16.mxu0 %v7734
    %10024 = vmatpush1.bf16.msra.mxu0 %v7733
    %10025 = vmatprep.subr.bf16.mxu0 %v7740
    %10026 = vmatpush1.bf16.msra.mxu0 %v7739
    %10027 = vmatprep.subr.bf16.mxu0 %v7746
    %10028 = vmatpush1.bf16.msra.mxu0 %v7745
    %10029 = vmatprep.subr.bf16.mxu0 %v7752
    %10030 = vmatpush1.bf16.msra.mxu0 %v7751
    %10031 = vmatprep.subr.bf16.mxu0 %v7758
    %10032 = vmatpush1.bf16.msra.mxu0 %v7757
    %10033 = vmatprep.subr.bf16.mxu0 %v7764
    %10034 = vmatpush1.bf16.msra.mxu0 %v7763
    %10035 = vmatprep.subr.bf16.mxu0 %v7770
    %10036 = vmatpush1.bf16.msra.mxu0 %v7769
    %10037 = vmatprep.subr.bf16.mxu0 %v7776
    %10038 = vmatpush1.bf16.msra.mxu0 %v7775
    %10039 = vmatprep.subr.bf16.mxu0 %v7782
    %10040 = vmatpush1.bf16.msra.mxu0 %v7781
    %10041 = vmatprep.subr.bf16.mxu0 %v7788
    %10042 = vmatpush1.bf16.msra.mxu0 %v7787
    %10043 = vmatprep.subr.bf16.mxu0 %v7794
    %10044 = vmatpush1.bf16.msra.mxu0 %v7793
    %10045 = vmatprep.subr.bf16.mxu0 %v7800
    %10046 = vmatpush1.bf16.msra.mxu0 %v7799
    %10047 = vmatprep.subr.bf16.mxu0 %v7806
    %10048 = vmatpush1.bf16.msra.mxu0 %v7805
    %10049 = vmatprep.subr.bf16.mxu0 %v7812
    %10050 = vmatpush1.bf16.msra.mxu0 %v7811
    %10051 = vmatprep.subr.bf16.mxu0 %v7818
    %10052 = vmatpush1.bf16.msra.mxu0 %v7817
    %10053 = vmatprep.subr.bf16.mxu0 %v7824
    %10054 = vmatpush1.bf16.msra.mxu0 %v7823
    %10055 = vmatprep.mubr.bf16.mxu0 %v2689
    %10056 = vmatmul.mubr.bf16.gmra.mrb[0].mxu0 %v2688
    %v10057 = vpop.f32.mrb[0].mxu0
    %v10058 = vadd.f32 %v10017, %v10057
    %v10059 = vpop.f32.mrb[0].mxu0
    %v10060 = vadd.f32 %v10019, %v10059
    %v10061 = vpop.f32.mrb[0].mxu0
    %v10062 = vpop.f32.mrb[0].mxu0
    %10063 = vdwg.mxu0
    %10064 = vmatprep.subr.bf16.mxu0 %v7830
    %10065 = vmatpush1.bf16.msra.mxu0 %v7829
    %10066 = vmatprep.subr.bf16.mxu0 %v7836
    %10067 = vmatpush1.bf16.msra.mxu0 %v7835
    %10068 = vmatprep.subr.bf16.mxu0 %v7842
    %10069 = vmatpush1.bf16.msra.mxu0 %v7841
    %10070 = vmatprep.subr.bf16.mxu0 %v7848
    %10071 = vmatpush1.bf16.msra.mxu0 %v7847
    %10072 = vmatprep.subr.bf16.mxu0 %v7854
    %10073 = vmatpush1.bf16.msra.mxu0 %v7853
    %10074 = vmatprep.subr.bf16.mxu0 %v7860
    %10075 = vmatpush1.bf16.msra.mxu0 %v7859
    %10076 = vmatprep.subr.bf16.mxu0 %v7866
    %10077 = vmatpush1.bf16.msra.mxu0 %v7865
    %10078 = vmatprep.subr.bf16.mxu0 %v7872
    %10079 = vmatpush1.bf16.msra.mxu0 %v7871
    %10080 = vmatprep.subr.bf16.mxu0 %v7878
    %10081 = vmatpush1.bf16.msra.mxu0 %v7877
    %10082 = vmatprep.subr.bf16.mxu0 %v7884
    %10083 = vmatpush1.bf16.msra.mxu0 %v7883
    %10084 = vmatprep.subr.bf16.mxu0 %v7890
    %10085 = vmatpush1.bf16.msra.mxu0 %v7889
    %10086 = vmatprep.subr.bf16.mxu0 %v7896
    %10087 = vmatpush1.bf16.msra.mxu0 %v7895
    %10088 = vmatprep.subr.bf16.mxu0 %v7902
    %10089 = vmatpush1.bf16.msra.mxu0 %v7901
    %10090 = vmatprep.subr.bf16.mxu0 %v7908
    %10091 = vmatpush1.bf16.msra.mxu0 %v7907
    %10092 = vmatprep.subr.bf16.mxu0 %v7914
    %10093 = vmatpush1.bf16.msra.mxu0 %v7913
    %10094 = vmatprep.subr.bf16.mxu0 %v7920
    %10095 = vmatpush1.bf16.msra.mxu0 %v7919
    %10096 = vmatprep.mubr.bf16.mxu0 %v2691
    %10097 = vmatmul.mubr.bf16.gmra.mrb[0].mxu0 %v2690
    %v10098 = vpop.f32.mrb[0].mxu0
    %v10099 = vadd.f32 %v10058, %v10098
    %v10100 = vpop.f32.mrb[0].mxu0
    %v10101 = vadd.f32 %v10060, %v10100
    %v10102 = vpop.f32.mrb[0].mxu0
    %v10103 = vpop.f32.mrb[0].mxu0
    %10104 = vdwg.mxu0
    %10105 = vmatprep.subr.bf16.mxu0 %v7926
    %10106 = vmatpush1.bf16.msra.mxu0 %v7925
    %10107 = vmatprep.subr.bf16.mxu0 %v7932
    %10108 = vmatpush1.bf16.msra.mxu0 %v7931
    %10109 = vmatprep.subr.bf16.mxu0 %v7938
    %10110 = vmatpush1.bf16.msra.mxu0 %v7937
    %10111 = vmatprep.subr.bf16.mxu0 %v7944
    %10112 = vmatpush1.bf16.msra.mxu0 %v7943
    %10113 = vmatprep.subr.bf16.mxu0 %v7950
    %10114 = vmatpush1.bf16.msra.mxu0 %v7949
    %10115 = vmatprep.subr.bf16.mxu0 %v7956
    %10116 = vmatpush1.bf16.msra.mxu0 %v7955
    %10117 = vmatprep.subr.bf16.mxu0 %v7962
    %10118 = vmatpush1.bf16.msra.mxu0 %v7961
    %10119 = vmatprep.subr.bf16.mxu0 %v7968
    %10120 = vmatpush1.bf16.msra.mxu0 %v7967
    %10121 = vmatprep.subr.bf16.mxu0 %v7974
    %10122 = vmatpush1.bf16.msra.mxu0 %v7973
    %10123 = vmatprep.subr.bf16.mxu0 %v7980
    %10124 = vmatpush1.bf16.msra.mxu0 %v7979
    %10125 = vmatprep.subr.bf16.mxu0 %v7986
    %10126 = vmatpush1.bf16.msra.mxu0 %v7985
    %10127 = vmatprep.subr.bf16.mxu0 %v7992
    %10128 = vmatpush1.bf16.msra.mxu0 %v7991
    %10129 = vmatprep.subr.bf16.mxu0 %v7998
    %10130 = vmatpush1.bf16.msra.mxu0 %v7997
    %10131 = vmatprep.subr.bf16.mxu0 %v8004
    %10132 = vmatpush1.bf16.msra.mxu0 %v8003
    %10133 = vmatprep.subr.bf16.mxu0 %v8010
    %10134 = vmatpush1.bf16.msra.mxu0 %v8009
    %10135 = vmatprep.subr.bf16.mxu0 %v8016
    %10136 = vmatpush1.bf16.msra.mxu0 %v8015
    %10137 = vmatprep.mubr.bf16.mxu0 %v2693
    %10138 = vmatmul.mubr.bf16.gmra.mrb[0].mxu0 %v2692
    %v10139 = vpop.f32.mrb[0].mxu0
    %v10140 = vadd.f32 %v10099, %v10139
    %v10141 = vpop.f32.mrb[0].mxu0
    %v10142 = vadd.f32 %v10101, %v10141
    %v10143 = vpop.f32.mrb[0].mxu0
    %v10144 = vpop.f32.mrb[0].mxu0
    %10145 = vdwg.mxu0
    %10146 = vmatprep.subr.bf16.mxu0 %v8022
    %10147 = vmatpush1.bf16.msra.mxu0 %v8021
    %10148 = vmatprep.subr.bf16.mxu0 %v8028
    %10149 = vmatpush1.bf16.msra.mxu0 %v8027
    %10150 = vmatprep.subr.bf16.mxu0 %v8034
    %10151 = vmatpush1.bf16.msra.mxu0 %v8033
    %10152 = vmatprep.subr.bf16.mxu0 %v8040
    %10153 = vmatpush1.bf16.msra.mxu0 %v8039
    %10154 = vmatprep.subr.bf16.mxu0 %v8046
    %10155 = vmatpush1.bf16.msra.mxu0 %v8045
    %10156 = vmatprep.subr.bf16.mxu0 %v8052
    %10157 = vmatpush1.bf16.msra.mxu0 %v8051
    %10158 = vmatprep.subr.bf16.mxu0 %v8058
    %10159 = vmatpush1.bf16.msra.mxu0 %v8057
    %10160 = vmatprep.subr.bf16.mxu0 %v8064
    %10161 = vmatpush1.bf16.msra.mxu0 %v8063
    %10162 = vmatprep.subr.bf16.mxu0 %v8070
    %10163 = vmatpush1.bf16.msra.mxu0 %v8069
    %10164 = vmatprep.subr.bf16.mxu0 %v8076
    %10165 = vmatpush1.bf16.msra.mxu0 %v8075
    %10166 = vmatprep.subr.bf16.mxu0 %v8082
    %10167 = vmatpush1.bf16.msra.mxu0 %v8081
    %10168 = vmatprep.subr.bf16.mxu0 %v8088
    %10169 = vmatpush1.bf16.msra.mxu0 %v8087
    %10170 = vmatprep.subr.bf16.mxu0 %v8094
    %10171 = vmatpush1.bf16.msra.mxu0 %v8093
    %10172 = vmatprep.subr.bf16.mxu0 %v8100
    %10173 = vmatpush1.bf16.msra.mxu0 %v8099
    %10174 = vmatprep.subr.bf16.mxu0 %v8106
    %10175 = vmatpush1.bf16.msra.mxu0 %v8105
    %10176 = vmatprep.subr.bf16.mxu0 %v8112
    %10177 = vmatpush1.bf16.msra.mxu0 %v8111
    %10178 = vmatprep.mubr.bf16.mxu0 %v2695
    %10179 = vmatmul.mubr.bf16.gmra.mrb[0].mxu0 %v2694
    %v10180 = vpop.f32.mrb[0].mxu0
    %v10181 = vadd.f32 %v10140, %v10180
    %v10182 = vpop.f32.mrb[0].mxu0
    %v10183 = vadd.f32 %v10142, %v10182
    %v10184 = vpop.f32.mrb[0].mxu0
    %v10185 = vpop.f32.mrb[0].mxu0
    %10186 = vdwg.mxu0
    %10187 = vmatprep.subr.bf16.mxu0 %v8118
    %10188 = vmatpush1.bf16.msra.mxu0 %v8117
    %10189 = vmatprep.subr.bf16.mxu0 %v8124
    %10190 = vmatpush1.bf16.msra.mxu0 %v8123
    %10191 = vmatprep.subr.bf16.mxu0 %v8130
    %10192 = vmatpush1.bf16.msra.mxu0 %v8129
    %10193 = vmatprep.subr.bf16.mxu0 %v8136
    %10194 = vmatpush1.bf16.msra.mxu0 %v8135
    %10195 = vmatprep.subr.bf16.mxu0 %v8142
    %10196 = vmatpush1.bf16.msra.mxu0 %v8141
    %10197 = vmatprep.subr.bf16.mxu0 %v8148
    %10198 = vmatpush1.bf16.msra.mxu0 %v8147
    %10199 = vmatprep.subr.bf16.mxu0 %v8154
    %10200 = vmatpush1.bf16.msra.mxu0 %v8153
    %10201 = vmatprep.subr.bf16.mxu0 %v8160
    %10202 = vmatpush1.bf16.msra.mxu0 %v8159
    %10203 = vmatprep.subr.bf16.mxu0 %v8166
    %10204 = vmatpush1.bf16.msra.mxu0 %v8165
    %10205 = vmatprep.subr.bf16.mxu0 %v8172
    %10206 = vmatpush1.bf16.msra.mxu0 %v8171
    %10207 = vmatprep.subr.bf16.mxu0 %v8178
    %10208 = vmatpush1.bf16.msra.mxu0 %v8177
    %10209 = vmatprep.subr.bf16.mxu0 %v8184
    %10210 = vmatpush1.bf16.msra.mxu0 %v8183
    %10211 = vmatprep.subr.bf16.mxu0 %v8190
    %10212 = vmatpush1.bf16.msra.mxu0 %v8189
    %10213 = vmatprep.subr.bf16.mxu0 %v8196
    %10214 = vmatpush1.bf16.msra.mxu0 %v8195
    %10215 = vmatprep.subr.bf16.mxu0 %v8202
    %10216 = vmatpush1.bf16.msra.mxu0 %v8201
    %10217 = vmatprep.subr.bf16.mxu0 %v8208
    %10218 = vmatpush1.bf16.msra.mxu0 %v8207
    %10219 = vmatprep.mubr.bf16.mxu0 %v2697
    %10220 = vmatmul.mubr.bf16.gmra.mrb[0].mxu0 %v2696
    %v10221 = vpop.f32.mrb[0].mxu0
    %v10222 = vadd.f32 %v10181, %v10221
    %v10223 = vpop.f32.mrb[0].mxu0
    %v10224 = vadd.f32 %v10183, %v10223
    %v10225 = vpop.f32.mrb[0].mxu0
    %v10226 = vpop.f32.mrb[0].mxu0
    %10227 = vdwg.mxu0
    %10228 = vmatprep.subr.bf16.mxu0 %v8214
    %10229 = vmatpush1.bf16.msra.mxu0 %v8213
    %10230 = vmatprep.subr.bf16.mxu0 %v8220
    %10231 = vmatpush1.bf16.msra.mxu0 %v8219
    %10232 = vmatprep.subr.bf16.mxu0 %v8226
    %10233 = vmatpush1.bf16.msra.mxu0 %v8225
    %10234 = vmatprep.subr.bf16.mxu0 %v8232
    %10235 = vmatpush1.bf16.msra.mxu0 %v8231
    %10236 = vmatprep.subr.bf16.mxu0 %v8238
    %10237 = vmatpush1.bf16.msra.mxu0 %v8237
    %10238 = vmatprep.subr.bf16.mxu0 %v8244
    %10239 = vmatpush1.bf16.msra.mxu0 %v8243
    %10240 = vmatprep.subr.bf16.mxu0 %v8250
    %10241 = vmatpush1.bf16.msra.mxu0 %v8249
    %10242 = vmatprep.subr.bf16.mxu0 %v8256
    %10243 = vmatpush1.bf16.msra.mxu0 %v8255
    %10244 = vmatprep.subr.bf16.mxu0 %v8262
    %10245 = vmatpush1.bf16.msra.mxu0 %v8261
    %10246 = vmatprep.subr.bf16.mxu0 %v8268
    %10247 = vmatpush1.bf16.msra.mxu0 %v8267
    %10248 = vmatprep.subr.bf16.mxu0 %v8274
    %10249 = vmatpush1.bf16.msra.mxu0 %v8273
    %10250 = vmatprep.subr.bf16.mxu0 %v8280
    %10251 = vmatpush1.bf16.msra.mxu0 %v8279
    %10252 = vmatprep.subr.bf16.mxu0 %v8286
    %10253 = vmatpush1.bf16.msra.mxu0 %v8285
    %10254 = vmatprep.subr.bf16.mxu0 %v8292
    %10255 = vmatpush1.bf16.msra.mxu0 %v8291
    %10256 = vmatprep.subr.bf16.mxu0 %v8298
    %10257 = vmatpush1.bf16.msra.mxu0 %v8297
    %10258 = vmatprep.subr.bf16.mxu0 %v8304
    %10259 = vmatpush1.bf16.msra.mxu0 %v8303
    %10260 = vmatprep.mubr.bf16.mxu0 %v2699
    %10261 = vmatmul.mubr.bf16.gmra.mrb[0].mxu0 %v2698
    %v10262 = vpop.f32.mrb[0].mxu0
    %v10263 = vadd.f32 %v10222, %v10262
    %v10264 = vpop.f32.mrb[0].mxu0
    %v10265 = vadd.f32 %v10224, %v10264
    %v10266 = vpop.f32.mrb[0].mxu0
    %v10267 = vpop.f32.mrb[0].mxu0
    %10268 = vdwg.mxu0
    %10269 = vmatprep.subr.bf16.mxu0 %v8310
    %10270 = vmatpush1.bf16.msra.mxu0 %v8309
    %10271 = vmatprep.subr.bf16.mxu0 %v8316
    %10272 = vmatpush1.bf16.msra.mxu0 %v8315
    %10273 = vmatprep.subr.bf16.mxu0 %v8322
    %10274 = vmatpush1.bf16.msra.mxu0 %v8321
    %10275 = vmatprep.subr.bf16.mxu0 %v8328
    %10276 = vmatpush1.bf16.msra.mxu0 %v8327
    %10277 = vmatprep.subr.bf16.mxu0 %v8334
    %10278 = vmatpush1.bf16.msra.mxu0 %v8333
    %10279 = vmatprep.subr.bf16.mxu0 %v8340
    %10280 = vmatpush1.bf16.msra.mxu0 %v8339
    %10281 = vmatprep.subr.bf16.mxu0 %v8346
    %10282 = vmatpush1.bf16.msra.mxu0 %v8345
    %10283 = vmatprep.subr.bf16.mxu0 %v8352
    %10284 = vmatpush1.bf16.msra.mxu0 %v8351
    %10285 = vmatprep.subr.bf16.mxu0 %v8358
    %10286 = vmatpush1.bf16.msra.mxu0 %v8357
    %10287 = vmatprep.subr.bf16.mxu0 %v8364
    %10288 = vmatpush1.bf16.msra.mxu0 %v8363
    %10289 = vmatprep.subr.bf16.mxu0 %v8370
    %10290 = vmatpush1.bf16.msra.mxu0 %v8369
    %10291 = vmatprep.subr.bf16.mxu0 %v8376
    %10292 = vmatpush1.bf16.msra.mxu0 %v8375
    %10293 = vmatprep.subr.bf16.mxu0 %v8382
    %10294 = vmatpush1.bf16.msra.mxu0 %v8381
    %10295 = vmatprep.subr.bf16.mxu0 %v8388
    %10296 = vmatpush1.bf16.msra.mxu0 %v8387
    %10297 = vmatprep.subr.bf16.mxu0 %v8394
    %10298 = vmatpush1.bf16.msra.mxu0 %v8393
    %10299 = vmatprep.subr.bf16.mxu0 %v8400
    %10300 = vmatpush1.bf16.msra.mxu0 %v8399
    %10301 = vmatprep.mubr.bf16.mxu0 %v2701
    %10302 = vmatmul.mubr.bf16.gmra.mrb[0].mxu0 %v2700
    %v10303 = vpop.f32.mrb[0].mxu0
    %v10304 = vadd.f32 %v10263, %v10303
    %v10305 = vpop.f32.mrb[0].mxu0
    %v10306 = vadd.f32 %v10265, %v10305
    %v10307 = vpop.f32.mrb[0].mxu0
    %v10308 = vpop.f32.mrb[0].mxu0
    %10309 = vdwg.mxu0
    %10310 = vmatprep.subr.bf16.mxu0 %v8406
    %10311 = vmatpush1.bf16.msra.mxu0 %v8405
    %10312 = vmatprep.subr.bf16.mxu0 %v8412
    %10313 = vmatpush1.bf16.msra.mxu0 %v8411
    %10314 = vmatprep.subr.bf16.mxu0 %v8418
    %10315 = vmatpush1.bf16.msra.mxu0 %v8417
    %10316 = vmatprep.subr.bf16.mxu0 %v8424
    %10317 = vmatpush1.bf16.msra.mxu0 %v8423
    %10318 = vmatprep.subr.bf16.mxu0 %v8430
    %10319 = vmatpush1.bf16.msra.mxu0 %v8429
    %10320 = vmatprep.subr.bf16.mxu0 %v8436
    %10321 = vmatpush1.bf16.msra.mxu0 %v8435
    %10322 = vmatprep.subr.bf16.mxu0 %v8442
    %10323 = vmatpush1.bf16.msra.mxu0 %v8441
    %10324 = vmatprep.subr.bf16.mxu0 %v8448
    %10325 = vmatpush1.bf16.msra.mxu0 %v8447
    %10326 = vmatprep.subr.bf16.mxu0 %v8454
    %10327 = vmatpush1.bf16.msra.mxu0 %v8453
    %10328 = vmatprep.subr.bf16.mxu0 %v8460
    %10329 = vmatpush1.bf16.msra.mxu0 %v8459
    %10330 = vmatprep.subr.bf16.mxu0 %v8466
    %10331 = vmatpush1.bf16.msra.mxu0 %v8465
    %10332 = vmatprep.subr.bf16.mxu0 %v8472
    %10333 = vmatpush1.bf16.msra.mxu0 %v8471
    %10334 = vmatprep.subr.bf16.mxu0 %v8478
    %10335 = vmatpush1.bf16.msra.mxu0 %v8477
    %10336 = vmatprep.subr.bf16.mxu0 %v8484
    %10337 = vmatpush1.bf16.msra.mxu0 %v8483
    %10338 = vmatprep.subr.bf16.mxu0 %v8490
    %10339 = vmatpush1.bf16.msra.mxu0 %v8489
    %10340 = vmatprep.subr.bf16.mxu0 %v8496
    %10341 = vmatpush1.bf16.msra.mxu0 %v8495
    %10342 = vmatprep.mubr.bf16.mxu0 %v2703
    %10343 = vmatmul.mubr.bf16.gmra.mrb[0].mxu0 %v2702
    %v10344 = vpop.f32.mrb[0].mxu0
    %v10345 = vadd.f32 %v10304, %v10344
    %v10346 = vpop.f32.mrb[0].mxu0
    %v10347 = vadd.f32 %v10306, %v10346
    %v10348 = vpop.f32.mrb[0].mxu0
    %v10349 = vpop.f32.mrb[0].mxu0
    %10350 = vdwg.mxu0
    %10351 = vmatprep.subr.bf16.mxu0 %v8502
    %10352 = vmatpush1.bf16.msra.mxu0 %v8501
    %10353 = vmatprep.subr.bf16.mxu0 %v8508
    %10354 = vmatpush1.bf16.msra.mxu0 %v8507
    %10355 = vmatprep.subr.bf16.mxu0 %v8514
    %10356 = vmatpush1.bf16.msra.mxu0 %v8513
    %10357 = vmatprep.subr.bf16.mxu0 %v8520
    %10358 = vmatpush1.bf16.msra.mxu0 %v8519
    %10359 = vmatprep.subr.bf16.mxu0 %v8526
    %10360 = vmatpush1.bf16.msra.mxu0 %v8525
    %10361 = vmatprep.subr.bf16.mxu0 %v8532
    %10362 = vmatpush1.bf16.msra.mxu0 %v8531
    %10363 = vmatprep.subr.bf16.mxu0 %v8538
    %10364 = vmatpush1.bf16.msra.mxu0 %v8537
    %10365 = vmatprep.subr.bf16.mxu0 %v8544
    %10366 = vmatpush1.bf16.msra.mxu0 %v8543
    %10367 = vmatprep.subr.bf16.mxu0 %v8550
    %10368 = vmatpush1.bf16.msra.mxu0 %v8549
    %10369 = vmatprep.subr.bf16.mxu0 %v8556
    %10370 = vmatpush1.bf16.msra.mxu0 %v8555
    %10371 = vmatprep.subr.bf16.mxu0 %v8562
    %10372 = vmatpush1.bf16.msra.mxu0 %v8561
    %10373 = vmatprep.subr.bf16.mxu0 %v8568
    %10374 = vmatpush1.bf16.msra.mxu0 %v8567
    %10375 = vmatprep.subr.bf16.mxu0 %v8574
    %10376 = vmatpush1.bf16.msra.mxu0 %v8573
    %10377 = vmatprep.subr.bf16.mxu0 %v8580
    %10378 = vmatpush1.bf16.msra.mxu0 %v8579
    %10379 = vmatprep.subr.bf16.mxu0 %v8586
    %10380 = vmatpush1.bf16.msra.mxu0 %v8585
    %10381 = vmatprep.subr.bf16.mxu0 %v8592
    %10382 = vmatpush1.bf16.msra.mxu0 %v8591
    %10383 = vmatprep.mubr.bf16.mxu0 %v2705
    %10384 = vmatmul.mubr.bf16.gmra.mrb[0].mxu0 %v2704
    %v10385 = vpop.f32.mrb[0].mxu0
    %v10386 = vadd.f32 %v10345, %v10385
    %v10387 = vpop.f32.mrb[0].mxu0
    %v10388 = vadd.f32 %v10347, %v10387
    %v10389 = vpop.f32.mrb[0].mxu0
    %v10390 = vpop.f32.mrb[0].mxu0
    %10391 = vdwg.mxu0
    %10392 = vmatprep.subr.bf16.mxu0 %v8598
    %10393 = vmatpush1.bf16.msra.mxu0 %v8597
    %10394 = vmatprep.subr.bf16.mxu0 %v8604
    %10395 = vmatpush1.bf16.msra.mxu0 %v8603
    %10396 = vmatprep.subr.bf16.mxu0 %v8610
    %10397 = vmatpush1.bf16.msra.mxu0 %v8609
    %10398 = vmatprep.subr.bf16.mxu0 %v8616
    %10399 = vmatpush1.bf16.msra.mxu0 %v8615
    %10400 = vmatprep.subr.bf16.mxu0 %v8622
    %10401 = vmatpush1.bf16.msra.mxu0 %v8621
    %10402 = vmatprep.subr.bf16.mxu0 %v8628
    %10403 = vmatpush1.bf16.msra.mxu0 %v8627
    %10404 = vmatprep.subr.bf16.mxu0 %v8634
    %10405 = vmatpush1.bf16.msra.mxu0 %v8633
    %10406 = vmatprep.subr.bf16.mxu0 %v8640
    %10407 = vmatpush1.bf16.msra.mxu0 %v8639
    %10408 = vmatprep.subr.bf16.mxu0 %v8646
    %10409 = vmatpush1.bf16.msra.mxu0 %v8645
    %10410 = vmatprep.subr.bf16.mxu0 %v8652
    %10411 = vmatpush1.bf16.msra.mxu0 %v8651
    %10412 = vmatprep.subr.bf16.mxu0 %v8658
    %10413 = vmatpush1.bf16.msra.mxu0 %v8657
    %10414 = vmatprep.subr.bf16.mxu0 %v8664
    %10415 = vmatpush1.bf16.msra.mxu0 %v8663
    %10416 = vmatprep.subr.bf16.mxu0 %v8670
    %10417 = vmatpush1.bf16.msra.mxu0 %v8669
    %10418 = vmatprep.subr.bf16.mxu0 %v8676
    %10419 = vmatpush1.bf16.msra.mxu0 %v8675
    %10420 = vmatprep.subr.bf16.mxu0 %v8682
    %10421 = vmatpush1.bf16.msra.mxu0 %v8681
    %10422 = vmatprep.subr.bf16.mxu0 %v8688
    %10423 = vmatpush1.bf16.msra.mxu0 %v8687
    %10424 = vmatprep.mubr.bf16.mxu0 %v2707
    %10425 = vmatmul.mubr.bf16.gmra.mrb[0].mxu0 %v2706
    %v10426 = vpop.f32.mrb[0].mxu0
    %v10427 = vadd.f32 %v10386, %v10426
    %v10428 = vpop.f32.mrb[0].mxu0
    %v10429 = vadd.f32 %v10388, %v10428
    %v10430 = vpop.f32.mrb[0].mxu0
    %v10431 = vpop.f32.mrb[0].mxu0
    %10432 = vdwg.mxu0
    %10433 = vmatprep.subr.bf16.mxu0 %v8694
    %10434 = vmatpush1.bf16.msra.mxu0 %v8693
    %10435 = vmatprep.subr.bf16.mxu0 %v8700
    %10436 = vmatpush1.bf16.msra.mxu0 %v8699
    %10437 = vmatprep.subr.bf16.mxu0 %v8706
    %10438 = vmatpush1.bf16.msra.mxu0 %v8705
    %10439 = vmatprep.subr.bf16.mxu0 %v8712
    %10440 = vmatpush1.bf16.msra.mxu0 %v8711
    %10441 = vmatprep.subr.bf16.mxu0 %v8718
    %10442 = vmatpush1.bf16.msra.mxu0 %v8717
    %10443 = vmatprep.subr.bf16.mxu0 %v8724
    %10444 = vmatpush1.bf16.msra.mxu0 %v8723
    %10445 = vmatprep.subr.bf16.mxu0 %v8730
    %10446 = vmatpush1.bf16.msra.mxu0 %v8729
    %10447 = vmatprep.subr.bf16.mxu0 %v8736
    %10448 = vmatpush1.bf16.msra.mxu0 %v8735
    %10449 = vmatprep.subr.bf16.mxu0 0
    %10450 = vmatpush1.bf16.msra.mxu0 0
    %10451 = vmatprep.subr.bf16.mxu0 0
    %10452 = vmatpush1.bf16.msra.mxu0 0
    %10453 = vmatprep.subr.bf16.mxu0 0
    %10454 = vmatpush1.bf16.msra.mxu0 0
    %10455 = vmatprep.subr.bf16.mxu0 0
    %10456 = vmatpush1.bf16.msra.mxu0 0
    %10457 = vmatprep.subr.bf16.mxu0 0
    %10458 = vmatpush1.bf16.msra.mxu0 0
    %10459 = vmatprep.subr.bf16.mxu0 0
    %10460 = vmatpush1.bf16.msra.mxu0 0
    %10461 = vmatprep.subr.bf16.mxu0 0
    %10462 = vmatpush1.bf16.msra.mxu0 0
    %10463 = vmatprep.subr.bf16.mxu0 0
    %10464 = vmatpush1.bf16.msra.mxu0 0
    %10465 = vmatprep.mubr.bf16.mxu0 0
    %10466 = vmatmul.mubr.bf16.gmra.mrb[0].mxu0 %v2708
    %v10467 = vpop.f32.mrb[0].mxu0
    %v10468 = vadd.f32 %v10427, %v10467
    %v10469 = vpop.f32.mrb[0].mxu0
    %v10470 = vadd.f32 %v10429, %v10469
    %v10471 = vpop.f32.mrb[0].mxu0
    %v10472 = vpop.f32.mrb[0].mxu0
    %10473 = vdwg.mxu0
    %10474 = vmatprep.subr.bf16.mxu0 %v7544
    %10475 = vmatpush1.bf16.msra.mxu0 %v7543
    %10476 = vmatprep.subr.bf16.mxu0 %v7550
    %10477 = vmatpush1.bf16.msra.mxu0 %v7549
    %10478 = vmatprep.subr.bf16.mxu0 %v7556
    %10479 = vmatpush1.bf16.msra.mxu0 %v7555
    %10480 = vmatprep.subr.bf16.mxu0 %v7562
    %10481 = vmatpush1.bf16.msra.mxu0 %v7561
    %10482 = vmatprep.subr.bf16.mxu0 %v7568
    %10483 = vmatpush1.bf16.msra.mxu0 %v7567
    %10484 = vmatprep.subr.bf16.mxu0 %v7574
    %10485 = vmatpush1.bf16.msra.mxu0 %v7573
    %10486 = vmatprep.subr.bf16.mxu0 %v7580
    %10487 = vmatpush1.bf16.msra.mxu0 %v7579
    %10488 = vmatprep.subr.bf16.mxu0 %v7586
    %10489 = vmatpush1.bf16.msra.mxu0 %v7585
    %10490 = vmatprep.subr.bf16.mxu0 %v7592
    %10491 = vmatpush1.bf16.msra.mxu0 %v7591
    %10492 = vmatprep.subr.bf16.mxu0 %v7598
    %10493 = vmatpush1.bf16.msra.mxu0 %v7597
    %10494 = vmatprep.subr.bf16.mxu0 %v7604
    %10495 = vmatpush1.bf16.msra.mxu0 %v7603
    %10496 = vmatprep.subr.bf16.mxu0 %v7610
    %10497 = vmatpush1.bf16.msra.mxu0 %v7609
    %10498 = vmatprep.subr.bf16.mxu0 %v7616
    %10499 = vmatpush1.bf16.msra.mxu0 %v7615
    %10500 = vmatprep.subr.bf16.mxu0 %v7622
    %10501 = vmatpush1.bf16.msra.mxu0 %v7621
    %10502 = vmatprep.subr.bf16.mxu0 %v7628
    %10503 = vmatpush1.bf16.msra.mxu0 %v7627
    %10504 = vmatprep.subr.bf16.mxu0 %v7634
    %10505 = vmatpush1.bf16.msra.mxu0 %v7633
    %10506 = vmatprep.mubr.bf16.mxu0 %v2685
    %10507 = vmatmul.mubr.bf16.gmra.mrb[0].mxu0 %v2684
    %v10508 = vpop.f32.mrb[0].mxu0
    %v10509 = vadd.f32 %v3922, %v10508
    %v10510 = vpop.f32.mrb[0].mxu0
    %v10511 = vadd.f32 %v3926, %v10510
    %v10512 = vpop.f32.mrb[0].mxu0
    %v10513 = vpop.f32.mrb[0].mxu0
    %10514 = vdwg.mxu0
    %10515 = vmatprep.subr.bf16.mxu0 %v7640
    %10516 = vmatpush1.bf16.msra.mxu0 %v7639
    %10517 = vmatprep.subr.bf16.mxu0 %v7646
    %10518 = vmatpush1.bf16.msra.mxu0 %v7645
    %10519 = vmatprep.subr.bf16.mxu0 %v7652
    %10520 = vmatpush1.bf16.msra.mxu0 %v7651
    %10521 = vmatprep.subr.bf16.mxu0 %v7658
    %10522 = vmatpush1.bf16.msra.mxu0 %v7657
    %10523 = vmatprep.subr.bf16.mxu0 %v7664
    %10524 = vmatpush1.bf16.msra.mxu0 %v7663
    %10525 = vmatprep.subr.bf16.mxu0 %v7670
    %10526 = vmatpush1.bf16.msra.mxu0 %v7669
    %10527 = vmatprep.subr.bf16.mxu0 %v7676
    %10528 = vmatpush1.bf16.msra.mxu0 %v7675
    %10529 = vmatprep.subr.bf16.mxu0 %v7682
    %10530 = vmatpush1.bf16.msra.mxu0 %v7681
    %10531 = vmatprep.subr.bf16.mxu0 %v7688
    %10532 = vmatpush1.bf16.msra.mxu0 %v7687
    %10533 = vmatprep.subr.bf16.mxu0 %v7694
    %10534 = vmatpush1.bf16.msra.mxu0 %v7693
    %10535 = vmatprep.subr.bf16.mxu0 %v7700
    %10536 = vmatpush1.bf16.msra.mxu0 %v7699
    %10537 = vmatprep.subr.bf16.mxu0 %v7706
    %10538 = vmatpush1.bf16.msra.mxu0 %v7705
    %10539 = vmatprep.subr.bf16.mxu0 %v7712
    %10540 = vmatpush1.bf16.msra.mxu0 %v7711
    %10541 = vmatprep.subr.bf16.mxu0 %v7718
    %10542 = vmatpush1.bf16.msra.mxu0 %v7717
    %10543 = vmatprep.subr.bf16.mxu0 %v7724
    %10544 = vmatpush1.bf16.msra.mxu0 %v7723
    %10545 = vmatprep.subr.bf16.mxu0 %v7730
    %10546 = vmatpush1.bf16.msra.mxu0 %v7729
    %10547 = vmatprep.mubr.bf16.mxu0 %v2687
    %10548 = vmatmul.mubr.bf16.gmra.mrb[0].mxu0 %v2686
    %v10549 = vpop.f32.mrb[0].mxu0
    %v10550 = vadd.f32 %v10509, %v10549
    %v10551 = vpop.f32.mrb[0].mxu0
    %v10552 = vadd.f32 %v10511, %v10551
    %v10553 = vpop.f32.mrb[0].mxu0
    %v10554 = vpop.f32.mrb[0].mxu0
    %10555 = vdwg.mxu0
    %10556 = vmatprep.subr.bf16.mxu0 %v7736
    %10557 = vmatpush1.bf16.msra.mxu0 %v7735
    %10558 = vmatprep.subr.bf16.mxu0 %v7742
    %10559 = vmatpush1.bf16.msra.mxu0 %v7741
    %10560 = vmatprep.subr.bf16.mxu0 %v7748
    %10561 = vmatpush1.bf16.msra.mxu0 %v7747
    %10562 = vmatprep.subr.bf16.mxu0 %v7754
    %10563 = vmatpush1.bf16.msra.mxu0 %v7753
    %10564 = vmatprep.subr.bf16.mxu0 %v7760
    %10565 = vmatpush1.bf16.msra.mxu0 %v7759
    %10566 = vmatprep.subr.bf16.mxu0 %v7766
    %10567 = vmatpush1.bf16.msra.mxu0 %v7765
    %10568 = vmatprep.subr.bf16.mxu0 %v7772
    %10569 = vmatpush1.bf16.msra.mxu0 %v7771
    %10570 = vmatprep.subr.bf16.mxu0 %v7778
    %10571 = vmatpush1.bf16.msra.mxu0 %v7777
    %10572 = vmatprep.subr.bf16.mxu0 %v7784
    %10573 = vmatpush1.bf16.msra.mxu0 %v7783
    %10574 = vmatprep.subr.bf16.mxu0 %v7790
    %10575 = vmatpush1.bf16.msra.mxu0 %v7789
    %10576 = vmatprep.subr.bf16.mxu0 %v7796
    %10577 = vmatpush1.bf16.msra.mxu0 %v7795
    %10578 = vmatprep.subr.bf16.mxu0 %v7802
    %10579 = vmatpush1.bf16.msra.mxu0 %v7801
    %10580 = vmatprep.subr.bf16.mxu0 %v7808
    %10581 = vmatpush1.bf16.msra.mxu0 %v7807
    %10582 = vmatprep.subr.bf16.mxu0 %v7814
    %10583 = vmatpush1.bf16.msra.mxu0 %v7813
    %10584 = vmatprep.subr.bf16.mxu0 %v7820
    %10585 = vmatpush1.bf16.msra.mxu0 %v7819
    %10586 = vmatprep.subr.bf16.mxu0 %v7826
    %10587 = vmatpush1.bf16.msra.mxu0 %v7825
    %10588 = vmatprep.mubr.bf16.mxu0 %v2689
    %10589 = vmatmul.mubr.bf16.gmra.mrb[0].mxu0 %v2688
    %v10590 = vpop.f32.mrb[0].mxu0
    %v10591 = vadd.f32 %v10550, %v10590
    %v10592 = vpop.f32.mrb[0].mxu0
    %v10593 = vadd.f32 %v10552, %v10592
    %v10594 = vpop.f32.mrb[0].mxu0
    %v10595 = vpop.f32.mrb[0].mxu0
    %10596 = vdwg.mxu0
    %10597 = vmatprep.subr.bf16.mxu0 %v7832
    %10598 = vmatpush1.bf16.msra.mxu0 %v7831
    %10599 = vmatprep.subr.bf16.mxu0 %v7838
    %10600 = vmatpush1.bf16.msra.mxu0 %v7837
    %10601 = vmatprep.subr.bf16.mxu0 %v7844
    %10602 = vmatpush1.bf16.msra.mxu0 %v7843
    %10603 = vmatprep.subr.bf16.mxu0 %v7850
    %10604 = vmatpush1.bf16.msra.mxu0 %v7849
    %10605 = vmatprep.subr.bf16.mxu0 %v7856
    %10606 = vmatpush1.bf16.msra.mxu0 %v7855
    %10607 = vmatprep.subr.bf16.mxu0 %v7862
    %10608 = vmatpush1.bf16.msra.mxu0 %v7861
    %10609 = vmatprep.subr.bf16.mxu0 %v7868
    %10610 = vmatpush1.bf16.msra.mxu0 %v7867
    %10611 = vmatprep.subr.bf16.mxu0 %v7874
    %10612 = vmatpush1.bf16.msra.mxu0 %v7873
    %10613 = vmatprep.subr.bf16.mxu0 %v7880
    %10614 = vmatpush1.bf16.msra.mxu0 %v7879
    %10615 = vmatprep.subr.bf16.mxu0 %v7886
    %10616 = vmatpush1.bf16.msra.mxu0 %v7885
    %10617 = vmatprep.subr.bf16.mxu0 %v7892
    %10618 = vmatpush1.bf16.msra.mxu0 %v7891
    %10619 = vmatprep.subr.bf16.mxu0 %v7898
    %10620 = vmatpush1.bf16.msra.mxu0 %v7897
    %10621 = vmatprep.subr.bf16.mxu0 %v7904
    %10622 = vmatpush1.bf16.msra.mxu0 %v7903
    %10623 = vmatprep.subr.bf16.mxu0 %v7910
    %10624 = vmatpush1.bf16.msra.mxu0 %v7909
    %10625 = vmatprep.subr.bf16.mxu0 %v7916
    %10626 = vmatpush1.bf16.msra.mxu0 %v7915
    %10627 = vmatprep.subr.bf16.mxu0 %v7922
    %10628 = vmatpush1.bf16.msra.mxu0 %v7921
    %10629 = vmatprep.mubr.bf16.mxu0 %v2691
    %10630 = vmatmul.mubr.bf16.gmra.mrb[0].mxu0 %v2690
    %v10631 = vpop.f32.mrb[0].mxu0
    %v10632 = vadd.f32 %v10591, %v10631
    %v10633 = vpop.f32.mrb[0].mxu0
    %v10634 = vadd.f32 %v10593, %v10633
    %v10635 = vpop.f32.mrb[0].mxu0
    %v10636 = vpop.f32.mrb[0].mxu0
    %10637 = vdwg.mxu0
    %10638 = vmatprep.subr.bf16.mxu0 %v7928
    %10639 = vmatpush1.bf16.msra.mxu0 %v7927
    %10640 = vmatprep.subr.bf16.mxu0 %v7934
    %10641 = vmatpush1.bf16.msra.mxu0 %v7933
    %10642 = vmatprep.subr.bf16.mxu0 %v7940
    %10643 = vmatpush1.bf16.msra.mxu0 %v7939
    %10644 = vmatprep.subr.bf16.mxu0 %v7946
    %10645 = vmatpush1.bf16.msra.mxu0 %v7945
    %10646 = vmatprep.subr.bf16.mxu0 %v7952
    %10647 = vmatpush1.bf16.msra.mxu0 %v7951
    %10648 = vmatprep.subr.bf16.mxu0 %v7958
    %10649 = vmatpush1.bf16.msra.mxu0 %v7957
    %10650 = vmatprep.subr.bf16.mxu0 %v7964
    %10651 = vmatpush1.bf16.msra.mxu0 %v7963
    %10652 = vmatprep.subr.bf16.mxu0 %v7970
    %10653 = vmatpush1.bf16.msra.mxu0 %v7969
    %10654 = vmatprep.subr.bf16.mxu0 %v7976
    %10655 = vmatpush1.bf16.msra.mxu0 %v7975
    %10656 = vmatprep.subr.bf16.mxu0 %v7982
    %10657 = vmatpush1.bf16.msra.mxu0 %v7981
    %10658 = vmatprep.subr.bf16.mxu0 %v7988
    %10659 = vmatpush1.bf16.msra.mxu0 %v7987
    %10660 = vmatprep.subr.bf16.mxu0 %v7994
    %10661 = vmatpush1.bf16.msra.mxu0 %v7993
    %10662 = vmatprep.subr.bf16.mxu0 %v8000
    %10663 = vmatpush1.bf16.msra.mxu0 %v7999
    %10664 = vmatprep.subr.bf16.mxu0 %v8006
    %10665 = vmatpush1.bf16.msra.mxu0 %v8005
    %10666 = vmatprep.subr.bf16.mxu0 %v8012
    %10667 = vmatpush1.bf16.msra.mxu0 %v8011
    %10668 = vmatprep.subr.bf16.mxu0 %v8018
    %10669 = vmatpush1.bf16.msra.mxu0 %v8017
    %10670 = vmatprep.mubr.bf16.mxu0 %v2693
    %10671 = vmatmul.mubr.bf16.gmra.mrb[0].mxu0 %v2692
    %v10672 = vpop.f32.mrb[0].mxu0
    %v10673 = vadd.f32 %v10632, %v10672
    %v10674 = vpop.f32.mrb[0].mxu0
    %v10675 = vadd.f32 %v10634, %v10674
    %v10676 = vpop.f32.mrb[0].mxu0
    %v10677 = vpop.f32.mrb[0].mxu0
    %10678 = vdwg.mxu0
    %10679 = vmatprep.subr.bf16.mxu0 %v8024
    %10680 = vmatpush1.bf16.msra.mxu0 %v8023
    %10681 = vmatprep.subr.bf16.mxu0 %v8030
    %10682 = vmatpush1.bf16.msra.mxu0 %v8029
    %10683 = vmatprep.subr.bf16.mxu0 %v8036
    %10684 = vmatpush1.bf16.msra.mxu0 %v8035
    %10685 = vmatprep.subr.bf16.mxu0 %v8042
    %10686 = vmatpush1.bf16.msra.mxu0 %v8041
    %10687 = vmatprep.subr.bf16.mxu0 %v8048
    %10688 = vmatpush1.bf16.msra.mxu0 %v8047
    %10689 = vmatprep.subr.bf16.mxu0 %v8054
    %10690 = vmatpush1.bf16.msra.mxu0 %v8053
    %10691 = vmatprep.subr.bf16.mxu0 %v8060
    %10692 = vmatpush1.bf16.msra.mxu0 %v8059
    %10693 = vmatprep.subr.bf16.mxu0 %v8066
    %10694 = vmatpush1.bf16.msra.mxu0 %v8065
    %10695 = vmatprep.subr.bf16.mxu0 %v8072
    %10696 = vmatpush1.bf16.msra.mxu0 %v8071
    %10697 = vmatprep.subr.bf16.mxu0 %v8078
    %10698 = vmatpush1.bf16.msra.mxu0 %v8077
    %10699 = vmatprep.subr.bf16.mxu0 %v8084
    %10700 = vmatpush1.bf16.msra.mxu0 %v8083
    %10701 = vmatprep.subr.bf16.mxu0 %v8090
    %10702 = vmatpush1.bf16.msra.mxu0 %v8089
    %10703 = vmatprep.subr.bf16.mxu0 %v8096
    %10704 = vmatpush1.bf16.msra.mxu0 %v8095
    %10705 = vmatprep.subr.bf16.mxu0 %v8102
    %10706 = vmatpush1.bf16.msra.mxu0 %v8101
    %10707 = vmatprep.subr.bf16.mxu0 %v8108
    %10708 = vmatpush1.bf16.msra.mxu0 %v8107
    %10709 = vmatprep.subr.bf16.mxu0 %v8114
    %10710 = vmatpush1.bf16.msra.mxu0 %v8113
    %10711 = vmatprep.mubr.bf16.mxu0 %v2695
    %10712 = vmatmul.mubr.bf16.gmra.mrb[0].mxu0 %v2694
    %v10713 = vpop.f32.mrb[0].mxu0
    %v10714 = vadd.f32 %v10673, %v10713
    %v10715 = vpop.f32.mrb[0].mxu0
    %v10716 = vadd.f32 %v10675, %v10715
    %v10717 = vpop.f32.mrb[0].mxu0
    %v10718 = vpop.f32.mrb[0].mxu0
    %10719 = vdwg.mxu0
    %10720 = vmatprep.subr.bf16.mxu0 %v8120
    %10721 = vmatpush1.bf16.msra.mxu0 %v8119
    %10722 = vmatprep.subr.bf16.mxu0 %v8126
    %10723 = vmatpush1.bf16.msra.mxu0 %v8125
    %10724 = vmatprep.subr.bf16.mxu0 %v8132
    %10725 = vmatpush1.bf16.msra.mxu0 %v8131
    %10726 = vmatprep.subr.bf16.mxu0 %v8138
    %10727 = vmatpush1.bf16.msra.mxu0 %v8137
    %10728 = vmatprep.subr.bf16.mxu0 %v8144
    %10729 = vmatpush1.bf16.msra.mxu0 %v8143
    %10730 = vmatprep.subr.bf16.mxu0 %v8150
    %10731 = vmatpush1.bf16.msra.mxu0 %v8149
    %10732 = vmatprep.subr.bf16.mxu0 %v8156
    %10733 = vmatpush1.bf16.msra.mxu0 %v8155
    %10734 = vmatprep.subr.bf16.mxu0 %v8162
    %10735 = vmatpush1.bf16.msra.mxu0 %v8161
    %10736 = vmatprep.subr.bf16.mxu0 %v8168
    %10737 = vmatpush1.bf16.msra.mxu0 %v8167
    %10738 = vmatprep.subr.bf16.mxu0 %v8174
    %10739 = vmatpush1.bf16.msra.mxu0 %v8173
    %10740 = vmatprep.subr.bf16.mxu0 %v8180
    %10741 = vmatpush1.bf16.msra.mxu0 %v8179
    %10742 = vmatprep.subr.bf16.mxu0 %v8186
    %10743 = vmatpush1.bf16.msra.mxu0 %v8185
    %10744 = vmatprep.subr.bf16.mxu0 %v8192
    %10745 = vmatpush1.bf16.msra.mxu0 %v8191
    %10746 = vmatprep.subr.bf16.mxu0 %v8198
    %10747 = vmatpush1.bf16.msra.mxu0 %v8197
    %10748 = vmatprep.subr.bf16.mxu0 %v8204
    %10749 = vmatpush1.bf16.msra.mxu0 %v8203
    %10750 = vmatprep.subr.bf16.mxu0 %v8210
    %10751 = vmatpush1.bf16.msra.mxu0 %v8209
    %10752 = vmatprep.mubr.bf16.mxu0 %v2697
    %10753 = vmatmul.mubr.bf16.gmra.mrb[0].mxu0 %v2696
    %v10754 = vpop.f32.mrb[0].mxu0
    %v10755 = vadd.f32 %v10714, %v10754
    %v10756 = vpop.f32.mrb[0].mxu0
    %v10757 = vadd.f32 %v10716, %v10756
    %v10758 = vpop.f32.mrb[0].mxu0
    %v10759 = vpop.f32.mrb[0].mxu0
    %10760 = vdwg.mxu0
    %10761 = vmatprep.subr.bf16.mxu0 %v8216
    %10762 = vmatpush1.bf16.msra.mxu0 %v8215
    %10763 = vmatprep.subr.bf16.mxu0 %v8222
    %10764 = vmatpush1.bf16.msra.mxu0 %v8221
    %10765 = vmatprep.subr.bf16.mxu0 %v8228
    %10766 = vmatpush1.bf16.msra.mxu0 %v8227
    %10767 = vmatprep.subr.bf16.mxu0 %v8234
    %10768 = vmatpush1.bf16.msra.mxu0 %v8233
    %10769 = vmatprep.subr.bf16.mxu0 %v8240
    %10770 = vmatpush1.bf16.msra.mxu0 %v8239
    %10771 = vmatprep.subr.bf16.mxu0 %v8246
    %10772 = vmatpush1.bf16.msra.mxu0 %v8245
    %10773 = vmatprep.subr.bf16.mxu0 %v8252
    %10774 = vmatpush1.bf16.msra.mxu0 %v8251
    %10775 = vmatprep.subr.bf16.mxu0 %v8258
    %10776 = vmatpush1.bf16.msra.mxu0 %v8257
    %10777 = vmatprep.subr.bf16.mxu0 %v8264
    %10778 = vmatpush1.bf16.msra.mxu0 %v8263
    %10779 = vmatprep.subr.bf16.mxu0 %v8270
    %10780 = vmatpush1.bf16.msra.mxu0 %v8269
    %10781 = vmatprep.subr.bf16.mxu0 %v8276
    %10782 = vmatpush1.bf16.msra.mxu0 %v8275
    %10783 = vmatprep.subr.bf16.mxu0 %v8282
    %10784 = vmatpush1.bf16.msra.mxu0 %v8281
    %10785 = vmatprep.subr.bf16.mxu0 %v8288
    %10786 = vmatpush1.bf16.msra.mxu0 %v8287
    %10787 = vmatprep.subr.bf16.mxu0 %v8294
    %10788 = vmatpush1.bf16.msra.mxu0 %v8293
    %10789 = vmatprep.subr.bf16.mxu0 %v8300
    %10790 = vmatpush1.bf16.msra.mxu0 %v8299
    %10791 = vmatprep.subr.bf16.mxu0 %v8306
    %10792 = vmatpush1.bf16.msra.mxu0 %v8305
    %10793 = vmatprep.mubr.bf16.mxu0 %v2699
    %10794 = vmatmul.mubr.bf16.gmra.mrb[0].mxu0 %v2698
    %v10795 = vpop.f32.mrb[0].mxu0
    %v10796 = vadd.f32 %v10755, %v10795
    %v10797 = vpop.f32.mrb[0].mxu0
    %v10798 = vadd.f32 %v10757, %v10797
    %v10799 = vpop.f32.mrb[0].mxu0
    %v10800 = vpop.f32.mrb[0].mxu0
    %10801 = vdwg.mxu0
    %10802 = vmatprep.subr.bf16.mxu0 %v8312
    %10803 = vmatpush1.bf16.msra.mxu0 %v8311
    %10804 = vmatprep.subr.bf16.mxu0 %v8318
    %10805 = vmatpush1.bf16.msra.mxu0 %v8317
    %10806 = vmatprep.subr.bf16.mxu0 %v8324
    %10807 = vmatpush1.bf16.msra.mxu0 %v8323
    %10808 = vmatprep.subr.bf16.mxu0 %v8330
    %10809 = vmatpush1.bf16.msra.mxu0 %v8329
    %10810 = vmatprep.subr.bf16.mxu0 %v8336
    %10811 = vmatpush1.bf16.msra.mxu0 %v8335
    %10812 = vmatprep.subr.bf16.mxu0 %v8342
    %10813 = vmatpush1.bf16.msra.mxu0 %v8341
    %10814 = vmatprep.subr.bf16.mxu0 %v8348
    %10815 = vmatpush1.bf16.msra.mxu0 %v8347
    %10816 = vmatprep.subr.bf16.mxu0 %v8354
    %10817 = vmatpush1.bf16.msra.mxu0 %v8353
    %10818 = vmatprep.subr.bf16.mxu0 %v8360
    %10819 = vmatpush1.bf16.msra.mxu0 %v8359
    %10820 = vmatprep.subr.bf16.mxu0 %v8366
    %10821 = vmatpush1.bf16.msra.mxu0 %v8365
    %10822 = vmatprep.subr.bf16.mxu0 %v8372
    %10823 = vmatpush1.bf16.msra.mxu0 %v8371
    %10824 = vmatprep.subr.bf16.mxu0 %v8378
    %10825 = vmatpush1.bf16.msra.mxu0 %v8377
    %10826 = vmatprep.subr.bf16.mxu0 %v8384
    %10827 = vmatpush1.bf16.msra.mxu0 %v8383
    %10828 = vmatprep.subr.bf16.mxu0 %v8390
    %10829 = vmatpush1.bf16.msra.mxu0 %v8389
    %10830 = vmatprep.subr.bf16.mxu0 %v8396
    %10831 = vmatpush1.bf16.msra.mxu0 %v8395
    %10832 = vmatprep.subr.bf16.mxu0 %v8402
    %10833 = vmatpush1.bf16.msra.mxu0 %v8401
    %10834 = vmatprep.mubr.bf16.mxu0 %v2701
    %10835 = vmatmul.mubr.bf16.gmra.mrb[0].mxu0 %v2700
    %v10836 = vpop.f32.mrb[0].mxu0
    %v10837 = vadd.f32 %v10796, %v10836
    %v10838 = vpop.f32.mrb[0].mxu0
    %v10839 = vadd.f32 %v10798, %v10838
    %v10840 = vpop.f32.mrb[0].mxu0
    %v10841 = vpop.f32.mrb[0].mxu0
    %10842 = vdwg.mxu0
    %10843 = vmatprep.subr.bf16.mxu0 %v8408
    %10844 = vmatpush1.bf16.msra.mxu0 %v8407
    %10845 = vmatprep.subr.bf16.mxu0 %v8414
    %10846 = vmatpush1.bf16.msra.mxu0 %v8413
    %10847 = vmatprep.subr.bf16.mxu0 %v8420
    %10848 = vmatpush1.bf16.msra.mxu0 %v8419
    %10849 = vmatprep.subr.bf16.mxu0 %v8426
    %10850 = vmatpush1.bf16.msra.mxu0 %v8425
    %10851 = vmatprep.subr.bf16.mxu0 %v8432
    %10852 = vmatpush1.bf16.msra.mxu0 %v8431
    %10853 = vmatprep.subr.bf16.mxu0 %v8438
    %10854 = vmatpush1.bf16.msra.mxu0 %v8437
    %10855 = vmatprep.subr.bf16.mxu0 %v8444
    %10856 = vmatpush1.bf16.msra.mxu0 %v8443
    %10857 = vmatprep.subr.bf16.mxu0 %v8450
    %10858 = vmatpush1.bf16.msra.mxu0 %v8449
    %10859 = vmatprep.subr.bf16.mxu0 %v8456
    %10860 = vmatpush1.bf16.msra.mxu0 %v8455
    %10861 = vmatprep.subr.bf16.mxu0 %v8462
    %10862 = vmatpush1.bf16.msra.mxu0 %v8461
    %10863 = vmatprep.subr.bf16.mxu0 %v8468
    %10864 = vmatpush1.bf16.msra.mxu0 %v8467
    %10865 = vmatprep.subr.bf16.mxu0 %v8474
    %10866 = vmatpush1.bf16.msra.mxu0 %v8473
    %10867 = vmatprep.subr.bf16.mxu0 %v8480
    %10868 = vmatpush1.bf16.msra.mxu0 %v8479
    %10869 = vmatprep.subr.bf16.mxu0 %v8486
    %10870 = vmatpush1.bf16.msra.mxu0 %v8485
    %10871 = vmatprep.subr.bf16.mxu0 %v8492
    %10872 = vmatpush1.bf16.msra.mxu0 %v8491
    %10873 = vmatprep.subr.bf16.mxu0 %v8498
    %10874 = vmatpush1.bf16.msra.mxu0 %v8497
    %10875 = vmatprep.mubr.bf16.mxu0 %v2703
    %10876 = vmatmul.mubr.bf16.gmra.mrb[0].mxu0 %v2702
    %v10877 = vpop.f32.mrb[0].mxu0
    %v10878 = vadd.f32 %v10837, %v10877
    %v10879 = vpop.f32.mrb[0].mxu0
    %v10880 = vadd.f32 %v10839, %v10879
    %v10881 = vpop.f32.mrb[0].mxu0
    %v10882 = vpop.f32.mrb[0].mxu0
    %10883 = vdwg.mxu0
    %10884 = vmatprep.subr.bf16.mxu0 %v8504
    %10885 = vmatpush1.bf16.msra.mxu0 %v8503
    %10886 = vmatprep.subr.bf16.mxu0 %v8510
    %10887 = vmatpush1.bf16.msra.mxu0 %v8509
    %10888 = vmatprep.subr.bf16.mxu0 %v8516
    %10889 = vmatpush1.bf16.msra.mxu0 %v8515
    %10890 = vmatprep.subr.bf16.mxu0 %v8522
    %10891 = vmatpush1.bf16.msra.mxu0 %v8521
    %10892 = vmatprep.subr.bf16.mxu0 %v8528
    %10893 = vmatpush1.bf16.msra.mxu0 %v8527
    %10894 = vmatprep.subr.bf16.mxu0 %v8534
    %10895 = vmatpush1.bf16.msra.mxu0 %v8533
    %10896 = vmatprep.subr.bf16.mxu0 %v8540
    %10897 = vmatpush1.bf16.msra.mxu0 %v8539
    %10898 = vmatprep.subr.bf16.mxu0 %v8546
    %10899 = vmatpush1.bf16.msra.mxu0 %v8545
    %10900 = vmatprep.subr.bf16.mxu0 %v8552
    %10901 = vmatpush1.bf16.msra.mxu0 %v8551
    %10902 = vmatprep.subr.bf16.mxu0 %v8558
    %10903 = vmatpush1.bf16.msra.mxu0 %v8557
    %10904 = vmatprep.subr.bf16.mxu0 %v8564
    %10905 = vmatpush1.bf16.msra.mxu0 %v8563
    %10906 = vmatprep.subr.bf16.mxu0 %v8570
    %10907 = vmatpush1.bf16.msra.mxu0 %v8569
    %10908 = vmatprep.subr.bf16.mxu0 %v8576
    %10909 = vmatpush1.bf16.msra.mxu0 %v8575
    %10910 = vmatprep.subr.bf16.mxu0 %v8582
    %10911 = vmatpush1.bf16.msra.mxu0 %v8581
    %10912 = vmatprep.subr.bf16.mxu0 %v8588
    %10913 = vmatpush1.bf16.msra.mxu0 %v8587
    %10914 = vmatprep.subr.bf16.mxu0 %v8594
    %10915 = vmatpush1.bf16.msra.mxu0 %v8593
    %10916 = vmatprep.mubr.bf16.mxu0 %v2705
    %10917 = vmatmul.mubr.bf16.gmra.mrb[0].mxu0 %v2704
    %v10918 = vpop.f32.mrb[0].mxu0
    %v10919 = vadd.f32 %v10878, %v10918
    %v10920 = vpop.f32.mrb[0].mxu0
    %v10921 = vadd.f32 %v10880, %v10920
    %v10922 = vpop.f32.mrb[0].mxu0
    %v10923 = vpop.f32.mrb[0].mxu0
    %10924 = vdwg.mxu0
    %10925 = vmatprep.subr.bf16.mxu0 %v8600
    %10926 = vmatpush1.bf16.msra.mxu0 %v8599
    %10927 = vmatprep.subr.bf16.mxu0 %v8606
    %10928 = vmatpush1.bf16.msra.mxu0 %v8605
    %10929 = vmatprep.subr.bf16.mxu0 %v8612
    %10930 = vmatpush1.bf16.msra.mxu0 %v8611
    %10931 = vmatprep.subr.bf16.mxu0 %v8618
    %10932 = vmatpush1.bf16.msra.mxu0 %v8617
    %10933 = vmatprep.subr.bf16.mxu0 %v8624
    %10934 = vmatpush1.bf16.msra.mxu0 %v8623
    %10935 = vmatprep.subr.bf16.mxu0 %v8630
    %10936 = vmatpush1.bf16.msra.mxu0 %v8629
    %10937 = vmatprep.subr.bf16.mxu0 %v8636
    %10938 = vmatpush1.bf16.msra.mxu0 %v8635
    %10939 = vmatprep.subr.bf16.mxu0 %v8642
    %10940 = vmatpush1.bf16.msra.mxu0 %v8641
    %10941 = vmatprep.subr.bf16.mxu0 %v8648
    %10942 = vmatpush1.bf16.msra.mxu0 %v8647
    %10943 = vmatprep.subr.bf16.mxu0 %v8654
    %10944 = vmatpush1.bf16.msra.mxu0 %v8653
    %10945 = vmatprep.subr.bf16.mxu0 %v8660
    %10946 = vmatpush1.bf16.msra.mxu0 %v8659
    %10947 = vmatprep.subr.bf16.mxu0 %v8666
    %10948 = vmatpush1.bf16.msra.mxu0 %v8665
    %10949 = vmatprep.subr.bf16.mxu0 %v8672
    %10950 = vmatpush1.bf16.msra.mxu0 %v8671
    %10951 = vmatprep.subr.bf16.mxu0 %v8678
    %10952 = vmatpush1.bf16.msra.mxu0 %v8677
    %10953 = vmatprep.subr.bf16.mxu0 %v8684
    %10954 = vmatpush1.bf16.msra.mxu0 %v8683
    %10955 = vmatprep.subr.bf16.mxu0 %v8690
    %10956 = vmatpush1.bf16.msra.mxu0 %v8689
    %10957 = vmatprep.mubr.bf16.mxu0 %v2707
    %10958 = vmatmul.mubr.bf16.gmra.mrb[0].mxu0 %v2706
    %v10959 = vpop.f32.mrb[0].mxu0
    %v10960 = vadd.f32 %v10919, %v10959
    %v10961 = vpop.f32.mrb[0].mxu0
    %v10962 = vadd.f32 %v10921, %v10961
    %v10963 = vpop.f32.mrb[0].mxu0
    %v10964 = vpop.f32.mrb[0].mxu0
    %10965 = vdwg.mxu0
    %10966 = vmatprep.subr.bf16.mxu0 %v8696
    %10967 = vmatpush1.bf16.msra.mxu0 %v8695
    %10968 = vmatprep.subr.bf16.mxu0 %v8702
    %10969 = vmatpush1.bf16.msra.mxu0 %v8701
    %10970 = vmatprep.subr.bf16.mxu0 %v8708
    %10971 = vmatpush1.bf16.msra.mxu0 %v8707
    %10972 = vmatprep.subr.bf16.mxu0 %v8714
    %10973 = vmatpush1.bf16.msra.mxu0 %v8713
    %10974 = vmatprep.subr.bf16.mxu0 %v8720
    %10975 = vmatpush1.bf16.msra.mxu0 %v8719
    %10976 = vmatprep.subr.bf16.mxu0 %v8726
    %10977 = vmatpush1.bf16.msra.mxu0 %v8725
    %10978 = vmatprep.subr.bf16.mxu0 %v8732
    %10979 = vmatpush1.bf16.msra.mxu0 %v8731
    %10980 = vmatprep.subr.bf16.mxu0 %v8738
    %10981 = vmatpush1.bf16.msra.mxu0 %v8737
    %10982 = vmatprep.subr.bf16.mxu0 0
    %10983 = vmatpush1.bf16.msra.mxu0 0
    %10984 = vmatprep.subr.bf16.mxu0 0
    %10985 = vmatpush1.bf16.msra.mxu0 0
    %10986 = vmatprep.subr.bf16.mxu0 0
    %10987 = vmatpush1.bf16.msra.mxu0 0
    %10988 = vmatprep.subr.bf16.mxu0 0
    %10989 = vmatpush1.bf16.msra.mxu0 0
    %10990 = vmatprep.subr.bf16.mxu0 0
    %10991 = vmatpush1.bf16.msra.mxu0 0
    %10992 = vmatprep.subr.bf16.mxu0 0
    %10993 = vmatpush1.bf16.msra.mxu0 0
    %10994 = vmatprep.subr.bf16.mxu0 0
    %10995 = vmatpush1.bf16.msra.mxu0 0
    %10996 = vmatprep.subr.bf16.mxu0 0
    %10997 = vmatpush1.bf16.msra.mxu0 0
    %10998 = vmatprep.mubr.bf16.mxu0 0
    %10999 = vmatmul.mubr.bf16.gmra.mrb[0].mxu0 %v2708
    %v11000 = vpop.f32.mrb[0].mxu0
    %v11001 = vadd.f32 %v10960, %v11000
    %v11002 = vpop.f32.mrb[0].mxu0
    %v11003 = vadd.f32 %v10962, %v11002
    %v11004 = vpop.f32.mrb[0].mxu0
    %v11005 = vpop.f32.mrb[0].mxu0
    %11006 = vdwg.mxu0
    %11007 = vmatprep.subr.bf16.mxu0 %v7546
    %11008 = vmatpush1.bf16.msra.mxu0 %v7545
    %11009 = vmatprep.subr.bf16.mxu0 %v7552
    %11010 = vmatpush1.bf16.msra.mxu0 %v7551
    %11011 = vmatprep.subr.bf16.mxu0 %v7558
    %11012 = vmatpush1.bf16.msra.mxu0 %v7557
    %11013 = vmatprep.subr.bf16.mxu0 %v7564
    %11014 = vmatpush1.bf16.msra.mxu0 %v7563
    %11015 = vmatprep.subr.bf16.mxu0 %v7570
    %11016 = vmatpush1.bf16.msra.mxu0 %v7569
    %11017 = vmatprep.subr.bf16.mxu0 %v7576
    %11018 = vmatpush1.bf16.msra.mxu0 %v7575
    %11019 = vmatprep.subr.bf16.mxu0 %v7582
    %11020 = vmatpush1.bf16.msra.mxu0 %v7581
    %11021 = vmatprep.subr.bf16.mxu0 %v7588
    %11022 = vmatpush1.bf16.msra.mxu0 %v7587
    %11023 = vmatprep.subr.bf16.mxu0 %v7594
    %11024 = vmatpush1.bf16.msra.mxu0 %v7593
    %11025 = vmatprep.subr.bf16.mxu0 %v7600
    %11026 = vmatpush1.bf16.msra.mxu0 %v7599
    %11027 = vmatprep.subr.bf16.mxu0 %v7606
    %11028 = vmatpush1.bf16.msra.mxu0 %v7605
    %11029 = vmatprep.subr.bf16.mxu0 %v7612
    %11030 = vmatpush1.bf16.msra.mxu0 %v7611
    %11031 = vmatprep.subr.bf16.mxu0 %v7618
    %11032 = vmatpush1.bf16.msra.mxu0 %v7617
    %11033 = vmatprep.subr.bf16.mxu0 %v7624
    %11034 = vmatpush1.bf16.msra.mxu0 %v7623
    %11035 = vmatprep.subr.bf16.mxu0 %v7630
    %11036 = vmatpush1.bf16.msra.mxu0 %v7629
    %11037 = vmatprep.subr.bf16.mxu0 %v7636
    %11038 = vmatpush1.bf16.msra.mxu0 %v7635
    %11039 = vmatprep.mubr.bf16.mxu0 %v2685
    %11040 = vmatmul.mubr.bf16.gmra.mrb[0].mxu0 %v2684
    %v11041 = vpop.f32.mrb[0].mxu0
    %v11042 = vadd.f32 %v3930, %v11041
    %v11043 = vpop.f32.mrb[0].mxu0
    %v11044 = vadd.f32 %v3934, %v11043
    %v11045 = vpop.f32.mrb[0].mxu0
    %v11046 = vpop.f32.mrb[0].mxu0
    %11047 = vdwg.mxu0
    %11048 = vmatprep.subr.bf16.mxu0 %v7642
    %11049 = vmatpush1.bf16.msra.mxu0 %v7641
    %11050 = vmatprep.subr.bf16.mxu0 %v7648
    %11051 = vmatpush1.bf16.msra.mxu0 %v7647
    %11052 = vmatprep.subr.bf16.mxu0 %v7654
    %11053 = vmatpush1.bf16.msra.mxu0 %v7653
    %11054 = vmatprep.subr.bf16.mxu0 %v7660
    %11055 = vmatpush1.bf16.msra.mxu0 %v7659
    %11056 = vmatprep.subr.bf16.mxu0 %v7666
    %11057 = vmatpush1.bf16.msra.mxu0 %v7665
    %11058 = vmatprep.subr.bf16.mxu0 %v7672
    %11059 = vmatpush1.bf16.msra.mxu0 %v7671
    %11060 = vmatprep.subr.bf16.mxu0 %v7678
    %11061 = vmatpush1.bf16.msra.mxu0 %v7677
    %11062 = vmatprep.subr.bf16.mxu0 %v7684
    %11063 = vmatpush1.bf16.msra.mxu0 %v7683
    %11064 = vmatprep.subr.bf16.mxu0 %v7690
    %11065 = vmatpush1.bf16.msra.mxu0 %v7689
    %11066 = vmatprep.subr.bf16.mxu0 %v7696
    %11067 = vmatpush1.bf16.msra.mxu0 %v7695
    %11068 = vmatprep.subr.bf16.mxu0 %v7702
    %11069 = vmatpush1.bf16.msra.mxu0 %v7701
    %11070 = vmatprep.subr.bf16.mxu0 %v7708
    %11071 = vmatpush1.bf16.msra.mxu0 %v7707
    %11072 = vmatprep.subr.bf16.mxu0 %v7714
    %11073 = vmatpush1.bf16.msra.mxu0 %v7713
    %11074 = vmatprep.subr.bf16.mxu0 %v7720
    %11075 = vmatpush1.bf16.msra.mxu0 %v7719
    %11076 = vmatprep.subr.bf16.mxu0 %v7726
    %11077 = vmatpush1.bf16.msra.mxu0 %v7725
    %11078 = vmatprep.subr.bf16.mxu0 %v7732
    %11079 = vmatpush1.bf16.msra.mxu0 %v7731
    %11080 = vmatprep.mubr.bf16.mxu0 %v2687
    %11081 = vmatmul.mubr.bf16.gmra.mrb[0].mxu0 %v2686
    %v11082 = vpop.f32.mrb[0].mxu0
    %v11083 = vadd.f32 %v11042, %v11082
    %v11084 = vpop.f32.mrb[0].mxu0
    %v11085 = vadd.f32 %v11044, %v11084
    %v11086 = vpop.f32.mrb[0].mxu0
    %v11087 = vpop.f32.mrb[0].mxu0
    %11088 = vdwg.mxu0
    %11089 = vmatprep.subr.bf16.mxu0 %v7738
    %11090 = vmatpush1.bf16.msra.mxu0 %v7737
    %11091 = vmatprep.subr.bf16.mxu0 %v7744
    %11092 = vmatpush1.bf16.msra.mxu0 %v7743
    %11093 = vmatprep.subr.bf16.mxu0 %v7750
    %11094 = vmatpush1.bf16.msra.mxu0 %v7749
    %11095 = vmatprep.subr.bf16.mxu0 %v7756
    %11096 = vmatpush1.bf16.msra.mxu0 %v7755
    %11097 = vmatprep.subr.bf16.mxu0 %v7762
    %11098 = vmatpush1.bf16.msra.mxu0 %v7761
    %11099 = vmatprep.subr.bf16.mxu0 %v7768
    %11100 = vmatpush1.bf16.msra.mxu0 %v7767
    %11101 = vmatprep.subr.bf16.mxu0 %v7774
    %11102 = vmatpush1.bf16.msra.mxu0 %v7773
    %11103 = vmatprep.subr.bf16.mxu0 %v7780
    %11104 = vmatpush1.bf16.msra.mxu0 %v7779
    %11105 = vmatprep.subr.bf16.mxu0 %v7786
    %11106 = vmatpush1.bf16.msra.mxu0 %v7785
    %11107 = vmatprep.subr.bf16.mxu0 %v7792
    %11108 = vmatpush1.bf16.msra.mxu0 %v7791
    %11109 = vmatprep.subr.bf16.mxu0 %v7798
    %11110 = vmatpush1.bf16.msra.mxu0 %v7797
    %11111 = vmatprep.subr.bf16.mxu0 %v7804
    %11112 = vmatpush1.bf16.msra.mxu0 %v7803
    %11113 = vmatprep.subr.bf16.mxu0 %v7810
    %11114 = vmatpush1.bf16.msra.mxu0 %v7809
    %11115 = vmatprep.subr.bf16.mxu0 %v7816
    %11116 = vmatpush1.bf16.msra.mxu0 %v7815
    %11117 = vmatprep.subr.bf16.mxu0 %v7822
    %11118 = vmatpush1.bf16.msra.mxu0 %v7821
    %11119 = vmatprep.subr.bf16.mxu0 %v7828
    %11120 = vmatpush1.bf16.msra.mxu0 %v7827
    %11121 = vmatprep.mubr.bf16.mxu0 %v2689
    %11122 = vmatmul.mubr.bf16.gmra.mrb[0].mxu0 %v2688
    %v11123 = vpop.f32.mrb[0].mxu0
    %v11124 = vadd.f32 %v11083, %v11123
    %v11125 = vpop.f32.mrb[0].mxu0
    %v11126 = vadd.f32 %v11085, %v11125
    %v11127 = vpop.f32.mrb[0].mxu0
    %v11128 = vpop.f32.mrb[0].mxu0
    %11129 = vdwg.mxu0
    %11130 = vmatprep.subr.bf16.mxu0 %v7834
    %11131 = vmatpush1.bf16.msra.mxu0 %v7833
    %11132 = vmatprep.subr.bf16.mxu0 %v7840
    %11133 = vmatpush1.bf16.msra.mxu0 %v7839
    %11134 = vmatprep.subr.bf16.mxu0 %v7846
    %11135 = vmatpush1.bf16.msra.mxu0 %v7845
    %11136 = vmatprep.subr.bf16.mxu0 %v7852
    %11137 = vmatpush1.bf16.msra.mxu0 %v7851
    %11138 = vmatprep.subr.bf16.mxu0 %v7858
    %11139 = vmatpush1.bf16.msra.mxu0 %v7857
    %11140 = vmatprep.subr.bf16.mxu0 %v7864
    %11141 = vmatpush1.bf16.msra.mxu0 %v7863
    %11142 = vmatprep.subr.bf16.mxu0 %v7870
    %11143 = vmatpush1.bf16.msra.mxu0 %v7869
    %11144 = vmatprep.subr.bf16.mxu0 %v7876
    %11145 = vmatpush1.bf16.msra.mxu0 %v7875
    %11146 = vmatprep.subr.bf16.mxu0 %v7882
    %11147 = vmatpush1.bf16.msra.mxu0 %v7881
    %11148 = vmatprep.subr.bf16.mxu0 %v7888
    %11149 = vmatpush1.bf16.msra.mxu0 %v7887
    %11150 = vmatprep.subr.bf16.mxu0 %v7894
    %11151 = vmatpush1.bf16.msra.mxu0 %v7893
    %11152 = vmatprep.subr.bf16.mxu0 %v7900
    %11153 = vmatpush1.bf16.msra.mxu0 %v7899
    %11154 = vmatprep.subr.bf16.mxu0 %v7906
    %11155 = vmatpush1.bf16.msra.mxu0 %v7905
    %11156 = vmatprep.subr.bf16.mxu0 %v7912
    %11157 = vmatpush1.bf16.msra.mxu0 %v7911
    %11158 = vmatprep.subr.bf16.mxu0 %v7918
    %11159 = vmatpush1.bf16.msra.mxu0 %v7917
    %11160 = vmatprep.subr.bf16.mxu0 %v7924
    %11161 = vmatpush1.bf16.msra.mxu0 %v7923
    %11162 = vmatprep.mubr.bf16.mxu0 %v2691
    %11163 = vmatmul.mubr.bf16.gmra.mrb[0].mxu0 %v2690
    %v11164 = vpop.f32.mrb[0].mxu0
    %v11165 = vadd.f32 %v11124, %v11164
    %v11166 = vpop.f32.mrb[0].mxu0
    %v11167 = vadd.f32 %v11126, %v11166
    %v11168 = vpop.f32.mrb[0].mxu0
    %v11169 = vpop.f32.mrb[0].mxu0
    %11170 = vdwg.mxu0
    %11171 = vmatprep.subr.bf16.mxu0 %v7930
    %11172 = vmatpush1.bf16.msra.mxu0 %v7929
    %11173 = vmatprep.subr.bf16.mxu0 %v7936
    %11174 = vmatpush1.bf16.msra.mxu0 %v7935
    %11175 = vmatprep.subr.bf16.mxu0 %v7942
    %11176 = vmatpush1.bf16.msra.mxu0 %v7941
    %11177 = vmatprep.subr.bf16.mxu0 %v7948
    %11178 = vmatpush1.bf16.msra.mxu0 %v7947
    %11179 = vmatprep.subr.bf16.mxu0 %v7954
    %11180 = vmatpush1.bf16.msra.mxu0 %v7953
    %11181 = vmatprep.subr.bf16.mxu0 %v7960
    %11182 = vmatpush1.bf16.msra.mxu0 %v7959
    %11183 = vmatprep.subr.bf16.mxu0 %v7966
    %11184 = vmatpush1.bf16.msra.mxu0 %v7965
    %11185 = vmatprep.subr.bf16.mxu0 %v7972
    %11186 = vmatpush1.bf16.msra.mxu0 %v7971
    %11187 = vmatprep.subr.bf16.mxu0 %v7978
    %11188 = vmatpush1.bf16.msra.mxu0 %v7977
    %11189 = vmatprep.subr.bf16.mxu0 %v7984
    %11190 = vmatpush1.bf16.msra.mxu0 %v7983
    %11191 = vmatprep.subr.bf16.mxu0 %v7990
    %11192 = vmatpush1.bf16.msra.mxu0 %v7989
    %11193 = vmatprep.subr.bf16.mxu0 %v7996
    %11194 = vmatpush1.bf16.msra.mxu0 %v7995
    %11195 = vmatprep.subr.bf16.mxu0 %v8002
    %11196 = vmatpush1.bf16.msra.mxu0 %v8001
    %11197 = vmatprep.subr.bf16.mxu0 %v8008
    %11198 = vmatpush1.bf16.msra.mxu0 %v8007
    %11199 = vmatprep.subr.bf16.mxu0 %v8014
    %11200 = vmatpush1.bf16.msra.mxu0 %v8013
    %11201 = vmatprep.subr.bf16.mxu0 %v8020
    %11202 = vmatpush1.bf16.msra.mxu0 %v8019
    %11203 = vmatprep.mubr.bf16.mxu0 %v2693
    %11204 = vmatmul.mubr.bf16.gmra.mrb[0].mxu0 %v2692
    %v11205 = vpop.f32.mrb[0].mxu0
    %v11206 = vadd.f32 %v11165, %v11205
    %v11207 = vpop.f32.mrb[0].mxu0
    %v11208 = vadd.f32 %v11167, %v11207
    %v11209 = vpop.f32.mrb[0].mxu0
    %v11210 = vpop.f32.mrb[0].mxu0
    %11211 = vdwg.mxu0
    %11212 = vmatprep.subr.bf16.mxu0 %v8026
    %11213 = vmatpush1.bf16.msra.mxu0 %v8025
    %11214 = vmatprep.subr.bf16.mxu0 %v8032
    %11215 = vmatpush1.bf16.msra.mxu0 %v8031
    %11216 = vmatprep.subr.bf16.mxu0 %v8038
    %11217 = vmatpush1.bf16.msra.mxu0 %v8037
    %11218 = vmatprep.subr.bf16.mxu0 %v8044
    %11219 = vmatpush1.bf16.msra.mxu0 %v8043
    %11220 = vmatprep.subr.bf16.mxu0 %v8050
    %11221 = vmatpush1.bf16.msra.mxu0 %v8049
    %11222 = vmatprep.subr.bf16.mxu0 %v8056
    %11223 = vmatpush1.bf16.msra.mxu0 %v8055
    %11224 = vmatprep.subr.bf16.mxu0 %v8062
    %11225 = vmatpush1.bf16.msra.mxu0 %v8061
    %11226 = vmatprep.subr.bf16.mxu0 %v8068
    %11227 = vmatpush1.bf16.msra.mxu0 %v8067
    %11228 = vmatprep.subr.bf16.mxu0 %v8074
    %11229 = vmatpush1.bf16.msra.mxu0 %v8073
    %11230 = vmatprep.subr.bf16.mxu0 %v8080
    %11231 = vmatpush1.bf16.msra.mxu0 %v8079
    %11232 = vmatprep.subr.bf16.mxu0 %v8086
    %11233 = vmatpush1.bf16.msra.mxu0 %v8085
    %11234 = vmatprep.subr.bf16.mxu0 %v8092
    %11235 = vmatpush1.bf16.msra.mxu0 %v8091
    %11236 = vmatprep.subr.bf16.mxu0 %v8098
    %11237 = vmatpush1.bf16.msra.mxu0 %v8097
    %11238 = vmatprep.subr.bf16.mxu0 %v8104
    %11239 = vmatpush1.bf16.msra.mxu0 %v8103
    %11240 = vmatprep.subr.bf16.mxu0 %v8110
    %11241 = vmatpush1.bf16.msra.mxu0 %v8109
    %11242 = vmatprep.subr.bf16.mxu0 %v8116
    %11243 = vmatpush1.bf16.msra.mxu0 %v8115
    %11244 = vmatprep.mubr.bf16.mxu0 %v2695
    %11245 = vmatmul.mubr.bf16.gmra.mrb[0].mxu0 %v2694
    %v11246 = vpop.f32.mrb[0].mxu0
    %v11247 = vadd.f32 %v11206, %v11246
    %v11248 = vpop.f32.mrb[0].mxu0
    %v11249 = vadd.f32 %v11208, %v11248
    %v11250 = vpop.f32.mrb[0].mxu0
    %v11251 = vpop.f32.mrb[0].mxu0
    %11252 = vdwg.mxu0
    %11253 = vmatprep.subr.bf16.mxu0 %v8122
    %11254 = vmatpush1.bf16.msra.mxu0 %v8121
    %11255 = vmatprep.subr.bf16.mxu0 %v8128
    %11256 = vmatpush1.bf16.msra.mxu0 %v8127
    %11257 = vmatprep.subr.bf16.mxu0 %v8134
    %11258 = vmatpush1.bf16.msra.mxu0 %v8133
    %11259 = vmatprep.subr.bf16.mxu0 %v8140
    %11260 = vmatpush1.bf16.msra.mxu0 %v8139
    %11261 = vmatprep.subr.bf16.mxu0 %v8146
    %11262 = vmatpush1.bf16.msra.mxu0 %v8145
    %11263 = vmatprep.subr.bf16.mxu0 %v8152
    %11264 = vmatpush1.bf16.msra.mxu0 %v8151
    %11265 = vmatprep.subr.bf16.mxu0 %v8158
    %11266 = vmatpush1.bf16.msra.mxu0 %v8157
    %11267 = vmatprep.subr.bf16.mxu0 %v8164
    %11268 = vmatpush1.bf16.msra.mxu0 %v8163
    %11269 = vmatprep.subr.bf16.mxu0 %v8170
    %11270 = vmatpush1.bf16.msra.mxu0 %v8169
    %11271 = vmatprep.subr.bf16.mxu0 %v8176
    %11272 = vmatpush1.bf16.msra.mxu0 %v8175
    %11273 = vmatprep.subr.bf16.mxu0 %v8182
    %11274 = vmatpush1.bf16.msra.mxu0 %v8181
    %11275 = vmatprep.subr.bf16.mxu0 %v8188
    %11276 = vmatpush1.bf16.msra.mxu0 %v8187
    %11277 = vmatprep.subr.bf16.mxu0 %v8194
    %11278 = vmatpush1.bf16.msra.mxu0 %v8193
    %11279 = vmatprep.subr.bf16.mxu0 %v8200
    %11280 = vmatpush1.bf16.msra.mxu0 %v8199
    %11281 = vmatprep.subr.bf16.mxu0 %v8206
    %11282 = vmatpush1.bf16.msra.mxu0 %v8205
    %11283 = vmatprep.subr.bf16.mxu0 %v8212
    %11284 = vmatpush1.bf16.msra.mxu0 %v8211
    %11285 = vmatprep.mubr.bf16.mxu0 %v2697
    %11286 = vmatmul.mubr.bf16.gmra.mrb[0].mxu0 %v2696
    %v11287 = vpop.f32.mrb[0].mxu0
    %v11288 = vadd.f32 %v11247, %v11287
    %v11289 = vpop.f32.mrb[0].mxu0
    %v11290 = vadd.f32 %v11249, %v11289
    %v11291 = vpop.f32.mrb[0].mxu0
    %v11292 = vpop.f32.mrb[0].mxu0
    %11293 = vdwg.mxu0
    %11294 = vmatprep.subr.bf16.mxu0 %v8218
    %11295 = vmatpush1.bf16.msra.mxu0 %v8217
    %11296 = vmatprep.subr.bf16.mxu0 %v8224
    %11297 = vmatpush1.bf16.msra.mxu0 %v8223
    %11298 = vmatprep.subr.bf16.mxu0 %v8230
    %11299 = vmatpush1.bf16.msra.mxu0 %v8229
    %11300 = vmatprep.subr.bf16.mxu0 %v8236
    %11301 = vmatpush1.bf16.msra.mxu0 %v8235
    %11302 = vmatprep.subr.bf16.mxu0 %v8242
    %11303 = vmatpush1.bf16.msra.mxu0 %v8241
    %11304 = vmatprep.subr.bf16.mxu0 %v8248
    %11305 = vmatpush1.bf16.msra.mxu0 %v8247
    %11306 = vmatprep.subr.bf16.mxu0 %v8254
    %11307 = vmatpush1.bf16.msra.mxu0 %v8253
    %11308 = vmatprep.subr.bf16.mxu0 %v8260
    %11309 = vmatpush1.bf16.msra.mxu0 %v8259
    %11310 = vmatprep.subr.bf16.mxu0 %v8266
    %11311 = vmatpush1.bf16.msra.mxu0 %v8265
    %11312 = vmatprep.subr.bf16.mxu0 %v8272
    %11313 = vmatpush1.bf16.msra.mxu0 %v8271
    %11314 = vmatprep.subr.bf16.mxu0 %v8278
    %11315 = vmatpush1.bf16.msra.mxu0 %v8277
    %11316 = vmatprep.subr.bf16.mxu0 %v8284
    %11317 = vmatpush1.bf16.msra.mxu0 %v8283
    %11318 = vmatprep.subr.bf16.mxu0 %v8290
    %11319 = vmatpush1.bf16.msra.mxu0 %v8289
    %11320 = vmatprep.subr.bf16.mxu0 %v8296
    %11321 = vmatpush1.bf16.msra.mxu0 %v8295
    %11322 = vmatprep.subr.bf16.mxu0 %v8302
    %11323 = vmatpush1.bf16.msra.mxu0 %v8301
    %11324 = vmatprep.subr.bf16.mxu0 %v8308
    %11325 = vmatpush1.bf16.msra.mxu0 %v8307
    %11326 = vmatprep.mubr.bf16.mxu0 %v2699
    %11327 = vmatmul.mubr.bf16.gmra.mrb[0].mxu0 %v2698
    %v11328 = vpop.f32.mrb[0].mxu0
    %v11329 = vadd.f32 %v11288, %v11328
    %v11330 = vpop.f32.mrb[0].mxu0
    %v11331 = vadd.f32 %v11290, %v11330
    %v11332 = vpop.f32.mrb[0].mxu0
    %v11333 = vpop.f32.mrb[0].mxu0
    %11334 = vdwg.mxu0
    %11335 = vmatprep.subr.bf16.mxu0 %v8314
    %11336 = vmatpush1.bf16.msra.mxu0 %v8313
    %11337 = vmatprep.subr.bf16.mxu0 %v8320
    %11338 = vmatpush1.bf16.msra.mxu0 %v8319
    %11339 = vmatprep.subr.bf16.mxu0 %v8326
    %11340 = vmatpush1.bf16.msra.mxu0 %v8325
    %11341 = vmatprep.subr.bf16.mxu0 %v8332
    %11342 = vmatpush1.bf16.msra.mxu0 %v8331
    %11343 = vmatprep.subr.bf16.mxu0 %v8338
    %11344 = vmatpush1.bf16.msra.mxu0 %v8337
    %11345 = vmatprep.subr.bf16.mxu0 %v8344
    %11346 = vmatpush1.bf16.msra.mxu0 %v8343
    %11347 = vmatprep.subr.bf16.mxu0 %v8350
    %11348 = vmatpush1.bf16.msra.mxu0 %v8349
    %11349 = vmatprep.subr.bf16.mxu0 %v8356
    %11350 = vmatpush1.bf16.msra.mxu0 %v8355
    %11351 = vmatprep.subr.bf16.mxu0 %v8362
    %11352 = vmatpush1.bf16.msra.mxu0 %v8361
    %11353 = vmatprep.subr.bf16.mxu0 %v8368
    %11354 = vmatpush1.bf16.msra.mxu0 %v8367
    %11355 = vmatprep.subr.bf16.mxu0 %v8374
    %11356 = vmatpush1.bf16.msra.mxu0 %v8373
    %11357 = vmatprep.subr.bf16.mxu0 %v8380
    %11358 = vmatpush1.bf16.msra.mxu0 %v8379
    %11359 = vmatprep.subr.bf16.mxu0 %v8386
    %11360 = vmatpush1.bf16.msra.mxu0 %v8385
    %11361 = vmatprep.subr.bf16.mxu0 %v8392
    %11362 = vmatpush1.bf16.msra.mxu0 %v8391
    %11363 = vmatprep.subr.bf16.mxu0 %v8398
    %11364 = vmatpush1.bf16.msra.mxu0 %v8397
    %11365 = vmatprep.subr.bf16.mxu0 %v8404
    %11366 = vmatpush1.bf16.msra.mxu0 %v8403
    %11367 = vmatprep.mubr.bf16.mxu0 %v2701
    %11368 = vmatmul.mubr.bf16.gmra.mrb[0].mxu0 %v2700
    %v11369 = vpop.f32.mrb[0].mxu0
    %v11370 = vadd.f32 %v11329, %v11369
    %v11371 = vpop.f32.mrb[0].mxu0
    %v11372 = vadd.f32 %v11331, %v11371
    %v11373 = vpop.f32.mrb[0].mxu0
    %v11374 = vpop.f32.mrb[0].mxu0
    %11375 = vdwg.mxu0
    %11376 = vmatprep.subr.bf16.mxu0 %v8410
    %11377 = vmatpush1.bf16.msra.mxu0 %v8409
    %11378 = vmatprep.subr.bf16.mxu0 %v8416
    %11379 = vmatpush1.bf16.msra.mxu0 %v8415
    %11380 = vmatprep.subr.bf16.mxu0 %v8422
    %11381 = vmatpush1.bf16.msra.mxu0 %v8421
    %11382 = vmatprep.subr.bf16.mxu0 %v8428
    %11383 = vmatpush1.bf16.msra.mxu0 %v8427
    %11384 = vmatprep.subr.bf16.mxu0 %v8434
    %11385 = vmatpush1.bf16.msra.mxu0 %v8433
    %11386 = vmatprep.subr.bf16.mxu0 %v8440
    %11387 = vmatpush1.bf16.msra.mxu0 %v8439
    %11388 = vmatprep.subr.bf16.mxu0 %v8446
    %11389 = vmatpush1.bf16.msra.mxu0 %v8445
    %11390 = vmatprep.subr.bf16.mxu0 %v8452
    %11391 = vmatpush1.bf16.msra.mxu0 %v8451
    %11392 = vmatprep.subr.bf16.mxu0 %v8458
    %11393 = vmatpush1.bf16.msra.mxu0 %v8457
    %11394 = vmatprep.subr.bf16.mxu0 %v8464
    %11395 = vmatpush1.bf16.msra.mxu0 %v8463
    %11396 = vmatprep.subr.bf16.mxu0 %v8470
    %11397 = vmatpush1.bf16.msra.mxu0 %v8469
    %11398 = vmatprep.subr.bf16.mxu0 %v8476
    %11399 = vmatpush1.bf16.msra.mxu0 %v8475
    %11400 = vmatprep.subr.bf16.mxu0 %v8482
    %11401 = vmatpush1.bf16.msra.mxu0 %v8481
    %11402 = vmatprep.subr.bf16.mxu0 %v8488
    %11403 = vmatpush1.bf16.msra.mxu0 %v8487
    %11404 = vmatprep.subr.bf16.mxu0 %v8494
    %11405 = vmatpush1.bf16.msra.mxu0 %v8493
    %11406 = vmatprep.subr.bf16.mxu0 %v8500
    %11407 = vmatpush1.bf16.msra.mxu0 %v8499
    %11408 = vmatprep.mubr.bf16.mxu0 %v2703
    %11409 = vmatmul.mubr.bf16.gmra.mrb[0].mxu0 %v2702
    %v11410 = vpop.f32.mrb[0].mxu0
    %v11411 = vadd.f32 %v11370, %v11410
    %v11412 = vpop.f32.mrb[0].mxu0
    %v11413 = vadd.f32 %v11372, %v11412
    %v11414 = vpop.f32.mrb[0].mxu0
    %v11415 = vpop.f32.mrb[0].mxu0
    %11416 = vdwg.mxu0
    %11417 = vmatprep.subr.bf16.mxu0 %v8506
    %11418 = vmatpush1.bf16.msra.mxu0 %v8505
    %11419 = vmatprep.subr.bf16.mxu0 %v8512
    %11420 = vmatpush1.bf16.msra.mxu0 %v8511
    %11421 = vmatprep.subr.bf16.mxu0 %v8518
    %11422 = vmatpush1.bf16.msra.mxu0 %v8517
    %11423 = vmatprep.subr.bf16.mxu0 %v8524
    %11424 = vmatpush1.bf16.msra.mxu0 %v8523
    %11425 = vmatprep.subr.bf16.mxu0 %v8530
    %11426 = vmatpush1.bf16.msra.mxu0 %v8529
    %11427 = vmatprep.subr.bf16.mxu0 %v8536
    %11428 = vmatpush1.bf16.msra.mxu0 %v8535
    %11429 = vmatprep.subr.bf16.mxu0 %v8542
    %11430 = vmatpush1.bf16.msra.mxu0 %v8541
    %11431 = vmatprep.subr.bf16.mxu0 %v8548
    %11432 = vmatpush1.bf16.msra.mxu0 %v8547
    %11433 = vmatprep.subr.bf16.mxu0 %v8554
    %11434 = vmatpush1.bf16.msra.mxu0 %v8553
    %11435 = vmatprep.subr.bf16.mxu0 %v8560
    %11436 = vmatpush1.bf16.msra.mxu0 %v8559
    %11437 = vmatprep.subr.bf16.mxu0 %v8566
    %11438 = vmatpush1.bf16.msra.mxu0 %v8565
    %11439 = vmatprep.subr.bf16.mxu0 %v8572
    %11440 = vmatpush1.bf16.msra.mxu0 %v8571
    %11441 = vmatprep.subr.bf16.mxu0 %v8578
    %11442 = vmatpush1.bf16.msra.mxu0 %v8577
    %11443 = vmatprep.subr.bf16.mxu0 %v8584
    %11444 = vmatpush1.bf16.msra.mxu0 %v8583
    %11445 = vmatprep.subr.bf16.mxu0 %v8590
    %11446 = vmatpush1.bf16.msra.mxu0 %v8589
    %11447 = vmatprep.subr.bf16.mxu0 %v8596
    %11448 = vmatpush1.bf16.msra.mxu0 %v8595
    %11449 = vmatprep.mubr.bf16.mxu0 %v2705
    %11450 = vmatmul.mubr.bf16.gmra.mrb[0].mxu0 %v2704
    %v11451 = vpop.f32.mrb[0].mxu0
    %v11452 = vadd.f32 %v11411, %v11451
    %v11453 = vpop.f32.mrb[0].mxu0
    %v11454 = vadd.f32 %v11413, %v11453
    %v11455 = vpop.f32.mrb[0].mxu0
    %v11456 = vpop.f32.mrb[0].mxu0
    %11457 = vdwg.mxu0
    %11458 = vmatprep.subr.bf16.mxu0 %v8602
    %11459 = vmatpush1.bf16.msra.mxu0 %v8601
    %11460 = vmatprep.subr.bf16.mxu0 %v8608
    %11461 = vmatpush1.bf16.msra.mxu0 %v8607
    %11462 = vmatprep.subr.bf16.mxu0 %v8614
    %11463 = vmatpush1.bf16.msra.mxu0 %v8613
    %11464 = vmatprep.subr.bf16.mxu0 %v8620
    %11465 = vmatpush1.bf16.msra.mxu0 %v8619
    %11466 = vmatprep.subr.bf16.mxu0 %v8626
    %11467 = vmatpush1.bf16.msra.mxu0 %v8625
    %11468 = vmatprep.subr.bf16.mxu0 %v8632
    %11469 = vmatpush1.bf16.msra.mxu0 %v8631
    %11470 = vmatprep.subr.bf16.mxu0 %v8638
    %11471 = vmatpush1.bf16.msra.mxu0 %v8637
    %11472 = vmatprep.subr.bf16.mxu0 %v8644
    %11473 = vmatpush1.bf16.msra.mxu0 %v8643
    %11474 = vmatprep.subr.bf16.mxu0 %v8650
    %11475 = vmatpush1.bf16.msra.mxu0 %v8649
    %11476 = vmatprep.subr.bf16.mxu0 %v8656
    %11477 = vmatpush1.bf16.msra.mxu0 %v8655
    %11478 = vmatprep.subr.bf16.mxu0 %v8662
    %11479 = vmatpush1.bf16.msra.mxu0 %v8661
    %11480 = vmatprep.subr.bf16.mxu0 %v8668
    %11481 = vmatpush1.bf16.msra.mxu0 %v8667
    %11482 = vmatprep.subr.bf16.mxu0 %v8674
    %11483 = vmatpush1.bf16.msra.mxu0 %v8673
    %11484 = vmatprep.subr.bf16.mxu0 %v8680
    %11485 = vmatpush1.bf16.msra.mxu0 %v8679
    %11486 = vmatprep.subr.bf16.mxu0 %v8686
    %11487 = vmatpush1.bf16.msra.mxu0 %v8685
    %11488 = vmatprep.subr.bf16.mxu0 %v8692
    %11489 = vmatpush1.bf16.msra.mxu0 %v8691
    %11490 = vmatprep.mubr.bf16.mxu0 %v2707
    %11491 = vmatmul.mubr.bf16.gmra.mrb[0].mxu0 %v2706
    %v11492 = vpop.f32.mrb[0].mxu0
    %v11493 = vadd.f32 %v11452, %v11492
    %v11494 = vpop.f32.mrb[0].mxu0
    %v11495 = vadd.f32 %v11454, %v11494
    %v11496 = vpop.f32.mrb[0].mxu0
    %v11497 = vpop.f32.mrb[0].mxu0
    %11498 = vdwg.mxu0
    %11499 = vmatprep.subr.bf16.mxu0 %v8698
    %11500 = vmatpush1.bf16.msra.mxu0 %v8697
    %11501 = vmatprep.subr.bf16.mxu0 %v8704
    %11502 = vmatpush1.bf16.msra.mxu0 %v8703
    %11503 = vmatprep.subr.bf16.mxu0 %v8710
    %11504 = vmatpush1.bf16.msra.mxu0 %v8709
    %11505 = vmatprep.subr.bf16.mxu0 %v8716
    %11506 = vmatpush1.bf16.msra.mxu0 %v8715
    %11507 = vmatprep.subr.bf16.mxu0 %v8722
    %11508 = vmatpush1.bf16.msra.mxu0 %v8721
    %11509 = vmatprep.subr.bf16.mxu0 %v8728
    %11510 = vmatpush1.bf16.msra.mxu0 %v8727
    %11511 = vmatprep.subr.bf16.mxu0 %v8734
    %11512 = vmatpush1.bf16.msra.mxu0 %v8733
    %11513 = vmatprep.subr.bf16.mxu0 %v8740
    %11514 = vmatpush1.bf16.msra.mxu0 %v8739
    %11515 = vmatprep.subr.bf16.mxu0 0
    %11516 = vmatpush1.bf16.msra.mxu0 0
    %11517 = vmatprep.subr.bf16.mxu0 0
    %11518 = vmatpush1.bf16.msra.mxu0 0
    %11519 = vmatprep.subr.bf16.mxu0 0
    %11520 = vmatpush1.bf16.msra.mxu0 0
    %11521 = vmatprep.subr.bf16.mxu0 0
    %11522 = vmatpush1.bf16.msra.mxu0 0
    %11523 = vmatprep.subr.bf16.mxu0 0
    %11524 = vmatpush1.bf16.msra.mxu0 0
    %11525 = vmatprep.subr.bf16.mxu0 0
    %11526 = vmatpush1.bf16.msra.mxu0 0
    %11527 = vmatprep.subr.bf16.mxu0 0
    %11528 = vmatpush1.bf16.msra.mxu0 0
    %11529 = vmatprep.subr.bf16.mxu0 0
    %11530 = vmatpush1.bf16.msra.mxu0 0
    %11531 = vmatprep.mubr.bf16.mxu0 0
    %11532 = vmatmul.mubr.bf16.gmra.mrb[0].mxu0 %v2708
    %v11533 = vpop.f32.mrb[0].mxu0
    %v11534 = vadd.f32 %v11493, %v11533
    %v11535 = vpop.f32.mrb[0].mxu0
    %v11536 = vadd.f32 %v11495, %v11535
    %v11537 = vpop.f32.mrb[0].mxu0
    %v11538 = vpop.f32.mrb[0].mxu0
    %11539 = vdwg.mxu0
    %v11540 = vmax.f32 %v10468, 0.0
    %v11541 = vmax.f32 %v10470, 0.0
    %v11542 = vmax.f32 %v11001, 0.0
    %v11543 = vmax.f32 %v11003, 0.0
    %v11544 = vmax.f32 %v11534, 0.0
    %v11545 = vmax.f32 %v11536, 0.0
    %v11546 = vpack.c.bf16 %v11540, %v11540
    %v11547 = vpack.c.bf16 %v11541, %v11541
    %v11548 = vpack.c.bf16 %v11542, %v11542
    %v11549 = vpack.c.bf16 %v11543, %v11543
    %v11550 = vpack.c.bf16 %v11544, %v11544
    %v11551 = vpack.c.bf16 %v11545, %v11545
    %v11552 = vld [vmem:[#allocation10] sm:$0xf]
    %v11553 = vld [vmem:[#allocation10 + $0x4] sm:$0xf]
    %v11554 = vld [vmem:[#allocation10 + $0x8] sm:$0xf]
    %v11555 = vld [vmem:[#allocation10 + $0xc] sm:$0xf]
    %v11556 = vld [vmem:[#allocation10 + $0x10] sm:$0xf]
    %v11557 = vld [vmem:[#allocation10 + $0x14] sm:$0xf]
    %v11558 = vld [vmem:[#allocation10 + $0x18] sm:$0xf]
    %v11559 = vld [vmem:[#allocation10 + $0x1c] sm:$0xf]
    %v11560 = vld [vmem:[#allocation10 + $0x20] sm:$0xf]
    %v11561 = vld [vmem:[#allocation10 + $0x24] sm:$0xf]
    %v11562 = vld [vmem:[#allocation10 + $0x28] sm:$0xf]
    %v11563 = vld [vmem:[#allocation10 + $0x2c] sm:$0xf]
    %v11564 = vld [vmem:[#allocation10 + $0x30] sm:$0xf]
    %v11565 = vld [vmem:[#allocation10 + $0x34] sm:$0xf]
    %v11566 = vld [vmem:[#allocation10 + $0x38] sm:$0xf]
    %v11567 = vld [vmem:[#allocation10 + $0x3c] sm:$0xf]
    %v11568 = vld [vmem:[#allocation10 + $0x40] sm:$0xf]
    %v11569 = vld [vmem:[#allocation10 + $0x44] sm:$0xf]
    %v11570 = vld [vmem:[#allocation10 + $0x48] sm:$0xf]
    %v11571 = vld [vmem:[#allocation10 + $0x4c] sm:$0xf]
    %v11572 = vld [vmem:[#allocation10 + $0x50] sm:$0xf]
    %v11573 = vld [vmem:[#allocation10 + $0x54] sm:$0xf]
    %v11574 = vld [vmem:[#allocation10 + $0x58] sm:$0xf]
    %v11575 = vld [vmem:[#allocation10 + $0x5c] sm:$0xf]
    %v11576 = vld [vmem:[#allocation10 + $0x60] sm:$0xf]
    %v11577 = vld [vmem:[#allocation10 + $0x64] sm:$0xf]
    %v11578 = vld [vmem:[#allocation10 + $0x68] sm:$0xf]
    %v11579 = vld [vmem:[#allocation10 + $0x6c] sm:$0xf]
    %v11580 = vld [vmem:[#allocation10 + $0x70] sm:$0xf]
    %v11581 = vld [vmem:[#allocation10 + $0x74] sm:$0xf]
    %v11582 = vld [vmem:[#allocation10 + $0x78] sm:$0xf]
    %v11583 = vld [vmem:[#allocation10 + $0x7c] sm:$0xf]
    %v11584 = vld [vmem:[#allocation10 + $0x80] sm:$0xf]
    %v11585 = vld [vmem:[#allocation10 + $0x84] sm:$0xf]
    %v11586 = vld [vmem:[#allocation10 + $0x88] sm:$0xf]
    %v11587 = vld [vmem:[#allocation10 + $0x8c] sm:$0xf]
    %v11588 = vld [vmem:[#allocation10 + $0x90] sm:$0xf]
    %v11589 = vld [vmem:[#allocation10 + $0x94] sm:$0xf]
    %v11590 = vld [vmem:[#allocation10 + $0x98] sm:$0xf]
    %v11591 = vld [vmem:[#allocation10 + $0x9c] sm:$0xf]
    %v11592 = vld [vmem:[#allocation10 + $0xa0] sm:$0xf]
    %v11593 = vld [vmem:[#allocation10 + $0xa4] sm:$0xf]
    %v11594 = vld [vmem:[#allocation10 + $0xa8] sm:$0xf]
    %v11595 = vld [vmem:[#allocation10 + $0xac] sm:$0xf]
    %v11596 = vld [vmem:[#allocation10 + $0xb0] sm:$0xf]
    %v11597 = vld [vmem:[#allocation10 + $0xb4] sm:$0xf]
    %v11598 = vld [vmem:[#allocation10 + $0xb8] sm:$0xf]
    %v11599 = vld [vmem:[#allocation10 + $0xbc] sm:$0xf]
    %v11600 = vld [vmem:[#allocation10 + $0xc0] sm:$0xf]
    %v11601 = vld [vmem:[#allocation10 + $0xc4] sm:$0xf]
    %v11602 = vld [vmem:[#allocation10 + $0xc8] sm:$0xf]
    %v11603 = vld [vmem:[#allocation10 + $0xcc] sm:$0xf]
    %v11604 = vld [vmem:[#allocation10 + $0xd0] sm:$0xf]
    %v11605 = vld [vmem:[#allocation10 + $0xd4] sm:$0xf]
    %v11606 = vld [vmem:[#allocation10 + $0xd8] sm:$0xf]
    %v11607 = vld [vmem:[#allocation10 + $0xdc] sm:$0xf]
    %v11608 = vld [vmem:[#allocation10 + $0xe0] sm:$0xf]
    %v11609 = vld [vmem:[#allocation10 + $0xe4] sm:$0xf]
    %v11610 = vld [vmem:[#allocation10 + $0xe8] sm:$0xf]
    %v11611 = vld [vmem:[#allocation10 + $0xec] sm:$0xf]
    %v11612 = vld [vmem:[#allocation10 + $0xf0] sm:$0xf]
    %v11613 = vld [vmem:[#allocation10 + $0xf4] sm:$0xf]
    %v11614 = vld [vmem:[#allocation10 + $0xf8] sm:$0xf]
    %v11615 = vld [vmem:[#allocation10 + $0xfc] sm:$0xf]
    %v11616 = vld [vmem:[#allocation10 + $0x100] sm:$0xf]
    %v11617 = vld [vmem:[#allocation10 + $0x104] sm:$0xf]
    %v11618 = vld [vmem:[#allocation10 + $0x108] sm:$0xf]
    %v11619 = vld [vmem:[#allocation10 + $0x10c] sm:$0xf]
    %v11620 = vld [vmem:[#allocation10 + $0x110] sm:$0xf]
    %v11621 = vld [vmem:[#allocation10 + $0x114] sm:$0xf]
    %v11622 = vld [vmem:[#allocation10 + $0x118] sm:$0xf]
    %v11623 = vld [vmem:[#allocation10 + $0x11c] sm:$0xf]
    %v11624 = vld [vmem:[#allocation10 + $0x120] sm:$0xf]
    %v11625 = vld [vmem:[#allocation10 + $0x124] sm:$0xf]
    %v11626 = vld [vmem:[#allocation10 + $0x128] sm:$0xf]
    %v11627 = vld [vmem:[#allocation10 + $0x12c] sm:$0xf]
    %v11628 = vld [vmem:[#allocation10 + $0x130] sm:$0xf]
    %v11629 = vld [vmem:[#allocation10 + $0x134] sm:$0xf]
    %v11630 = vld [vmem:[#allocation10 + $0x138] sm:$0xf]
    %v11631 = vld [vmem:[#allocation10 + $0x13c] sm:$0xf]
    %v11632 = vld [vmem:[#allocation10 + $0x140] sm:$0xf]
    %v11633 = vld [vmem:[#allocation10 + $0x144] sm:$0xf]
    %v11634 = vld [vmem:[#allocation10 + $0x148] sm:$0xf]
    %v11635 = vld [vmem:[#allocation10 + $0x14c] sm:$0xf]
    %v11636 = vld [vmem:[#allocation10 + $0x150] sm:$0xf]
    %v11637 = vld [vmem:[#allocation10 + $0x154] sm:$0xf]
    %v11638 = vld [vmem:[#allocation10 + $0x158] sm:$0xf]
    %v11639 = vld [vmem:[#allocation10 + $0x15c] sm:$0xf]
    %v11640 = vld [vmem:[#allocation10 + $0x160] sm:$0xf]
    %v11641 = vld [vmem:[#allocation10 + $0x164] sm:$0xf]
    %v11642 = vld [vmem:[#allocation10 + $0x168] sm:$0xf]
    %v11643 = vld [vmem:[#allocation10 + $0x16c] sm:$0xf]
    %v11644 = vld [vmem:[#allocation10 + $0x170] sm:$0xf]
    %v11645 = vld [vmem:[#allocation10 + $0x174] sm:$0xf]
    %v11646 = vld [vmem:[#allocation10 + $0x178] sm:$0xf]
    %v11647 = vld [vmem:[#allocation10 + $0x17c] sm:$0xf]
    %v11648 = vld [vmem:[#allocation12] sm:$0x1]
    %v11650 = vlaneseq
    %v11651 = vshrl.u32 %v11650, 7
    %v11652 = vsub.s32 0, %v11651
    %v11653 = vrot.slane %v11648, %v11652
    %v11751 = vunpack.c.l.b16 %v11552
    %v11752 = vunpack.c.l.b16 %v11553
    %v11753 = vunpack.c.l.b16 %v11554
    %v11754 = vunpack.c.l.b16 %v11555
    %v11755 = vunpack.c.l.b16 %v11556
    %v11756 = vunpack.c.l.b16 %v11557
    %v11757 = vunpack.c.l.b16 %v11558
    %v11758 = vunpack.c.l.b16 %v11559
    %v11759 = vunpack.c.l.b16 %v11560
    %v11760 = vunpack.c.l.b16 %v11561
    %v11761 = vunpack.c.l.b16 %v11562
    %v11762 = vunpack.c.l.b16 %v11563
    %v11763 = vunpack.c.l.b16 %v11564
    %v11764 = vunpack.c.l.b16 %v11565
    %v11765 = vunpack.c.l.b16 %v11566
    %v11766 = vunpack.c.l.b16 %v11567
    %v11767 = vunpack.c.l.b16 %v11568
    %v11768 = vunpack.c.l.b16 %v11569
    %v11769 = vunpack.c.l.b16 %v11570
    %v11770 = vunpack.c.l.b16 %v11571
    %v11771 = vunpack.c.l.b16 %v11572
    %v11772 = vunpack.c.l.b16 %v11573
    %v11773 = vunpack.c.l.b16 %v11574
    %v11774 = vunpack.c.l.b16 %v11575
    %v11775 = vunpack.c.l.b16 %v11576
    %v11776 = vunpack.c.l.b16 %v11577
    %v11777 = vunpack.c.l.b16 %v11578
    %v11778 = vunpack.c.l.b16 %v11579
    %v11779 = vunpack.c.l.b16 %v11580
    %v11780 = vunpack.c.l.b16 %v11581
    %v11781 = vunpack.c.l.b16 %v11582
    %v11782 = vunpack.c.l.b16 %v11583
    %v11783 = vunpack.c.l.b16 %v11584
    %v11784 = vunpack.c.l.b16 %v11585
    %v11785 = vunpack.c.l.b16 %v11586
    %v11786 = vunpack.c.l.b16 %v11587
    %v11787 = vunpack.c.l.b16 %v11588
    %v11788 = vunpack.c.l.b16 %v11589
    %v11789 = vunpack.c.l.b16 %v11590
    %v11790 = vunpack.c.l.b16 %v11591
    %v11791 = vunpack.c.l.b16 %v11592
    %v11792 = vunpack.c.l.b16 %v11593
    %v11793 = vunpack.c.l.b16 %v11594
    %v11794 = vunpack.c.l.b16 %v11595
    %v11795 = vunpack.c.l.b16 %v11596
    %v11796 = vunpack.c.l.b16 %v11597
    %v11797 = vunpack.c.l.b16 %v11598
    %v11798 = vunpack.c.l.b16 %v11599
    %v11799 = vunpack.c.l.b16 %v11600
    %v11800 = vunpack.c.l.b16 %v11601
    %v11801 = vunpack.c.l.b16 %v11602
    %v11802 = vunpack.c.l.b16 %v11603
    %v11803 = vunpack.c.l.b16 %v11604
    %v11804 = vunpack.c.l.b16 %v11605
    %v11805 = vunpack.c.l.b16 %v11606
    %v11806 = vunpack.c.l.b16 %v11607
    %v11807 = vunpack.c.l.b16 %v11608
    %v11808 = vunpack.c.l.b16 %v11609
    %v11809 = vunpack.c.l.b16 %v11610
    %v11810 = vunpack.c.l.b16 %v11611
    %v11811 = vunpack.c.l.b16 %v11612
    %v11812 = vunpack.c.l.b16 %v11613
    %v11813 = vunpack.c.l.b16 %v11614
    %v11814 = vunpack.c.l.b16 %v11615
    %v11815 = vunpack.c.l.b16 %v11616
    %v11816 = vunpack.c.l.b16 %v11617
    %v11817 = vunpack.c.l.b16 %v11618
    %v11818 = vunpack.c.l.b16 %v11619
    %v11819 = vunpack.c.l.b16 %v11620
    %v11820 = vunpack.c.l.b16 %v11621
    %v11821 = vunpack.c.l.b16 %v11622
    %v11822 = vunpack.c.l.b16 %v11623
    %v11823 = vunpack.c.l.b16 %v11624
    %v11824 = vunpack.c.l.b16 %v11625
    %v11825 = vunpack.c.l.b16 %v11626
    %v11826 = vunpack.c.l.b16 %v11627
    %v11827 = vunpack.c.l.b16 %v11628
    %v11828 = vunpack.c.l.b16 %v11629
    %v11829 = vunpack.c.l.b16 %v11630
    %v11830 = vunpack.c.l.b16 %v11631
    %v11831 = vunpack.c.l.b16 %v11632
    %v11832 = vunpack.c.l.b16 %v11633
    %v11833 = vunpack.c.l.b16 %v11634
    %v11834 = vunpack.c.l.b16 %v11635
    %v11835 = vunpack.c.l.b16 %v11636
    %v11836 = vunpack.c.l.b16 %v11637
    %v11837 = vunpack.c.l.b16 %v11638
    %v11838 = vunpack.c.l.b16 %v11639
    %v11839 = vunpack.c.l.b16 %v11640
    %v11840 = vunpack.c.l.b16 %v11641
    %v11841 = vunpack.c.l.b16 %v11642
    %v11842 = vunpack.c.l.b16 %v11643
    %v11843 = vunpack.c.l.b16 %v11644
    %v11844 = vunpack.c.l.b16 %v11645
    %v11845 = vunpack.c.l.b16 %v11646
    %v11846 = vunpack.c.l.b16 %v11647
    %v11847 = vpack.c.b16 %v11752, %v11751
    %v11848 = vpack.c.b16 %v11754, %v11753
    %v11849 = vpack.c.b16 %v11756, %v11755
    %v11850 = vpack.c.b16 %v11758, %v11757
    %v11851 = vpack.c.b16 %v11760, %v11759
    %v11852 = vpack.c.b16 %v11762, %v11761
    %v11853 = vpack.c.b16 %v11764, %v11763
    %v11854 = vpack.c.b16 %v11766, %v11765
    %v11855 = vpack.c.b16 %v11768, %v11767
    %v11856 = vpack.c.b16 %v11770, %v11769
    %v11857 = vpack.c.b16 %v11772, %v11771
    %v11858 = vpack.c.b16 %v11774, %v11773
    %v11859 = vpack.c.b16 %v11776, %v11775
    %v11860 = vpack.c.b16 %v11778, %v11777
    %v11861 = vpack.c.b16 %v11780, %v11779
    %v11862 = vpack.c.b16 %v11782, %v11781
    %v11863 = vpack.c.b16 %v11784, %v11783
    %v11864 = vpack.c.b16 %v11786, %v11785
    %v11865 = vpack.c.b16 %v11788, %v11787
    %v11866 = vpack.c.b16 %v11790, %v11789
    %v11867 = vpack.c.b16 %v11792, %v11791
    %v11868 = vpack.c.b16 %v11794, %v11793
    %v11869 = vpack.c.b16 %v11796, %v11795
    %v11870 = vpack.c.b16 %v11798, %v11797
    %v11871 = vpack.c.b16 %v11800, %v11799
    %v11872 = vpack.c.b16 %v11802, %v11801
    %v11873 = vpack.c.b16 %v11804, %v11803
    %v11874 = vpack.c.b16 %v11806, %v11805
    %v11875 = vpack.c.b16 %v11808, %v11807
    %v11876 = vpack.c.b16 %v11810, %v11809
    %v11877 = vpack.c.b16 %v11812, %v11811
    %v11878 = vpack.c.b16 %v11814, %v11813
    %v11879 = vpack.c.b16 %v11816, %v11815
    %v11880 = vpack.c.b16 %v11818, %v11817
    %v11881 = vpack.c.b16 %v11820, %v11819
    %v11882 = vpack.c.b16 %v11822, %v11821
    %v11883 = vpack.c.b16 %v11824, %v11823
    %v11884 = vpack.c.b16 %v11826, %v11825
    %v11885 = vpack.c.b16 %v11828, %v11827
    %v11886 = vpack.c.b16 %v11830, %v11829
    %v11887 = vpack.c.b16 %v11832, %v11831
    %v11888 = vpack.c.b16 %v11834, %v11833
    %v11889 = vpack.c.b16 %v11836, %v11835
    %v11890 = vpack.c.b16 %v11838, %v11837
    %v11891 = vpack.c.b16 %v11840, %v11839
    %v11892 = vpack.c.b16 %v11842, %v11841
    %v11893 = vpack.c.b16 %v11844, %v11843
    %v11894 = vpack.c.b16 %v11846, %v11845
    %11943 = vmatprep.subr.bf16.mxu0 0
    %11944 = vmatpush1.bf16.msra.mxu0 %v11847
    %11945 = vmatprep.subr.bf16.mxu0 0
    %11946 = vmatpush1.bf16.msra.mxu0 %v11848
    %11947 = vmatprep.subr.bf16.mxu0 0
    %11948 = vmatpush1.bf16.msra.mxu0 %v11849
    %11949 = vmatprep.subr.bf16.mxu0 0
    %11950 = vmatpush1.bf16.msra.mxu0 %v11850
    %11951 = vmatprep.subr.bf16.mxu0 0
    %11952 = vmatpush1.bf16.msra.mxu0 %v11851
    %11953 = vmatprep.subr.bf16.mxu0 0
    %11954 = vmatpush1.bf16.msra.mxu0 %v11852
    %11955 = vmatprep.subr.bf16.mxu0 0
    %11956 = vmatpush1.bf16.msra.mxu0 %v11853
    %11957 = vmatprep.subr.bf16.mxu0 0
    %11958 = vmatpush1.bf16.msra.mxu0 %v11854
    %11959 = vmatprep.subr.bf16.mxu0 0
    %11960 = vmatpush1.bf16.msra.mxu0 %v11855
    %11961 = vmatprep.subr.bf16.mxu0 0
    %11962 = vmatpush1.bf16.msra.mxu0 %v11856
    %11963 = vmatprep.subr.bf16.mxu0 0
    %11964 = vmatpush1.bf16.msra.mxu0 %v11857
    %11965 = vmatprep.subr.bf16.mxu0 0
    %11966 = vmatpush1.bf16.msra.mxu0 %v11858
    %11967 = vmatprep.subr.bf16.mxu0 0
    %11968 = vmatpush1.bf16.msra.mxu0 %v11859
    %11969 = vmatprep.subr.bf16.mxu0 0
    %11970 = vmatpush1.bf16.msra.mxu0 %v11860
    %11971 = vmatprep.subr.bf16.mxu0 0
    %11972 = vmatpush1.bf16.msra.mxu0 %v11861
    %11973 = vmatprep.subr.bf16.mxu0 0
    %11974 = vmatpush1.bf16.msra.mxu0 %v11862
    %11975 = vmatprep.mubr.bf16.mxu0 %v11547
    %11976 = vmatmul.mubr.bf16.gmra.mrb[0].mxu0 %v11546
    %v11977 = vpop.f32.mrb[0].mxu0
    %v11978 = vadd.f32 %v11653, %v11977
    %v11979 = vpop.f32.mrb[0].mxu0
    %v11980 = vpop.f32.mrb[0].mxu0
    %v11981 = vpop.f32.mrb[0].mxu0
    %11982 = vdwg.mxu0
    %11983 = vmatprep.subr.bf16.mxu0 0
    %11984 = vmatpush1.bf16.msra.mxu0 %v11863
    %11985 = vmatprep.subr.bf16.mxu0 0
    %11986 = vmatpush1.bf16.msra.mxu0 %v11864
    %11987 = vmatprep.subr.bf16.mxu0 0
    %11988 = vmatpush1.bf16.msra.mxu0 %v11865
    %11989 = vmatprep.subr.bf16.mxu0 0
    %11990 = vmatpush1.bf16.msra.mxu0 %v11866
    %11991 = vmatprep.subr.bf16.mxu0 0
    %11992 = vmatpush1.bf16.msra.mxu0 %v11867
    %11993 = vmatprep.subr.bf16.mxu0 0
    %11994 = vmatpush1.bf16.msra.mxu0 %v11868
    %11995 = vmatprep.subr.bf16.mxu0 0
    %11996 = vmatpush1.bf16.msra.mxu0 %v11869
    %11997 = vmatprep.subr.bf16.mxu0 0
    %11998 = vmatpush1.bf16.msra.mxu0 %v11870
    %11999 = vmatprep.subr.bf16.mxu0 0
    %12000 = vmatpush1.bf16.msra.mxu0 %v11871
    %12001 = vmatprep.subr.bf16.mxu0 0
    %12002 = vmatpush1.bf16.msra.mxu0 %v11872
    %12003 = vmatprep.subr.bf16.mxu0 0
    %12004 = vmatpush1.bf16.msra.mxu0 %v11873
    %12005 = vmatprep.subr.bf16.mxu0 0
    %12006 = vmatpush1.bf16.msra.mxu0 %v11874
    %12007 = vmatprep.subr.bf16.mxu0 0
    %12008 = vmatpush1.bf16.msra.mxu0 %v11875
    %12009 = vmatprep.subr.bf16.mxu0 0
    %12010 = vmatpush1.bf16.msra.mxu0 %v11876
    %12011 = vmatprep.subr.bf16.mxu0 0
    %12012 = vmatpush1.bf16.msra.mxu0 %v11877
    %12013 = vmatprep.subr.bf16.mxu0 0
    %12014 = vmatpush1.bf16.msra.mxu0 %v11878
    %12015 = vmatprep.mubr.bf16.mxu0 %v11549
    %12016 = vmatmul.mubr.bf16.gmra.mrb[0].mxu0 %v11548
    %v12017 = vpop.f32.mrb[0].mxu0
    %v12018 = vadd.f32 %v11978, %v12017
    %v12019 = vpop.f32.mrb[0].mxu0
    %v12020 = vpop.f32.mrb[0].mxu0
    %v12021 = vpop.f32.mrb[0].mxu0
    %12022 = vdwg.mxu0
    %12023 = vmatprep.subr.bf16.mxu0 0
    %12024 = vmatpush1.bf16.msra.mxu0 %v11879
    %12025 = vmatprep.subr.bf16.mxu0 0
    %12026 = vmatpush1.bf16.msra.mxu0 %v11880
    %12027 = vmatprep.subr.bf16.mxu0 0
    %12028 = vmatpush1.bf16.msra.mxu0 %v11881
    %12029 = vmatprep.subr.bf16.mxu0 0
    %12030 = vmatpush1.bf16.msra.mxu0 %v11882
    %12031 = vmatprep.subr.bf16.mxu0 0
    %12032 = vmatpush1.bf16.msra.mxu0 %v11883
    %12033 = vmatprep.subr.bf16.mxu0 0
    %12034 = vmatpush1.bf16.msra.mxu0 %v11884
    %12035 = vmatprep.subr.bf16.mxu0 0
    %12036 = vmatpush1.bf16.msra.mxu0 %v11885
    %12037 = vmatprep.subr.bf16.mxu0 0
    %12038 = vmatpush1.bf16.msra.mxu0 %v11886
    %12039 = vmatprep.subr.bf16.mxu0 0
    %12040 = vmatpush1.bf16.msra.mxu0 %v11887
    %12041 = vmatprep.subr.bf16.mxu0 0
    %12042 = vmatpush1.bf16.msra.mxu0 %v11888
    %12043 = vmatprep.subr.bf16.mxu0 0
    %12044 = vmatpush1.bf16.msra.mxu0 %v11889
    %12045 = vmatprep.subr.bf16.mxu0 0
    %12046 = vmatpush1.bf16.msra.mxu0 %v11890
    %12047 = vmatprep.subr.bf16.mxu0 0
    %12048 = vmatpush1.bf16.msra.mxu0 %v11891
    %12049 = vmatprep.subr.bf16.mxu0 0
    %12050 = vmatpush1.bf16.msra.mxu0 %v11892
    %12051 = vmatprep.subr.bf16.mxu0 0
    %12052 = vmatpush1.bf16.msra.mxu0 %v11893
    %12053 = vmatprep.subr.bf16.mxu0 0
    %12054 = vmatpush1.bf16.msra.mxu0 %v11894
    %12055 = vmatprep.mubr.bf16.mxu0 %v11551
    %12056 = vmatmul.mubr.bf16.gmra.mrb[0].mxu0 %v11550
    %v12057 = vpop.f32.mrb[0].mxu0
    %v12058 = vadd.f32 %v12018, %v12057
    %v12059 = vpop.f32.mrb[0].mxu0
    %v12060 = vpop.f32.mrb[0].mxu0
    %v12061 = vpop.f32.mrb[0].mxu0
    %12062 = vdwg.mxu0
    %12063 = vst [vmem:[%s8] sm:$0xff] %v12058
    // Predicated region
    $region62: #{customnet_forward_prepared.1} parent=1 // pred_check
      _
    $region63: #{customnet_forward_prepared.1} parent=1 // pred_check_branch
      %12065 = sbr.rel (0) target = $region65
    $region64: #{customnet_forward_prepared.1} parent=1 // pred_region
      _
    $region65: #{customnet_forward_prepared.1} parent=1 // pred_fallthru
      _
    // Predicated region
    $region66: #{customnet_forward_prepared.1} parent=1 // pred_check
      _
    $region67: #{customnet_forward_prepared.1} parent=1 // pred_check_branch
      %12067 = sbr.rel (0) target = $region69
    $region68: #{customnet_forward_prepared.1} parent=1 // pred_region
      _
    $region69: #{customnet_forward_prepared.1} parent=1 // pred_fallthru
      _
    %12068 = vsyncpa [#allocation3], 1
    %12069 = vsyncpa [#allocation5], 1
    %12070 = vsyncpa [#allocation8], 1
    %12071 = vsyncpa [#allocation11], 1

</llo_original>
